<compile_context>
chip_gen: v5e
topology: v5e:2x2
jax: 0.10.0
libtpu: 0.0.40
codegen_flags: <defaults>
</compile_context>

<pallas_src>
import jax
import jax.numpy as jnp
from jax.experimental import pallas as pl
from jax.experimental.pallas import tpu as pltpu


def conv3d_pallas(x_ncdhw, weight_oidhw, bias):
    """Valid (no-pad, stride-1) 3D conv matching nn.Conv3d semantics.

    x_ncdhw      : (N, Cin, D, H, W)  f32
    weight_oidhw : (Cout, Cin, kd, kh, kw)  (PyTorch layout)
    bias         : (Cout,)
    returns      : (N, Cout, Do, Ho, Wo)
    """
    N, Cin, D, H, W = x_ncdhw.shape
    Cout, _, kd, kh, kw = weight_oidhw.shape
    Do, Ho, Wo = D - kd + 1, H - kh + 1, W - kw + 1

    DHW = D * H * W
    # Lanes actually needed in the "holes" layout: max valid s' + 1.
    SL = (Do - 1) * H * W + (Ho - 1) * W + Wo          # 3550 for 16^3 / k=3
    K = kd * kh * kw * Cin                              # 108
    Kpad = pl.cdiv(K, 8) * 8                            # 112 (f32 sublane alignment)

    # Static tap offsets into the flattened input (a*H*W + b*W + c); max offset + SL
    # == D*H*W exactly, so every in-kernel slice stays in bounds with no padding.
    offs = [a * H * W + b * W + c
            for a in range(kd) for b in range(kh) for c in range(kw)]

    def kernel(w_ref, b_ref, x_ref, o_ref, p_ref):
        # w_ref : (Cout, Kpad) f32   flattened weights, zero-padded columns
        # b_ref : (Cout, 1)    f32   bias
        # x_ref : (Cin, DHW)   f32   one batch element, spatially flattened
        # o_ref : (Cout, DHW)  f32   lane-dense output (holes layout)
        # p_ref : (Kpad, SL)   f32   VMEM im2col scratch
        # ---- build the patch matrix in VMEM (contiguous lane slices per tap) ----
        for t, off in enumerate(offs):
            p_ref[pl.ds(t * Cin, Cin), :] = x_ref[:, pl.ds(off, SL)]
        if Kpad > K:  # zero the alignment rows once (w columns there are zero too)
            p_ref[pl.ds(K, Kpad - K), :] = jnp.zeros((Kpad - K, SL), jnp.float32)
        # ---- one GEMM on the MXU, f32 accumulation, f32 bias post-GEMM ----
        acc = jnp.dot(w_ref[...], p_ref[...], preferred_element_type=jnp.float32)
        acc = acc + b_ref[...]
        o_ref[:, pl.ds(0, SL)] = acc.astype(o_ref.dtype)
        if SL < DHW:  # keep the unused tail deterministic (sliced away in wrapper)
            o_ref[:, pl.ds(SL, DHW - SL)] = jnp.zeros((Cout, DHW - SL), o_ref.dtype)

    # ---------------- wrapper-side layout glue (tiny, no data expansion) ----------------
    x_flat = x_ncdhw.reshape(N, Cin, DHW)                                    # free reshape
    w2 = jnp.transpose(weight_oidhw, (0, 2, 3, 4, 1)).reshape(Cout, K)       # (kd,kh,kw,Cin)
    if Kpad > K:
        w2 = jnp.concatenate([w2, jnp.zeros((Cout, Kpad - K), w2.dtype)], axis=1)
    b2 = bias.reshape(Cout, 1).astype(jnp.float32)

    itemsize = 4
    cost = pl.CostEstimate(
        flops=2 * N * Cout * Kpad * SL,
        transcendentals=0,
        bytes_accessed=(N * Cin * DHW + Cout * Kpad + Cout + N * Cout * DHW) * itemsize,
    )

    out_full = pl.pallas_call(
        kernel,
        out_shape=jax.ShapeDtypeStruct((N, Cout, DHW), x_ncdhw.dtype),
        grid_spec=pltpu.PrefetchScalarGridSpec(
            num_scalar_prefetch=0,
            grid=(N,),                       # one batch element per step
            in_specs=[
                pl.BlockSpec((Cout, Kpad), lambda n: (0, 0)),            # weights resident
                pl.BlockSpec((Cout, 1), lambda n: (0, 0)),               # bias resident
                pl.BlockSpec((None, Cin, DHW), lambda n: (n, 0, 0)),     # per-batch input
            ],
            out_specs=pl.BlockSpec((None, Cout, DHW), lambda n: (n, 0, 0)),
            scratch_shapes=[pltpu.VMEM((Kpad, SL), jnp.float32)],
        ),
        compiler_params=pltpu.CompilerParams(
            dimension_semantics=("parallel",),   # feeds both v7x TensorCores with N=2
        ),
        cost_estimate=cost,
    )(w2, b2, x_flat)

    # Holes layout -> NCDHW: free reshape + cheap slice (only remaining XLA glue;
    # fuses into the consumer under jit).
    return out_full.reshape(N, Cout, D, H, W)[:, :, :Do, :Ho, :Wo]


if __name__ == "__main__":
    # Shapes consistent with nn.Conv3d(in_channels=4, out_channels=8, kernel_size=3).
    N, Cin, Cout, Kk = 2, 4, 8, 3
    D = H = W = 16

    key = jax.random.PRNGKey(0)
    kx, kw_, kb = jax.random.split(key, 3)

    x = jax.random.normal(kx, (N, Cin, D, H, W), dtype=jnp.float32)
    fan_in = Cin * Kk * Kk * Kk
    bound = 1.0 / (fan_in ** 0.5)
    weight = jax.random.uniform(kw_, (Cout, Cin, Kk, Kk, Kk),
                                minval=-bound, maxval=bound, dtype=jnp.float32)
    bias = jax.random.uniform(kb, (Cout,), minval=-bound, maxval=bound,
                              dtype=jnp.float32)

    conv3d = jax.jit(conv3d_pallas)
    out = jax.block_until_ready(conv3d(x, weight, bias))

    # Reference check against XLA's conv (same semantics as nn.Conv3d).
    ref = jax.lax.conv_general_dilated(
        x, weight, window_strides=(1, 1, 1), padding="VALID",
        dimension_numbers=("NCDHW", "OIDHW", "NCDHW"),
    ) + bias.reshape(1, Cout, 1, 1, 1)

    assert out.shape == (N, Cout, D - Kk + 1, H - Kk + 1, W - Kk + 1)
    err = float(jnp.max(jnp.abs(out - ref)))
    assert jnp.allclose(out, ref, atol=2e-2, rtol=2e-2), err
    print("KERNEL_OK")
</pallas_src>

<mosaic_0001>
module attributes {stable_mosaic.version = 11 : i64} {
  func.func @kernel(%arg0: i32, %arg1: memref<8x112xf32, #tpu.memory_space<vmem>>, %arg2: memref<8x1xf32, #tpu.memory_space<vmem>>, %arg3: memref<1x4x4096xf32, #tpu.memory_space<vmem>>, %arg4: memref<1x8x4096xf32, #tpu.memory_space<vmem>>, %arg5: memref<112x3550xf32, #tpu.memory_space<vmem>>) attributes {dimension_semantics = [#tpu.dimension_semantics<parallel>], iteration_bounds = array<i64: 2>, scalar_prefetch = 0 : i64, scratch_operands = 1 : i64, tpu.core_type = #tpu.core_type<tc>, window_params = [{pipeline_mode = #tpu.pipeline_mode<synchronous>, transform_indices = @transform_0, window_bounds = array<i64: 8, 112>}, {pipeline_mode = #tpu.pipeline_mode<synchronous>, transform_indices = @transform_1, window_bounds = array<i64: 8, 1>}, {transform_indices = @transform_2, window_bounds = array<i64: 1, 4, 4096>}, {transform_indices = @transform_3, window_bounds = array<i64: 1, 8, 4096>}]} {
    %c0 = arith.constant 0 : index
    %c0_0 = arith.constant 0 : index
    %c0_1 = arith.constant 0 : index
    %0 = vector.load %arg3[%c0, %c0_0, %c0_1] : memref<1x4x4096xf32, #tpu.memory_space<vmem>>, vector<1x4x3550xf32>
    %1 = vector.shape_cast %0 : vector<1x4x3550xf32> to vector<4x3550xf32>
    %c0_2 = arith.constant 0 : index
    %c0_3 = arith.constant 0 : index
    %2 = vector.load %arg5[%c0_2, %c0_3] : memref<112x3550xf32, #tpu.memory_space<vmem>>, vector<4x3550xf32>
    tpu.vector_store %arg5[%c0_2, %c0_3], %1 {strides = array<i32>} : memref<112x3550xf32, #tpu.memory_space<vmem>>, vector<4x3550xf32>,
    %c0_4 = arith.constant 0 : index
    %c0_5 = arith.constant 0 : index
    %c1 = arith.constant 1 : index
    %3 = vector.load %arg3[%c0_4, %c0_5, %c1] : memref<1x4x4096xf32, #tpu.memory_space<vmem>>, vector<1x4x3550xf32>
    %4 = vector.shape_cast %3 : vector<1x4x3550xf32> to vector<4x3550xf32>
    %c4 = arith.constant 4 : index
    %c0_6 = arith.constant 0 : index
    %5 = vector.load %arg5[%c4, %c0_6] : memref<112x3550xf32, #tpu.memory_space<vmem>>, vector<4x3550xf32>
    tpu.vector_store %arg5[%c4, %c0_6], %4 {strides = array<i32>} : memref<112x3550xf32, #tpu.memory_space<vmem>>, vector<4x3550xf32>,
    %c0_7 = arith.constant 0 : index
    %c0_8 = arith.constant 0 : index
    %c2 = arith.constant 2 : index
    %6 = vector.load %arg3[%c0_7, %c0_8, %c2] : memref<1x4x4096xf32, #tpu.memory_space<vmem>>, vector<1x4x3550xf32>
    %7 = vector.shape_cast %6 : vector<1x4x3550xf32> to vector<4x3550xf32>
    %c8 = arith.constant 8 : index
    %c0_9 = arith.constant 0 : index
    %8 = vector.load %arg5[%c8, %c0_9] : memref<112x3550xf32, #tpu.memory_space<vmem>>, vector<4x3550xf32>
    tpu.vector_store %arg5[%c8, %c0_9], %7 {strides = array<i32>} : memref<112x3550xf32, #tpu.memory_space<vmem>>, vector<4x3550xf32>,
    %c0_10 = arith.constant 0 : index
    %c0_11 = arith.constant 0 : index
    %c16 = arith.constant 16 : index
    %9 = vector.load %arg3[%c0_10, %c0_11, %c16] : memref<1x4x4096xf32, #tpu.memory_space<vmem>>, vector<1x4x3550xf32>
    %10 = vector.shape_cast %9 : vector<1x4x3550xf32> to vector<4x3550xf32>
    %c12 = arith.constant 12 : index
    %c0_12 = arith.constant 0 : index
    %11 = vector.load %arg5[%c12, %c0_12] : memref<112x3550xf32, #tpu.memory_space<vmem>>, vector<4x3550xf32>
    tpu.vector_store %arg5[%c12, %c0_12], %10 {strides = array<i32>} : memref<112x3550xf32, #tpu.memory_space<vmem>>, vector<4x3550xf32>,
    %c0_13 = arith.constant 0 : index
    %c0_14 = arith.constant 0 : index
    %c17 = arith.constant 17 : index
    %12 = vector.load %arg3[%c0_13, %c0_14, %c17] : memref<1x4x4096xf32, #tpu.memory_space<vmem>>, vector<1x4x3550xf32>
    %13 = vector.shape_cast %12 : vector<1x4x3550xf32> to vector<4x3550xf32>
    %c16_15 = arith.constant 16 : index
    %c0_16 = arith.constant 0 : index
    %14 = vector.load %arg5[%c16_15, %c0_16] : memref<112x3550xf32, #tpu.memory_space<vmem>>, vector<4x3550xf32>
    tpu.vector_store %arg5[%c16_15, %c0_16], %13 {strides = array<i32>} : memref<112x3550xf32, #tpu.memory_space<vmem>>, vector<4x3550xf32>,
    %c0_17 = arith.constant 0 : index
    %c0_18 = arith.constant 0 : index
    %c18 = arith.constant 18 : index
    %15 = vector.load %arg3[%c0_17, %c0_18, %c18] : memref<1x4x4096xf32, #tpu.memory_space<vmem>>, vector<1x4x3550xf32>
    %16 = vector.shape_cast %15 : vector<1x4x3550xf32> to vector<4x3550xf32>
    %c20 = arith.constant 20 : index
    %c0_19 = arith.constant 0 : index
    %17 = vector.load %arg5[%c20, %c0_19] : memref<112x3550xf32, #tpu.memory_space<vmem>>, vector<4x3550xf32>
    tpu.vector_store %arg5[%c20, %c0_19], %16 {strides = array<i32>} : memref<112x3550xf32, #tpu.memory_space<vmem>>, vector<4x3550xf32>,
    %c0_20 = arith.constant 0 : index
    %c0_21 = arith.constant 0 : index
    %c32 = arith.constant 32 : index
    %18 = vector.load %arg3[%c0_20, %c0_21, %c32] : memref<1x4x4096xf32, #tpu.memory_space<vmem>>, vector<1x4x3550xf32>
    %19 = vector.shape_cast %18 : vector<1x4x3550xf32> to vector<4x3550xf32>
    %c24 = arith.constant 24 : index
    %c0_22 = arith.constant 0 : index
    %20 = vector.load %arg5[%c24, %c0_22] : memref<112x3550xf32, #tpu.memory_space<vmem>>, vector<4x3550xf32>
    tpu.vector_store %arg5[%c24, %c0_22], %19 {strides = array<i32>} : memref<112x3550xf32, #tpu.memory_space<vmem>>, vector<4x3550xf32>,
    %c0_23 = arith.constant 0 : index
    %c0_24 = arith.constant 0 : index
    %c33 = arith.constant 33 : index
    %21 = vector.load %arg3[%c0_23, %c0_24, %c33] : memref<1x4x4096xf32, #tpu.memory_space<vmem>>, vector<1x4x3550xf32>
    %22 = vector.shape_cast %21 : vector<1x4x3550xf32> to vector<4x3550xf32>
    %c28 = arith.constant 28 : index
    %c0_25 = arith.constant 0 : index
    %23 = vector.load %arg5[%c28, %c0_25] : memref<112x3550xf32, #tpu.memory_space<vmem>>, vector<4x3550xf32>
    tpu.vector_store %arg5[%c28, %c0_25], %22 {strides = array<i32>} : memref<112x3550xf32, #tpu.memory_space<vmem>>, vector<4x3550xf32>,
    %c0_26 = arith.constant 0 : index
    %c0_27 = arith.constant 0 : index
    %c34 = arith.constant 34 : index
    %24 = vector.load %arg3[%c0_26, %c0_27, %c34] : memref<1x4x4096xf32, #tpu.memory_space<vmem>>, vector<1x4x3550xf32>
    %25 = vector.shape_cast %24 : vector<1x4x3550xf32> to vector<4x3550xf32>
    %c32_28 = arith.constant 32 : index
    %c0_29 = arith.constant 0 : index
    %26 = vector.load %arg5[%c32_28, %c0_29] : memref<112x3550xf32, #tpu.memory_space<vmem>>, vector<4x3550xf32>
    tpu.vector_store %arg5[%c32_28, %c0_29], %25 {strides = array<i32>} : memref<112x3550xf32, #tpu.memory_space<vmem>>, vector<4x3550xf32>,
    %c0_30 = arith.constant 0 : index
    %c0_31 = arith.constant 0 : index
    %c256 = arith.constant 256 : index
    %27 = vector.load %arg3[%c0_30, %c0_31, %c256] : memref<1x4x4096xf32, #tpu.memory_space<vmem>>, vector<1x4x3550xf32>
    %28 = vector.shape_cast %27 : vector<1x4x3550xf32> to vector<4x3550xf32>
    %c36 = arith.constant 36 : index
    %c0_32 = arith.constant 0 : index
    %29 = vector.load %arg5[%c36, %c0_32] : memref<112x3550xf32, #tpu.memory_space<vmem>>, vector<4x3550xf32>
    tpu.vector_store %arg5[%c36, %c0_32], %28 {strides = array<i32>} : memref<112x3550xf32, #tpu.memory_space<vmem>>, vector<4x3550xf32>,
    %c0_33 = arith.constant 0 : index
    %c0_34 = arith.constant 0 : index
    %c257 = arith.constant 257 : index
    %30 = vector.load %arg3[%c0_33, %c0_34, %c257] : memref<1x4x4096xf32, #tpu.memory_space<vmem>>, vector<1x4x3550xf32>
    %31 = vector.shape_cast %30 : vector<1x4x3550xf32> to vector<4x3550xf32>
    %c40 = arith.constant 40 : index
    %c0_35 = arith.constant 0 : index
    %32 = vector.load %arg5[%c40, %c0_35] : memref<112x3550xf32, #tpu.memory_space<vmem>>, vector<4x3550xf32>
    tpu.vector_store %arg5[%c40, %c0_35], %31 {strides = array<i32>} : memref<112x3550xf32, #tpu.memory_space<vmem>>, vector<4x3550xf32>,
    %c0_36 = arith.constant 0 : index
    %c0_37 = arith.constant 0 : index
    %c258 = arith.constant 258 : index
    %33 = vector.load %arg3[%c0_36, %c0_37, %c258] : memref<1x4x4096xf32, #tpu.memory_space<vmem>>, vector<1x4x3550xf32>
    %34 = vector.shape_cast %33 : vector<1x4x3550xf32> to vector<4x3550xf32>
    %c44 = arith.constant 44 : index
    %c0_38 = arith.constant 0 : index
    %35 = vector.load %arg5[%c44, %c0_38] : memref<112x3550xf32, #tpu.memory_space<vmem>>, vector<4x3550xf32>
    tpu.vector_store %arg5[%c44, %c0_38], %34 {strides = array<i32>} : memref<112x3550xf32, #tpu.memory_space<vmem>>, vector<4x3550xf32>,
    %c0_39 = arith.constant 0 : index
    %c0_40 = arith.constant 0 : index
    %c272 = arith.constant 272 : index
    %36 = vector.load %arg3[%c0_39, %c0_40, %c272] : memref<1x4x4096xf32, #tpu.memory_space<vmem>>, vector<1x4x3550xf32>
    %37 = vector.shape_cast %36 : vector<1x4x3550xf32> to vector<4x3550xf32>
    %c48 = arith.constant 48 : index
    %c0_41 = arith.constant 0 : index
    %38 = vector.load %arg5[%c48, %c0_41] : memref<112x3550xf32, #tpu.memory_space<vmem>>, vector<4x3550xf32>
    tpu.vector_store %arg5[%c48, %c0_41], %37 {strides = array<i32>} : memref<112x3550xf32, #tpu.memory_space<vmem>>, vector<4x3550xf32>,
    %c0_42 = arith.constant 0 : index
    %c0_43 = arith.constant 0 : index
    %c273 = arith.constant 273 : index
    %39 = vector.load %arg3[%c0_42, %c0_43, %c273] : memref<1x4x4096xf32, #tpu.memory_space<vmem>>, vector<1x4x3550xf32>
    %40 = vector.shape_cast %39 : vector<1x4x3550xf32> to vector<4x3550xf32>
    %c52 = arith.constant 52 : index
    %c0_44 = arith.constant 0 : index
    %41 = vector.load %arg5[%c52, %c0_44] : memref<112x3550xf32, #tpu.memory_space<vmem>>, vector<4x3550xf32>
    tpu.vector_store %arg5[%c52, %c0_44], %40 {strides = array<i32>} : memref<112x3550xf32, #tpu.memory_space<vmem>>, vector<4x3550xf32>,
    %c0_45 = arith.constant 0 : index
    %c0_46 = arith.constant 0 : index
    %c274 = arith.constant 274 : index
    %42 = vector.load %arg3[%c0_45, %c0_46, %c274] : memref<1x4x4096xf32, #tpu.memory_space<vmem>>, vector<1x4x3550xf32>
    %43 = vector.shape_cast %42 : vector<1x4x3550xf32> to vector<4x3550xf32>
    %c56 = arith.constant 56 : index
    %c0_47 = arith.constant 0 : index
    %44 = vector.load %arg5[%c56, %c0_47] : memref<112x3550xf32, #tpu.memory_space<vmem>>, vector<4x3550xf32>
    tpu.vector_store %arg5[%c56, %c0_47], %43 {strides = array<i32>} : memref<112x3550xf32, #tpu.memory_space<vmem>>, vector<4x3550xf32>,
    %c0_48 = arith.constant 0 : index
    %c0_49 = arith.constant 0 : index
    %c288 = arith.constant 288 : index
    %45 = vector.load %arg3[%c0_48, %c0_49, %c288] : memref<1x4x4096xf32, #tpu.memory_space<vmem>>, vector<1x4x3550xf32>
    %46 = vector.shape_cast %45 : vector<1x4x3550xf32> to vector<4x3550xf32>
    %c60 = arith.constant 60 : index
    %c0_50 = arith.constant 0 : index
    %47 = vector.load %arg5[%c60, %c0_50] : memref<112x3550xf32, #tpu.memory_space<vmem>>, vector<4x3550xf32>
    tpu.vector_store %arg5[%c60, %c0_50], %46 {strides = array<i32>} : memref<112x3550xf32, #tpu.memory_space<vmem>>, vector<4x3550xf32>,
    %c0_51 = arith.constant 0 : index
    %c0_52 = arith.constant 0 : index
    %c289 = arith.constant 289 : index
    %48 = vector.load %arg3[%c0_51, %c0_52, %c289] : memref<1x4x4096xf32, #tpu.memory_space<vmem>>, vector<1x4x3550xf32>
    %49 = vector.shape_cast %48 : vector<1x4x3550xf32> to vector<4x3550xf32>
    %c64 = arith.constant 64 : index
    %c0_53 = arith.constant 0 : index
    %50 = vector.load %arg5[%c64, %c0_53] : memref<112x3550xf32, #tpu.memory_space<vmem>>, vector<4x3550xf32>
    tpu.vector_store %arg5[%c64, %c0_53], %49 {strides = array<i32>} : memref<112x3550xf32, #tpu.memory_space<vmem>>, vector<4x3550xf32>,
    %c0_54 = arith.constant 0 : index
    %c0_55 = arith.constant 0 : index
    %c290 = arith.constant 290 : index
    %51 = vector.load %arg3[%c0_54, %c0_55, %c290] : memref<1x4x4096xf32, #tpu.memory_space<vmem>>, vector<1x4x3550xf32>
    %52 = vector.shape_cast %51 : vector<1x4x3550xf32> to vector<4x3550xf32>
    %c68 = arith.constant 68 : index
    %c0_56 = arith.constant 0 : index
    %53 = vector.load %arg5[%c68, %c0_56] : memref<112x3550xf32, #tpu.memory_space<vmem>>, vector<4x3550xf32>
    tpu.vector_store %arg5[%c68, %c0_56], %52 {strides = array<i32>} : memref<112x3550xf32, #tpu.memory_space<vmem>>, vector<4x3550xf32>,
    %c0_57 = arith.constant 0 : index
    %c0_58 = arith.constant 0 : index
    %c512 = arith.constant 512 : index
    %54 = vector.load %arg3[%c0_57, %c0_58, %c512] : memref<1x4x4096xf32, #tpu.memory_space<vmem>>, vector<1x4x3550xf32>
    %55 = vector.shape_cast %54 : vector<1x4x3550xf32> to vector<4x3550xf32>
    %c72 = arith.constant 72 : index
    %c0_59 = arith.constant 0 : index
    %56 = vector.load %arg5[%c72, %c0_59] : memref<112x3550xf32, #tpu.memory_space<vmem>>, vector<4x3550xf32>
    tpu.vector_store %arg5[%c72, %c0_59], %55 {strides = array<i32>} : memref<112x3550xf32, #tpu.memory_space<vmem>>, vector<4x3550xf32>,
    %c0_60 = arith.constant 0 : index
    %c0_61 = arith.constant 0 : index
    %c513 = arith.constant 513 : index
    %57 = vector.load %arg3[%c0_60, %c0_61, %c513] : memref<1x4x4096xf32, #tpu.memory_space<vmem>>, vector<1x4x3550xf32>
    %58 = vector.shape_cast %57 : vector<1x4x3550xf32> to vector<4x3550xf32>
    %c76 = arith.constant 76 : index
    %c0_62 = arith.constant 0 : index
    %59 = vector.load %arg5[%c76, %c0_62] : memref<112x3550xf32, #tpu.memory_space<vmem>>, vector<4x3550xf32>
    tpu.vector_store %arg5[%c76, %c0_62], %58 {strides = array<i32>} : memref<112x3550xf32, #tpu.memory_space<vmem>>, vector<4x3550xf32>,
    %c0_63 = arith.constant 0 : index
    %c0_64 = arith.constant 0 : index
    %c514 = arith.constant 514 : index
    %60 = vector.load %arg3[%c0_63, %c0_64, %c514] : memref<1x4x4096xf32, #tpu.memory_space<vmem>>, vector<1x4x3550xf32>
    %61 = vector.shape_cast %60 : vector<1x4x3550xf32> to vector<4x3550xf32>
    %c80 = arith.constant 80 : index
    %c0_65 = arith.constant 0 : index
    %62 = vector.load %arg5[%c80, %c0_65] : memref<112x3550xf32, #tpu.memory_space<vmem>>, vector<4x3550xf32>
    tpu.vector_store %arg5[%c80, %c0_65], %61 {strides = array<i32>} : memref<112x3550xf32, #tpu.memory_space<vmem>>, vector<4x3550xf32>,
    %c0_66 = arith.constant 0 : index
    %c0_67 = arith.constant 0 : index
    %c528 = arith.constant 528 : index
    %63 = vector.load %arg3[%c0_66, %c0_67, %c528] : memref<1x4x4096xf32, #tpu.memory_space<vmem>>, vector<1x4x3550xf32>
    %64 = vector.shape_cast %63 : vector<1x4x3550xf32> to vector<4x3550xf32>
    %c84 = arith.constant 84 : index
    %c0_68 = arith.constant 0 : index
    %65 = vector.load %arg5[%c84, %c0_68] : memref<112x3550xf32, #tpu.memory_space<vmem>>, vector<4x3550xf32>
    tpu.vector_store %arg5[%c84, %c0_68], %64 {strides = array<i32>} : memref<112x3550xf32, #tpu.memory_space<vmem>>, vector<4x3550xf32>,
    %c0_69 = arith.constant 0 : index
    %c0_70 = arith.constant 0 : index
    %c529 = arith.constant 529 : index
    %66 = vector.load %arg3[%c0_69, %c0_70, %c529] : memref<1x4x4096xf32, #tpu.memory_space<vmem>>, vector<1x4x3550xf32>
    %67 = vector.shape_cast %66 : vector<1x4x3550xf32> to vector<4x3550xf32>
    %c88 = arith.constant 88 : index
    %c0_71 = arith.constant 0 : index
    %68 = vector.load %arg5[%c88, %c0_71] : memref<112x3550xf32, #tpu.memory_space<vmem>>, vector<4x3550xf32>
    tpu.vector_store %arg5[%c88, %c0_71], %67 {strides = array<i32>} : memref<112x3550xf32, #tpu.memory_space<vmem>>, vector<4x3550xf32>,
    %c0_72 = arith.constant 0 : index
    %c0_73 = arith.constant 0 : index
    %c530 = arith.constant 530 : index
    %69 = vector.load %arg3[%c0_72, %c0_73, %c530] : memref<1x4x4096xf32, #tpu.memory_space<vmem>>, vector<1x4x3550xf32>
    %70 = vector.shape_cast %69 : vector<1x4x3550xf32> to vector<4x3550xf32>
    %c92 = arith.constant 92 : index
    %c0_74 = arith.constant 0 : index
    %71 = vector.load %arg5[%c92, %c0_74] : memref<112x3550xf32, #tpu.memory_space<vmem>>, vector<4x3550xf32>
    tpu.vector_store %arg5[%c92, %c0_74], %70 {strides = array<i32>} : memref<112x3550xf32, #tpu.memory_space<vmem>>, vector<4x3550xf32>,
    %c0_75 = arith.constant 0 : index
    %c0_76 = arith.constant 0 : index
    %c544 = arith.constant 544 : index
    %72 = vector.load %arg3[%c0_75, %c0_76, %c544] : memref<1x4x4096xf32, #tpu.memory_space<vmem>>, vector<1x4x3550xf32>
    %73 = vector.shape_cast %72 : vector<1x4x3550xf32> to vector<4x3550xf32>
    %c96 = arith.constant 96 : index
    %c0_77 = arith.constant 0 : index
    %74 = vector.load %arg5[%c96, %c0_77] : memref<112x3550xf32, #tpu.memory_space<vmem>>, vector<4x3550xf32>
    tpu.vector_store %arg5[%c96, %c0_77], %73 {strides = array<i32>} : memref<112x3550xf32, #tpu.memory_space<vmem>>, vector<4x3550xf32>,
    %c0_78 = arith.constant 0 : index
    %c0_79 = arith.constant 0 : index
    %c545 = arith.constant 545 : index
    %75 = vector.load %arg3[%c0_78, %c0_79, %c545] : memref<1x4x4096xf32, #tpu.memory_space<vmem>>, vector<1x4x3550xf32>
    %76 = vector.shape_cast %75 : vector<1x4x3550xf32> to vector<4x3550xf32>
    %c100 = arith.constant 100 : index
    %c0_80 = arith.constant 0 : index
    %77 = vector.load %arg5[%c100, %c0_80] : memref<112x3550xf32, #tpu.memory_space<vmem>>, vector<4x3550xf32>
    tpu.vector_store %arg5[%c100, %c0_80], %76 {strides = array<i32>} : memref<112x3550xf32, #tpu.memory_space<vmem>>, vector<4x3550xf32>,
    %c0_81 = arith.constant 0 : index
    %c0_82 = arith.constant 0 : index
    %c546 = arith.constant 546 : index
    %78 = vector.load %arg3[%c0_81, %c0_82, %c546] : memref<1x4x4096xf32, #tpu.memory_space<vmem>>, vector<1x4x3550xf32>
    %79 = vector.shape_cast %78 : vector<1x4x3550xf32> to vector<4x3550xf32>
    %c104 = arith.constant 104 : index
    %c0_83 = arith.constant 0 : index
    %80 = vector.load %arg5[%c104, %c0_83] : memref<112x3550xf32, #tpu.memory_space<vmem>>, vector<4x3550xf32>
    tpu.vector_store %arg5[%c104, %c0_83], %79 {strides = array<i32>} : memref<112x3550xf32, #tpu.memory_space<vmem>>, vector<4x3550xf32>,
    %cst = arith.constant 0.000000e+00 : f32
    %81 = vector.broadcast %cst : f32 to vector<4x3550xf32>
    %c108 = arith.constant 108 : index
    %c0_84 = arith.constant 0 : index
    %82 = vector.load %arg5[%c108, %c0_84] : memref<112x3550xf32, #tpu.memory_space<vmem>>, vector<4x3550xf32>
    tpu.vector_store %arg5[%c108, %c0_84], %81 {strides = array<i32>} : memref<112x3550xf32, #tpu.memory_space<vmem>>, vector<4x3550xf32>,
    %c0_85 = arith.constant 0 : index
    %c0_86 = arith.constant 0 : index
    %83 = vector.load %arg1[%c0_85, %c0_86] : memref<8x112xf32, #tpu.memory_space<vmem>>, vector<8x112xf32>
    %c0_87 = arith.constant 0 : index
    %c0_88 = arith.constant 0 : index
    %84 = vector.load %arg5[%c0_87, %c0_88] : memref<112x3550xf32, #tpu.memory_space<vmem>>, vector<112x3550xf32>
    %cst_89 = arith.constant dense<0.000000e+00> : vector<8x3550xf32>
    %85 = tpu.matmul %83, %84, %cst_89 {dimension_numbers = #tpu.dot_dimension_numbers<[1], [0], [0], [1], [0, 0, 1, 1], [], []>} : vector<8x112xf32>, vector<112x3550xf32>, vector<8x3550xf32> -> vector<8x3550xf32>
    %c0_90 = arith.constant 0 : index
    %c0_91 = arith.constant 0 : index
    %86 = vector.load %arg2[%c0_90, %c0_91] : memref<8x1xf32, #tpu.memory_space<vmem>>, vector<8x1xf32>
    %87 = vector.broadcast %86 : vector<8x1xf32> to vector<8x3550xf32>
    %88 = arith.addf %85, %87 : vector<8x3550xf32>
    %c0_92 = arith.constant 0 : index
    %c0_93 = arith.constant 0 : index
    %c0_94 = arith.constant 0 : index
    %89 = vector.load %arg4[%c0_92, %c0_93, %c0_94] : memref<1x8x4096xf32, #tpu.memory_space<vmem>>, vector<1x8x3550xf32>
    %90 = vector.shape_cast %89 : vector<1x8x3550xf32> to vector<8x3550xf32>
    %91 = vector.shape_cast %88 : vector<8x3550xf32> to vector<1x8x3550xf32>
    tpu.vector_store %arg4[%c0_92, %c0_93, %c0_94], %91 {strides = array<i32>} : memref<1x8x4096xf32, #tpu.memory_space<vmem>>, vector<1x8x3550xf32>,
    %cst_95 = arith.constant 0.000000e+00 : f32
    %92 = vector.broadcast %cst_95 : f32 to vector<8x546xf32>
    %c0_96 = arith.constant 0 : index
    %c0_97 = arith.constant 0 : index
    %c3550 = arith.constant 3550 : index
    %93 = vector.load %arg4[%c0_96, %c0_97, %c3550] : memref<1x8x4096xf32, #tpu.memory_space<vmem>>, vector<1x8x546xf32>
    %94 = vector.shape_cast %93 : vector<1x8x546xf32> to vector<8x546xf32>
    %95 = vector.shape_cast %92 : vector<8x546xf32> to vector<1x8x546xf32>
    tpu.vector_store %arg4[%c0_96, %c0_97, %c3550], %95 {strides = array<i32>} : memref<1x8x4096xf32, #tpu.memory_space<vmem>>, vector<1x8x546xf32>,
    return
  }
  func.func @transform_0(%arg0: i32) -> (i32, i32) {
    %c0_i32 = arith.constant 0 : i32
    %c0_i32_0 = arith.constant 0 : i32
    %c0_i32_1 = arith.constant 0 : i32
    return %c0_i32, %c0_i32_0 : i32, i32
  }
  func.func @transform_1(%arg0: i32) -> (i32, i32) {
    %c0_i32 = arith.constant 0 : i32
    %c0_i32_0 = arith.constant 0 : i32
    %c0_i32_1 = arith.constant 0 : i32
    return %c0_i32, %c0_i32_0 : i32, i32
  }
  func.func @transform_2(%arg0: i32) -> (i32, i32, i32) {
    %c0_i32 = arith.constant 0 : i32
    %c0_i32_0 = arith.constant 0 : i32
    %c0_i32_1 = arith.constant 0 : i32
    return %arg0, %c0_i32, %c0_i32_0 : i32, i32, i32
  }
  func.func @transform_3(%arg0: i32) -> (i32, i32, i32) {
    %c0_i32 = arith.constant 0 : i32
    %c0_i32_0 = arith.constant 0 : i32
    %c0_i32_1 = arith.constant 0 : i32
    return %arg0, %c0_i32, %c0_i32_0 : i32, i32, i32
  }
}

</mosaic_0001>

<llo_original>
// kernel: conv3d_pallas.1
$region0: #{conv3d_pallas.1}
  #allocation0 [shape = 'u32[]', space=smem, size = 0x4, offset = 0x4, fixed_abs, tag = 'smem constant byte address 0x4 - core index']
  #allocation1 [shape = 'u32[72,128]{1,0:T(1,128)}', space=vmem, size = 0x9000, scoped, tag = 'internal scratch']
  #allocation2 [shape = 'f32[112,3550]{1,0:T(8,128)}', space=vmem, size = 0x188000, scoped, tag = 'scratch operand']
  %s0 = inlined_call_operand.vmem [shape: f32[8,112], index: 0, kind: input, shape index: {}]
  %s1 = inlined_call_operand.vmem [shape: f32[8,1], index: 1, kind: input, shape index: {}]
  %s2 = inlined_call_operand.vmem [shape: f32[2,4,4096], index: 2, kind: input, shape index: {}]
  %s3 = inlined_call_operand.vmem [shape: f32[2,8,4096], index: 3, kind: output, shape index: {}]
  %s4 = sld [smem:[#allocation0]]
  $region45: #{conv3d_pallas.1} parent=0
    _
  %s6 = ssub.s32 1, %s4
  %s7 = scalar_select 0, %s6, %s4
  loop: start=0, step=1, limit=4
  $region2: #{conv3d_pallas.1} parent=0 // loop_pre_header
    _
  $region3: #{conv3d_pallas.1} parent=0 // loop_header
    %s9 = sphi 0, %s13
    %p10 = scmp.ge.s32.totalorder %s9, 4
    %s17 = sphi 0, %s17
    %s19 = sphi 0, %s17
    %s20 = sphi 0, %s19
    %s34 = sphi 0, %s20
    %s38 = sphi 0, %s38
    %s40 = sphi 0, %s38
    %s41 = sphi 0, %s40
    %s55 = sphi 0, %s41
    %s61 = sphi 0, %s63
    %s64 = sphi 0, %s61
    %s65 = sphi 0, %s64
    %s81 = sphi 0, %s65
    %s87 = sphi 0, %s89
    %s90 = sphi 0, %s87
    %s91 = sphi 0, %s90
    %s107 = sphi 0, %s91
  $region4: #{conv3d_pallas.1} parent=0 // loop_header_branch
    %12 = sbr.rel (%p10) target = $region8
  $region5: #{conv3d_pallas.1} parent=0 // loop_body
    %s14 = ssub.s32 %s9, 1
    %s15 = ssub.s32 %s9, 2
    %s16 = sadd.s32 %s9, 1
    %s18 = sadd.s32 %s17, 1
    %p21 = scmp.eq.s32.totalorder %s9, 1
    %p22 = scmp.ne.s32.totalorder %s17, %s19
    %p23 = scmp.eq.s32.totalorder %s9, 0
    %p24 = por %p22, %p23
    %p25 = scmp.ne.s32.totalorder %s17, %s19
    %p26 = scmp.eq.s32.totalorder %s14, 1
    %p27 = por %p25, %p26
    %p28 = scmp.ne.s32.totalorder %s19, %s20
    %p29 = scmp.eq.s32.totalorder %s14, 0
    %p30 = por %p28, %p29
    %p31 = scmp.ne.s32.totalorder %s19, %s20
    %p32 = scmp.eq.s32.totalorder %s15, 1
    %p33 = por %p31, %p32
    %p35 = scmp.ne.s32.totalorder %s20, %s34
    %p36 = scmp.eq.s32.totalorder %s15, 0
    %p37 = por %p35, %p36
    %s39 = sadd.s32 %s38, 1
    %p42 = scmp.eq.s32.totalorder %s9, 1
    %p43 = scmp.ne.s32.totalorder %s38, %s40
    %p44 = scmp.eq.s32.totalorder %s9, 0
    %p45 = por %p43, %p44
    %p46 = scmp.ne.s32.totalorder %s38, %s40
    %p47 = scmp.eq.s32.totalorder %s14, 1
    %p48 = por %p46, %p47
    %p49 = scmp.ne.s32.totalorder %s40, %s41
    %p50 = scmp.eq.s32.totalorder %s14, 0
    %p51 = por %p49, %p50
    %p52 = scmp.ne.s32.totalorder %s40, %s41
    %p53 = scmp.eq.s32.totalorder %s15, 1
    %p54 = por %p52, %p53
    %p56 = scmp.ne.s32.totalorder %s41, %s55
    %p57 = scmp.eq.s32.totalorder %s15, 0
    %p58 = por %p56, %p57
    %s59 = ssub.s32 %s9, %s16
    %p60 = scmp.eq.s32.totalorder %s59, 0
    %s62 = sadd.s32 %s61, 1
    %s63 = scalar_select %p60, %s61, %s62
    %p66 = pneg %p60
    %p67 = scmp.eq.s32.totalorder %s9, 1
    %p68 = por %p66, %p67
    %p69 = scmp.ne.s32.totalorder %s61, %s64
    %p70 = scmp.eq.s32.totalorder %s9, 0
    %p71 = por %p69, %p70
    %p72 = scmp.ne.s32.totalorder %s61, %s64
    %p73 = scmp.eq.s32.totalorder %s14, 1
    %p74 = por %p72, %p73
    %p75 = scmp.ne.s32.totalorder %s64, %s65
    %p76 = scmp.eq.s32.totalorder %s14, 0
    %p77 = por %p75, %p76
    %p78 = scmp.ne.s32.totalorder %s64, %s65
    %p79 = scmp.eq.s32.totalorder %s15, 1
    %p80 = por %p78, %p79
    %p82 = scmp.ne.s32.totalorder %s65, %s81
    %p83 = scmp.eq.s32.totalorder %s15, 0
    %p84 = por %p82, %p83
    %s85 = ssub.s32 %s9, %s16
    %p86 = scmp.eq.s32.totalorder %s85, 0
    %s88 = sadd.s32 %s87, 1
    %s89 = scalar_select %p86, %s87, %s88
    %p92 = pneg %p86
    %p93 = scmp.eq.s32.totalorder %s9, 1
    %p94 = por %p92, %p93
    %p95 = scmp.ne.s32.totalorder %s87, %s90
    %p96 = scmp.eq.s32.totalorder %s9, 0
    %p97 = por %p95, %p96
    %p98 = scmp.ne.s32.totalorder %s87, %s90
    %p99 = scmp.eq.s32.totalorder %s14, 1
    %p100 = por %p98, %p99
    %p101 = scmp.ne.s32.totalorder %s90, %s91
    %p102 = scmp.eq.s32.totalorder %s14, 0
    %p103 = por %p101, %p102
    %p104 = scmp.ne.s32.totalorder %s90, %s91
    %p105 = scmp.eq.s32.totalorder %s15, 1
    %p106 = por %p104, %p105
    %p108 = scmp.ne.s32.totalorder %s91, %s107
    %p109 = scmp.eq.s32.totalorder %s15, 0
    %p110 = por %p108, %p109
    %p111 = scmp.le.s32.totalorder 1, %s9
    %p112 = scmp.lt.s32.totalorder %s9, 3
    %p113 = pnand %p111, %p112
    %p114 = pneg %p113
    // Predicated region
    $region9: #{conv3d_pallas.1} parent=5 // pred_check
      _
    $region10: #{conv3d_pallas.1} parent=5 // pred_check_branch
      %116 = sbr.rel (%p113) target = $region12
    $region11: #{conv3d_pallas.1} parent=5 // pred_region
      %s117 = ssub.s32 %s9, 1
      // Predicated region
      $region13: #{conv3d_pallas.1} parent=11 // pred_check
        %p118 = pneg %p30
      $region14: #{conv3d_pallas.1} parent=11 // pred_check_branch
        %120 = sbr.rel (%p118) target = $region16
      $region15: #{conv3d_pallas.1} parent=11 // pred_region
        _
      $region16: #{conv3d_pallas.1} parent=11 // pred_fallthru
        _
      // Predicated region
      $region17: #{conv3d_pallas.1} parent=11 // pred_check
        %p121 = pneg %p51
      $region18: #{conv3d_pallas.1} parent=11 // pred_check_branch
        %123 = sbr.rel (%p121) target = $region20
      $region19: #{conv3d_pallas.1} parent=11 // pred_region
        _
      $region20: #{conv3d_pallas.1} parent=11 // pred_fallthru
        _
    $region12: #{conv3d_pallas.1} parent=5 // pred_fallthru
      _
    %p124 = scmp.lt.s32.totalorder %s9, 2
    // Predicated region
    $region21: #{conv3d_pallas.1} parent=5 // pred_check
      %p125 = pneg %p124
    $region22: #{conv3d_pallas.1} parent=5 // pred_check_branch
      %127 = sbr.rel (%p125) target = $region24
    $region23: #{conv3d_pallas.1} parent=5 // pred_region
      // Predicated region
      $region25: #{conv3d_pallas.1} parent=23 // pred_check
        %p128 = pneg %p71
      $region26: #{conv3d_pallas.1} parent=23 // pred_check_branch
        %130 = sbr.rel (%p128) target = $region28
      $region27: #{conv3d_pallas.1} parent=23 // pred_region
        %p131 = scmp.lt.s32.totalorder %s9, 1
        %s132 = scalar_select %p131, %s9, 1
        %s133 = smul.addr %s132, 32
        %s134 = smul.addr %s133, 4
        %s135 = scalar_lea.vmem %s2, %s134
      $region28: #{conv3d_pallas.1} parent=23 // pred_fallthru
        _
    $region24: #{conv3d_pallas.1} parent=5 // pred_fallthru
      _
    %p136 = scmp.le.s32.totalorder 1, %s9
    %p137 = scmp.lt.s32.totalorder %s9, 3
    %p138 = pnand %p136, %p137
    %p139 = pneg %p138
    // Predicated region
    $region29: #{conv3d_pallas.1} parent=5 // pred_check
      _
    $region30: #{conv3d_pallas.1} parent=5 // pred_check_branch
      %141 = sbr.rel (%p138) target = $region32
    $region31: #{conv3d_pallas.1} parent=5 // pred_region
      %s142 = ssub.s32 %s9, 1
      %p143 = pneg %p30
      %p144 = pneg %p27
      %p145 = pneg %p51
      %p146 = pneg %p48
      %p147 = scmp.lt.s32.totalorder %s14, 1
      %s148 = scalar_select %p147, %s14, 1
      %s149 = smul.addr %s148, 32
      %s150 = smul.addr %s149, 4
      %s151 = scalar_lea.vmem %s2, %s150
      %p152 = pneg %p77
      %p153 = pneg %p74
      %p154 = pneg %p103
      %p155 = pneg %p100
      %p156 = scmp.lt.s32.totalorder %s14, 1
      %s157 = scalar_select %p156, %s14, 1
      %s158 = smul.addr %s157, 32
      %s159 = smul.addr %s158, 8
      %s160 = scalar_lea.vmem %s3, %s159
      %p161 = scmp.lt.s32.totalorder %s14, 1
      %s162 = scalar_select %p161, %s14, 1
      %s163 = smul.addr %s162, 32
      %s164 = smul.addr %s163, 4
      %s165 = scalar_lea.vmem %s2, %s164
      %p166 = scmp.lt.s32.totalorder %s14, 1
      %s167 = scalar_select %p166, %s14, 1
      %s168 = smul.addr %s167, 32
      %s169 = smul.addr %s168, 8
      %s170 = scalar_lea.vmem %s3, %s169
      %v171 = vld [vmem:[%s165] sm:$0xff]
      %v172 = vld [vmem:[%s165 + $0x8] sm:$0xff]
      %v173 = vld [vmem:[%s165 + $0x10] sm:$0xff]
      %v174 = vld [vmem:[%s165 + $0x18] sm:$0xff]
      %v175 = vld [vmem:[%s165 + $0x20] sm:$0xff]
      %v176 = vld [vmem:[%s165 + $0x28] sm:$0xff]
      %v177 = vld [vmem:[%s165 + $0x30] sm:$0xff]
      %v178 = vld [vmem:[%s165 + $0x38] sm:$0xff]
      %v179 = vld [vmem:[%s165 + $0x40] sm:$0xff]
      %v180 = vld [vmem:[%s165 + $0x48] sm:$0xff]
      %v181 = vld [vmem:[%s165 + $0x50] sm:$0xff]
      %v182 = vld [vmem:[%s165 + $0x58] sm:$0xff]
      %v183 = vld [vmem:[%s165 + $0x60] sm:$0xff]
      %v184 = vld [vmem:[%s165 + $0x68] sm:$0xff]
      %199 = vst [vmem:[#allocation1] ss:$2 sm:$0xff] %v171
      %s200 = scalar_lea.vmem [#allocation1], 16
      %201 = vst [vmem:[%s200] ss:$2 sm:$0xff] %v172
      %s202 = scalar_lea.vmem [#allocation1], 32
      %203 = vst [vmem:[%s202] ss:$2 sm:$0xff] %v173
      %s204 = scalar_lea.vmem [#allocation1], 48
      %205 = vst [vmem:[%s204] ss:$2 sm:$0xff] %v174
      %v206 = vld.sshfl [vmem:[#allocation1] sm:$0xff pattern:$0x75316420]
      %v207 = vld.sshfl [vmem:[#allocation1 + $0x8] sm:$0xff pattern:$0x75316420]
      %v208 = vld.sshfl [vmem:[#allocation1 + $0x10] sm:$0xff pattern:$0x75316420]
      %v209 = vld.sshfl [vmem:[#allocation1 + $0x18] sm:$0xff pattern:$0x75316420]
      %v210 = vld.sshfl [vmem:[#allocation1 + $0x20] sm:$0xff pattern:$0x75316420]
      %v211 = vld.sshfl [vmem:[#allocation1 + $0x28] sm:$0xff pattern:$0x75316420]
      %v212 = vld.sshfl [vmem:[#allocation1 + $0x30] sm:$0xff pattern:$0x75316420]
      %v213 = vld.sshfl [vmem:[#allocation1 + $0x38] sm:$0xff pattern:$0x75316420]
      %214 = vst [vmem:[#allocation1] ss:$2 sm:$0xff] %v175
      %215 = vst [vmem:[%s200] ss:$2 sm:$0xff] %v176
      %216 = vst [vmem:[%s202] ss:$2 sm:$0xff] %v177
      %217 = vst [vmem:[%s204] ss:$2 sm:$0xff] %v178
      %v218 = vld.sshfl [vmem:[#allocation1] sm:$0xff pattern:$0x75316420]
      %v219 = vld.sshfl [vmem:[#allocation1 + $0x8] sm:$0xff pattern:$0x75316420]
      %v220 = vld.sshfl [vmem:[#allocation1 + $0x10] sm:$0xff pattern:$0x75316420]
      %v221 = vld.sshfl [vmem:[#allocation1 + $0x18] sm:$0xff pattern:$0x75316420]
      %v222 = vld.sshfl [vmem:[#allocation1 + $0x20] sm:$0xff pattern:$0x75316420]
      %v223 = vld.sshfl [vmem:[#allocation1 + $0x28] sm:$0xff pattern:$0x75316420]
      %v224 = vld.sshfl [vmem:[#allocation1 + $0x30] sm:$0xff pattern:$0x75316420]
      %v225 = vld.sshfl [vmem:[#allocation1 + $0x38] sm:$0xff pattern:$0x75316420]
      %226 = vst [vmem:[#allocation1] ss:$2 sm:$0xff] %v179
      %227 = vst [vmem:[%s200] ss:$2 sm:$0xff] %v180
      %228 = vst [vmem:[%s202] ss:$2 sm:$0xff] %v181
      %229 = vst [vmem:[%s204] ss:$2 sm:$0xff] %v182
      %v230 = vld.sshfl [vmem:[#allocation1] sm:$0xff pattern:$0x75316420]
      %v231 = vld.sshfl [vmem:[#allocation1 + $0x8] sm:$0xff pattern:$0x75316420]
      %v232 = vld.sshfl [vmem:[#allocation1 + $0x10] sm:$0xff pattern:$0x75316420]
      %v233 = vld.sshfl [vmem:[#allocation1 + $0x18] sm:$0xff pattern:$0x75316420]
      %v234 = vld.sshfl [vmem:[#allocation1 + $0x20] sm:$0xff pattern:$0x75316420]
      %v235 = vld.sshfl [vmem:[#allocation1 + $0x28] sm:$0xff pattern:$0x75316420]
      %v236 = vld.sshfl [vmem:[#allocation1 + $0x30] sm:$0xff pattern:$0x75316420]
      %v237 = vld.sshfl [vmem:[#allocation1 + $0x38] sm:$0xff pattern:$0x75316420]
      %238 = vst [vmem:[#allocation1] ss:$2 sm:$0xff] %v183
      %239 = vst [vmem:[%s200] ss:$2 sm:$0xff] %v184
      %v240 = vld.sshfl [vmem:[#allocation1] sm:$0xff pattern:$0x75316420]
      %v241 = vld.sshfl [vmem:[#allocation1 + $0x8] sm:$0xff pattern:$0x75316420]
      %v242 = vld.sshfl [vmem:[#allocation1 + $0x10] sm:$0xff pattern:$0x75316420]
      %v243 = vld.sshfl [vmem:[#allocation1 + $0x18] sm:$0xff pattern:$0x75316420]
      %272 = vst [vmem:[#allocation2] sm:$0xf] %v206
      %273 = vst [vmem:[#allocation2 + $0x8] sm:$0xf] %v207
      %274 = vst [vmem:[#allocation2 + $0x10] sm:$0xf] %v208
      %275 = vst [vmem:[#allocation2 + $0x18] sm:$0xf] %v209
      %276 = vst [vmem:[#allocation2 + $0x20] sm:$0xf] %v210
      %277 = vst [vmem:[#allocation2 + $0x28] sm:$0xf] %v211
      %278 = vst [vmem:[#allocation2 + $0x30] sm:$0xf] %v212
      %279 = vst [vmem:[#allocation2 + $0x38] sm:$0xf] %v213
      %280 = vst [vmem:[#allocation2 + $0x40] sm:$0xf] %v218
      %281 = vst [vmem:[#allocation2 + $0x48] sm:$0xf] %v219
      %282 = vst [vmem:[#allocation2 + $0x50] sm:$0xf] %v220
      %283 = vst [vmem:[#allocation2 + $0x58] sm:$0xf] %v221
      %284 = vst [vmem:[#allocation2 + $0x60] sm:$0xf] %v222
      %285 = vst [vmem:[#allocation2 + $0x68] sm:$0xf] %v223
      %286 = vst [vmem:[#allocation2 + $0x70] sm:$0xf] %v224
      %287 = vst [vmem:[#allocation2 + $0x78] sm:$0xf] %v225
      %288 = vst [vmem:[#allocation2 + $0x80] sm:$0xf] %v230
      %289 = vst [vmem:[#allocation2 + $0x88] sm:$0xf] %v231
      %290 = vst [vmem:[#allocation2 + $0x90] sm:$0xf] %v232
      %291 = vst [vmem:[#allocation2 + $0x98] sm:$0xf] %v233
      %292 = vst [vmem:[#allocation2 + $0xa0] sm:$0xf] %v234
      %293 = vst [vmem:[#allocation2 + $0xa8] sm:$0xf] %v235
      %294 = vst [vmem:[#allocation2 + $0xb0] sm:$0xf] %v236
      %295 = vst [vmem:[#allocation2 + $0xb8] sm:$0xf] %v237
      %296 = vst [vmem:[#allocation2 + $0xc0] sm:$0xf] %v240
      %297 = vst [vmem:[#allocation2 + $0xc8] sm:$0xf] %v241
      %298 = vst [vmem:[#allocation2 + $0xd0] sm:$0xf] %v242
      %vm299 = vcmask 764928
      %300 = vst.msk [vmem:[#allocation2 + $0xd8] sm:$0xf] %vm299, %v243
      %v301 = vld [vmem:[%s165] sm:$0xff]
      %v302 = vld [vmem:[%s165 + $0x8] sm:$0xff]
      %v303 = vld [vmem:[%s165 + $0x10] sm:$0xff]
      %v304 = vld [vmem:[%s165 + $0x18] sm:$0xff]
      %v305 = vld [vmem:[%s165 + $0x20] sm:$0xff]
      %v306 = vld [vmem:[%s165 + $0x28] sm:$0xff]
      %v307 = vld [vmem:[%s165 + $0x30] sm:$0xff]
      %v308 = vld [vmem:[%s165 + $0x38] sm:$0xff]
      %v309 = vld [vmem:[%s165 + $0x40] sm:$0xff]
      %v310 = vld [vmem:[%s165 + $0x48] sm:$0xff]
      %v311 = vld [vmem:[%s165 + $0x50] sm:$0xff]
      %v312 = vld [vmem:[%s165 + $0x58] sm:$0xff]
      %v313 = vld [vmem:[%s165 + $0x60] sm:$0xff]
      %v314 = vld [vmem:[%s165 + $0x68] sm:$0xff]
      %s329 = scalar_lea.vmem [#allocation1], 1
      %330 = vst [vmem:[%s329] ss:$2 sm:$0xff] %v301
      %s331 = scalar_lea.vmem [#allocation1], 17
      %332 = vst [vmem:[%s331] ss:$2 sm:$0xff] %v302
      %s333 = scalar_lea.vmem [#allocation1], 33
      %334 = vst [vmem:[%s333] ss:$2 sm:$0xff] %v303
      %s335 = scalar_lea.vmem [#allocation1], 49
      %336 = vst [vmem:[%s335] ss:$2 sm:$0xff] %v304
      %v337 = vld.sshfl [vmem:[#allocation1] sm:$0xff pattern:$0x75316420]
      %v338 = vld.sshfl [vmem:[#allocation1 + $0x8] sm:$0xff pattern:$0x75316420]
      %v339 = vld.sshfl [vmem:[#allocation1 + $0x10] sm:$0xff pattern:$0x75316420]
      %v340 = vld.sshfl [vmem:[#allocation1 + $0x18] sm:$0xff pattern:$0x75316420]
      %v341 = vld.sshfl [vmem:[#allocation1 + $0x20] sm:$0xff pattern:$0x75316420]
      %v342 = vld.sshfl [vmem:[#allocation1 + $0x28] sm:$0xff pattern:$0x75316420]
      %v343 = vld.sshfl [vmem:[#allocation1 + $0x30] sm:$0xff pattern:$0x75316420]
      %v344 = vld.sshfl [vmem:[#allocation1 + $0x38] sm:$0xff pattern:$0x75316420]
      %345 = vst [vmem:[%s329] ss:$2 sm:$0xff] %v305
      %346 = vst [vmem:[%s331] ss:$2 sm:$0xff] %v306
      %347 = vst [vmem:[%s333] ss:$2 sm:$0xff] %v307
      %348 = vst [vmem:[%s335] ss:$2 sm:$0xff] %v308
      %v349 = vld.sshfl [vmem:[#allocation1] sm:$0xff pattern:$0x75316420]
      %v350 = vld.sshfl [vmem:[#allocation1 + $0x8] sm:$0xff pattern:$0x75316420]
      %v351 = vld.sshfl [vmem:[#allocation1 + $0x10] sm:$0xff pattern:$0x75316420]
      %v352 = vld.sshfl [vmem:[#allocation1 + $0x18] sm:$0xff pattern:$0x75316420]
      %v353 = vld.sshfl [vmem:[#allocation1 + $0x20] sm:$0xff pattern:$0x75316420]
      %v354 = vld.sshfl [vmem:[#allocation1 + $0x28] sm:$0xff pattern:$0x75316420]
      %v355 = vld.sshfl [vmem:[#allocation1 + $0x30] sm:$0xff pattern:$0x75316420]
      %v356 = vld.sshfl [vmem:[#allocation1 + $0x38] sm:$0xff pattern:$0x75316420]
      %357 = vst [vmem:[%s329] ss:$2 sm:$0xff] %v309
      %358 = vst [vmem:[%s331] ss:$2 sm:$0xff] %v310
      %359 = vst [vmem:[%s333] ss:$2 sm:$0xff] %v311
      %360 = vst [vmem:[%s335] ss:$2 sm:$0xff] %v312
      %v361 = vld.sshfl [vmem:[#allocation1] sm:$0xff pattern:$0x75316420]
      %v362 = vld.sshfl [vmem:[#allocation1 + $0x8] sm:$0xff pattern:$0x75316420]
      %v363 = vld.sshfl [vmem:[#allocation1 + $0x10] sm:$0xff pattern:$0x75316420]
      %v364 = vld.sshfl [vmem:[#allocation1 + $0x18] sm:$0xff pattern:$0x75316420]
      %v365 = vld.sshfl [vmem:[#allocation1 + $0x20] sm:$0xff pattern:$0x75316420]
      %v366 = vld.sshfl [vmem:[#allocation1 + $0x28] sm:$0xff pattern:$0x75316420]
      %v367 = vld.sshfl [vmem:[#allocation1 + $0x30] sm:$0xff pattern:$0x75316420]
      %v368 = vld.sshfl [vmem:[#allocation1 + $0x38] sm:$0xff pattern:$0x75316420]
      %369 = vst [vmem:[%s329] ss:$2 sm:$0xff] %v313
      %370 = vst [vmem:[%s331] ss:$2 sm:$0xff] %v314
      %v371 = vld.sshfl [vmem:[#allocation1] sm:$0xff pattern:$0x75316420]
      %v372 = vld.sshfl [vmem:[#allocation1 + $0x8] sm:$0xff pattern:$0x75316420]
      %v373 = vld.sshfl [vmem:[#allocation1 + $0x10] sm:$0xff pattern:$0x75316420]
      %v374 = vld.sshfl [vmem:[#allocation1 + $0x18] sm:$0xff pattern:$0x75316420]
      %375 = vrot.lane.b32.xlu0 %v337, 127
      %v376 = vpop.permute.xlu0 %375
      %377 = vrot.lane.b32.xlu0 %v338, 127
      %v378 = vpop.permute.xlu0 %377
      %379 = vrot.lane.b32.xlu0 %v339, 127
      %v380 = vpop.permute.xlu0 %379
      %381 = vrot.lane.b32.xlu0 %v340, 127
      %v382 = vpop.permute.xlu0 %381
      %383 = vrot.lane.b32.xlu0 %v341, 127
      %v384 = vpop.permute.xlu0 %383
      %385 = vrot.lane.b32.xlu0 %v342, 127
      %v386 = vpop.permute.xlu0 %385
      %387 = vrot.lane.b32.xlu0 %v343, 127
      %v388 = vpop.permute.xlu0 %387
      %389 = vrot.lane.b32.xlu0 %v344, 127
      %v390 = vpop.permute.xlu0 %389
      %391 = vrot.lane.b32.xlu0 %v349, 127
      %v392 = vpop.permute.xlu0 %391
      %393 = vrot.lane.b32.xlu0 %v350, 127
      %v394 = vpop.permute.xlu0 %393
      %395 = vrot.lane.b32.xlu0 %v351, 127
      %v396 = vpop.permute.xlu0 %395
      %397 = vrot.lane.b32.xlu0 %v352, 127
      %v398 = vpop.permute.xlu0 %397
      %399 = vrot.lane.b32.xlu0 %v353, 127
      %v400 = vpop.permute.xlu0 %399
      %401 = vrot.lane.b32.xlu0 %v354, 127
      %v402 = vpop.permute.xlu0 %401
      %403 = vrot.lane.b32.xlu0 %v355, 127
      %v404 = vpop.permute.xlu0 %403
      %405 = vrot.lane.b32.xlu0 %v356, 127
      %v406 = vpop.permute.xlu0 %405
      %407 = vrot.lane.b32.xlu0 %v361, 127
      %v408 = vpop.permute.xlu0 %407
      %409 = vrot.lane.b32.xlu0 %v362, 127
      %v410 = vpop.permute.xlu0 %409
      %411 = vrot.lane.b32.xlu0 %v363, 127
      %v412 = vpop.permute.xlu0 %411
      %413 = vrot.lane.b32.xlu0 %v364, 127
      %v414 = vpop.permute.xlu0 %413
      %415 = vrot.lane.b32.xlu0 %v365, 127
      %v416 = vpop.permute.xlu0 %415
      %417 = vrot.lane.b32.xlu0 %v366, 127
      %v418 = vpop.permute.xlu0 %417
      %419 = vrot.lane.b32.xlu0 %v367, 127
      %v420 = vpop.permute.xlu0 %419
      %421 = vrot.lane.b32.xlu0 %v368, 127
      %v422 = vpop.permute.xlu0 %421
      %423 = vrot.lane.b32.xlu0 %v371, 127
      %v424 = vpop.permute.xlu0 %423
      %425 = vrot.lane.b32.xlu0 %v372, 127
      %v426 = vpop.permute.xlu0 %425
      %427 = vrot.lane.b32.xlu0 %v373, 127
      %v428 = vpop.permute.xlu0 %427
      %429 = vrot.lane.b32.xlu0 %v374, 127
      %v430 = vpop.permute.xlu0 %429
      %vm431 = vcmask 1039360
      %v432 = vsel %vm431, %v376, %v378
      %v433 = vsel %vm431, %v378, %v380
      %v434 = vsel %vm431, %v380, %v382
      %v435 = vsel %vm431, %v382, %v384
      %v436 = vsel %vm431, %v384, %v386
      %v437 = vsel %vm431, %v386, %v388
      %v438 = vsel %vm431, %v388, %v390
      %v439 = vsel %vm431, %v390, %v392
      %v440 = vsel %vm431, %v392, %v394
      %v441 = vsel %vm431, %v394, %v396
      %v442 = vsel %vm431, %v396, %v398
      %v443 = vsel %vm431, %v398, %v400
      %v444 = vsel %vm431, %v400, %v402
      %v445 = vsel %vm431, %v402, %v404
      %v446 = vsel %vm431, %v404, %v406
      %v447 = vsel %vm431, %v406, %v408
      %v448 = vsel %vm431, %v408, %v410
      %v449 = vsel %vm431, %v410, %v412
      %v450 = vsel %vm431, %v412, %v414
      %v451 = vsel %vm431, %v414, %v416
      %v452 = vsel %vm431, %v416, %v418
      %v453 = vsel %vm431, %v418, %v420
      %v454 = vsel %vm431, %v420, %v422
      %v455 = vsel %vm431, %v422, %v424
      %v456 = vsel %vm431, %v424, %v426
      %v457 = vsel %vm431, %v426, %v428
      %v458 = vsel %vm431, %v428, %v430
      %487 = vst [vmem:[#allocation2] sm:$0xf0] %v432
      %488 = vst [vmem:[#allocation2 + $0x8] sm:$0xf0] %v433
      %489 = vst [vmem:[#allocation2 + $0x10] sm:$0xf0] %v434
      %490 = vst [vmem:[#allocation2 + $0x18] sm:$0xf0] %v435
      %491 = vst [vmem:[#allocation2 + $0x20] sm:$0xf0] %v436
      %492 = vst [vmem:[#allocation2 + $0x28] sm:$0xf0] %v437
      %493 = vst [vmem:[#allocation2 + $0x30] sm:$0xf0] %v438
      %494 = vst [vmem:[#allocation2 + $0x38] sm:$0xf0] %v439
      %495 = vst [vmem:[#allocation2 + $0x40] sm:$0xf0] %v440
      %496 = vst [vmem:[#allocation2 + $0x48] sm:$0xf0] %v441
      %497 = vst [vmem:[#allocation2 + $0x50] sm:$0xf0] %v442
      %498 = vst [vmem:[#allocation2 + $0x58] sm:$0xf0] %v443
      %499 = vst [vmem:[#allocation2 + $0x60] sm:$0xf0] %v444
      %500 = vst [vmem:[#allocation2 + $0x68] sm:$0xf0] %v445
      %501 = vst [vmem:[#allocation2 + $0x70] sm:$0xf0] %v446
      %502 = vst [vmem:[#allocation2 + $0x78] sm:$0xf0] %v447
      %503 = vst [vmem:[#allocation2 + $0x80] sm:$0xf0] %v448
      %504 = vst [vmem:[#allocation2 + $0x88] sm:$0xf0] %v449
      %505 = vst [vmem:[#allocation2 + $0x90] sm:$0xf0] %v450
      %506 = vst [vmem:[#allocation2 + $0x98] sm:$0xf0] %v451
      %507 = vst [vmem:[#allocation2 + $0xa0] sm:$0xf0] %v452
      %508 = vst [vmem:[#allocation2 + $0xa8] sm:$0xf0] %v453
      %509 = vst [vmem:[#allocation2 + $0xb0] sm:$0xf0] %v454
      %510 = vst [vmem:[#allocation2 + $0xb8] sm:$0xf0] %v455
      %511 = vst [vmem:[#allocation2 + $0xc0] sm:$0xf0] %v456
      %512 = vst [vmem:[#allocation2 + $0xc8] sm:$0xf0] %v457
      %513 = vst [vmem:[#allocation2 + $0xd0] sm:$0xf0] %v458
      %vm514 = vcmask 769028
      %515 = vst.msk [vmem:[#allocation2 + $0xd8] sm:$0xf0] %vm514, %v430
      %v516 = vld [vmem:[%s165] sm:$0xff]
      %v517 = vld [vmem:[%s165 + $0x8] sm:$0xff]
      %v518 = vld [vmem:[%s165 + $0x10] sm:$0xff]
      %v519 = vld [vmem:[%s165 + $0x18] sm:$0xff]
      %v520 = vld [vmem:[%s165 + $0x20] sm:$0xff]
      %v521 = vld [vmem:[%s165 + $0x28] sm:$0xff]
      %v522 = vld [vmem:[%s165 + $0x30] sm:$0xff]
      %v523 = vld [vmem:[%s165 + $0x38] sm:$0xff]
      %v524 = vld [vmem:[%s165 + $0x40] sm:$0xff]
      %v525 = vld [vmem:[%s165 + $0x48] sm:$0xff]
      %v526 = vld [vmem:[%s165 + $0x50] sm:$0xff]
      %v527 = vld [vmem:[%s165 + $0x58] sm:$0xff]
      %v528 = vld [vmem:[%s165 + $0x60] sm:$0xff]
      %v529 = vld [vmem:[%s165 + $0x68] sm:$0xff]
      %544 = vst [vmem:[#allocation1] ss:$2 sm:$0xff] %v516
      %s545 = scalar_lea.vmem [#allocation1], 16
      %546 = vst [vmem:[%s545] ss:$2 sm:$0xff] %v517
      %s547 = scalar_lea.vmem [#allocation1], 32
      %548 = vst [vmem:[%s547] ss:$2 sm:$0xff] %v518
      %s549 = scalar_lea.vmem [#allocation1], 48
      %550 = vst [vmem:[%s549] ss:$2 sm:$0xff] %v519
      %v551 = vld.sshfl [vmem:[#allocation1] sm:$0xff pattern:$0x75316420]
      %v552 = vld.sshfl [vmem:[#allocation1 + $0x8] sm:$0xff pattern:$0x75316420]
      %v553 = vld.sshfl [vmem:[#allocation1 + $0x10] sm:$0xff pattern:$0x75316420]
      %v554 = vld.sshfl [vmem:[#allocation1 + $0x18] sm:$0xff pattern:$0x75316420]
      %v555 = vld.sshfl [vmem:[#allocation1 + $0x20] sm:$0xff pattern:$0x75316420]
      %v556 = vld.sshfl [vmem:[#allocation1 + $0x28] sm:$0xff pattern:$0x75316420]
      %v557 = vld.sshfl [vmem:[#allocation1 + $0x30] sm:$0xff pattern:$0x75316420]
      %v558 = vld.sshfl [vmem:[#allocation1 + $0x38] sm:$0xff pattern:$0x75316420]
      %559 = vst [vmem:[#allocation1] ss:$2 sm:$0xff] %v520
      %560 = vst [vmem:[%s545] ss:$2 sm:$0xff] %v521
      %561 = vst [vmem:[%s547] ss:$2 sm:$0xff] %v522
      %562 = vst [vmem:[%s549] ss:$2 sm:$0xff] %v523
      %v563 = vld.sshfl [vmem:[#allocation1] sm:$0xff pattern:$0x75316420]
      %v564 = vld.sshfl [vmem:[#allocation1 + $0x8] sm:$0xff pattern:$0x75316420]
      %v565 = vld.sshfl [vmem:[#allocation1 + $0x10] sm:$0xff pattern:$0x75316420]
      %v566 = vld.sshfl [vmem:[#allocation1 + $0x18] sm:$0xff pattern:$0x75316420]
      %v567 = vld.sshfl [vmem:[#allocation1 + $0x20] sm:$0xff pattern:$0x75316420]
      %v568 = vld.sshfl [vmem:[#allocation1 + $0x28] sm:$0xff pattern:$0x75316420]
      %v569 = vld.sshfl [vmem:[#allocation1 + $0x30] sm:$0xff pattern:$0x75316420]
      %v570 = vld.sshfl [vmem:[#allocation1 + $0x38] sm:$0xff pattern:$0x75316420]
      %571 = vst [vmem:[#allocation1] ss:$2 sm:$0xff] %v524
      %572 = vst [vmem:[%s545] ss:$2 sm:$0xff] %v525
      %573 = vst [vmem:[%s547] ss:$2 sm:$0xff] %v526
      %574 = vst [vmem:[%s549] ss:$2 sm:$0xff] %v527
      %v575 = vld.sshfl [vmem:[#allocation1] sm:$0xff pattern:$0x75316420]
      %v576 = vld.sshfl [vmem:[#allocation1 + $0x8] sm:$0xff pattern:$0x75316420]
      %v577 = vld.sshfl [vmem:[#allocation1 + $0x10] sm:$0xff pattern:$0x75316420]
      %v578 = vld.sshfl [vmem:[#allocation1 + $0x18] sm:$0xff pattern:$0x75316420]
      %v579 = vld.sshfl [vmem:[#allocation1 + $0x20] sm:$0xff pattern:$0x75316420]
      %v580 = vld.sshfl [vmem:[#allocation1 + $0x28] sm:$0xff pattern:$0x75316420]
      %v581 = vld.sshfl [vmem:[#allocation1 + $0x30] sm:$0xff pattern:$0x75316420]
      %v582 = vld.sshfl [vmem:[#allocation1 + $0x38] sm:$0xff pattern:$0x75316420]
      %583 = vst [vmem:[#allocation1] ss:$2 sm:$0xff] %v528
      %584 = vst [vmem:[%s545] ss:$2 sm:$0xff] %v529
      %v585 = vld.sshfl [vmem:[#allocation1] sm:$0xff pattern:$0x75316420]
      %v586 = vld.sshfl [vmem:[#allocation1 + $0x8] sm:$0xff pattern:$0x75316420]
      %v587 = vld.sshfl [vmem:[#allocation1 + $0x10] sm:$0xff pattern:$0x75316420]
      %v588 = vld.sshfl [vmem:[#allocation1 + $0x18] sm:$0xff pattern:$0x75316420]
      %589 = vrot.lane.b32.xlu0 %v551, 126
      %v590 = vpop.permute.xlu0 %589
      %591 = vrot.lane.b32.xlu0 %v552, 126
      %v592 = vpop.permute.xlu0 %591
      %593 = vrot.lane.b32.xlu0 %v553, 126
      %v594 = vpop.permute.xlu0 %593
      %595 = vrot.lane.b32.xlu0 %v554, 126
      %v596 = vpop.permute.xlu0 %595
      %597 = vrot.lane.b32.xlu0 %v555, 126
      %v598 = vpop.permute.xlu0 %597
      %599 = vrot.lane.b32.xlu0 %v556, 126
      %v600 = vpop.permute.xlu0 %599
      %601 = vrot.lane.b32.xlu0 %v557, 126
      %v602 = vpop.permute.xlu0 %601
      %603 = vrot.lane.b32.xlu0 %v558, 126
      %v604 = vpop.permute.xlu0 %603
      %605 = vrot.lane.b32.xlu0 %v563, 126
      %v606 = vpop.permute.xlu0 %605
      %607 = vrot.lane.b32.xlu0 %v564, 126
      %v608 = vpop.permute.xlu0 %607
      %609 = vrot.lane.b32.xlu0 %v565, 126
      %v610 = vpop.permute.xlu0 %609
      %611 = vrot.lane.b32.xlu0 %v566, 126
      %v612 = vpop.permute.xlu0 %611
      %613 = vrot.lane.b32.xlu0 %v567, 126
      %v614 = vpop.permute.xlu0 %613
      %615 = vrot.lane.b32.xlu0 %v568, 126
      %v616 = vpop.permute.xlu0 %615
      %617 = vrot.lane.b32.xlu0 %v569, 126
      %v618 = vpop.permute.xlu0 %617
      %619 = vrot.lane.b32.xlu0 %v570, 126
      %v620 = vpop.permute.xlu0 %619
      %621 = vrot.lane.b32.xlu0 %v575, 126
      %v622 = vpop.permute.xlu0 %621
      %623 = vrot.lane.b32.xlu0 %v576, 126
      %v624 = vpop.permute.xlu0 %623
      %625 = vrot.lane.b32.xlu0 %v577, 126
      %v626 = vpop.permute.xlu0 %625
      %627 = vrot.lane.b32.xlu0 %v578, 126
      %v628 = vpop.permute.xlu0 %627
      %629 = vrot.lane.b32.xlu0 %v579, 126
      %v630 = vpop.permute.xlu0 %629
      %631 = vrot.lane.b32.xlu0 %v580, 126
      %v632 = vpop.permute.xlu0 %631
      %633 = vrot.lane.b32.xlu0 %v581, 126
      %v634 = vpop.permute.xlu0 %633
      %635 = vrot.lane.b32.xlu0 %v582, 126
      %v636 = vpop.permute.xlu0 %635
      %637 = vrot.lane.b32.xlu0 %v585, 126
      %v638 = vpop.permute.xlu0 %637
      %639 = vrot.lane.b32.xlu0 %v586, 126
      %v640 = vpop.permute.xlu0 %639
      %641 = vrot.lane.b32.xlu0 %v587, 126
      %v642 = vpop.permute.xlu0 %641
      %643 = vrot.lane.b32.xlu0 %v588, 126
      %v644 = vpop.permute.xlu0 %643
      %vm645 = vcmask 1031168
      %v646 = vsel %vm645, %v590, %v592
      %v647 = vsel %vm645, %v592, %v594
      %v648 = vsel %vm645, %v594, %v596
      %v649 = vsel %vm645, %v596, %v598
      %v650 = vsel %vm645, %v598, %v600
      %v651 = vsel %vm645, %v600, %v602
      %v652 = vsel %vm645, %v602, %v604
      %v653 = vsel %vm645, %v604, %v606
      %v654 = vsel %vm645, %v606, %v608
      %v655 = vsel %vm645, %v608, %v610
      %v656 = vsel %vm645, %v610, %v612
      %v657 = vsel %vm645, %v612, %v614
      %v658 = vsel %vm645, %v614, %v616
      %v659 = vsel %vm645, %v616, %v618
      %v660 = vsel %vm645, %v618, %v620
      %v661 = vsel %vm645, %v620, %v622
      %v662 = vsel %vm645, %v622, %v624
      %v663 = vsel %vm645, %v624, %v626
      %v664 = vsel %vm645, %v626, %v628
      %v665 = vsel %vm645, %v628, %v630
      %v666 = vsel %vm645, %v630, %v632
      %v667 = vsel %vm645, %v632, %v634
      %v668 = vsel %vm645, %v634, %v636
      %v669 = vsel %vm645, %v636, %v638
      %v670 = vsel %vm645, %v638, %v640
      %v671 = vsel %vm645, %v640, %v642
      %v672 = vsel %vm645, %v642, %v644
      %701 = vst [vmem:[#allocation2 + $0xe0] sm:$0xf] %v646
      %702 = vst [vmem:[#allocation2 + $0xe8] sm:$0xf] %v647
      %703 = vst [vmem:[#allocation2 + $0xf0] sm:$0xf] %v648
      %704 = vst [vmem:[#allocation2 + $0xf8] sm:$0xf] %v649
      %705 = vst [vmem:[#allocation2 + $0x100] sm:$0xf] %v650
      %706 = vst [vmem:[#allocation2 + $0x108] sm:$0xf] %v651
      %707 = vst [vmem:[#allocation2 + $0x110] sm:$0xf] %v652
      %708 = vst [vmem:[#allocation2 + $0x118] sm:$0xf] %v653
      %709 = vst [vmem:[#allocation2 + $0x120] sm:$0xf] %v654
      %710 = vst [vmem:[#allocation2 + $0x128] sm:$0xf] %v655
      %711 = vst [vmem:[#allocation2 + $0x130] sm:$0xf] %v656
      %712 = vst [vmem:[#allocation2 + $0x138] sm:$0xf] %v657
      %713 = vst [vmem:[#allocation2 + $0x140] sm:$0xf] %v658
      %714 = vst [vmem:[#allocation2 + $0x148] sm:$0xf] %v659
      %715 = vst [vmem:[#allocation2 + $0x150] sm:$0xf] %v660
      %716 = vst [vmem:[#allocation2 + $0x158] sm:$0xf] %v661
      %717 = vst [vmem:[#allocation2 + $0x160] sm:$0xf] %v662
      %718 = vst [vmem:[#allocation2 + $0x168] sm:$0xf] %v663
      %719 = vst [vmem:[#allocation2 + $0x170] sm:$0xf] %v664
      %720 = vst [vmem:[#allocation2 + $0x178] sm:$0xf] %v665
      %721 = vst [vmem:[#allocation2 + $0x180] sm:$0xf] %v666
      %722 = vst [vmem:[#allocation2 + $0x188] sm:$0xf] %v667
      %723 = vst [vmem:[#allocation2 + $0x190] sm:$0xf] %v668
      %724 = vst [vmem:[#allocation2 + $0x198] sm:$0xf] %v669
      %725 = vst [vmem:[#allocation2 + $0x1a0] sm:$0xf] %v670
      %726 = vst [vmem:[#allocation2 + $0x1a8] sm:$0xf] %v671
      %727 = vst [vmem:[#allocation2 + $0x1b0] sm:$0xf] %v672
      %728 = vst.msk [vmem:[#allocation2 + $0x1b8] sm:$0xf] %vm299, %v644
      %v729 = vld [vmem:[%s165] sm:$0xff]
      %v730 = vld [vmem:[%s165 + $0x8] sm:$0xff]
      %v731 = vld [vmem:[%s165 + $0x10] sm:$0xff]
      %v732 = vld [vmem:[%s165 + $0x18] sm:$0xff]
      %v733 = vld [vmem:[%s165 + $0x20] sm:$0xff]
      %v734 = vld [vmem:[%s165 + $0x28] sm:$0xff]
      %v735 = vld [vmem:[%s165 + $0x30] sm:$0xff]
      %v736 = vld [vmem:[%s165 + $0x38] sm:$0xff]
      %v737 = vld [vmem:[%s165 + $0x40] sm:$0xff]
      %v738 = vld [vmem:[%s165 + $0x48] sm:$0xff]
      %v739 = vld [vmem:[%s165 + $0x50] sm:$0xff]
      %v740 = vld [vmem:[%s165 + $0x58] sm:$0xff]
      %v741 = vld [vmem:[%s165 + $0x60] sm:$0xff]
      %v742 = vld [vmem:[%s165 + $0x68] sm:$0xff]
      %s757 = scalar_lea.vmem [#allocation1], 1
      %758 = vst [vmem:[%s757] ss:$2 sm:$0xff] %v729
      %s759 = scalar_lea.vmem [#allocation1], 17
      %760 = vst [vmem:[%s759] ss:$2 sm:$0xff] %v730
      %s761 = scalar_lea.vmem [#allocation1], 33
      %762 = vst [vmem:[%s761] ss:$2 sm:$0xff] %v731
      %s763 = scalar_lea.vmem [#allocation1], 49
      %764 = vst [vmem:[%s763] ss:$2 sm:$0xff] %v732
      %v765 = vld.sshfl [vmem:[#allocation1] sm:$0xff pattern:$0x75316420]
      %v766 = vld.sshfl [vmem:[#allocation1 + $0x8] sm:$0xff pattern:$0x75316420]
      %v767 = vld.sshfl [vmem:[#allocation1 + $0x10] sm:$0xff pattern:$0x75316420]
      %v768 = vld.sshfl [vmem:[#allocation1 + $0x18] sm:$0xff pattern:$0x75316420]
      %v769 = vld.sshfl [vmem:[#allocation1 + $0x20] sm:$0xff pattern:$0x75316420]
      %v770 = vld.sshfl [vmem:[#allocation1 + $0x28] sm:$0xff pattern:$0x75316420]
      %v771 = vld.sshfl [vmem:[#allocation1 + $0x30] sm:$0xff pattern:$0x75316420]
      %v772 = vld.sshfl [vmem:[#allocation1 + $0x38] sm:$0xff pattern:$0x75316420]
      %773 = vst [vmem:[%s757] ss:$2 sm:$0xff] %v733
      %774 = vst [vmem:[%s759] ss:$2 sm:$0xff] %v734
      %775 = vst [vmem:[%s761] ss:$2 sm:$0xff] %v735
      %776 = vst [vmem:[%s763] ss:$2 sm:$0xff] %v736
      %v777 = vld.sshfl [vmem:[#allocation1] sm:$0xff pattern:$0x75316420]
      %v778 = vld.sshfl [vmem:[#allocation1 + $0x8] sm:$0xff pattern:$0x75316420]
      %v779 = vld.sshfl [vmem:[#allocation1 + $0x10] sm:$0xff pattern:$0x75316420]
      %v780 = vld.sshfl [vmem:[#allocation1 + $0x18] sm:$0xff pattern:$0x75316420]
      %v781 = vld.sshfl [vmem:[#allocation1 + $0x20] sm:$0xff pattern:$0x75316420]
      %v782 = vld.sshfl [vmem:[#allocation1 + $0x28] sm:$0xff pattern:$0x75316420]
      %v783 = vld.sshfl [vmem:[#allocation1 + $0x30] sm:$0xff pattern:$0x75316420]
      %v784 = vld.sshfl [vmem:[#allocation1 + $0x38] sm:$0xff pattern:$0x75316420]
      %785 = vst [vmem:[%s757] ss:$2 sm:$0xff] %v737
      %786 = vst [vmem:[%s759] ss:$2 sm:$0xff] %v738
      %787 = vst [vmem:[%s761] ss:$2 sm:$0xff] %v739
      %788 = vst [vmem:[%s763] ss:$2 sm:$0xff] %v740
      %v789 = vld.sshfl [vmem:[#allocation1] sm:$0xff pattern:$0x75316420]
      %v790 = vld.sshfl [vmem:[#allocation1 + $0x8] sm:$0xff pattern:$0x75316420]
      %v791 = vld.sshfl [vmem:[#allocation1 + $0x10] sm:$0xff pattern:$0x75316420]
      %v792 = vld.sshfl [vmem:[#allocation1 + $0x18] sm:$0xff pattern:$0x75316420]
      %v793 = vld.sshfl [vmem:[#allocation1 + $0x20] sm:$0xff pattern:$0x75316420]
      %v794 = vld.sshfl [vmem:[#allocation1 + $0x28] sm:$0xff pattern:$0x75316420]
      %v795 = vld.sshfl [vmem:[#allocation1 + $0x30] sm:$0xff pattern:$0x75316420]
      %v796 = vld.sshfl [vmem:[#allocation1 + $0x38] sm:$0xff pattern:$0x75316420]
      %797 = vst [vmem:[%s757] ss:$2 sm:$0xff] %v741
      %798 = vst [vmem:[%s759] ss:$2 sm:$0xff] %v742
      %v799 = vld.sshfl [vmem:[#allocation1] sm:$0xff pattern:$0x75316420]
      %v800 = vld.sshfl [vmem:[#allocation1 + $0x8] sm:$0xff pattern:$0x75316420]
      %v801 = vld.sshfl [vmem:[#allocation1 + $0x10] sm:$0xff pattern:$0x75316420]
      %v802 = vld.sshfl [vmem:[#allocation1 + $0x18] sm:$0xff pattern:$0x75316420]
      %803 = vrot.lane.b32.xlu0 %v765, 112
      %v804 = vpop.permute.xlu0 %803
      %805 = vrot.lane.b32.xlu0 %v766, 112
      %v806 = vpop.permute.xlu0 %805
      %807 = vrot.lane.b32.xlu0 %v767, 112
      %v808 = vpop.permute.xlu0 %807
      %809 = vrot.lane.b32.xlu0 %v768, 112
      %v810 = vpop.permute.xlu0 %809
      %811 = vrot.lane.b32.xlu0 %v769, 112
      %v812 = vpop.permute.xlu0 %811
      %813 = vrot.lane.b32.xlu0 %v770, 112
      %v814 = vpop.permute.xlu0 %813
      %815 = vrot.lane.b32.xlu0 %v771, 112
      %v816 = vpop.permute.xlu0 %815
      %817 = vrot.lane.b32.xlu0 %v772, 112
      %v818 = vpop.permute.xlu0 %817
      %819 = vrot.lane.b32.xlu0 %v777, 112
      %v820 = vpop.permute.xlu0 %819
      %821 = vrot.lane.b32.xlu0 %v778, 112
      %v822 = vpop.permute.xlu0 %821
      %823 = vrot.lane.b32.xlu0 %v779, 112
      %v824 = vpop.permute.xlu0 %823
      %825 = vrot.lane.b32.xlu0 %v780, 112
      %v826 = vpop.permute.xlu0 %825
      %827 = vrot.lane.b32.xlu0 %v781, 112
      %v828 = vpop.permute.xlu0 %827
      %829 = vrot.lane.b32.xlu0 %v782, 112
      %v830 = vpop.permute.xlu0 %829
      %831 = vrot.lane.b32.xlu0 %v783, 112
      %v832 = vpop.permute.xlu0 %831
      %833 = vrot.lane.b32.xlu0 %v784, 112
      %v834 = vpop.permute.xlu0 %833
      %835 = vrot.lane.b32.xlu0 %v789, 112
      %v836 = vpop.permute.xlu0 %835
      %837 = vrot.lane.b32.xlu0 %v790, 112
      %v838 = vpop.permute.xlu0 %837
      %839 = vrot.lane.b32.xlu0 %v791, 112
      %v840 = vpop.permute.xlu0 %839
      %841 = vrot.lane.b32.xlu0 %v792, 112
      %v842 = vpop.permute.xlu0 %841
      %843 = vrot.lane.b32.xlu0 %v793, 112
      %v844 = vpop.permute.xlu0 %843
      %845 = vrot.lane.b32.xlu0 %v794, 112
      %v846 = vpop.permute.xlu0 %845
      %847 = vrot.lane.b32.xlu0 %v795, 112
      %v848 = vpop.permute.xlu0 %847
      %849 = vrot.lane.b32.xlu0 %v796, 112
      %v850 = vpop.permute.xlu0 %849
      %851 = vrot.lane.b32.xlu0 %v799, 112
      %v852 = vpop.permute.xlu0 %851
      %853 = vrot.lane.b32.xlu0 %v800, 112
      %v854 = vpop.permute.xlu0 %853
      %855 = vrot.lane.b32.xlu0 %v801, 112
      %v856 = vpop.permute.xlu0 %855
      %857 = vrot.lane.b32.xlu0 %v802, 112
      %v858 = vpop.permute.xlu0 %857
      %vm859 = vcmask 916480
      %v860 = vsel %vm859, %v804, %v806
      %v861 = vsel %vm859, %v806, %v808
      %v862 = vsel %vm859, %v808, %v810
      %v863 = vsel %vm859, %v810, %v812
      %v864 = vsel %vm859, %v812, %v814
      %v865 = vsel %vm859, %v814, %v816
      %v866 = vsel %vm859, %v816, %v818
      %v867 = vsel %vm859, %v818, %v820
      %v868 = vsel %vm859, %v820, %v822
      %v869 = vsel %vm859, %v822, %v824
      %v870 = vsel %vm859, %v824, %v826
      %v871 = vsel %vm859, %v826, %v828
      %v872 = vsel %vm859, %v828, %v830
      %v873 = vsel %vm859, %v830, %v832
      %v874 = vsel %vm859, %v832, %v834
      %v875 = vsel %vm859, %v834, %v836
      %v876 = vsel %vm859, %v836, %v838
      %v877 = vsel %vm859, %v838, %v840
      %v878 = vsel %vm859, %v840, %v842
      %v879 = vsel %vm859, %v842, %v844
      %v880 = vsel %vm859, %v844, %v846
      %v881 = vsel %vm859, %v846, %v848
      %v882 = vsel %vm859, %v848, %v850
      %v883 = vsel %vm859, %v850, %v852
      %v884 = vsel %vm859, %v852, %v854
      %v885 = vsel %vm859, %v854, %v856
      %v886 = vsel %vm859, %v856, %v858
      %915 = vst [vmem:[#allocation2 + $0xe0] sm:$0xf0] %v860
      %916 = vst [vmem:[#allocation2 + $0xe8] sm:$0xf0] %v861
      %917 = vst [vmem:[#allocation2 + $0xf0] sm:$0xf0] %v862
      %918 = vst [vmem:[#allocation2 + $0xf8] sm:$0xf0] %v863
      %919 = vst [vmem:[#allocation2 + $0x100] sm:$0xf0] %v864
      %920 = vst [vmem:[#allocation2 + $0x108] sm:$0xf0] %v865
      %921 = vst [vmem:[#allocation2 + $0x110] sm:$0xf0] %v866
      %922 = vst [vmem:[#allocation2 + $0x118] sm:$0xf0] %v867
      %923 = vst [vmem:[#allocation2 + $0x120] sm:$0xf0] %v868
      %924 = vst [vmem:[#allocation2 + $0x128] sm:$0xf0] %v869
      %925 = vst [vmem:[#allocation2 + $0x130] sm:$0xf0] %v870
      %926 = vst [vmem:[#allocation2 + $0x138] sm:$0xf0] %v871
      %927 = vst [vmem:[#allocation2 + $0x140] sm:$0xf0] %v872
      %928 = vst [vmem:[#allocation2 + $0x148] sm:$0xf0] %v873
      %929 = vst [vmem:[#allocation2 + $0x150] sm:$0xf0] %v874
      %930 = vst [vmem:[#allocation2 + $0x158] sm:$0xf0] %v875
      %931 = vst [vmem:[#allocation2 + $0x160] sm:$0xf0] %v876
      %932 = vst [vmem:[#allocation2 + $0x168] sm:$0xf0] %v877
      %933 = vst [vmem:[#allocation2 + $0x170] sm:$0xf0] %v878
      %934 = vst [vmem:[#allocation2 + $0x178] sm:$0xf0] %v879
      %935 = vst [vmem:[#allocation2 + $0x180] sm:$0xf0] %v880
      %936 = vst [vmem:[#allocation2 + $0x188] sm:$0xf0] %v881
      %937 = vst [vmem:[#allocation2 + $0x190] sm:$0xf0] %v882
      %938 = vst [vmem:[#allocation2 + $0x198] sm:$0xf0] %v883
      %939 = vst [vmem:[#allocation2 + $0x1a0] sm:$0xf0] %v884
      %940 = vst [vmem:[#allocation2 + $0x1a8] sm:$0xf0] %v885
      %941 = vst [vmem:[#allocation2 + $0x1b0] sm:$0xf0] %v886
      %942 = vst.msk [vmem:[#allocation2 + $0x1b8] sm:$0xf0] %vm514, %v858
      %v943 = vld [vmem:[%s165] sm:$0xff]
      %v944 = vld [vmem:[%s165 + $0x8] sm:$0xff]
      %v945 = vld [vmem:[%s165 + $0x10] sm:$0xff]
      %v946 = vld [vmem:[%s165 + $0x18] sm:$0xff]
      %v947 = vld [vmem:[%s165 + $0x20] sm:$0xff]
      %v948 = vld [vmem:[%s165 + $0x28] sm:$0xff]
      %v949 = vld [vmem:[%s165 + $0x30] sm:$0xff]
      %v950 = vld [vmem:[%s165 + $0x38] sm:$0xff]
      %v951 = vld [vmem:[%s165 + $0x40] sm:$0xff]
      %v952 = vld [vmem:[%s165 + $0x48] sm:$0xff]
      %v953 = vld [vmem:[%s165 + $0x50] sm:$0xff]
      %v954 = vld [vmem:[%s165 + $0x58] sm:$0xff]
      %v955 = vld [vmem:[%s165 + $0x60] sm:$0xff]
      %v956 = vld [vmem:[%s165 + $0x68] sm:$0xff]
      %971 = vst [vmem:[#allocation1] ss:$2 sm:$0xff] %v943
      %s972 = scalar_lea.vmem [#allocation1], 16
      %973 = vst [vmem:[%s972] ss:$2 sm:$0xff] %v944
      %s974 = scalar_lea.vmem [#allocation1], 32
      %975 = vst [vmem:[%s974] ss:$2 sm:$0xff] %v945
      %s976 = scalar_lea.vmem [#allocation1], 48
      %977 = vst [vmem:[%s976] ss:$2 sm:$0xff] %v946
      %v978 = vld.sshfl [vmem:[#allocation1] sm:$0xff pattern:$0x75316420]
      %v979 = vld.sshfl [vmem:[#allocation1 + $0x8] sm:$0xff pattern:$0x75316420]
      %v980 = vld.sshfl [vmem:[#allocation1 + $0x10] sm:$0xff pattern:$0x75316420]
      %v981 = vld.sshfl [vmem:[#allocation1 + $0x18] sm:$0xff pattern:$0x75316420]
      %v982 = vld.sshfl [vmem:[#allocation1 + $0x20] sm:$0xff pattern:$0x75316420]
      %v983 = vld.sshfl [vmem:[#allocation1 + $0x28] sm:$0xff pattern:$0x75316420]
      %v984 = vld.sshfl [vmem:[#allocation1 + $0x30] sm:$0xff pattern:$0x75316420]
      %v985 = vld.sshfl [vmem:[#allocation1 + $0x38] sm:$0xff pattern:$0x75316420]
      %986 = vst [vmem:[#allocation1] ss:$2 sm:$0xff] %v947
      %987 = vst [vmem:[%s972] ss:$2 sm:$0xff] %v948
      %988 = vst [vmem:[%s974] ss:$2 sm:$0xff] %v949
      %989 = vst [vmem:[%s976] ss:$2 sm:$0xff] %v950
      %v990 = vld.sshfl [vmem:[#allocation1] sm:$0xff pattern:$0x75316420]
      %v991 = vld.sshfl [vmem:[#allocation1 + $0x8] sm:$0xff pattern:$0x75316420]
      %v992 = vld.sshfl [vmem:[#allocation1 + $0x10] sm:$0xff pattern:$0x75316420]
      %v993 = vld.sshfl [vmem:[#allocation1 + $0x18] sm:$0xff pattern:$0x75316420]
      %v994 = vld.sshfl [vmem:[#allocation1 + $0x20] sm:$0xff pattern:$0x75316420]
      %v995 = vld.sshfl [vmem:[#allocation1 + $0x28] sm:$0xff pattern:$0x75316420]
      %v996 = vld.sshfl [vmem:[#allocation1 + $0x30] sm:$0xff pattern:$0x75316420]
      %v997 = vld.sshfl [vmem:[#allocation1 + $0x38] sm:$0xff pattern:$0x75316420]
      %998 = vst [vmem:[#allocation1] ss:$2 sm:$0xff] %v951
      %999 = vst [vmem:[%s972] ss:$2 sm:$0xff] %v952
      %1000 = vst [vmem:[%s974] ss:$2 sm:$0xff] %v953
      %1001 = vst [vmem:[%s976] ss:$2 sm:$0xff] %v954
      %v1002 = vld.sshfl [vmem:[#allocation1] sm:$0xff pattern:$0x75316420]
      %v1003 = vld.sshfl [vmem:[#allocation1 + $0x8] sm:$0xff pattern:$0x75316420]
      %v1004 = vld.sshfl [vmem:[#allocation1 + $0x10] sm:$0xff pattern:$0x75316420]
      %v1005 = vld.sshfl [vmem:[#allocation1 + $0x18] sm:$0xff pattern:$0x75316420]
      %v1006 = vld.sshfl [vmem:[#allocation1 + $0x20] sm:$0xff pattern:$0x75316420]
      %v1007 = vld.sshfl [vmem:[#allocation1 + $0x28] sm:$0xff pattern:$0x75316420]
      %v1008 = vld.sshfl [vmem:[#allocation1 + $0x30] sm:$0xff pattern:$0x75316420]
      %v1009 = vld.sshfl [vmem:[#allocation1 + $0x38] sm:$0xff pattern:$0x75316420]
      %1010 = vst [vmem:[#allocation1] ss:$2 sm:$0xff] %v955
      %1011 = vst [vmem:[%s972] ss:$2 sm:$0xff] %v956
      %v1012 = vld.sshfl [vmem:[#allocation1] sm:$0xff pattern:$0x75316420]
      %v1013 = vld.sshfl [vmem:[#allocation1 + $0x8] sm:$0xff pattern:$0x75316420]
      %v1014 = vld.sshfl [vmem:[#allocation1 + $0x10] sm:$0xff pattern:$0x75316420]
      %v1015 = vld.sshfl [vmem:[#allocation1 + $0x18] sm:$0xff pattern:$0x75316420]
      %1016 = vrot.lane.b32.xlu0 %v978, 111
      %v1017 = vpop.permute.xlu0 %1016
      %1018 = vrot.lane.b32.xlu0 %v979, 111
      %v1019 = vpop.permute.xlu0 %1018
      %1020 = vrot.lane.b32.xlu0 %v980, 111
      %v1021 = vpop.permute.xlu0 %1020
      %1022 = vrot.lane.b32.xlu0 %v981, 111
      %v1023 = vpop.permute.xlu0 %1022
      %1024 = vrot.lane.b32.xlu0 %v982, 111
      %v1025 = vpop.permute.xlu0 %1024
      %1026 = vrot.lane.b32.xlu0 %v983, 111
      %v1027 = vpop.permute.xlu0 %1026
      %1028 = vrot.lane.b32.xlu0 %v984, 111
      %v1029 = vpop.permute.xlu0 %1028
      %1030 = vrot.lane.b32.xlu0 %v985, 111
      %v1031 = vpop.permute.xlu0 %1030
      %1032 = vrot.lane.b32.xlu0 %v990, 111
      %v1033 = vpop.permute.xlu0 %1032
      %1034 = vrot.lane.b32.xlu0 %v991, 111
      %v1035 = vpop.permute.xlu0 %1034
      %1036 = vrot.lane.b32.xlu0 %v992, 111
      %v1037 = vpop.permute.xlu0 %1036
      %1038 = vrot.lane.b32.xlu0 %v993, 111
      %v1039 = vpop.permute.xlu0 %1038
      %1040 = vrot.lane.b32.xlu0 %v994, 111
      %v1041 = vpop.permute.xlu0 %1040
      %1042 = vrot.lane.b32.xlu0 %v995, 111
      %v1043 = vpop.permute.xlu0 %1042
      %1044 = vrot.lane.b32.xlu0 %v996, 111
      %v1045 = vpop.permute.xlu0 %1044
      %1046 = vrot.lane.b32.xlu0 %v997, 111
      %v1047 = vpop.permute.xlu0 %1046
      %1048 = vrot.lane.b32.xlu0 %v1002, 111
      %v1049 = vpop.permute.xlu0 %1048
      %1050 = vrot.lane.b32.xlu0 %v1003, 111
      %v1051 = vpop.permute.xlu0 %1050
      %1052 = vrot.lane.b32.xlu0 %v1004, 111
      %v1053 = vpop.permute.xlu0 %1052
      %1054 = vrot.lane.b32.xlu0 %v1005, 111
      %v1055 = vpop.permute.xlu0 %1054
      %1056 = vrot.lane.b32.xlu0 %v1006, 111
      %v1057 = vpop.permute.xlu0 %1056
      %1058 = vrot.lane.b32.xlu0 %v1007, 111
      %v1059 = vpop.permute.xlu0 %1058
      %1060 = vrot.lane.b32.xlu0 %v1008, 111
      %v1061 = vpop.permute.xlu0 %1060
      %1062 = vrot.lane.b32.xlu0 %v1009, 111
      %v1063 = vpop.permute.xlu0 %1062
      %1064 = vrot.lane.b32.xlu0 %v1012, 111
      %v1065 = vpop.permute.xlu0 %1064
      %1066 = vrot.lane.b32.xlu0 %v1013, 111
      %v1067 = vpop.permute.xlu0 %1066
      %1068 = vrot.lane.b32.xlu0 %v1014, 111
      %v1069 = vpop.permute.xlu0 %1068
      %1070 = vrot.lane.b32.xlu0 %v1015, 111
      %v1071 = vpop.permute.xlu0 %1070
      %vm1072 = vcmask 908288
      %v1073 = vsel %vm1072, %v1017, %v1019
      %v1074 = vsel %vm1072, %v1019, %v1021
      %v1075 = vsel %vm1072, %v1021, %v1023
      %v1076 = vsel %vm1072, %v1023, %v1025
      %v1077 = vsel %vm1072, %v1025, %v1027
      %v1078 = vsel %vm1072, %v1027, %v1029
      %v1079 = vsel %vm1072, %v1029, %v1031
      %v1080 = vsel %vm1072, %v1031, %v1033
      %v1081 = vsel %vm1072, %v1033, %v1035
      %v1082 = vsel %vm1072, %v1035, %v1037
      %v1083 = vsel %vm1072, %v1037, %v1039
      %v1084 = vsel %vm1072, %v1039, %v1041
      %v1085 = vsel %vm1072, %v1041, %v1043
      %v1086 = vsel %vm1072, %v1043, %v1045
      %v1087 = vsel %vm1072, %v1045, %v1047
      %v1088 = vsel %vm1072, %v1047, %v1049
      %v1089 = vsel %vm1072, %v1049, %v1051
      %v1090 = vsel %vm1072, %v1051, %v1053
      %v1091 = vsel %vm1072, %v1053, %v1055
      %v1092 = vsel %vm1072, %v1055, %v1057
      %v1093 = vsel %vm1072, %v1057, %v1059
      %v1094 = vsel %vm1072, %v1059, %v1061
      %v1095 = vsel %vm1072, %v1061, %v1063
      %v1096 = vsel %vm1072, %v1063, %v1065
      %v1097 = vsel %vm1072, %v1065, %v1067
      %v1098 = vsel %vm1072, %v1067, %v1069
      %v1099 = vsel %vm1072, %v1069, %v1071
      %1128 = vst [vmem:[#allocation2 + $0x1c0] sm:$0xf] %v1073
      %1129 = vst [vmem:[#allocation2 + $0x1c8] sm:$0xf] %v1074
      %1130 = vst [vmem:[#allocation2 + $0x1d0] sm:$0xf] %v1075
      %1131 = vst [vmem:[#allocation2 + $0x1d8] sm:$0xf] %v1076
      %1132 = vst [vmem:[#allocation2 + $0x1e0] sm:$0xf] %v1077
      %1133 = vst [vmem:[#allocation2 + $0x1e8] sm:$0xf] %v1078
      %1134 = vst [vmem:[#allocation2 + $0x1f0] sm:$0xf] %v1079
      %1135 = vst [vmem:[#allocation2 + $0x1f8] sm:$0xf] %v1080
      %1136 = vst [vmem:[#allocation2 + $0x200] sm:$0xf] %v1081
      %1137 = vst [vmem:[#allocation2 + $0x208] sm:$0xf] %v1082
      %1138 = vst [vmem:[#allocation2 + $0x210] sm:$0xf] %v1083
      %1139 = vst [vmem:[#allocation2 + $0x218] sm:$0xf] %v1084
      %1140 = vst [vmem:[#allocation2 + $0x220] sm:$0xf] %v1085
      %1141 = vst [vmem:[#allocation2 + $0x228] sm:$0xf] %v1086
      %1142 = vst [vmem:[#allocation2 + $0x230] sm:$0xf] %v1087
      %1143 = vst [vmem:[#allocation2 + $0x238] sm:$0xf] %v1088
      %1144 = vst [vmem:[#allocation2 + $0x240] sm:$0xf] %v1089
      %1145 = vst [vmem:[#allocation2 + $0x248] sm:$0xf] %v1090
      %1146 = vst [vmem:[#allocation2 + $0x250] sm:$0xf] %v1091
      %1147 = vst [vmem:[#allocation2 + $0x258] sm:$0xf] %v1092
      %1148 = vst [vmem:[#allocation2 + $0x260] sm:$0xf] %v1093
      %1149 = vst [vmem:[#allocation2 + $0x268] sm:$0xf] %v1094
      %1150 = vst [vmem:[#allocation2 + $0x270] sm:$0xf] %v1095
      %1151 = vst [vmem:[#allocation2 + $0x278] sm:$0xf] %v1096
      %1152 = vst [vmem:[#allocation2 + $0x280] sm:$0xf] %v1097
      %1153 = vst [vmem:[#allocation2 + $0x288] sm:$0xf] %v1098
      %1154 = vst [vmem:[#allocation2 + $0x290] sm:$0xf] %v1099
      %1155 = vst.msk [vmem:[#allocation2 + $0x298] sm:$0xf] %vm299, %v1071
      %v1156 = vld [vmem:[%s165] sm:$0xff]
      %v1157 = vld [vmem:[%s165 + $0x8] sm:$0xff]
      %v1158 = vld [vmem:[%s165 + $0x10] sm:$0xff]
      %v1159 = vld [vmem:[%s165 + $0x18] sm:$0xff]
      %v1160 = vld [vmem:[%s165 + $0x20] sm:$0xff]
      %v1161 = vld [vmem:[%s165 + $0x28] sm:$0xff]
      %v1162 = vld [vmem:[%s165 + $0x30] sm:$0xff]
      %v1163 = vld [vmem:[%s165 + $0x38] sm:$0xff]
      %v1164 = vld [vmem:[%s165 + $0x40] sm:$0xff]
      %v1165 = vld [vmem:[%s165 + $0x48] sm:$0xff]
      %v1166 = vld [vmem:[%s165 + $0x50] sm:$0xff]
      %v1167 = vld [vmem:[%s165 + $0x58] sm:$0xff]
      %v1168 = vld [vmem:[%s165 + $0x60] sm:$0xff]
      %v1169 = vld [vmem:[%s165 + $0x68] sm:$0xff]
      %s1184 = scalar_lea.vmem [#allocation1], 1
      %1185 = vst [vmem:[%s1184] ss:$2 sm:$0xff] %v1156
      %s1186 = scalar_lea.vmem [#allocation1], 17
      %1187 = vst [vmem:[%s1186] ss:$2 sm:$0xff] %v1157
      %s1188 = scalar_lea.vmem [#allocation1], 33
      %1189 = vst [vmem:[%s1188] ss:$2 sm:$0xff] %v1158
      %s1190 = scalar_lea.vmem [#allocation1], 49
      %1191 = vst [vmem:[%s1190] ss:$2 sm:$0xff] %v1159
      %v1192 = vld.sshfl [vmem:[#allocation1] sm:$0xff pattern:$0x75316420]
      %v1193 = vld.sshfl [vmem:[#allocation1 + $0x8] sm:$0xff pattern:$0x75316420]
      %v1194 = vld.sshfl [vmem:[#allocation1 + $0x10] sm:$0xff pattern:$0x75316420]
      %v1195 = vld.sshfl [vmem:[#allocation1 + $0x18] sm:$0xff pattern:$0x75316420]
      %v1196 = vld.sshfl [vmem:[#allocation1 + $0x20] sm:$0xff pattern:$0x75316420]
      %v1197 = vld.sshfl [vmem:[#allocation1 + $0x28] sm:$0xff pattern:$0x75316420]
      %v1198 = vld.sshfl [vmem:[#allocation1 + $0x30] sm:$0xff pattern:$0x75316420]
      %v1199 = vld.sshfl [vmem:[#allocation1 + $0x38] sm:$0xff pattern:$0x75316420]
      %1200 = vst [vmem:[%s1184] ss:$2 sm:$0xff] %v1160
      %1201 = vst [vmem:[%s1186] ss:$2 sm:$0xff] %v1161
      %1202 = vst [vmem:[%s1188] ss:$2 sm:$0xff] %v1162
      %1203 = vst [vmem:[%s1190] ss:$2 sm:$0xff] %v1163
      %v1204 = vld.sshfl [vmem:[#allocation1] sm:$0xff pattern:$0x75316420]
      %v1205 = vld.sshfl [vmem:[#allocation1 + $0x8] sm:$0xff pattern:$0x75316420]
      %v1206 = vld.sshfl [vmem:[#allocation1 + $0x10] sm:$0xff pattern:$0x75316420]
      %v1207 = vld.sshfl [vmem:[#allocation1 + $0x18] sm:$0xff pattern:$0x75316420]
      %v1208 = vld.sshfl [vmem:[#allocation1 + $0x20] sm:$0xff pattern:$0x75316420]
      %v1209 = vld.sshfl [vmem:[#allocation1 + $0x28] sm:$0xff pattern:$0x75316420]
      %v1210 = vld.sshfl [vmem:[#allocation1 + $0x30] sm:$0xff pattern:$0x75316420]
      %v1211 = vld.sshfl [vmem:[#allocation1 + $0x38] sm:$0xff pattern:$0x75316420]
      %1212 = vst [vmem:[%s1184] ss:$2 sm:$0xff] %v1164
      %1213 = vst [vmem:[%s1186] ss:$2 sm:$0xff] %v1165
      %1214 = vst [vmem:[%s1188] ss:$2 sm:$0xff] %v1166
      %1215 = vst [vmem:[%s1190] ss:$2 sm:$0xff] %v1167
      %v1216 = vld.sshfl [vmem:[#allocation1] sm:$0xff pattern:$0x75316420]
      %v1217 = vld.sshfl [vmem:[#allocation1 + $0x8] sm:$0xff pattern:$0x75316420]
      %v1218 = vld.sshfl [vmem:[#allocation1 + $0x10] sm:$0xff pattern:$0x75316420]
      %v1219 = vld.sshfl [vmem:[#allocation1 + $0x18] sm:$0xff pattern:$0x75316420]
      %v1220 = vld.sshfl [vmem:[#allocation1 + $0x20] sm:$0xff pattern:$0x75316420]
      %v1221 = vld.sshfl [vmem:[#allocation1 + $0x28] sm:$0xff pattern:$0x75316420]
      %v1222 = vld.sshfl [vmem:[#allocation1 + $0x30] sm:$0xff pattern:$0x75316420]
      %v1223 = vld.sshfl [vmem:[#allocation1 + $0x38] sm:$0xff pattern:$0x75316420]
      %1224 = vst [vmem:[%s1184] ss:$2 sm:$0xff] %v1168
      %1225 = vst [vmem:[%s1186] ss:$2 sm:$0xff] %v1169
      %v1226 = vld.sshfl [vmem:[#allocation1] sm:$0xff pattern:$0x75316420]
      %v1227 = vld.sshfl [vmem:[#allocation1 + $0x8] sm:$0xff pattern:$0x75316420]
      %v1228 = vld.sshfl [vmem:[#allocation1 + $0x10] sm:$0xff pattern:$0x75316420]
      %v1229 = vld.sshfl [vmem:[#allocation1 + $0x18] sm:$0xff pattern:$0x75316420]
      %1230 = vrot.lane.b32.xlu0 %v1192, 110
      %v1231 = vpop.permute.xlu0 %1230
      %1232 = vrot.lane.b32.xlu0 %v1193, 110
      %v1233 = vpop.permute.xlu0 %1232
      %1234 = vrot.lane.b32.xlu0 %v1194, 110
      %v1235 = vpop.permute.xlu0 %1234
      %1236 = vrot.lane.b32.xlu0 %v1195, 110
      %v1237 = vpop.permute.xlu0 %1236
      %1238 = vrot.lane.b32.xlu0 %v1196, 110
      %v1239 = vpop.permute.xlu0 %1238
      %1240 = vrot.lane.b32.xlu0 %v1197, 110
      %v1241 = vpop.permute.xlu0 %1240
      %1242 = vrot.lane.b32.xlu0 %v1198, 110
      %v1243 = vpop.permute.xlu0 %1242
      %1244 = vrot.lane.b32.xlu0 %v1199, 110
      %v1245 = vpop.permute.xlu0 %1244
      %1246 = vrot.lane.b32.xlu0 %v1204, 110
      %v1247 = vpop.permute.xlu0 %1246
      %1248 = vrot.lane.b32.xlu0 %v1205, 110
      %v1249 = vpop.permute.xlu0 %1248
      %1250 = vrot.lane.b32.xlu0 %v1206, 110
      %v1251 = vpop.permute.xlu0 %1250
      %1252 = vrot.lane.b32.xlu0 %v1207, 110
      %v1253 = vpop.permute.xlu0 %1252
      %1254 = vrot.lane.b32.xlu0 %v1208, 110
      %v1255 = vpop.permute.xlu0 %1254
      %1256 = vrot.lane.b32.xlu0 %v1209, 110
      %v1257 = vpop.permute.xlu0 %1256
      %1258 = vrot.lane.b32.xlu0 %v1210, 110
      %v1259 = vpop.permute.xlu0 %1258
      %1260 = vrot.lane.b32.xlu0 %v1211, 110
      %v1261 = vpop.permute.xlu0 %1260
      %1262 = vrot.lane.b32.xlu0 %v1216, 110
      %v1263 = vpop.permute.xlu0 %1262
      %1264 = vrot.lane.b32.xlu0 %v1217, 110
      %v1265 = vpop.permute.xlu0 %1264
      %1266 = vrot.lane.b32.xlu0 %v1218, 110
      %v1267 = vpop.permute.xlu0 %1266
      %1268 = vrot.lane.b32.xlu0 %v1219, 110
      %v1269 = vpop.permute.xlu0 %1268
      %1270 = vrot.lane.b32.xlu0 %v1220, 110
      %v1271 = vpop.permute.xlu0 %1270
      %1272 = vrot.lane.b32.xlu0 %v1221, 110
      %v1273 = vpop.permute.xlu0 %1272
      %1274 = vrot.lane.b32.xlu0 %v1222, 110
      %v1275 = vpop.permute.xlu0 %1274
      %1276 = vrot.lane.b32.xlu0 %v1223, 110
      %v1277 = vpop.permute.xlu0 %1276
      %1278 = vrot.lane.b32.xlu0 %v1226, 110
      %v1279 = vpop.permute.xlu0 %1278
      %1280 = vrot.lane.b32.xlu0 %v1227, 110
      %v1281 = vpop.permute.xlu0 %1280
      %1282 = vrot.lane.b32.xlu0 %v1228, 110
      %v1283 = vpop.permute.xlu0 %1282
      %1284 = vrot.lane.b32.xlu0 %v1229, 110
      %v1285 = vpop.permute.xlu0 %1284
      %vm1286 = vcmask 900096
      %v1287 = vsel %vm1286, %v1231, %v1233
      %v1288 = vsel %vm1286, %v1233, %v1235
      %v1289 = vsel %vm1286, %v1235, %v1237
      %v1290 = vsel %vm1286, %v1237, %v1239
      %v1291 = vsel %vm1286, %v1239, %v1241
      %v1292 = vsel %vm1286, %v1241, %v1243
      %v1293 = vsel %vm1286, %v1243, %v1245
      %v1294 = vsel %vm1286, %v1245, %v1247
      %v1295 = vsel %vm1286, %v1247, %v1249
      %v1296 = vsel %vm1286, %v1249, %v1251
      %v1297 = vsel %vm1286, %v1251, %v1253
      %v1298 = vsel %vm1286, %v1253, %v1255
      %v1299 = vsel %vm1286, %v1255, %v1257
      %v1300 = vsel %vm1286, %v1257, %v1259
      %v1301 = vsel %vm1286, %v1259, %v1261
      %v1302 = vsel %vm1286, %v1261, %v1263
      %v1303 = vsel %vm1286, %v1263, %v1265
      %v1304 = vsel %vm1286, %v1265, %v1267
      %v1305 = vsel %vm1286, %v1267, %v1269
      %v1306 = vsel %vm1286, %v1269, %v1271
      %v1307 = vsel %vm1286, %v1271, %v1273
      %v1308 = vsel %vm1286, %v1273, %v1275
      %v1309 = vsel %vm1286, %v1275, %v1277
      %v1310 = vsel %vm1286, %v1277, %v1279
      %v1311 = vsel %vm1286, %v1279, %v1281
      %v1312 = vsel %vm1286, %v1281, %v1283
      %v1313 = vsel %vm1286, %v1283, %v1285
      %1342 = vst [vmem:[#allocation2 + $0x1c0] sm:$0xf0] %v1287
      %1343 = vst [vmem:[#allocation2 + $0x1c8] sm:$0xf0] %v1288
      %1344 = vst [vmem:[#allocation2 + $0x1d0] sm:$0xf0] %v1289
      %1345 = vst [vmem:[#allocation2 + $0x1d8] sm:$0xf0] %v1290
      %1346 = vst [vmem:[#allocation2 + $0x1e0] sm:$0xf0] %v1291
      %1347 = vst [vmem:[#allocation2 + $0x1e8] sm:$0xf0] %v1292
      %1348 = vst [vmem:[#allocation2 + $0x1f0] sm:$0xf0] %v1293
      %1349 = vst [vmem:[#allocation2 + $0x1f8] sm:$0xf0] %v1294
      %1350 = vst [vmem:[#allocation2 + $0x200] sm:$0xf0] %v1295
      %1351 = vst [vmem:[#allocation2 + $0x208] sm:$0xf0] %v1296
      %1352 = vst [vmem:[#allocation2 + $0x210] sm:$0xf0] %v1297
      %1353 = vst [vmem:[#allocation2 + $0x218] sm:$0xf0] %v1298
      %1354 = vst [vmem:[#allocation2 + $0x220] sm:$0xf0] %v1299
      %1355 = vst [vmem:[#allocation2 + $0x228] sm:$0xf0] %v1300
      %1356 = vst [vmem:[#allocation2 + $0x230] sm:$0xf0] %v1301
      %1357 = vst [vmem:[#allocation2 + $0x238] sm:$0xf0] %v1302
      %1358 = vst [vmem:[#allocation2 + $0x240] sm:$0xf0] %v1303
      %1359 = vst [vmem:[#allocation2 + $0x248] sm:$0xf0] %v1304
      %1360 = vst [vmem:[#allocation2 + $0x250] sm:$0xf0] %v1305
      %1361 = vst [vmem:[#allocation2 + $0x258] sm:$0xf0] %v1306
      %1362 = vst [vmem:[#allocation2 + $0x260] sm:$0xf0] %v1307
      %1363 = vst [vmem:[#allocation2 + $0x268] sm:$0xf0] %v1308
      %1364 = vst [vmem:[#allocation2 + $0x270] sm:$0xf0] %v1309
      %1365 = vst [vmem:[#allocation2 + $0x278] sm:$0xf0] %v1310
      %1366 = vst [vmem:[#allocation2 + $0x280] sm:$0xf0] %v1311
      %1367 = vst [vmem:[#allocation2 + $0x288] sm:$0xf0] %v1312
      %1368 = vst [vmem:[#allocation2 + $0x290] sm:$0xf0] %v1313
      %1369 = vst.msk [vmem:[#allocation2 + $0x298] sm:$0xf0] %vm514, %v1285
      %v1370 = vld [vmem:[%s165] sm:$0xff]
      %v1371 = vld [vmem:[%s165 + $0x8] sm:$0xff]
      %v1372 = vld [vmem:[%s165 + $0x10] sm:$0xff]
      %v1373 = vld [vmem:[%s165 + $0x18] sm:$0xff]
      %v1374 = vld [vmem:[%s165 + $0x20] sm:$0xff]
      %v1375 = vld [vmem:[%s165 + $0x28] sm:$0xff]
      %v1376 = vld [vmem:[%s165 + $0x30] sm:$0xff]
      %v1377 = vld [vmem:[%s165 + $0x38] sm:$0xff]
      %v1378 = vld [vmem:[%s165 + $0x40] sm:$0xff]
      %v1379 = vld [vmem:[%s165 + $0x48] sm:$0xff]
      %v1380 = vld [vmem:[%s165 + $0x50] sm:$0xff]
      %v1381 = vld [vmem:[%s165 + $0x58] sm:$0xff]
      %v1382 = vld [vmem:[%s165 + $0x60] sm:$0xff]
      %v1383 = vld [vmem:[%s165 + $0x68] sm:$0xff]
      %1398 = vst [vmem:[#allocation1] ss:$2 sm:$0xff] %v1370
      %s1399 = scalar_lea.vmem [#allocation1], 16
      %1400 = vst [vmem:[%s1399] ss:$2 sm:$0xff] %v1371
      %s1401 = scalar_lea.vmem [#allocation1], 32
      %1402 = vst [vmem:[%s1401] ss:$2 sm:$0xff] %v1372
      %s1403 = scalar_lea.vmem [#allocation1], 48
      %1404 = vst [vmem:[%s1403] ss:$2 sm:$0xff] %v1373
      %v1405 = vld.sshfl [vmem:[#allocation1] sm:$0xff pattern:$0x75316420]
      %v1406 = vld.sshfl [vmem:[#allocation1 + $0x8] sm:$0xff pattern:$0x75316420]
      %v1407 = vld.sshfl [vmem:[#allocation1 + $0x10] sm:$0xff pattern:$0x75316420]
      %v1408 = vld.sshfl [vmem:[#allocation1 + $0x18] sm:$0xff pattern:$0x75316420]
      %v1409 = vld.sshfl [vmem:[#allocation1 + $0x20] sm:$0xff pattern:$0x75316420]
      %v1410 = vld.sshfl [vmem:[#allocation1 + $0x28] sm:$0xff pattern:$0x75316420]
      %v1411 = vld.sshfl [vmem:[#allocation1 + $0x30] sm:$0xff pattern:$0x75316420]
      %v1412 = vld.sshfl [vmem:[#allocation1 + $0x38] sm:$0xff pattern:$0x75316420]
      %1413 = vst [vmem:[#allocation1] ss:$2 sm:$0xff] %v1374
      %1414 = vst [vmem:[%s1399] ss:$2 sm:$0xff] %v1375
      %1415 = vst [vmem:[%s1401] ss:$2 sm:$0xff] %v1376
      %1416 = vst [vmem:[%s1403] ss:$2 sm:$0xff] %v1377
      %v1417 = vld.sshfl [vmem:[#allocation1] sm:$0xff pattern:$0x75316420]
      %v1418 = vld.sshfl [vmem:[#allocation1 + $0x8] sm:$0xff pattern:$0x75316420]
      %v1419 = vld.sshfl [vmem:[#allocation1 + $0x10] sm:$0xff pattern:$0x75316420]
      %v1420 = vld.sshfl [vmem:[#allocation1 + $0x18] sm:$0xff pattern:$0x75316420]
      %v1421 = vld.sshfl [vmem:[#allocation1 + $0x20] sm:$0xff pattern:$0x75316420]
      %v1422 = vld.sshfl [vmem:[#allocation1 + $0x28] sm:$0xff pattern:$0x75316420]
      %v1423 = vld.sshfl [vmem:[#allocation1 + $0x30] sm:$0xff pattern:$0x75316420]
      %v1424 = vld.sshfl [vmem:[#allocation1 + $0x38] sm:$0xff pattern:$0x75316420]
      %1425 = vst [vmem:[#allocation1] ss:$2 sm:$0xff] %v1378
      %1426 = vst [vmem:[%s1399] ss:$2 sm:$0xff] %v1379
      %1427 = vst [vmem:[%s1401] ss:$2 sm:$0xff] %v1380
      %1428 = vst [vmem:[%s1403] ss:$2 sm:$0xff] %v1381
      %v1429 = vld.sshfl [vmem:[#allocation1] sm:$0xff pattern:$0x75316420]
      %v1430 = vld.sshfl [vmem:[#allocation1 + $0x8] sm:$0xff pattern:$0x75316420]
      %v1431 = vld.sshfl [vmem:[#allocation1 + $0x10] sm:$0xff pattern:$0x75316420]
      %v1432 = vld.sshfl [vmem:[#allocation1 + $0x18] sm:$0xff pattern:$0x75316420]
      %v1433 = vld.sshfl [vmem:[#allocation1 + $0x20] sm:$0xff pattern:$0x75316420]
      %v1434 = vld.sshfl [vmem:[#allocation1 + $0x28] sm:$0xff pattern:$0x75316420]
      %v1435 = vld.sshfl [vmem:[#allocation1 + $0x30] sm:$0xff pattern:$0x75316420]
      %v1436 = vld.sshfl [vmem:[#allocation1 + $0x38] sm:$0xff pattern:$0x75316420]
      %1437 = vst [vmem:[#allocation1] ss:$2 sm:$0xff] %v1382
      %1438 = vst [vmem:[%s1399] ss:$2 sm:$0xff] %v1383
      %v1439 = vld.sshfl [vmem:[#allocation1] sm:$0xff pattern:$0x75316420]
      %v1440 = vld.sshfl [vmem:[#allocation1 + $0x8] sm:$0xff pattern:$0x75316420]
      %v1441 = vld.sshfl [vmem:[#allocation1 + $0x10] sm:$0xff pattern:$0x75316420]
      %v1442 = vld.sshfl [vmem:[#allocation1 + $0x18] sm:$0xff pattern:$0x75316420]
      %1443 = vrot.lane.b32.xlu0 %v1405, 96
      %v1444 = vpop.permute.xlu0 %1443
      %1445 = vrot.lane.b32.xlu0 %v1406, 96
      %v1446 = vpop.permute.xlu0 %1445
      %1447 = vrot.lane.b32.xlu0 %v1407, 96
      %v1448 = vpop.permute.xlu0 %1447
      %1449 = vrot.lane.b32.xlu0 %v1408, 96
      %v1450 = vpop.permute.xlu0 %1449
      %1451 = vrot.lane.b32.xlu0 %v1409, 96
      %v1452 = vpop.permute.xlu0 %1451
      %1453 = vrot.lane.b32.xlu0 %v1410, 96
      %v1454 = vpop.permute.xlu0 %1453
      %1455 = vrot.lane.b32.xlu0 %v1411, 96
      %v1456 = vpop.permute.xlu0 %1455
      %1457 = vrot.lane.b32.xlu0 %v1412, 96
      %v1458 = vpop.permute.xlu0 %1457
      %1459 = vrot.lane.b32.xlu0 %v1417, 96
      %v1460 = vpop.permute.xlu0 %1459
      %1461 = vrot.lane.b32.xlu0 %v1418, 96
      %v1462 = vpop.permute.xlu0 %1461
      %1463 = vrot.lane.b32.xlu0 %v1419, 96
      %v1464 = vpop.permute.xlu0 %1463
      %1465 = vrot.lane.b32.xlu0 %v1420, 96
      %v1466 = vpop.permute.xlu0 %1465
      %1467 = vrot.lane.b32.xlu0 %v1421, 96
      %v1468 = vpop.permute.xlu0 %1467
      %1469 = vrot.lane.b32.xlu0 %v1422, 96
      %v1470 = vpop.permute.xlu0 %1469
      %1471 = vrot.lane.b32.xlu0 %v1423, 96
      %v1472 = vpop.permute.xlu0 %1471
      %1473 = vrot.lane.b32.xlu0 %v1424, 96
      %v1474 = vpop.permute.xlu0 %1473
      %1475 = vrot.lane.b32.xlu0 %v1429, 96
      %v1476 = vpop.permute.xlu0 %1475
      %1477 = vrot.lane.b32.xlu0 %v1430, 96
      %v1478 = vpop.permute.xlu0 %1477
      %1479 = vrot.lane.b32.xlu0 %v1431, 96
      %v1480 = vpop.permute.xlu0 %1479
      %1481 = vrot.lane.b32.xlu0 %v1432, 96
      %v1482 = vpop.permute.xlu0 %1481
      %1483 = vrot.lane.b32.xlu0 %v1433, 96
      %v1484 = vpop.permute.xlu0 %1483
      %1485 = vrot.lane.b32.xlu0 %v1434, 96
      %v1486 = vpop.permute.xlu0 %1485
      %1487 = vrot.lane.b32.xlu0 %v1435, 96
      %v1488 = vpop.permute.xlu0 %1487
      %1489 = vrot.lane.b32.xlu0 %v1436, 96
      %v1490 = vpop.permute.xlu0 %1489
      %1491 = vrot.lane.b32.xlu0 %v1439, 96
      %v1492 = vpop.permute.xlu0 %1491
      %1493 = vrot.lane.b32.xlu0 %v1440, 96
      %v1494 = vpop.permute.xlu0 %1493
      %1495 = vrot.lane.b32.xlu0 %v1441, 96
      %v1496 = vpop.permute.xlu0 %1495
      %1497 = vrot.lane.b32.xlu0 %v1442, 96
      %v1498 = vpop.permute.xlu0 %1497
      %vm1499 = vcmask 785408
      %v1500 = vsel %vm1499, %v1444, %v1446
      %v1501 = vsel %vm1499, %v1446, %v1448
      %v1502 = vsel %vm1499, %v1448, %v1450
      %v1503 = vsel %vm1499, %v1450, %v1452
      %v1504 = vsel %vm1499, %v1452, %v1454
      %v1505 = vsel %vm1499, %v1454, %v1456
      %v1506 = vsel %vm1499, %v1456, %v1458
      %v1507 = vsel %vm1499, %v1458, %v1460
      %v1508 = vsel %vm1499, %v1460, %v1462
      %v1509 = vsel %vm1499, %v1462, %v1464
      %v1510 = vsel %vm1499, %v1464, %v1466
      %v1511 = vsel %vm1499, %v1466, %v1468
      %v1512 = vsel %vm1499, %v1468, %v1470
      %v1513 = vsel %vm1499, %v1470, %v1472
      %v1514 = vsel %vm1499, %v1472, %v1474
      %v1515 = vsel %vm1499, %v1474, %v1476
      %v1516 = vsel %vm1499, %v1476, %v1478
      %v1517 = vsel %vm1499, %v1478, %v1480
      %v1518 = vsel %vm1499, %v1480, %v1482
      %v1519 = vsel %vm1499, %v1482, %v1484
      %v1520 = vsel %vm1499, %v1484, %v1486
      %v1521 = vsel %vm1499, %v1486, %v1488
      %v1522 = vsel %vm1499, %v1488, %v1490
      %v1523 = vsel %vm1499, %v1490, %v1492
      %v1524 = vsel %vm1499, %v1492, %v1494
      %v1525 = vsel %vm1499, %v1494, %v1496
      %v1526 = vsel %vm1499, %v1496, %v1498
      %1555 = vst [vmem:[#allocation2 + $0x2a0] sm:$0xf] %v1500
      %1556 = vst [vmem:[#allocation2 + $0x2a8] sm:$0xf] %v1501
      %1557 = vst [vmem:[#allocation2 + $0x2b0] sm:$0xf] %v1502
      %1558 = vst [vmem:[#allocation2 + $0x2b8] sm:$0xf] %v1503
      %1559 = vst [vmem:[#allocation2 + $0x2c0] sm:$0xf] %v1504
      %1560 = vst [vmem:[#allocation2 + $0x2c8] sm:$0xf] %v1505
      %1561 = vst [vmem:[#allocation2 + $0x2d0] sm:$0xf] %v1506
      %1562 = vst [vmem:[#allocation2 + $0x2d8] sm:$0xf] %v1507
      %1563 = vst [vmem:[#allocation2 + $0x2e0] sm:$0xf] %v1508
      %1564 = vst [vmem:[#allocation2 + $0x2e8] sm:$0xf] %v1509
      %1565 = vst [vmem:[#allocation2 + $0x2f0] sm:$0xf] %v1510
      %1566 = vst [vmem:[#allocation2 + $0x2f8] sm:$0xf] %v1511
      %1567 = vst [vmem:[#allocation2 + $0x300] sm:$0xf] %v1512
      %1568 = vst [vmem:[#allocation2 + $0x308] sm:$0xf] %v1513
      %1569 = vst [vmem:[#allocation2 + $0x310] sm:$0xf] %v1514
      %1570 = vst [vmem:[#allocation2 + $0x318] sm:$0xf] %v1515
      %1571 = vst [vmem:[#allocation2 + $0x320] sm:$0xf] %v1516
      %1572 = vst [vmem:[#allocation2 + $0x328] sm:$0xf] %v1517
      %1573 = vst [vmem:[#allocation2 + $0x330] sm:$0xf] %v1518
      %1574 = vst [vmem:[#allocation2 + $0x338] sm:$0xf] %v1519
      %1575 = vst [vmem:[#allocation2 + $0x340] sm:$0xf] %v1520
      %1576 = vst [vmem:[#allocation2 + $0x348] sm:$0xf] %v1521
      %1577 = vst [vmem:[#allocation2 + $0x350] sm:$0xf] %v1522
      %1578 = vst [vmem:[#allocation2 + $0x358] sm:$0xf] %v1523
      %1579 = vst [vmem:[#allocation2 + $0x360] sm:$0xf] %v1524
      %1580 = vst [vmem:[#allocation2 + $0x368] sm:$0xf] %v1525
      %1581 = vst [vmem:[#allocation2 + $0x370] sm:$0xf] %v1526
      %1582 = vst.msk [vmem:[#allocation2 + $0x378] sm:$0xf] %vm299, %v1498
      %v1583 = vld [vmem:[%s165] sm:$0xff]
      %v1584 = vld [vmem:[%s165 + $0x8] sm:$0xff]
      %v1585 = vld [vmem:[%s165 + $0x10] sm:$0xff]
      %v1586 = vld [vmem:[%s165 + $0x18] sm:$0xff]
      %v1587 = vld [vmem:[%s165 + $0x20] sm:$0xff]
      %v1588 = vld [vmem:[%s165 + $0x28] sm:$0xff]
      %v1589 = vld [vmem:[%s165 + $0x30] sm:$0xff]
      %v1590 = vld [vmem:[%s165 + $0x38] sm:$0xff]
      %v1591 = vld [vmem:[%s165 + $0x40] sm:$0xff]
      %v1592 = vld [vmem:[%s165 + $0x48] sm:$0xff]
      %v1593 = vld [vmem:[%s165 + $0x50] sm:$0xff]
      %v1594 = vld [vmem:[%s165 + $0x58] sm:$0xff]
      %v1595 = vld [vmem:[%s165 + $0x60] sm:$0xff]
      %v1596 = vld [vmem:[%s165 + $0x68] sm:$0xff]
      %s1611 = scalar_lea.vmem [#allocation1], 1
      %1612 = vst [vmem:[%s1611] ss:$2 sm:$0xff] %v1583
      %s1613 = scalar_lea.vmem [#allocation1], 17
      %1614 = vst [vmem:[%s1613] ss:$2 sm:$0xff] %v1584
      %s1615 = scalar_lea.vmem [#allocation1], 33
      %1616 = vst [vmem:[%s1615] ss:$2 sm:$0xff] %v1585
      %s1617 = scalar_lea.vmem [#allocation1], 49
      %1618 = vst [vmem:[%s1617] ss:$2 sm:$0xff] %v1586
      %v1619 = vld.sshfl [vmem:[#allocation1] sm:$0xff pattern:$0x75316420]
      %v1620 = vld.sshfl [vmem:[#allocation1 + $0x8] sm:$0xff pattern:$0x75316420]
      %v1621 = vld.sshfl [vmem:[#allocation1 + $0x10] sm:$0xff pattern:$0x75316420]
      %v1622 = vld.sshfl [vmem:[#allocation1 + $0x18] sm:$0xff pattern:$0x75316420]
      %v1623 = vld.sshfl [vmem:[#allocation1 + $0x20] sm:$0xff pattern:$0x75316420]
      %v1624 = vld.sshfl [vmem:[#allocation1 + $0x28] sm:$0xff pattern:$0x75316420]
      %v1625 = vld.sshfl [vmem:[#allocation1 + $0x30] sm:$0xff pattern:$0x75316420]
      %v1626 = vld.sshfl [vmem:[#allocation1 + $0x38] sm:$0xff pattern:$0x75316420]
      %1627 = vst [vmem:[%s1611] ss:$2 sm:$0xff] %v1587
      %1628 = vst [vmem:[%s1613] ss:$2 sm:$0xff] %v1588
      %1629 = vst [vmem:[%s1615] ss:$2 sm:$0xff] %v1589
      %1630 = vst [vmem:[%s1617] ss:$2 sm:$0xff] %v1590
      %v1631 = vld.sshfl [vmem:[#allocation1] sm:$0xff pattern:$0x75316420]
      %v1632 = vld.sshfl [vmem:[#allocation1 + $0x8] sm:$0xff pattern:$0x75316420]
      %v1633 = vld.sshfl [vmem:[#allocation1 + $0x10] sm:$0xff pattern:$0x75316420]
      %v1634 = vld.sshfl [vmem:[#allocation1 + $0x18] sm:$0xff pattern:$0x75316420]
      %v1635 = vld.sshfl [vmem:[#allocation1 + $0x20] sm:$0xff pattern:$0x75316420]
      %v1636 = vld.sshfl [vmem:[#allocation1 + $0x28] sm:$0xff pattern:$0x75316420]
      %v1637 = vld.sshfl [vmem:[#allocation1 + $0x30] sm:$0xff pattern:$0x75316420]
      %v1638 = vld.sshfl [vmem:[#allocation1 + $0x38] sm:$0xff pattern:$0x75316420]
      %1639 = vst [vmem:[%s1611] ss:$2 sm:$0xff] %v1591
      %1640 = vst [vmem:[%s1613] ss:$2 sm:$0xff] %v1592
      %1641 = vst [vmem:[%s1615] ss:$2 sm:$0xff] %v1593
      %1642 = vst [vmem:[%s1617] ss:$2 sm:$0xff] %v1594
      %v1643 = vld.sshfl [vmem:[#allocation1] sm:$0xff pattern:$0x75316420]
      %v1644 = vld.sshfl [vmem:[#allocation1 + $0x8] sm:$0xff pattern:$0x75316420]
      %v1645 = vld.sshfl [vmem:[#allocation1 + $0x10] sm:$0xff pattern:$0x75316420]
      %v1646 = vld.sshfl [vmem:[#allocation1 + $0x18] sm:$0xff pattern:$0x75316420]
      %v1647 = vld.sshfl [vmem:[#allocation1 + $0x20] sm:$0xff pattern:$0x75316420]
      %v1648 = vld.sshfl [vmem:[#allocation1 + $0x28] sm:$0xff pattern:$0x75316420]
      %v1649 = vld.sshfl [vmem:[#allocation1 + $0x30] sm:$0xff pattern:$0x75316420]
      %v1650 = vld.sshfl [vmem:[#allocation1 + $0x38] sm:$0xff pattern:$0x75316420]
      %1651 = vst [vmem:[%s1611] ss:$2 sm:$0xff] %v1595
      %1652 = vst [vmem:[%s1613] ss:$2 sm:$0xff] %v1596
      %v1653 = vld.sshfl [vmem:[#allocation1] sm:$0xff pattern:$0x75316420]
      %v1654 = vld.sshfl [vmem:[#allocation1 + $0x8] sm:$0xff pattern:$0x75316420]
      %v1655 = vld.sshfl [vmem:[#allocation1 + $0x10] sm:$0xff pattern:$0x75316420]
      %v1656 = vld.sshfl [vmem:[#allocation1 + $0x18] sm:$0xff pattern:$0x75316420]
      %1657 = vrot.lane.b32.xlu0 %v1619, 95
      %v1658 = vpop.permute.xlu0 %1657
      %1659 = vrot.lane.b32.xlu0 %v1620, 95
      %v1660 = vpop.permute.xlu0 %1659
      %1661 = vrot.lane.b32.xlu0 %v1621, 95
      %v1662 = vpop.permute.xlu0 %1661
      %1663 = vrot.lane.b32.xlu0 %v1622, 95
      %v1664 = vpop.permute.xlu0 %1663
      %1665 = vrot.lane.b32.xlu0 %v1623, 95
      %v1666 = vpop.permute.xlu0 %1665
      %1667 = vrot.lane.b32.xlu0 %v1624, 95
      %v1668 = vpop.permute.xlu0 %1667
      %1669 = vrot.lane.b32.xlu0 %v1625, 95
      %v1670 = vpop.permute.xlu0 %1669
      %1671 = vrot.lane.b32.xlu0 %v1626, 95
      %v1672 = vpop.permute.xlu0 %1671
      %1673 = vrot.lane.b32.xlu0 %v1631, 95
      %v1674 = vpop.permute.xlu0 %1673
      %1675 = vrot.lane.b32.xlu0 %v1632, 95
      %v1676 = vpop.permute.xlu0 %1675
      %1677 = vrot.lane.b32.xlu0 %v1633, 95
      %v1678 = vpop.permute.xlu0 %1677
      %1679 = vrot.lane.b32.xlu0 %v1634, 95
      %v1680 = vpop.permute.xlu0 %1679
      %1681 = vrot.lane.b32.xlu0 %v1635, 95
      %v1682 = vpop.permute.xlu0 %1681
      %1683 = vrot.lane.b32.xlu0 %v1636, 95
      %v1684 = vpop.permute.xlu0 %1683
      %1685 = vrot.lane.b32.xlu0 %v1637, 95
      %v1686 = vpop.permute.xlu0 %1685
      %1687 = vrot.lane.b32.xlu0 %v1638, 95
      %v1688 = vpop.permute.xlu0 %1687
      %1689 = vrot.lane.b32.xlu0 %v1643, 95
      %v1690 = vpop.permute.xlu0 %1689
      %1691 = vrot.lane.b32.xlu0 %v1644, 95
      %v1692 = vpop.permute.xlu0 %1691
      %1693 = vrot.lane.b32.xlu0 %v1645, 95
      %v1694 = vpop.permute.xlu0 %1693
      %1695 = vrot.lane.b32.xlu0 %v1646, 95
      %v1696 = vpop.permute.xlu0 %1695
      %1697 = vrot.lane.b32.xlu0 %v1647, 95
      %v1698 = vpop.permute.xlu0 %1697
      %1699 = vrot.lane.b32.xlu0 %v1648, 95
      %v1700 = vpop.permute.xlu0 %1699
      %1701 = vrot.lane.b32.xlu0 %v1649, 95
      %v1702 = vpop.permute.xlu0 %1701
      %1703 = vrot.lane.b32.xlu0 %v1650, 95
      %v1704 = vpop.permute.xlu0 %1703
      %1705 = vrot.lane.b32.xlu0 %v1653, 95
      %v1706 = vpop.permute.xlu0 %1705
      %1707 = vrot.lane.b32.xlu0 %v1654, 95
      %v1708 = vpop.permute.xlu0 %1707
      %1709 = vrot.lane.b32.xlu0 %v1655, 95
      %v1710 = vpop.permute.xlu0 %1709
      %1711 = vrot.lane.b32.xlu0 %v1656, 95
      %v1712 = vpop.permute.xlu0 %1711
      %vm1713 = vcmask 777216
      %v1714 = vsel %vm1713, %v1658, %v1660
      %v1715 = vsel %vm1713, %v1660, %v1662
      %v1716 = vsel %vm1713, %v1662, %v1664
      %v1717 = vsel %vm1713, %v1664, %v1666
      %v1718 = vsel %vm1713, %v1666, %v1668
      %v1719 = vsel %vm1713, %v1668, %v1670
      %v1720 = vsel %vm1713, %v1670, %v1672
      %v1721 = vsel %vm1713, %v1672, %v1674
      %v1722 = vsel %vm1713, %v1674, %v1676
      %v1723 = vsel %vm1713, %v1676, %v1678
      %v1724 = vsel %vm1713, %v1678, %v1680
      %v1725 = vsel %vm1713, %v1680, %v1682
      %v1726 = vsel %vm1713, %v1682, %v1684
      %v1727 = vsel %vm1713, %v1684, %v1686
      %v1728 = vsel %vm1713, %v1686, %v1688
      %v1729 = vsel %vm1713, %v1688, %v1690
      %v1730 = vsel %vm1713, %v1690, %v1692
      %v1731 = vsel %vm1713, %v1692, %v1694
      %v1732 = vsel %vm1713, %v1694, %v1696
      %v1733 = vsel %vm1713, %v1696, %v1698
      %v1734 = vsel %vm1713, %v1698, %v1700
      %v1735 = vsel %vm1713, %v1700, %v1702
      %v1736 = vsel %vm1713, %v1702, %v1704
      %v1737 = vsel %vm1713, %v1704, %v1706
      %v1738 = vsel %vm1713, %v1706, %v1708
      %v1739 = vsel %vm1713, %v1708, %v1710
      %v1740 = vsel %vm1713, %v1710, %v1712
      %1769 = vst [vmem:[#allocation2 + $0x2a0] sm:$0xf0] %v1714
      %1770 = vst [vmem:[#allocation2 + $0x2a8] sm:$0xf0] %v1715
      %1771 = vst [vmem:[#allocation2 + $0x2b0] sm:$0xf0] %v1716
      %1772 = vst [vmem:[#allocation2 + $0x2b8] sm:$0xf0] %v1717
      %1773 = vst [vmem:[#allocation2 + $0x2c0] sm:$0xf0] %v1718
      %1774 = vst [vmem:[#allocation2 + $0x2c8] sm:$0xf0] %v1719
      %1775 = vst [vmem:[#allocation2 + $0x2d0] sm:$0xf0] %v1720
      %1776 = vst [vmem:[#allocation2 + $0x2d8] sm:$0xf0] %v1721
      %1777 = vst [vmem:[#allocation2 + $0x2e0] sm:$0xf0] %v1722
      %1778 = vst [vmem:[#allocation2 + $0x2e8] sm:$0xf0] %v1723
      %1779 = vst [vmem:[#allocation2 + $0x2f0] sm:$0xf0] %v1724
      %1780 = vst [vmem:[#allocation2 + $0x2f8] sm:$0xf0] %v1725
      %1781 = vst [vmem:[#allocation2 + $0x300] sm:$0xf0] %v1726
      %1782 = vst [vmem:[#allocation2 + $0x308] sm:$0xf0] %v1727
      %1783 = vst [vmem:[#allocation2 + $0x310] sm:$0xf0] %v1728
      %1784 = vst [vmem:[#allocation2 + $0x318] sm:$0xf0] %v1729
      %1785 = vst [vmem:[#allocation2 + $0x320] sm:$0xf0] %v1730
      %1786 = vst [vmem:[#allocation2 + $0x328] sm:$0xf0] %v1731
      %1787 = vst [vmem:[#allocation2 + $0x330] sm:$0xf0] %v1732
      %1788 = vst [vmem:[#allocation2 + $0x338] sm:$0xf0] %v1733
      %1789 = vst [vmem:[#allocation2 + $0x340] sm:$0xf0] %v1734
      %1790 = vst [vmem:[#allocation2 + $0x348] sm:$0xf0] %v1735
      %1791 = vst [vmem:[#allocation2 + $0x350] sm:$0xf0] %v1736
      %1792 = vst [vmem:[#allocation2 + $0x358] sm:$0xf0] %v1737
      %1793 = vst [vmem:[#allocation2 + $0x360] sm:$0xf0] %v1738
      %1794 = vst [vmem:[#allocation2 + $0x368] sm:$0xf0] %v1739
      %1795 = vst [vmem:[#allocation2 + $0x370] sm:$0xf0] %v1740
      %1796 = vst.msk [vmem:[#allocation2 + $0x378] sm:$0xf0] %vm514, %v1712
      %v1797 = vld [vmem:[%s165] sm:$0xff]
      %v1798 = vld [vmem:[%s165 + $0x8] sm:$0xff]
      %v1799 = vld [vmem:[%s165 + $0x10] sm:$0xff]
      %v1800 = vld [vmem:[%s165 + $0x18] sm:$0xff]
      %v1801 = vld [vmem:[%s165 + $0x20] sm:$0xff]
      %v1802 = vld [vmem:[%s165 + $0x28] sm:$0xff]
      %v1803 = vld [vmem:[%s165 + $0x30] sm:$0xff]
      %v1804 = vld [vmem:[%s165 + $0x38] sm:$0xff]
      %v1805 = vld [vmem:[%s165 + $0x40] sm:$0xff]
      %v1806 = vld [vmem:[%s165 + $0x48] sm:$0xff]
      %v1807 = vld [vmem:[%s165 + $0x50] sm:$0xff]
      %v1808 = vld [vmem:[%s165 + $0x58] sm:$0xff]
      %v1809 = vld [vmem:[%s165 + $0x60] sm:$0xff]
      %v1810 = vld [vmem:[%s165 + $0x68] sm:$0xff]
      %1825 = vst [vmem:[#allocation1] ss:$2 sm:$0xff] %v1797
      %s1826 = scalar_lea.vmem [#allocation1], 16
      %1827 = vst [vmem:[%s1826] ss:$2 sm:$0xff] %v1798
      %s1828 = scalar_lea.vmem [#allocation1], 32
      %1829 = vst [vmem:[%s1828] ss:$2 sm:$0xff] %v1799
      %s1830 = scalar_lea.vmem [#allocation1], 48
      %1831 = vst [vmem:[%s1830] ss:$2 sm:$0xff] %v1800
      %v1832 = vld.sshfl [vmem:[#allocation1] sm:$0xff pattern:$0x75316420]
      %v1833 = vld.sshfl [vmem:[#allocation1 + $0x8] sm:$0xff pattern:$0x75316420]
      %v1834 = vld.sshfl [vmem:[#allocation1 + $0x10] sm:$0xff pattern:$0x75316420]
      %v1835 = vld.sshfl [vmem:[#allocation1 + $0x18] sm:$0xff pattern:$0x75316420]
      %v1836 = vld.sshfl [vmem:[#allocation1 + $0x20] sm:$0xff pattern:$0x75316420]
      %v1837 = vld.sshfl [vmem:[#allocation1 + $0x28] sm:$0xff pattern:$0x75316420]
      %v1838 = vld.sshfl [vmem:[#allocation1 + $0x30] sm:$0xff pattern:$0x75316420]
      %v1839 = vld.sshfl [vmem:[#allocation1 + $0x38] sm:$0xff pattern:$0x75316420]
      %1840 = vst [vmem:[#allocation1] ss:$2 sm:$0xff] %v1801
      %1841 = vst [vmem:[%s1826] ss:$2 sm:$0xff] %v1802
      %1842 = vst [vmem:[%s1828] ss:$2 sm:$0xff] %v1803
      %1843 = vst [vmem:[%s1830] ss:$2 sm:$0xff] %v1804
      %v1844 = vld.sshfl [vmem:[#allocation1] sm:$0xff pattern:$0x75316420]
      %v1845 = vld.sshfl [vmem:[#allocation1 + $0x8] sm:$0xff pattern:$0x75316420]
      %v1846 = vld.sshfl [vmem:[#allocation1 + $0x10] sm:$0xff pattern:$0x75316420]
      %v1847 = vld.sshfl [vmem:[#allocation1 + $0x18] sm:$0xff pattern:$0x75316420]
      %v1848 = vld.sshfl [vmem:[#allocation1 + $0x20] sm:$0xff pattern:$0x75316420]
      %v1849 = vld.sshfl [vmem:[#allocation1 + $0x28] sm:$0xff pattern:$0x75316420]
      %v1850 = vld.sshfl [vmem:[#allocation1 + $0x30] sm:$0xff pattern:$0x75316420]
      %v1851 = vld.sshfl [vmem:[#allocation1 + $0x38] sm:$0xff pattern:$0x75316420]
      %1852 = vst [vmem:[#allocation1] ss:$2 sm:$0xff] %v1805
      %1853 = vst [vmem:[%s1826] ss:$2 sm:$0xff] %v1806
      %1854 = vst [vmem:[%s1828] ss:$2 sm:$0xff] %v1807
      %1855 = vst [vmem:[%s1830] ss:$2 sm:$0xff] %v1808
      %v1856 = vld.sshfl [vmem:[#allocation1] sm:$0xff pattern:$0x75316420]
      %v1857 = vld.sshfl [vmem:[#allocation1 + $0x8] sm:$0xff pattern:$0x75316420]
      %v1858 = vld.sshfl [vmem:[#allocation1 + $0x10] sm:$0xff pattern:$0x75316420]
      %v1859 = vld.sshfl [vmem:[#allocation1 + $0x18] sm:$0xff pattern:$0x75316420]
      %v1860 = vld.sshfl [vmem:[#allocation1 + $0x20] sm:$0xff pattern:$0x75316420]
      %v1861 = vld.sshfl [vmem:[#allocation1 + $0x28] sm:$0xff pattern:$0x75316420]
      %v1862 = vld.sshfl [vmem:[#allocation1 + $0x30] sm:$0xff pattern:$0x75316420]
      %v1863 = vld.sshfl [vmem:[#allocation1 + $0x38] sm:$0xff pattern:$0x75316420]
      %1864 = vst [vmem:[#allocation1] ss:$2 sm:$0xff] %v1809
      %1865 = vst [vmem:[%s1826] ss:$2 sm:$0xff] %v1810
      %v1866 = vld.sshfl [vmem:[#allocation1] sm:$0xff pattern:$0x75316420]
      %v1867 = vld.sshfl [vmem:[#allocation1 + $0x8] sm:$0xff pattern:$0x75316420]
      %v1868 = vld.sshfl [vmem:[#allocation1 + $0x10] sm:$0xff pattern:$0x75316420]
      %v1869 = vld.sshfl [vmem:[#allocation1 + $0x18] sm:$0xff pattern:$0x75316420]
      %1870 = vrot.lane.b32.xlu0 %v1832, 94
      %v1871 = vpop.permute.xlu0 %1870
      %1872 = vrot.lane.b32.xlu0 %v1833, 94
      %v1873 = vpop.permute.xlu0 %1872
      %1874 = vrot.lane.b32.xlu0 %v1834, 94
      %v1875 = vpop.permute.xlu0 %1874
      %1876 = vrot.lane.b32.xlu0 %v1835, 94
      %v1877 = vpop.permute.xlu0 %1876
      %1878 = vrot.lane.b32.xlu0 %v1836, 94
      %v1879 = vpop.permute.xlu0 %1878
      %1880 = vrot.lane.b32.xlu0 %v1837, 94
      %v1881 = vpop.permute.xlu0 %1880
      %1882 = vrot.lane.b32.xlu0 %v1838, 94
      %v1883 = vpop.permute.xlu0 %1882
      %1884 = vrot.lane.b32.xlu0 %v1839, 94
      %v1885 = vpop.permute.xlu0 %1884
      %1886 = vrot.lane.b32.xlu0 %v1844, 94
      %v1887 = vpop.permute.xlu0 %1886
      %1888 = vrot.lane.b32.xlu0 %v1845, 94
      %v1889 = vpop.permute.xlu0 %1888
      %1890 = vrot.lane.b32.xlu0 %v1846, 94
      %v1891 = vpop.permute.xlu0 %1890
      %1892 = vrot.lane.b32.xlu0 %v1847, 94
      %v1893 = vpop.permute.xlu0 %1892
      %1894 = vrot.lane.b32.xlu0 %v1848, 94
      %v1895 = vpop.permute.xlu0 %1894
      %1896 = vrot.lane.b32.xlu0 %v1849, 94
      %v1897 = vpop.permute.xlu0 %1896
      %1898 = vrot.lane.b32.xlu0 %v1850, 94
      %v1899 = vpop.permute.xlu0 %1898
      %1900 = vrot.lane.b32.xlu0 %v1851, 94
      %v1901 = vpop.permute.xlu0 %1900
      %1902 = vrot.lane.b32.xlu0 %v1856, 94
      %v1903 = vpop.permute.xlu0 %1902
      %1904 = vrot.lane.b32.xlu0 %v1857, 94
      %v1905 = vpop.permute.xlu0 %1904
      %1906 = vrot.lane.b32.xlu0 %v1858, 94
      %v1907 = vpop.permute.xlu0 %1906
      %1908 = vrot.lane.b32.xlu0 %v1859, 94
      %v1909 = vpop.permute.xlu0 %1908
      %1910 = vrot.lane.b32.xlu0 %v1860, 94
      %v1911 = vpop.permute.xlu0 %1910
      %1912 = vrot.lane.b32.xlu0 %v1861, 94
      %v1913 = vpop.permute.xlu0 %1912
      %1914 = vrot.lane.b32.xlu0 %v1862, 94
      %v1915 = vpop.permute.xlu0 %1914
      %1916 = vrot.lane.b32.xlu0 %v1863, 94
      %v1917 = vpop.permute.xlu0 %1916
      %1918 = vrot.lane.b32.xlu0 %v1866, 94
      %v1919 = vpop.permute.xlu0 %1918
      %1920 = vrot.lane.b32.xlu0 %v1867, 94
      %v1921 = vpop.permute.xlu0 %1920
      %1922 = vrot.lane.b32.xlu0 %v1868, 94
      %v1923 = vpop.permute.xlu0 %1922
      %1924 = vrot.lane.b32.xlu0 %v1869, 94
      %v1925 = vpop.permute.xlu0 %1924
      %vm1926 = vcmask 769024
      %v1927 = vsel %vm1926, %v1871, %v1873
      %v1928 = vsel %vm1926, %v1873, %v1875
      %v1929 = vsel %vm1926, %v1875, %v1877
      %v1930 = vsel %vm1926, %v1877, %v1879
      %v1931 = vsel %vm1926, %v1879, %v1881
      %v1932 = vsel %vm1926, %v1881, %v1883
      %v1933 = vsel %vm1926, %v1883, %v1885
      %v1934 = vsel %vm1926, %v1885, %v1887
      %v1935 = vsel %vm1926, %v1887, %v1889
      %v1936 = vsel %vm1926, %v1889, %v1891
      %v1937 = vsel %vm1926, %v1891, %v1893
      %v1938 = vsel %vm1926, %v1893, %v1895
      %v1939 = vsel %vm1926, %v1895, %v1897
      %v1940 = vsel %vm1926, %v1897, %v1899
      %v1941 = vsel %vm1926, %v1899, %v1901
      %v1942 = vsel %vm1926, %v1901, %v1903
      %v1943 = vsel %vm1926, %v1903, %v1905
      %v1944 = vsel %vm1926, %v1905, %v1907
      %v1945 = vsel %vm1926, %v1907, %v1909
      %v1946 = vsel %vm1926, %v1909, %v1911
      %v1947 = vsel %vm1926, %v1911, %v1913
      %v1948 = vsel %vm1926, %v1913, %v1915
      %v1949 = vsel %vm1926, %v1915, %v1917
      %v1950 = vsel %vm1926, %v1917, %v1919
      %v1951 = vsel %vm1926, %v1919, %v1921
      %v1952 = vsel %vm1926, %v1921, %v1923
      %v1953 = vsel %vm1926, %v1923, %v1925
      %1982 = vst [vmem:[#allocation2 + $0x380] sm:$0xf] %v1927
      %1983 = vst [vmem:[#allocation2 + $0x388] sm:$0xf] %v1928
      %1984 = vst [vmem:[#allocation2 + $0x390] sm:$0xf] %v1929
      %1985 = vst [vmem:[#allocation2 + $0x398] sm:$0xf] %v1930
      %1986 = vst [vmem:[#allocation2 + $0x3a0] sm:$0xf] %v1931
      %1987 = vst [vmem:[#allocation2 + $0x3a8] sm:$0xf] %v1932
      %1988 = vst [vmem:[#allocation2 + $0x3b0] sm:$0xf] %v1933
      %1989 = vst [vmem:[#allocation2 + $0x3b8] sm:$0xf] %v1934
      %1990 = vst [vmem:[#allocation2 + $0x3c0] sm:$0xf] %v1935
      %1991 = vst [vmem:[#allocation2 + $0x3c8] sm:$0xf] %v1936
      %1992 = vst [vmem:[#allocation2 + $0x3d0] sm:$0xf] %v1937
      %1993 = vst [vmem:[#allocation2 + $0x3d8] sm:$0xf] %v1938
      %1994 = vst [vmem:[#allocation2 + $0x3e0] sm:$0xf] %v1939
      %1995 = vst [vmem:[#allocation2 + $0x3e8] sm:$0xf] %v1940
      %1996 = vst [vmem:[#allocation2 + $0x3f0] sm:$0xf] %v1941
      %1997 = vst [vmem:[#allocation2 + $0x3f8] sm:$0xf] %v1942
      %1998 = vst [vmem:[#allocation2 + $0x400] sm:$0xf] %v1943
      %1999 = vst [vmem:[#allocation2 + $0x408] sm:$0xf] %v1944
      %2000 = vst [vmem:[#allocation2 + $0x410] sm:$0xf] %v1945
      %2001 = vst [vmem:[#allocation2 + $0x418] sm:$0xf] %v1946
      %2002 = vst [vmem:[#allocation2 + $0x420] sm:$0xf] %v1947
      %2003 = vst [vmem:[#allocation2 + $0x428] sm:$0xf] %v1948
      %2004 = vst [vmem:[#allocation2 + $0x430] sm:$0xf] %v1949
      %2005 = vst [vmem:[#allocation2 + $0x438] sm:$0xf] %v1950
      %2006 = vst [vmem:[#allocation2 + $0x440] sm:$0xf] %v1951
      %2007 = vst [vmem:[#allocation2 + $0x448] sm:$0xf] %v1952
      %2008 = vst [vmem:[#allocation2 + $0x450] sm:$0xf] %v1953
      %2009 = vst.msk [vmem:[#allocation2 + $0x458] sm:$0xf] %vm299, %v1925
      %v2010 = vld [vmem:[%s165 + $0x8] sm:$0xff]
      %v2011 = vld [vmem:[%s165 + $0x10] sm:$0xff]
      %v2012 = vld [vmem:[%s165 + $0x18] sm:$0xff]
      %v2013 = vld [vmem:[%s165 + $0x20] sm:$0xff]
      %v2014 = vld [vmem:[%s165 + $0x28] sm:$0xff]
      %v2015 = vld [vmem:[%s165 + $0x30] sm:$0xff]
      %v2016 = vld [vmem:[%s165 + $0x38] sm:$0xff]
      %v2017 = vld [vmem:[%s165 + $0x40] sm:$0xff]
      %v2018 = vld [vmem:[%s165 + $0x48] sm:$0xff]
      %v2019 = vld [vmem:[%s165 + $0x50] sm:$0xff]
      %v2020 = vld [vmem:[%s165 + $0x58] sm:$0xff]
      %v2021 = vld [vmem:[%s165 + $0x60] sm:$0xff]
      %v2022 = vld [vmem:[%s165 + $0x68] sm:$0xff]
      %v2023 = vld [vmem:[%s165 + $0x70] sm:$0xff]
      %s2038 = scalar_lea.vmem [#allocation1], 1
      %2039 = vst [vmem:[%s2038] ss:$2 sm:$0xff] %v2010
      %s2040 = scalar_lea.vmem [#allocation1], 17
      %2041 = vst [vmem:[%s2040] ss:$2 sm:$0xff] %v2011
      %s2042 = scalar_lea.vmem [#allocation1], 33
      %2043 = vst [vmem:[%s2042] ss:$2 sm:$0xff] %v2012
      %s2044 = scalar_lea.vmem [#allocation1], 49
      %2045 = vst [vmem:[%s2044] ss:$2 sm:$0xff] %v2013
      %v2046 = vld.sshfl [vmem:[#allocation1] sm:$0xff pattern:$0x75316420]
      %v2047 = vld.sshfl [vmem:[#allocation1 + $0x8] sm:$0xff pattern:$0x75316420]
      %v2048 = vld.sshfl [vmem:[#allocation1 + $0x10] sm:$0xff pattern:$0x75316420]
      %v2049 = vld.sshfl [vmem:[#allocation1 + $0x18] sm:$0xff pattern:$0x75316420]
      %v2050 = vld.sshfl [vmem:[#allocation1 + $0x20] sm:$0xff pattern:$0x75316420]
      %v2051 = vld.sshfl [vmem:[#allocation1 + $0x28] sm:$0xff pattern:$0x75316420]
      %v2052 = vld.sshfl [vmem:[#allocation1 + $0x30] sm:$0xff pattern:$0x75316420]
      %v2053 = vld.sshfl [vmem:[#allocation1 + $0x38] sm:$0xff pattern:$0x75316420]
      %2054 = vst [vmem:[%s2038] ss:$2 sm:$0xff] %v2014
      %2055 = vst [vmem:[%s2040] ss:$2 sm:$0xff] %v2015
      %2056 = vst [vmem:[%s2042] ss:$2 sm:$0xff] %v2016
      %2057 = vst [vmem:[%s2044] ss:$2 sm:$0xff] %v2017
      %v2058 = vld.sshfl [vmem:[#allocation1] sm:$0xff pattern:$0x75316420]
      %v2059 = vld.sshfl [vmem:[#allocation1 + $0x8] sm:$0xff pattern:$0x75316420]
      %v2060 = vld.sshfl [vmem:[#allocation1 + $0x10] sm:$0xff pattern:$0x75316420]
      %v2061 = vld.sshfl [vmem:[#allocation1 + $0x18] sm:$0xff pattern:$0x75316420]
      %v2062 = vld.sshfl [vmem:[#allocation1 + $0x20] sm:$0xff pattern:$0x75316420]
      %v2063 = vld.sshfl [vmem:[#allocation1 + $0x28] sm:$0xff pattern:$0x75316420]
      %v2064 = vld.sshfl [vmem:[#allocation1 + $0x30] sm:$0xff pattern:$0x75316420]
      %v2065 = vld.sshfl [vmem:[#allocation1 + $0x38] sm:$0xff pattern:$0x75316420]
      %2066 = vst [vmem:[%s2038] ss:$2 sm:$0xff] %v2018
      %2067 = vst [vmem:[%s2040] ss:$2 sm:$0xff] %v2019
      %2068 = vst [vmem:[%s2042] ss:$2 sm:$0xff] %v2020
      %2069 = vst [vmem:[%s2044] ss:$2 sm:$0xff] %v2021
      %v2070 = vld.sshfl [vmem:[#allocation1] sm:$0xff pattern:$0x75316420]
      %v2071 = vld.sshfl [vmem:[#allocation1 + $0x8] sm:$0xff pattern:$0x75316420]
      %v2072 = vld.sshfl [vmem:[#allocation1 + $0x10] sm:$0xff pattern:$0x75316420]
      %v2073 = vld.sshfl [vmem:[#allocation1 + $0x18] sm:$0xff pattern:$0x75316420]
      %v2074 = vld.sshfl [vmem:[#allocation1 + $0x20] sm:$0xff pattern:$0x75316420]
      %v2075 = vld.sshfl [vmem:[#allocation1 + $0x28] sm:$0xff pattern:$0x75316420]
      %v2076 = vld.sshfl [vmem:[#allocation1 + $0x30] sm:$0xff pattern:$0x75316420]
      %v2077 = vld.sshfl [vmem:[#allocation1 + $0x38] sm:$0xff pattern:$0x75316420]
      %2078 = vst [vmem:[%s2038] ss:$2 sm:$0xff] %v2022
      %2079 = vst [vmem:[%s2040] ss:$2 sm:$0xff] %v2023
      %v2080 = vld.sshfl [vmem:[#allocation1] sm:$0xff pattern:$0x75316420]
      %v2081 = vld.sshfl [vmem:[#allocation1 + $0x8] sm:$0xff pattern:$0x75316420]
      %v2082 = vld.sshfl [vmem:[#allocation1 + $0x10] sm:$0xff pattern:$0x75316420]
      %v2083 = vld.sshfl [vmem:[#allocation1 + $0x18] sm:$0xff pattern:$0x75316420]
      %2112 = vst [vmem:[#allocation2 + $0x380] sm:$0xf0] %v2046
      %2113 = vst [vmem:[#allocation2 + $0x388] sm:$0xf0] %v2047
      %2114 = vst [vmem:[#allocation2 + $0x390] sm:$0xf0] %v2048
      %2115 = vst [vmem:[#allocation2 + $0x398] sm:$0xf0] %v2049
      %2116 = vst [vmem:[#allocation2 + $0x3a0] sm:$0xf0] %v2050
      %2117 = vst [vmem:[#allocation2 + $0x3a8] sm:$0xf0] %v2051
      %2118 = vst [vmem:[#allocation2 + $0x3b0] sm:$0xf0] %v2052
      %2119 = vst [vmem:[#allocation2 + $0x3b8] sm:$0xf0] %v2053
      %2120 = vst [vmem:[#allocation2 + $0x3c0] sm:$0xf0] %v2058
      %2121 = vst [vmem:[#allocation2 + $0x3c8] sm:$0xf0] %v2059
      %2122 = vst [vmem:[#allocation2 + $0x3d0] sm:$0xf0] %v2060
      %2123 = vst [vmem:[#allocation2 + $0x3d8] sm:$0xf0] %v2061
      %2124 = vst [vmem:[#allocation2 + $0x3e0] sm:$0xf0] %v2062
      %2125 = vst [vmem:[#allocation2 + $0x3e8] sm:$0xf0] %v2063
      %2126 = vst [vmem:[#allocation2 + $0x3f0] sm:$0xf0] %v2064
      %2127 = vst [vmem:[#allocation2 + $0x3f8] sm:$0xf0] %v2065
      %2128 = vst [vmem:[#allocation2 + $0x400] sm:$0xf0] %v2070
      %2129 = vst [vmem:[#allocation2 + $0x408] sm:$0xf0] %v2071
      %2130 = vst [vmem:[#allocation2 + $0x410] sm:$0xf0] %v2072
      %2131 = vst [vmem:[#allocation2 + $0x418] sm:$0xf0] %v2073
      %2132 = vst [vmem:[#allocation2 + $0x420] sm:$0xf0] %v2074
      %2133 = vst [vmem:[#allocation2 + $0x428] sm:$0xf0] %v2075
      %2134 = vst [vmem:[#allocation2 + $0x430] sm:$0xf0] %v2076
      %2135 = vst [vmem:[#allocation2 + $0x438] sm:$0xf0] %v2077
      %2136 = vst [vmem:[#allocation2 + $0x440] sm:$0xf0] %v2080
      %2137 = vst [vmem:[#allocation2 + $0x448] sm:$0xf0] %v2081
      %2138 = vst [vmem:[#allocation2 + $0x450] sm:$0xf0] %v2082
      %2139 = vst.msk [vmem:[#allocation2 + $0x458] sm:$0xf0] %vm514, %v2083
      %v2140 = vld [vmem:[%s165 + $0x8] sm:$0xff]
      %v2141 = vld [vmem:[%s165 + $0x10] sm:$0xff]
      %v2142 = vld [vmem:[%s165 + $0x18] sm:$0xff]
      %v2143 = vld [vmem:[%s165 + $0x20] sm:$0xff]
      %v2144 = vld [vmem:[%s165 + $0x28] sm:$0xff]
      %v2145 = vld [vmem:[%s165 + $0x30] sm:$0xff]
      %v2146 = vld [vmem:[%s165 + $0x38] sm:$0xff]
      %v2147 = vld [vmem:[%s165 + $0x40] sm:$0xff]
      %v2148 = vld [vmem:[%s165 + $0x48] sm:$0xff]
      %v2149 = vld [vmem:[%s165 + $0x50] sm:$0xff]
      %v2150 = vld [vmem:[%s165 + $0x58] sm:$0xff]
      %v2151 = vld [vmem:[%s165 + $0x60] sm:$0xff]
      %v2152 = vld [vmem:[%s165 + $0x68] sm:$0xff]
      %v2153 = vld [vmem:[%s165 + $0x70] sm:$0xff]
      %2168 = vst [vmem:[#allocation1] ss:$2 sm:$0xff] %v2140
      %s2169 = scalar_lea.vmem [#allocation1], 16
      %2170 = vst [vmem:[%s2169] ss:$2 sm:$0xff] %v2141
      %s2171 = scalar_lea.vmem [#allocation1], 32
      %2172 = vst [vmem:[%s2171] ss:$2 sm:$0xff] %v2142
      %s2173 = scalar_lea.vmem [#allocation1], 48
      %2174 = vst [vmem:[%s2173] ss:$2 sm:$0xff] %v2143
      %v2175 = vld.sshfl [vmem:[#allocation1] sm:$0xff pattern:$0x75316420]
      %v2176 = vld.sshfl [vmem:[#allocation1 + $0x8] sm:$0xff pattern:$0x75316420]
      %v2177 = vld.sshfl [vmem:[#allocation1 + $0x10] sm:$0xff pattern:$0x75316420]
      %v2178 = vld.sshfl [vmem:[#allocation1 + $0x18] sm:$0xff pattern:$0x75316420]
      %v2179 = vld.sshfl [vmem:[#allocation1 + $0x20] sm:$0xff pattern:$0x75316420]
      %v2180 = vld.sshfl [vmem:[#allocation1 + $0x28] sm:$0xff pattern:$0x75316420]
      %v2181 = vld.sshfl [vmem:[#allocation1 + $0x30] sm:$0xff pattern:$0x75316420]
      %v2182 = vld.sshfl [vmem:[#allocation1 + $0x38] sm:$0xff pattern:$0x75316420]
      %2183 = vst [vmem:[#allocation1] ss:$2 sm:$0xff] %v2144
      %2184 = vst [vmem:[%s2169] ss:$2 sm:$0xff] %v2145
      %2185 = vst [vmem:[%s2171] ss:$2 sm:$0xff] %v2146
      %2186 = vst [vmem:[%s2173] ss:$2 sm:$0xff] %v2147
      %v2187 = vld.sshfl [vmem:[#allocation1] sm:$0xff pattern:$0x75316420]
      %v2188 = vld.sshfl [vmem:[#allocation1 + $0x8] sm:$0xff pattern:$0x75316420]
      %v2189 = vld.sshfl [vmem:[#allocation1 + $0x10] sm:$0xff pattern:$0x75316420]
      %v2190 = vld.sshfl [vmem:[#allocation1 + $0x18] sm:$0xff pattern:$0x75316420]
      %v2191 = vld.sshfl [vmem:[#allocation1 + $0x20] sm:$0xff pattern:$0x75316420]
      %v2192 = vld.sshfl [vmem:[#allocation1 + $0x28] sm:$0xff pattern:$0x75316420]
      %v2193 = vld.sshfl [vmem:[#allocation1 + $0x30] sm:$0xff pattern:$0x75316420]
      %v2194 = vld.sshfl [vmem:[#allocation1 + $0x38] sm:$0xff pattern:$0x75316420]
      %2195 = vst [vmem:[#allocation1] ss:$2 sm:$0xff] %v2148
      %2196 = vst [vmem:[%s2169] ss:$2 sm:$0xff] %v2149
      %2197 = vst [vmem:[%s2171] ss:$2 sm:$0xff] %v2150
      %2198 = vst [vmem:[%s2173] ss:$2 sm:$0xff] %v2151
      %v2199 = vld.sshfl [vmem:[#allocation1] sm:$0xff pattern:$0x75316420]
      %v2200 = vld.sshfl [vmem:[#allocation1 + $0x8] sm:$0xff pattern:$0x75316420]
      %v2201 = vld.sshfl [vmem:[#allocation1 + $0x10] sm:$0xff pattern:$0x75316420]
      %v2202 = vld.sshfl [vmem:[#allocation1 + $0x18] sm:$0xff pattern:$0x75316420]
      %v2203 = vld.sshfl [vmem:[#allocation1 + $0x20] sm:$0xff pattern:$0x75316420]
      %v2204 = vld.sshfl [vmem:[#allocation1 + $0x28] sm:$0xff pattern:$0x75316420]
      %v2205 = vld.sshfl [vmem:[#allocation1 + $0x30] sm:$0xff pattern:$0x75316420]
      %v2206 = vld.sshfl [vmem:[#allocation1 + $0x38] sm:$0xff pattern:$0x75316420]
      %2207 = vst [vmem:[#allocation1] ss:$2 sm:$0xff] %v2152
      %2208 = vst [vmem:[%s2169] ss:$2 sm:$0xff] %v2153
      %v2209 = vld.sshfl [vmem:[#allocation1] sm:$0xff pattern:$0x75316420]
      %v2210 = vld.sshfl [vmem:[#allocation1 + $0x8] sm:$0xff pattern:$0x75316420]
      %v2211 = vld.sshfl [vmem:[#allocation1 + $0x10] sm:$0xff pattern:$0x75316420]
      %v2212 = vld.sshfl [vmem:[#allocation1 + $0x18] sm:$0xff pattern:$0x75316420]
      %2213 = vrot.lane.b32.xlu0 %v2175, 127
      %v2214 = vpop.permute.xlu0 %2213
      %2215 = vrot.lane.b32.xlu0 %v2176, 127
      %v2216 = vpop.permute.xlu0 %2215
      %2217 = vrot.lane.b32.xlu0 %v2177, 127
      %v2218 = vpop.permute.xlu0 %2217
      %2219 = vrot.lane.b32.xlu0 %v2178, 127
      %v2220 = vpop.permute.xlu0 %2219
      %2221 = vrot.lane.b32.xlu0 %v2179, 127
      %v2222 = vpop.permute.xlu0 %2221
      %2223 = vrot.lane.b32.xlu0 %v2180, 127
      %v2224 = vpop.permute.xlu0 %2223
      %2225 = vrot.lane.b32.xlu0 %v2181, 127
      %v2226 = vpop.permute.xlu0 %2225
      %2227 = vrot.lane.b32.xlu0 %v2182, 127
      %v2228 = vpop.permute.xlu0 %2227
      %2229 = vrot.lane.b32.xlu0 %v2187, 127
      %v2230 = vpop.permute.xlu0 %2229
      %2231 = vrot.lane.b32.xlu0 %v2188, 127
      %v2232 = vpop.permute.xlu0 %2231
      %2233 = vrot.lane.b32.xlu0 %v2189, 127
      %v2234 = vpop.permute.xlu0 %2233
      %2235 = vrot.lane.b32.xlu0 %v2190, 127
      %v2236 = vpop.permute.xlu0 %2235
      %2237 = vrot.lane.b32.xlu0 %v2191, 127
      %v2238 = vpop.permute.xlu0 %2237
      %2239 = vrot.lane.b32.xlu0 %v2192, 127
      %v2240 = vpop.permute.xlu0 %2239
      %2241 = vrot.lane.b32.xlu0 %v2193, 127
      %v2242 = vpop.permute.xlu0 %2241
      %2243 = vrot.lane.b32.xlu0 %v2194, 127
      %v2244 = vpop.permute.xlu0 %2243
      %2245 = vrot.lane.b32.xlu0 %v2199, 127
      %v2246 = vpop.permute.xlu0 %2245
      %2247 = vrot.lane.b32.xlu0 %v2200, 127
      %v2248 = vpop.permute.xlu0 %2247
      %2249 = vrot.lane.b32.xlu0 %v2201, 127
      %v2250 = vpop.permute.xlu0 %2249
      %2251 = vrot.lane.b32.xlu0 %v2202, 127
      %v2252 = vpop.permute.xlu0 %2251
      %2253 = vrot.lane.b32.xlu0 %v2203, 127
      %v2254 = vpop.permute.xlu0 %2253
      %2255 = vrot.lane.b32.xlu0 %v2204, 127
      %v2256 = vpop.permute.xlu0 %2255
      %2257 = vrot.lane.b32.xlu0 %v2205, 127
      %v2258 = vpop.permute.xlu0 %2257
      %2259 = vrot.lane.b32.xlu0 %v2206, 127
      %v2260 = vpop.permute.xlu0 %2259
      %2261 = vrot.lane.b32.xlu0 %v2209, 127
      %v2262 = vpop.permute.xlu0 %2261
      %2263 = vrot.lane.b32.xlu0 %v2210, 127
      %v2264 = vpop.permute.xlu0 %2263
      %2265 = vrot.lane.b32.xlu0 %v2211, 127
      %v2266 = vpop.permute.xlu0 %2265
      %2267 = vrot.lane.b32.xlu0 %v2212, 127
      %v2268 = vpop.permute.xlu0 %2267
      %v2269 = vsel %vm431, %v2214, %v2216
      %v2270 = vsel %vm431, %v2216, %v2218
      %v2271 = vsel %vm431, %v2218, %v2220
      %v2272 = vsel %vm431, %v2220, %v2222
      %v2273 = vsel %vm431, %v2222, %v2224
      %v2274 = vsel %vm431, %v2224, %v2226
      %v2275 = vsel %vm431, %v2226, %v2228
      %v2276 = vsel %vm431, %v2228, %v2230
      %v2277 = vsel %vm431, %v2230, %v2232
      %v2278 = vsel %vm431, %v2232, %v2234
      %v2279 = vsel %vm431, %v2234, %v2236
      %v2280 = vsel %vm431, %v2236, %v2238
      %v2281 = vsel %vm431, %v2238, %v2240
      %v2282 = vsel %vm431, %v2240, %v2242
      %v2283 = vsel %vm431, %v2242, %v2244
      %v2284 = vsel %vm431, %v2244, %v2246
      %v2285 = vsel %vm431, %v2246, %v2248
      %v2286 = vsel %vm431, %v2248, %v2250
      %v2287 = vsel %vm431, %v2250, %v2252
      %v2288 = vsel %vm431, %v2252, %v2254
      %v2289 = vsel %vm431, %v2254, %v2256
      %v2290 = vsel %vm431, %v2256, %v2258
      %v2291 = vsel %vm431, %v2258, %v2260
      %v2292 = vsel %vm431, %v2260, %v2262
      %v2293 = vsel %vm431, %v2262, %v2264
      %v2294 = vsel %vm431, %v2264, %v2266
      %v2295 = vsel %vm431, %v2266, %v2268
      %2324 = vst [vmem:[#allocation2 + $0x460] sm:$0xf] %v2269
      %2325 = vst [vmem:[#allocation2 + $0x468] sm:$0xf] %v2270
      %2326 = vst [vmem:[#allocation2 + $0x470] sm:$0xf] %v2271
      %2327 = vst [vmem:[#allocation2 + $0x478] sm:$0xf] %v2272
      %2328 = vst [vmem:[#allocation2 + $0x480] sm:$0xf] %v2273
      %2329 = vst [vmem:[#allocation2 + $0x488] sm:$0xf] %v2274
      %2330 = vst [vmem:[#allocation2 + $0x490] sm:$0xf] %v2275
      %2331 = vst [vmem:[#allocation2 + $0x498] sm:$0xf] %v2276
      %2332 = vst [vmem:[#allocation2 + $0x4a0] sm:$0xf] %v2277
      %2333 = vst [vmem:[#allocation2 + $0x4a8] sm:$0xf] %v2278
      %2334 = vst [vmem:[#allocation2 + $0x4b0] sm:$0xf] %v2279
      %2335 = vst [vmem:[#allocation2 + $0x4b8] sm:$0xf] %v2280
      %2336 = vst [vmem:[#allocation2 + $0x4c0] sm:$0xf] %v2281
      %2337 = vst [vmem:[#allocation2 + $0x4c8] sm:$0xf] %v2282
      %2338 = vst [vmem:[#allocation2 + $0x4d0] sm:$0xf] %v2283
      %2339 = vst [vmem:[#allocation2 + $0x4d8] sm:$0xf] %v2284
      %2340 = vst [vmem:[#allocation2 + $0x4e0] sm:$0xf] %v2285
      %2341 = vst [vmem:[#allocation2 + $0x4e8] sm:$0xf] %v2286
      %2342 = vst [vmem:[#allocation2 + $0x4f0] sm:$0xf] %v2287
      %2343 = vst [vmem:[#allocation2 + $0x4f8] sm:$0xf] %v2288
      %2344 = vst [vmem:[#allocation2 + $0x500] sm:$0xf] %v2289
      %2345 = vst [vmem:[#allocation2 + $0x508] sm:$0xf] %v2290
      %2346 = vst [vmem:[#allocation2 + $0x510] sm:$0xf] %v2291
      %2347 = vst [vmem:[#allocation2 + $0x518] sm:$0xf] %v2292
      %2348 = vst [vmem:[#allocation2 + $0x520] sm:$0xf] %v2293
      %2349 = vst [vmem:[#allocation2 + $0x528] sm:$0xf] %v2294
      %2350 = vst [vmem:[#allocation2 + $0x530] sm:$0xf] %v2295
      %2351 = vst.msk [vmem:[#allocation2 + $0x538] sm:$0xf] %vm299, %v2268
      %v2352 = vld [vmem:[%s165 + $0x8] sm:$0xff]
      %v2353 = vld [vmem:[%s165 + $0x10] sm:$0xff]
      %v2354 = vld [vmem:[%s165 + $0x18] sm:$0xff]
      %v2355 = vld [vmem:[%s165 + $0x20] sm:$0xff]
      %v2356 = vld [vmem:[%s165 + $0x28] sm:$0xff]
      %v2357 = vld [vmem:[%s165 + $0x30] sm:$0xff]
      %v2358 = vld [vmem:[%s165 + $0x38] sm:$0xff]
      %v2359 = vld [vmem:[%s165 + $0x40] sm:$0xff]
      %v2360 = vld [vmem:[%s165 + $0x48] sm:$0xff]
      %v2361 = vld [vmem:[%s165 + $0x50] sm:$0xff]
      %v2362 = vld [vmem:[%s165 + $0x58] sm:$0xff]
      %v2363 = vld [vmem:[%s165 + $0x60] sm:$0xff]
      %v2364 = vld [vmem:[%s165 + $0x68] sm:$0xff]
      %v2365 = vld [vmem:[%s165 + $0x70] sm:$0xff]
      %s2380 = scalar_lea.vmem [#allocation1], 1
      %2381 = vst [vmem:[%s2380] ss:$2 sm:$0xff] %v2352
      %s2382 = scalar_lea.vmem [#allocation1], 17
      %2383 = vst [vmem:[%s2382] ss:$2 sm:$0xff] %v2353
      %s2384 = scalar_lea.vmem [#allocation1], 33
      %2385 = vst [vmem:[%s2384] ss:$2 sm:$0xff] %v2354
      %s2386 = scalar_lea.vmem [#allocation1], 49
      %2387 = vst [vmem:[%s2386] ss:$2 sm:$0xff] %v2355
      %v2388 = vld.sshfl [vmem:[#allocation1] sm:$0xff pattern:$0x75316420]
      %v2389 = vld.sshfl [vmem:[#allocation1 + $0x8] sm:$0xff pattern:$0x75316420]
      %v2390 = vld.sshfl [vmem:[#allocation1 + $0x10] sm:$0xff pattern:$0x75316420]
      %v2391 = vld.sshfl [vmem:[#allocation1 + $0x18] sm:$0xff pattern:$0x75316420]
      %v2392 = vld.sshfl [vmem:[#allocation1 + $0x20] sm:$0xff pattern:$0x75316420]
      %v2393 = vld.sshfl [vmem:[#allocation1 + $0x28] sm:$0xff pattern:$0x75316420]
      %v2394 = vld.sshfl [vmem:[#allocation1 + $0x30] sm:$0xff pattern:$0x75316420]
      %v2395 = vld.sshfl [vmem:[#allocation1 + $0x38] sm:$0xff pattern:$0x75316420]
      %2396 = vst [vmem:[%s2380] ss:$2 sm:$0xff] %v2356
      %2397 = vst [vmem:[%s2382] ss:$2 sm:$0xff] %v2357
      %2398 = vst [vmem:[%s2384] ss:$2 sm:$0xff] %v2358
      %2399 = vst [vmem:[%s2386] ss:$2 sm:$0xff] %v2359
      %v2400 = vld.sshfl [vmem:[#allocation1] sm:$0xff pattern:$0x75316420]
      %v2401 = vld.sshfl [vmem:[#allocation1 + $0x8] sm:$0xff pattern:$0x75316420]
      %v2402 = vld.sshfl [vmem:[#allocation1 + $0x10] sm:$0xff pattern:$0x75316420]
      %v2403 = vld.sshfl [vmem:[#allocation1 + $0x18] sm:$0xff pattern:$0x75316420]
      %v2404 = vld.sshfl [vmem:[#allocation1 + $0x20] sm:$0xff pattern:$0x75316420]
      %v2405 = vld.sshfl [vmem:[#allocation1 + $0x28] sm:$0xff pattern:$0x75316420]
      %v2406 = vld.sshfl [vmem:[#allocation1 + $0x30] sm:$0xff pattern:$0x75316420]
      %v2407 = vld.sshfl [vmem:[#allocation1 + $0x38] sm:$0xff pattern:$0x75316420]
      %2408 = vst [vmem:[%s2380] ss:$2 sm:$0xff] %v2360
      %2409 = vst [vmem:[%s2382] ss:$2 sm:$0xff] %v2361
      %2410 = vst [vmem:[%s2384] ss:$2 sm:$0xff] %v2362
      %2411 = vst [vmem:[%s2386] ss:$2 sm:$0xff] %v2363
      %v2412 = vld.sshfl [vmem:[#allocation1] sm:$0xff pattern:$0x75316420]
      %v2413 = vld.sshfl [vmem:[#allocation1 + $0x8] sm:$0xff pattern:$0x75316420]
      %v2414 = vld.sshfl [vmem:[#allocation1 + $0x10] sm:$0xff pattern:$0x75316420]
      %v2415 = vld.sshfl [vmem:[#allocation1 + $0x18] sm:$0xff pattern:$0x75316420]
      %v2416 = vld.sshfl [vmem:[#allocation1 + $0x20] sm:$0xff pattern:$0x75316420]
      %v2417 = vld.sshfl [vmem:[#allocation1 + $0x28] sm:$0xff pattern:$0x75316420]
      %v2418 = vld.sshfl [vmem:[#allocation1 + $0x30] sm:$0xff pattern:$0x75316420]
      %v2419 = vld.sshfl [vmem:[#allocation1 + $0x38] sm:$0xff pattern:$0x75316420]
      %2420 = vst [vmem:[%s2380] ss:$2 sm:$0xff] %v2364
      %2421 = vst [vmem:[%s2382] ss:$2 sm:$0xff] %v2365
      %v2422 = vld.sshfl [vmem:[#allocation1] sm:$0xff pattern:$0x75316420]
      %v2423 = vld.sshfl [vmem:[#allocation1 + $0x8] sm:$0xff pattern:$0x75316420]
      %v2424 = vld.sshfl [vmem:[#allocation1 + $0x10] sm:$0xff pattern:$0x75316420]
      %v2425 = vld.sshfl [vmem:[#allocation1 + $0x18] sm:$0xff pattern:$0x75316420]
      %2426 = vrot.lane.b32.xlu0 %v2388, 126
      %v2427 = vpop.permute.xlu0 %2426
      %2428 = vrot.lane.b32.xlu0 %v2389, 126
      %v2429 = vpop.permute.xlu0 %2428
      %2430 = vrot.lane.b32.xlu0 %v2390, 126
      %v2431 = vpop.permute.xlu0 %2430
      %2432 = vrot.lane.b32.xlu0 %v2391, 126
      %v2433 = vpop.permute.xlu0 %2432
      %2434 = vrot.lane.b32.xlu0 %v2392, 126
      %v2435 = vpop.permute.xlu0 %2434
      %2436 = vrot.lane.b32.xlu0 %v2393, 126
      %v2437 = vpop.permute.xlu0 %2436
      %2438 = vrot.lane.b32.xlu0 %v2394, 126
      %v2439 = vpop.permute.xlu0 %2438
      %2440 = vrot.lane.b32.xlu0 %v2395, 126
      %v2441 = vpop.permute.xlu0 %2440
      %2442 = vrot.lane.b32.xlu0 %v2400, 126
      %v2443 = vpop.permute.xlu0 %2442
      %2444 = vrot.lane.b32.xlu0 %v2401, 126
      %v2445 = vpop.permute.xlu0 %2444
      %2446 = vrot.lane.b32.xlu0 %v2402, 126
      %v2447 = vpop.permute.xlu0 %2446
      %2448 = vrot.lane.b32.xlu0 %v2403, 126
      %v2449 = vpop.permute.xlu0 %2448
      %2450 = vrot.lane.b32.xlu0 %v2404, 126
      %v2451 = vpop.permute.xlu0 %2450
      %2452 = vrot.lane.b32.xlu0 %v2405, 126
      %v2453 = vpop.permute.xlu0 %2452
      %2454 = vrot.lane.b32.xlu0 %v2406, 126
      %v2455 = vpop.permute.xlu0 %2454
      %2456 = vrot.lane.b32.xlu0 %v2407, 126
      %v2457 = vpop.permute.xlu0 %2456
      %2458 = vrot.lane.b32.xlu0 %v2412, 126
      %v2459 = vpop.permute.xlu0 %2458
      %2460 = vrot.lane.b32.xlu0 %v2413, 126
      %v2461 = vpop.permute.xlu0 %2460
      %2462 = vrot.lane.b32.xlu0 %v2414, 126
      %v2463 = vpop.permute.xlu0 %2462
      %2464 = vrot.lane.b32.xlu0 %v2415, 126
      %v2465 = vpop.permute.xlu0 %2464
      %2466 = vrot.lane.b32.xlu0 %v2416, 126
      %v2467 = vpop.permute.xlu0 %2466
      %2468 = vrot.lane.b32.xlu0 %v2417, 126
      %v2469 = vpop.permute.xlu0 %2468
      %2470 = vrot.lane.b32.xlu0 %v2418, 126
      %v2471 = vpop.permute.xlu0 %2470
      %2472 = vrot.lane.b32.xlu0 %v2419, 126
      %v2473 = vpop.permute.xlu0 %2472
      %2474 = vrot.lane.b32.xlu0 %v2422, 126
      %v2475 = vpop.permute.xlu0 %2474
      %2476 = vrot.lane.b32.xlu0 %v2423, 126
      %v2477 = vpop.permute.xlu0 %2476
      %2478 = vrot.lane.b32.xlu0 %v2424, 126
      %v2479 = vpop.permute.xlu0 %2478
      %2480 = vrot.lane.b32.xlu0 %v2425, 126
      %v2481 = vpop.permute.xlu0 %2480
      %v2482 = vsel %vm645, %v2427, %v2429
      %v2483 = vsel %vm645, %v2429, %v2431
      %v2484 = vsel %vm645, %v2431, %v2433
      %v2485 = vsel %vm645, %v2433, %v2435
      %v2486 = vsel %vm645, %v2435, %v2437
      %v2487 = vsel %vm645, %v2437, %v2439
      %v2488 = vsel %vm645, %v2439, %v2441
      %v2489 = vsel %vm645, %v2441, %v2443
      %v2490 = vsel %vm645, %v2443, %v2445
      %v2491 = vsel %vm645, %v2445, %v2447
      %v2492 = vsel %vm645, %v2447, %v2449
      %v2493 = vsel %vm645, %v2449, %v2451
      %v2494 = vsel %vm645, %v2451, %v2453
      %v2495 = vsel %vm645, %v2453, %v2455
      %v2496 = vsel %vm645, %v2455, %v2457
      %v2497 = vsel %vm645, %v2457, %v2459
      %v2498 = vsel %vm645, %v2459, %v2461
      %v2499 = vsel %vm645, %v2461, %v2463
      %v2500 = vsel %vm645, %v2463, %v2465
      %v2501 = vsel %vm645, %v2465, %v2467
      %v2502 = vsel %vm645, %v2467, %v2469
      %v2503 = vsel %vm645, %v2469, %v2471
      %v2504 = vsel %vm645, %v2471, %v2473
      %v2505 = vsel %vm645, %v2473, %v2475
      %v2506 = vsel %vm645, %v2475, %v2477
      %v2507 = vsel %vm645, %v2477, %v2479
      %v2508 = vsel %vm645, %v2479, %v2481
      %2537 = vst [vmem:[#allocation2 + $0x460] sm:$0xf0] %v2482
      %2538 = vst [vmem:[#allocation2 + $0x468] sm:$0xf0] %v2483
      %2539 = vst [vmem:[#allocation2 + $0x470] sm:$0xf0] %v2484
      %2540 = vst [vmem:[#allocation2 + $0x478] sm:$0xf0] %v2485
      %2541 = vst [vmem:[#allocation2 + $0x480] sm:$0xf0] %v2486
      %2542 = vst [vmem:[#allocation2 + $0x488] sm:$0xf0] %v2487
      %2543 = vst [vmem:[#allocation2 + $0x490] sm:$0xf0] %v2488
      %2544 = vst [vmem:[#allocation2 + $0x498] sm:$0xf0] %v2489
      %2545 = vst [vmem:[#allocation2 + $0x4a0] sm:$0xf0] %v2490
      %2546 = vst [vmem:[#allocation2 + $0x4a8] sm:$0xf0] %v2491
      %2547 = vst [vmem:[#allocation2 + $0x4b0] sm:$0xf0] %v2492
      %2548 = vst [vmem:[#allocation2 + $0x4b8] sm:$0xf0] %v2493
      %2549 = vst [vmem:[#allocation2 + $0x4c0] sm:$0xf0] %v2494
      %2550 = vst [vmem:[#allocation2 + $0x4c8] sm:$0xf0] %v2495
      %2551 = vst [vmem:[#allocation2 + $0x4d0] sm:$0xf0] %v2496
      %2552 = vst [vmem:[#allocation2 + $0x4d8] sm:$0xf0] %v2497
      %2553 = vst [vmem:[#allocation2 + $0x4e0] sm:$0xf0] %v2498
      %2554 = vst [vmem:[#allocation2 + $0x4e8] sm:$0xf0] %v2499
      %2555 = vst [vmem:[#allocation2 + $0x4f0] sm:$0xf0] %v2500
      %2556 = vst [vmem:[#allocation2 + $0x4f8] sm:$0xf0] %v2501
      %2557 = vst [vmem:[#allocation2 + $0x500] sm:$0xf0] %v2502
      %2558 = vst [vmem:[#allocation2 + $0x508] sm:$0xf0] %v2503
      %2559 = vst [vmem:[#allocation2 + $0x510] sm:$0xf0] %v2504
      %2560 = vst [vmem:[#allocation2 + $0x518] sm:$0xf0] %v2505
      %2561 = vst [vmem:[#allocation2 + $0x520] sm:$0xf0] %v2506
      %2562 = vst [vmem:[#allocation2 + $0x528] sm:$0xf0] %v2507
      %2563 = vst [vmem:[#allocation2 + $0x530] sm:$0xf0] %v2508
      %2564 = vst.msk [vmem:[#allocation2 + $0x538] sm:$0xf0] %vm514, %v2481
      %v2565 = vld [vmem:[%s165 + $0x8] sm:$0xff]
      %v2566 = vld [vmem:[%s165 + $0x10] sm:$0xff]
      %v2567 = vld [vmem:[%s165 + $0x18] sm:$0xff]
      %v2568 = vld [vmem:[%s165 + $0x20] sm:$0xff]
      %v2569 = vld [vmem:[%s165 + $0x28] sm:$0xff]
      %v2570 = vld [vmem:[%s165 + $0x30] sm:$0xff]
      %v2571 = vld [vmem:[%s165 + $0x38] sm:$0xff]
      %v2572 = vld [vmem:[%s165 + $0x40] sm:$0xff]
      %v2573 = vld [vmem:[%s165 + $0x48] sm:$0xff]
      %v2574 = vld [vmem:[%s165 + $0x50] sm:$0xff]
      %v2575 = vld [vmem:[%s165 + $0x58] sm:$0xff]
      %v2576 = vld [vmem:[%s165 + $0x60] sm:$0xff]
      %v2577 = vld [vmem:[%s165 + $0x68] sm:$0xff]
      %v2578 = vld [vmem:[%s165 + $0x70] sm:$0xff]
      %2593 = vst [vmem:[#allocation1] ss:$2 sm:$0xff] %v2565
      %s2594 = scalar_lea.vmem [#allocation1], 16
      %2595 = vst [vmem:[%s2594] ss:$2 sm:$0xff] %v2566
      %s2596 = scalar_lea.vmem [#allocation1], 32
      %2597 = vst [vmem:[%s2596] ss:$2 sm:$0xff] %v2567
      %s2598 = scalar_lea.vmem [#allocation1], 48
      %2599 = vst [vmem:[%s2598] ss:$2 sm:$0xff] %v2568
      %v2600 = vld.sshfl [vmem:[#allocation1] sm:$0xff pattern:$0x75316420]
      %v2601 = vld.sshfl [vmem:[#allocation1 + $0x8] sm:$0xff pattern:$0x75316420]
      %v2602 = vld.sshfl [vmem:[#allocation1 + $0x10] sm:$0xff pattern:$0x75316420]
      %v2603 = vld.sshfl [vmem:[#allocation1 + $0x18] sm:$0xff pattern:$0x75316420]
      %v2604 = vld.sshfl [vmem:[#allocation1 + $0x20] sm:$0xff pattern:$0x75316420]
      %v2605 = vld.sshfl [vmem:[#allocation1 + $0x28] sm:$0xff pattern:$0x75316420]
      %v2606 = vld.sshfl [vmem:[#allocation1 + $0x30] sm:$0xff pattern:$0x75316420]
      %v2607 = vld.sshfl [vmem:[#allocation1 + $0x38] sm:$0xff pattern:$0x75316420]
      %2608 = vst [vmem:[#allocation1] ss:$2 sm:$0xff] %v2569
      %2609 = vst [vmem:[%s2594] ss:$2 sm:$0xff] %v2570
      %2610 = vst [vmem:[%s2596] ss:$2 sm:$0xff] %v2571
      %2611 = vst [vmem:[%s2598] ss:$2 sm:$0xff] %v2572
      %v2612 = vld.sshfl [vmem:[#allocation1] sm:$0xff pattern:$0x75316420]
      %v2613 = vld.sshfl [vmem:[#allocation1 + $0x8] sm:$0xff pattern:$0x75316420]
      %v2614 = vld.sshfl [vmem:[#allocation1 + $0x10] sm:$0xff pattern:$0x75316420]
      %v2615 = vld.sshfl [vmem:[#allocation1 + $0x18] sm:$0xff pattern:$0x75316420]
      %v2616 = vld.sshfl [vmem:[#allocation1 + $0x20] sm:$0xff pattern:$0x75316420]
      %v2617 = vld.sshfl [vmem:[#allocation1 + $0x28] sm:$0xff pattern:$0x75316420]
      %v2618 = vld.sshfl [vmem:[#allocation1 + $0x30] sm:$0xff pattern:$0x75316420]
      %v2619 = vld.sshfl [vmem:[#allocation1 + $0x38] sm:$0xff pattern:$0x75316420]
      %2620 = vst [vmem:[#allocation1] ss:$2 sm:$0xff] %v2573
      %2621 = vst [vmem:[%s2594] ss:$2 sm:$0xff] %v2574
      %2622 = vst [vmem:[%s2596] ss:$2 sm:$0xff] %v2575
      %2623 = vst [vmem:[%s2598] ss:$2 sm:$0xff] %v2576
      %v2624 = vld.sshfl [vmem:[#allocation1] sm:$0xff pattern:$0x75316420]
      %v2625 = vld.sshfl [vmem:[#allocation1 + $0x8] sm:$0xff pattern:$0x75316420]
      %v2626 = vld.sshfl [vmem:[#allocation1 + $0x10] sm:$0xff pattern:$0x75316420]
      %v2627 = vld.sshfl [vmem:[#allocation1 + $0x18] sm:$0xff pattern:$0x75316420]
      %v2628 = vld.sshfl [vmem:[#allocation1 + $0x20] sm:$0xff pattern:$0x75316420]
      %v2629 = vld.sshfl [vmem:[#allocation1 + $0x28] sm:$0xff pattern:$0x75316420]
      %v2630 = vld.sshfl [vmem:[#allocation1 + $0x30] sm:$0xff pattern:$0x75316420]
      %v2631 = vld.sshfl [vmem:[#allocation1 + $0x38] sm:$0xff pattern:$0x75316420]
      %2632 = vst [vmem:[#allocation1] ss:$2 sm:$0xff] %v2577
      %2633 = vst [vmem:[%s2594] ss:$2 sm:$0xff] %v2578
      %v2634 = vld.sshfl [vmem:[#allocation1] sm:$0xff pattern:$0x75316420]
      %v2635 = vld.sshfl [vmem:[#allocation1 + $0x8] sm:$0xff pattern:$0x75316420]
      %v2636 = vld.sshfl [vmem:[#allocation1 + $0x10] sm:$0xff pattern:$0x75316420]
      %v2637 = vld.sshfl [vmem:[#allocation1 + $0x18] sm:$0xff pattern:$0x75316420]
      %2638 = vrot.lane.b32.xlu0 %v2600, 112
      %v2639 = vpop.permute.xlu0 %2638
      %2640 = vrot.lane.b32.xlu0 %v2601, 112
      %v2641 = vpop.permute.xlu0 %2640
      %2642 = vrot.lane.b32.xlu0 %v2602, 112
      %v2643 = vpop.permute.xlu0 %2642
      %2644 = vrot.lane.b32.xlu0 %v2603, 112
      %v2645 = vpop.permute.xlu0 %2644
      %2646 = vrot.lane.b32.xlu0 %v2604, 112
      %v2647 = vpop.permute.xlu0 %2646
      %2648 = vrot.lane.b32.xlu0 %v2605, 112
      %v2649 = vpop.permute.xlu0 %2648
      %2650 = vrot.lane.b32.xlu0 %v2606, 112
      %v2651 = vpop.permute.xlu0 %2650
      %2652 = vrot.lane.b32.xlu0 %v2607, 112
      %v2653 = vpop.permute.xlu0 %2652
      %2654 = vrot.lane.b32.xlu0 %v2612, 112
      %v2655 = vpop.permute.xlu0 %2654
      %2656 = vrot.lane.b32.xlu0 %v2613, 112
      %v2657 = vpop.permute.xlu0 %2656
      %2658 = vrot.lane.b32.xlu0 %v2614, 112
      %v2659 = vpop.permute.xlu0 %2658
      %2660 = vrot.lane.b32.xlu0 %v2615, 112
      %v2661 = vpop.permute.xlu0 %2660
      %2662 = vrot.lane.b32.xlu0 %v2616, 112
      %v2663 = vpop.permute.xlu0 %2662
      %2664 = vrot.lane.b32.xlu0 %v2617, 112
      %v2665 = vpop.permute.xlu0 %2664
      %2666 = vrot.lane.b32.xlu0 %v2618, 112
      %v2667 = vpop.permute.xlu0 %2666
      %2668 = vrot.lane.b32.xlu0 %v2619, 112
      %v2669 = vpop.permute.xlu0 %2668
      %2670 = vrot.lane.b32.xlu0 %v2624, 112
      %v2671 = vpop.permute.xlu0 %2670
      %2672 = vrot.lane.b32.xlu0 %v2625, 112
      %v2673 = vpop.permute.xlu0 %2672
      %2674 = vrot.lane.b32.xlu0 %v2626, 112
      %v2675 = vpop.permute.xlu0 %2674
      %2676 = vrot.lane.b32.xlu0 %v2627, 112
      %v2677 = vpop.permute.xlu0 %2676
      %2678 = vrot.lane.b32.xlu0 %v2628, 112
      %v2679 = vpop.permute.xlu0 %2678
      %2680 = vrot.lane.b32.xlu0 %v2629, 112
      %v2681 = vpop.permute.xlu0 %2680
      %2682 = vrot.lane.b32.xlu0 %v2630, 112
      %v2683 = vpop.permute.xlu0 %2682
      %2684 = vrot.lane.b32.xlu0 %v2631, 112
      %v2685 = vpop.permute.xlu0 %2684
      %2686 = vrot.lane.b32.xlu0 %v2634, 112
      %v2687 = vpop.permute.xlu0 %2686
      %2688 = vrot.lane.b32.xlu0 %v2635, 112
      %v2689 = vpop.permute.xlu0 %2688
      %2690 = vrot.lane.b32.xlu0 %v2636, 112
      %v2691 = vpop.permute.xlu0 %2690
      %2692 = vrot.lane.b32.xlu0 %v2637, 112
      %v2693 = vpop.permute.xlu0 %2692
      %v2694 = vsel %vm859, %v2639, %v2641
      %v2695 = vsel %vm859, %v2641, %v2643
      %v2696 = vsel %vm859, %v2643, %v2645
      %v2697 = vsel %vm859, %v2645, %v2647
      %v2698 = vsel %vm859, %v2647, %v2649
      %v2699 = vsel %vm859, %v2649, %v2651
      %v2700 = vsel %vm859, %v2651, %v2653
      %v2701 = vsel %vm859, %v2653, %v2655
      %v2702 = vsel %vm859, %v2655, %v2657
      %v2703 = vsel %vm859, %v2657, %v2659
      %v2704 = vsel %vm859, %v2659, %v2661
      %v2705 = vsel %vm859, %v2661, %v2663
      %v2706 = vsel %vm859, %v2663, %v2665
      %v2707 = vsel %vm859, %v2665, %v2667
      %v2708 = vsel %vm859, %v2667, %v2669
      %v2709 = vsel %vm859, %v2669, %v2671
      %v2710 = vsel %vm859, %v2671, %v2673
      %v2711 = vsel %vm859, %v2673, %v2675
      %v2712 = vsel %vm859, %v2675, %v2677
      %v2713 = vsel %vm859, %v2677, %v2679
      %v2714 = vsel %vm859, %v2679, %v2681
      %v2715 = vsel %vm859, %v2681, %v2683
      %v2716 = vsel %vm859, %v2683, %v2685
      %v2717 = vsel %vm859, %v2685, %v2687
      %v2718 = vsel %vm859, %v2687, %v2689
      %v2719 = vsel %vm859, %v2689, %v2691
      %v2720 = vsel %vm859, %v2691, %v2693
      %2749 = vst [vmem:[#allocation2 + $0x540] sm:$0xf] %v2694
      %2750 = vst [vmem:[#allocation2 + $0x548] sm:$0xf] %v2695
      %2751 = vst [vmem:[#allocation2 + $0x550] sm:$0xf] %v2696
      %2752 = vst [vmem:[#allocation2 + $0x558] sm:$0xf] %v2697
      %2753 = vst [vmem:[#allocation2 + $0x560] sm:$0xf] %v2698
      %2754 = vst [vmem:[#allocation2 + $0x568] sm:$0xf] %v2699
      %2755 = vst [vmem:[#allocation2 + $0x570] sm:$0xf] %v2700
      %2756 = vst [vmem:[#allocation2 + $0x578] sm:$0xf] %v2701
      %2757 = vst [vmem:[#allocation2 + $0x580] sm:$0xf] %v2702
      %2758 = vst [vmem:[#allocation2 + $0x588] sm:$0xf] %v2703
      %2759 = vst [vmem:[#allocation2 + $0x590] sm:$0xf] %v2704
      %2760 = vst [vmem:[#allocation2 + $0x598] sm:$0xf] %v2705
      %2761 = vst [vmem:[#allocation2 + $0x5a0] sm:$0xf] %v2706
      %2762 = vst [vmem:[#allocation2 + $0x5a8] sm:$0xf] %v2707
      %2763 = vst [vmem:[#allocation2 + $0x5b0] sm:$0xf] %v2708
      %2764 = vst [vmem:[#allocation2 + $0x5b8] sm:$0xf] %v2709
      %2765 = vst [vmem:[#allocation2 + $0x5c0] sm:$0xf] %v2710
      %2766 = vst [vmem:[#allocation2 + $0x5c8] sm:$0xf] %v2711
      %2767 = vst [vmem:[#allocation2 + $0x5d0] sm:$0xf] %v2712
      %2768 = vst [vmem:[#allocation2 + $0x5d8] sm:$0xf] %v2713
      %2769 = vst [vmem:[#allocation2 + $0x5e0] sm:$0xf] %v2714
      %2770 = vst [vmem:[#allocation2 + $0x5e8] sm:$0xf] %v2715
      %2771 = vst [vmem:[#allocation2 + $0x5f0] sm:$0xf] %v2716
      %2772 = vst [vmem:[#allocation2 + $0x5f8] sm:$0xf] %v2717
      %2773 = vst [vmem:[#allocation2 + $0x600] sm:$0xf] %v2718
      %2774 = vst [vmem:[#allocation2 + $0x608] sm:$0xf] %v2719
      %2775 = vst [vmem:[#allocation2 + $0x610] sm:$0xf] %v2720
      %2776 = vst.msk [vmem:[#allocation2 + $0x618] sm:$0xf] %vm299, %v2693
      %v2777 = vld [vmem:[%s165 + $0x8] sm:$0xff]
      %v2778 = vld [vmem:[%s165 + $0x10] sm:$0xff]
      %v2779 = vld [vmem:[%s165 + $0x18] sm:$0xff]
      %v2780 = vld [vmem:[%s165 + $0x20] sm:$0xff]
      %v2781 = vld [vmem:[%s165 + $0x28] sm:$0xff]
      %v2782 = vld [vmem:[%s165 + $0x30] sm:$0xff]
      %v2783 = vld [vmem:[%s165 + $0x38] sm:$0xff]
      %v2784 = vld [vmem:[%s165 + $0x40] sm:$0xff]
      %v2785 = vld [vmem:[%s165 + $0x48] sm:$0xff]
      %v2786 = vld [vmem:[%s165 + $0x50] sm:$0xff]
      %v2787 = vld [vmem:[%s165 + $0x58] sm:$0xff]
      %v2788 = vld [vmem:[%s165 + $0x60] sm:$0xff]
      %v2789 = vld [vmem:[%s165 + $0x68] sm:$0xff]
      %v2790 = vld [vmem:[%s165 + $0x70] sm:$0xff]
      %s2805 = scalar_lea.vmem [#allocation1], 1
      %2806 = vst [vmem:[%s2805] ss:$2 sm:$0xff] %v2777
      %s2807 = scalar_lea.vmem [#allocation1], 17
      %2808 = vst [vmem:[%s2807] ss:$2 sm:$0xff] %v2778
      %s2809 = scalar_lea.vmem [#allocation1], 33
      %2810 = vst [vmem:[%s2809] ss:$2 sm:$0xff] %v2779
      %s2811 = scalar_lea.vmem [#allocation1], 49
      %2812 = vst [vmem:[%s2811] ss:$2 sm:$0xff] %v2780
      %v2813 = vld.sshfl [vmem:[#allocation1] sm:$0xff pattern:$0x75316420]
      %v2814 = vld.sshfl [vmem:[#allocation1 + $0x8] sm:$0xff pattern:$0x75316420]
      %v2815 = vld.sshfl [vmem:[#allocation1 + $0x10] sm:$0xff pattern:$0x75316420]
      %v2816 = vld.sshfl [vmem:[#allocation1 + $0x18] sm:$0xff pattern:$0x75316420]
      %v2817 = vld.sshfl [vmem:[#allocation1 + $0x20] sm:$0xff pattern:$0x75316420]
      %v2818 = vld.sshfl [vmem:[#allocation1 + $0x28] sm:$0xff pattern:$0x75316420]
      %v2819 = vld.sshfl [vmem:[#allocation1 + $0x30] sm:$0xff pattern:$0x75316420]
      %v2820 = vld.sshfl [vmem:[#allocation1 + $0x38] sm:$0xff pattern:$0x75316420]
      %2821 = vst [vmem:[%s2805] ss:$2 sm:$0xff] %v2781
      %2822 = vst [vmem:[%s2807] ss:$2 sm:$0xff] %v2782
      %2823 = vst [vmem:[%s2809] ss:$2 sm:$0xff] %v2783
      %2824 = vst [vmem:[%s2811] ss:$2 sm:$0xff] %v2784
      %v2825 = vld.sshfl [vmem:[#allocation1] sm:$0xff pattern:$0x75316420]
      %v2826 = vld.sshfl [vmem:[#allocation1 + $0x8] sm:$0xff pattern:$0x75316420]
      %v2827 = vld.sshfl [vmem:[#allocation1 + $0x10] sm:$0xff pattern:$0x75316420]
      %v2828 = vld.sshfl [vmem:[#allocation1 + $0x18] sm:$0xff pattern:$0x75316420]
      %v2829 = vld.sshfl [vmem:[#allocation1 + $0x20] sm:$0xff pattern:$0x75316420]
      %v2830 = vld.sshfl [vmem:[#allocation1 + $0x28] sm:$0xff pattern:$0x75316420]
      %v2831 = vld.sshfl [vmem:[#allocation1 + $0x30] sm:$0xff pattern:$0x75316420]
      %v2832 = vld.sshfl [vmem:[#allocation1 + $0x38] sm:$0xff pattern:$0x75316420]
      %2833 = vst [vmem:[%s2805] ss:$2 sm:$0xff] %v2785
      %2834 = vst [vmem:[%s2807] ss:$2 sm:$0xff] %v2786
      %2835 = vst [vmem:[%s2809] ss:$2 sm:$0xff] %v2787
      %2836 = vst [vmem:[%s2811] ss:$2 sm:$0xff] %v2788
      %v2837 = vld.sshfl [vmem:[#allocation1] sm:$0xff pattern:$0x75316420]
      %v2838 = vld.sshfl [vmem:[#allocation1 + $0x8] sm:$0xff pattern:$0x75316420]
      %v2839 = vld.sshfl [vmem:[#allocation1 + $0x10] sm:$0xff pattern:$0x75316420]
      %v2840 = vld.sshfl [vmem:[#allocation1 + $0x18] sm:$0xff pattern:$0x75316420]
      %v2841 = vld.sshfl [vmem:[#allocation1 + $0x20] sm:$0xff pattern:$0x75316420]
      %v2842 = vld.sshfl [vmem:[#allocation1 + $0x28] sm:$0xff pattern:$0x75316420]
      %v2843 = vld.sshfl [vmem:[#allocation1 + $0x30] sm:$0xff pattern:$0x75316420]
      %v2844 = vld.sshfl [vmem:[#allocation1 + $0x38] sm:$0xff pattern:$0x75316420]
      %2845 = vst [vmem:[%s2805] ss:$2 sm:$0xff] %v2789
      %2846 = vst [vmem:[%s2807] ss:$2 sm:$0xff] %v2790
      %v2847 = vld.sshfl [vmem:[#allocation1] sm:$0xff pattern:$0x75316420]
      %v2848 = vld.sshfl [vmem:[#allocation1 + $0x8] sm:$0xff pattern:$0x75316420]
      %v2849 = vld.sshfl [vmem:[#allocation1 + $0x10] sm:$0xff pattern:$0x75316420]
      %v2850 = vld.sshfl [vmem:[#allocation1 + $0x18] sm:$0xff pattern:$0x75316420]
      %2851 = vrot.lane.b32.xlu0 %v2813, 111
      %v2852 = vpop.permute.xlu0 %2851
      %2853 = vrot.lane.b32.xlu0 %v2814, 111
      %v2854 = vpop.permute.xlu0 %2853
      %2855 = vrot.lane.b32.xlu0 %v2815, 111
      %v2856 = vpop.permute.xlu0 %2855
      %2857 = vrot.lane.b32.xlu0 %v2816, 111
      %v2858 = vpop.permute.xlu0 %2857
      %2859 = vrot.lane.b32.xlu0 %v2817, 111
      %v2860 = vpop.permute.xlu0 %2859
      %2861 = vrot.lane.b32.xlu0 %v2818, 111
      %v2862 = vpop.permute.xlu0 %2861
      %2863 = vrot.lane.b32.xlu0 %v2819, 111
      %v2864 = vpop.permute.xlu0 %2863
      %2865 = vrot.lane.b32.xlu0 %v2820, 111
      %v2866 = vpop.permute.xlu0 %2865
      %2867 = vrot.lane.b32.xlu0 %v2825, 111
      %v2868 = vpop.permute.xlu0 %2867
      %2869 = vrot.lane.b32.xlu0 %v2826, 111
      %v2870 = vpop.permute.xlu0 %2869
      %2871 = vrot.lane.b32.xlu0 %v2827, 111
      %v2872 = vpop.permute.xlu0 %2871
      %2873 = vrot.lane.b32.xlu0 %v2828, 111
      %v2874 = vpop.permute.xlu0 %2873
      %2875 = vrot.lane.b32.xlu0 %v2829, 111
      %v2876 = vpop.permute.xlu0 %2875
      %2877 = vrot.lane.b32.xlu0 %v2830, 111
      %v2878 = vpop.permute.xlu0 %2877
      %2879 = vrot.lane.b32.xlu0 %v2831, 111
      %v2880 = vpop.permute.xlu0 %2879
      %2881 = vrot.lane.b32.xlu0 %v2832, 111
      %v2882 = vpop.permute.xlu0 %2881
      %2883 = vrot.lane.b32.xlu0 %v2837, 111
      %v2884 = vpop.permute.xlu0 %2883
      %2885 = vrot.lane.b32.xlu0 %v2838, 111
      %v2886 = vpop.permute.xlu0 %2885
      %2887 = vrot.lane.b32.xlu0 %v2839, 111
      %v2888 = vpop.permute.xlu0 %2887
      %2889 = vrot.lane.b32.xlu0 %v2840, 111
      %v2890 = vpop.permute.xlu0 %2889
      %2891 = vrot.lane.b32.xlu0 %v2841, 111
      %v2892 = vpop.permute.xlu0 %2891
      %2893 = vrot.lane.b32.xlu0 %v2842, 111
      %v2894 = vpop.permute.xlu0 %2893
      %2895 = vrot.lane.b32.xlu0 %v2843, 111
      %v2896 = vpop.permute.xlu0 %2895
      %2897 = vrot.lane.b32.xlu0 %v2844, 111
      %v2898 = vpop.permute.xlu0 %2897
      %2899 = vrot.lane.b32.xlu0 %v2847, 111
      %v2900 = vpop.permute.xlu0 %2899
      %2901 = vrot.lane.b32.xlu0 %v2848, 111
      %v2902 = vpop.permute.xlu0 %2901
      %2903 = vrot.lane.b32.xlu0 %v2849, 111
      %v2904 = vpop.permute.xlu0 %2903
      %2905 = vrot.lane.b32.xlu0 %v2850, 111
      %v2906 = vpop.permute.xlu0 %2905
      %v2907 = vsel %vm1072, %v2852, %v2854
      %v2908 = vsel %vm1072, %v2854, %v2856
      %v2909 = vsel %vm1072, %v2856, %v2858
      %v2910 = vsel %vm1072, %v2858, %v2860
      %v2911 = vsel %vm1072, %v2860, %v2862
      %v2912 = vsel %vm1072, %v2862, %v2864
      %v2913 = vsel %vm1072, %v2864, %v2866
      %v2914 = vsel %vm1072, %v2866, %v2868
      %v2915 = vsel %vm1072, %v2868, %v2870
      %v2916 = vsel %vm1072, %v2870, %v2872
      %v2917 = vsel %vm1072, %v2872, %v2874
      %v2918 = vsel %vm1072, %v2874, %v2876
      %v2919 = vsel %vm1072, %v2876, %v2878
      %v2920 = vsel %vm1072, %v2878, %v2880
      %v2921 = vsel %vm1072, %v2880, %v2882
      %v2922 = vsel %vm1072, %v2882, %v2884
      %v2923 = vsel %vm1072, %v2884, %v2886
      %v2924 = vsel %vm1072, %v2886, %v2888
      %v2925 = vsel %vm1072, %v2888, %v2890
      %v2926 = vsel %vm1072, %v2890, %v2892
      %v2927 = vsel %vm1072, %v2892, %v2894
      %v2928 = vsel %vm1072, %v2894, %v2896
      %v2929 = vsel %vm1072, %v2896, %v2898
      %v2930 = vsel %vm1072, %v2898, %v2900
      %v2931 = vsel %vm1072, %v2900, %v2902
      %v2932 = vsel %vm1072, %v2902, %v2904
      %v2933 = vsel %vm1072, %v2904, %v2906
      %2962 = vst [vmem:[#allocation2 + $0x540] sm:$0xf0] %v2907
      %2963 = vst [vmem:[#allocation2 + $0x548] sm:$0xf0] %v2908
      %2964 = vst [vmem:[#allocation2 + $0x550] sm:$0xf0] %v2909
      %2965 = vst [vmem:[#allocation2 + $0x558] sm:$0xf0] %v2910
      %2966 = vst [vmem:[#allocation2 + $0x560] sm:$0xf0] %v2911
      %2967 = vst [vmem:[#allocation2 + $0x568] sm:$0xf0] %v2912
      %2968 = vst [vmem:[#allocation2 + $0x570] sm:$0xf0] %v2913
      %2969 = vst [vmem:[#allocation2 + $0x578] sm:$0xf0] %v2914
      %2970 = vst [vmem:[#allocation2 + $0x580] sm:$0xf0] %v2915
      %2971 = vst [vmem:[#allocation2 + $0x588] sm:$0xf0] %v2916
      %2972 = vst [vmem:[#allocation2 + $0x590] sm:$0xf0] %v2917
      %2973 = vst [vmem:[#allocation2 + $0x598] sm:$0xf0] %v2918
      %2974 = vst [vmem:[#allocation2 + $0x5a0] sm:$0xf0] %v2919
      %2975 = vst [vmem:[#allocation2 + $0x5a8] sm:$0xf0] %v2920
      %2976 = vst [vmem:[#allocation2 + $0x5b0] sm:$0xf0] %v2921
      %2977 = vst [vmem:[#allocation2 + $0x5b8] sm:$0xf0] %v2922
      %2978 = vst [vmem:[#allocation2 + $0x5c0] sm:$0xf0] %v2923
      %2979 = vst [vmem:[#allocation2 + $0x5c8] sm:$0xf0] %v2924
      %2980 = vst [vmem:[#allocation2 + $0x5d0] sm:$0xf0] %v2925
      %2981 = vst [vmem:[#allocation2 + $0x5d8] sm:$0xf0] %v2926
      %2982 = vst [vmem:[#allocation2 + $0x5e0] sm:$0xf0] %v2927
      %2983 = vst [vmem:[#allocation2 + $0x5e8] sm:$0xf0] %v2928
      %2984 = vst [vmem:[#allocation2 + $0x5f0] sm:$0xf0] %v2929
      %2985 = vst [vmem:[#allocation2 + $0x5f8] sm:$0xf0] %v2930
      %2986 = vst [vmem:[#allocation2 + $0x600] sm:$0xf0] %v2931
      %2987 = vst [vmem:[#allocation2 + $0x608] sm:$0xf0] %v2932
      %2988 = vst [vmem:[#allocation2 + $0x610] sm:$0xf0] %v2933
      %2989 = vst.msk [vmem:[#allocation2 + $0x618] sm:$0xf0] %vm514, %v2906
      %v2990 = vld [vmem:[%s165 + $0x8] sm:$0xff]
      %v2991 = vld [vmem:[%s165 + $0x10] sm:$0xff]
      %v2992 = vld [vmem:[%s165 + $0x18] sm:$0xff]
      %v2993 = vld [vmem:[%s165 + $0x20] sm:$0xff]
      %v2994 = vld [vmem:[%s165 + $0x28] sm:$0xff]
      %v2995 = vld [vmem:[%s165 + $0x30] sm:$0xff]
      %v2996 = vld [vmem:[%s165 + $0x38] sm:$0xff]
      %v2997 = vld [vmem:[%s165 + $0x40] sm:$0xff]
      %v2998 = vld [vmem:[%s165 + $0x48] sm:$0xff]
      %v2999 = vld [vmem:[%s165 + $0x50] sm:$0xff]
      %v3000 = vld [vmem:[%s165 + $0x58] sm:$0xff]
      %v3001 = vld [vmem:[%s165 + $0x60] sm:$0xff]
      %v3002 = vld [vmem:[%s165 + $0x68] sm:$0xff]
      %v3003 = vld [vmem:[%s165 + $0x70] sm:$0xff]
      %3018 = vst [vmem:[#allocation1] ss:$2 sm:$0xff] %v2990
      %s3019 = scalar_lea.vmem [#allocation1], 16
      %3020 = vst [vmem:[%s3019] ss:$2 sm:$0xff] %v2991
      %s3021 = scalar_lea.vmem [#allocation1], 32
      %3022 = vst [vmem:[%s3021] ss:$2 sm:$0xff] %v2992
      %s3023 = scalar_lea.vmem [#allocation1], 48
      %3024 = vst [vmem:[%s3023] ss:$2 sm:$0xff] %v2993
      %v3025 = vld.sshfl [vmem:[#allocation1] sm:$0xff pattern:$0x75316420]
      %v3026 = vld.sshfl [vmem:[#allocation1 + $0x8] sm:$0xff pattern:$0x75316420]
      %v3027 = vld.sshfl [vmem:[#allocation1 + $0x10] sm:$0xff pattern:$0x75316420]
      %v3028 = vld.sshfl [vmem:[#allocation1 + $0x18] sm:$0xff pattern:$0x75316420]
      %v3029 = vld.sshfl [vmem:[#allocation1 + $0x20] sm:$0xff pattern:$0x75316420]
      %v3030 = vld.sshfl [vmem:[#allocation1 + $0x28] sm:$0xff pattern:$0x75316420]
      %v3031 = vld.sshfl [vmem:[#allocation1 + $0x30] sm:$0xff pattern:$0x75316420]
      %v3032 = vld.sshfl [vmem:[#allocation1 + $0x38] sm:$0xff pattern:$0x75316420]
      %3033 = vst [vmem:[#allocation1] ss:$2 sm:$0xff] %v2994
      %3034 = vst [vmem:[%s3019] ss:$2 sm:$0xff] %v2995
      %3035 = vst [vmem:[%s3021] ss:$2 sm:$0xff] %v2996
      %3036 = vst [vmem:[%s3023] ss:$2 sm:$0xff] %v2997
      %v3037 = vld.sshfl [vmem:[#allocation1] sm:$0xff pattern:$0x75316420]
      %v3038 = vld.sshfl [vmem:[#allocation1 + $0x8] sm:$0xff pattern:$0x75316420]
      %v3039 = vld.sshfl [vmem:[#allocation1 + $0x10] sm:$0xff pattern:$0x75316420]
      %v3040 = vld.sshfl [vmem:[#allocation1 + $0x18] sm:$0xff pattern:$0x75316420]
      %v3041 = vld.sshfl [vmem:[#allocation1 + $0x20] sm:$0xff pattern:$0x75316420]
      %v3042 = vld.sshfl [vmem:[#allocation1 + $0x28] sm:$0xff pattern:$0x75316420]
      %v3043 = vld.sshfl [vmem:[#allocation1 + $0x30] sm:$0xff pattern:$0x75316420]
      %v3044 = vld.sshfl [vmem:[#allocation1 + $0x38] sm:$0xff pattern:$0x75316420]
      %3045 = vst [vmem:[#allocation1] ss:$2 sm:$0xff] %v2998
      %3046 = vst [vmem:[%s3019] ss:$2 sm:$0xff] %v2999
      %3047 = vst [vmem:[%s3021] ss:$2 sm:$0xff] %v3000
      %3048 = vst [vmem:[%s3023] ss:$2 sm:$0xff] %v3001
      %v3049 = vld.sshfl [vmem:[#allocation1] sm:$0xff pattern:$0x75316420]
      %v3050 = vld.sshfl [vmem:[#allocation1 + $0x8] sm:$0xff pattern:$0x75316420]
      %v3051 = vld.sshfl [vmem:[#allocation1 + $0x10] sm:$0xff pattern:$0x75316420]
      %v3052 = vld.sshfl [vmem:[#allocation1 + $0x18] sm:$0xff pattern:$0x75316420]
      %v3053 = vld.sshfl [vmem:[#allocation1 + $0x20] sm:$0xff pattern:$0x75316420]
      %v3054 = vld.sshfl [vmem:[#allocation1 + $0x28] sm:$0xff pattern:$0x75316420]
      %v3055 = vld.sshfl [vmem:[#allocation1 + $0x30] sm:$0xff pattern:$0x75316420]
      %v3056 = vld.sshfl [vmem:[#allocation1 + $0x38] sm:$0xff pattern:$0x75316420]
      %3057 = vst [vmem:[#allocation1] ss:$2 sm:$0xff] %v3002
      %3058 = vst [vmem:[%s3019] ss:$2 sm:$0xff] %v3003
      %v3059 = vld.sshfl [vmem:[#allocation1] sm:$0xff pattern:$0x75316420]
      %v3060 = vld.sshfl [vmem:[#allocation1 + $0x8] sm:$0xff pattern:$0x75316420]
      %v3061 = vld.sshfl [vmem:[#allocation1 + $0x10] sm:$0xff pattern:$0x75316420]
      %v3062 = vld.sshfl [vmem:[#allocation1 + $0x18] sm:$0xff pattern:$0x75316420]
      %3063 = vrot.lane.b32.xlu0 %v3025, 110
      %v3064 = vpop.permute.xlu0 %3063
      %3065 = vrot.lane.b32.xlu0 %v3026, 110
      %v3066 = vpop.permute.xlu0 %3065
      %3067 = vrot.lane.b32.xlu0 %v3027, 110
      %v3068 = vpop.permute.xlu0 %3067
      %3069 = vrot.lane.b32.xlu0 %v3028, 110
      %v3070 = vpop.permute.xlu0 %3069
      %3071 = vrot.lane.b32.xlu0 %v3029, 110
      %v3072 = vpop.permute.xlu0 %3071
      %3073 = vrot.lane.b32.xlu0 %v3030, 110
      %v3074 = vpop.permute.xlu0 %3073
      %3075 = vrot.lane.b32.xlu0 %v3031, 110
      %v3076 = vpop.permute.xlu0 %3075
      %3077 = vrot.lane.b32.xlu0 %v3032, 110
      %v3078 = vpop.permute.xlu0 %3077
      %3079 = vrot.lane.b32.xlu0 %v3037, 110
      %v3080 = vpop.permute.xlu0 %3079
      %3081 = vrot.lane.b32.xlu0 %v3038, 110
      %v3082 = vpop.permute.xlu0 %3081
      %3083 = vrot.lane.b32.xlu0 %v3039, 110
      %v3084 = vpop.permute.xlu0 %3083
      %3085 = vrot.lane.b32.xlu0 %v3040, 110
      %v3086 = vpop.permute.xlu0 %3085
      %3087 = vrot.lane.b32.xlu0 %v3041, 110
      %v3088 = vpop.permute.xlu0 %3087
      %3089 = vrot.lane.b32.xlu0 %v3042, 110
      %v3090 = vpop.permute.xlu0 %3089
      %3091 = vrot.lane.b32.xlu0 %v3043, 110
      %v3092 = vpop.permute.xlu0 %3091
      %3093 = vrot.lane.b32.xlu0 %v3044, 110
      %v3094 = vpop.permute.xlu0 %3093
      %3095 = vrot.lane.b32.xlu0 %v3049, 110
      %v3096 = vpop.permute.xlu0 %3095
      %3097 = vrot.lane.b32.xlu0 %v3050, 110
      %v3098 = vpop.permute.xlu0 %3097
      %3099 = vrot.lane.b32.xlu0 %v3051, 110
      %v3100 = vpop.permute.xlu0 %3099
      %3101 = vrot.lane.b32.xlu0 %v3052, 110
      %v3102 = vpop.permute.xlu0 %3101
      %3103 = vrot.lane.b32.xlu0 %v3053, 110
      %v3104 = vpop.permute.xlu0 %3103
      %3105 = vrot.lane.b32.xlu0 %v3054, 110
      %v3106 = vpop.permute.xlu0 %3105
      %3107 = vrot.lane.b32.xlu0 %v3055, 110
      %v3108 = vpop.permute.xlu0 %3107
      %3109 = vrot.lane.b32.xlu0 %v3056, 110
      %v3110 = vpop.permute.xlu0 %3109
      %3111 = vrot.lane.b32.xlu0 %v3059, 110
      %v3112 = vpop.permute.xlu0 %3111
      %3113 = vrot.lane.b32.xlu0 %v3060, 110
      %v3114 = vpop.permute.xlu0 %3113
      %3115 = vrot.lane.b32.xlu0 %v3061, 110
      %v3116 = vpop.permute.xlu0 %3115
      %3117 = vrot.lane.b32.xlu0 %v3062, 110
      %v3118 = vpop.permute.xlu0 %3117
      %v3119 = vsel %vm1286, %v3064, %v3066
      %v3120 = vsel %vm1286, %v3066, %v3068
      %v3121 = vsel %vm1286, %v3068, %v3070
      %v3122 = vsel %vm1286, %v3070, %v3072
      %v3123 = vsel %vm1286, %v3072, %v3074
      %v3124 = vsel %vm1286, %v3074, %v3076
      %v3125 = vsel %vm1286, %v3076, %v3078
      %v3126 = vsel %vm1286, %v3078, %v3080
      %v3127 = vsel %vm1286, %v3080, %v3082
      %v3128 = vsel %vm1286, %v3082, %v3084
      %v3129 = vsel %vm1286, %v3084, %v3086
      %v3130 = vsel %vm1286, %v3086, %v3088
      %v3131 = vsel %vm1286, %v3088, %v3090
      %v3132 = vsel %vm1286, %v3090, %v3092
      %v3133 = vsel %vm1286, %v3092, %v3094
      %v3134 = vsel %vm1286, %v3094, %v3096
      %v3135 = vsel %vm1286, %v3096, %v3098
      %v3136 = vsel %vm1286, %v3098, %v3100
      %v3137 = vsel %vm1286, %v3100, %v3102
      %v3138 = vsel %vm1286, %v3102, %v3104
      %v3139 = vsel %vm1286, %v3104, %v3106
      %v3140 = vsel %vm1286, %v3106, %v3108
      %v3141 = vsel %vm1286, %v3108, %v3110
      %v3142 = vsel %vm1286, %v3110, %v3112
      %v3143 = vsel %vm1286, %v3112, %v3114
      %v3144 = vsel %vm1286, %v3114, %v3116
      %v3145 = vsel %vm1286, %v3116, %v3118
      %3174 = vst [vmem:[#allocation2 + $0x620] sm:$0xf] %v3119
      %3175 = vst [vmem:[#allocation2 + $0x628] sm:$0xf] %v3120
      %3176 = vst [vmem:[#allocation2 + $0x630] sm:$0xf] %v3121
      %3177 = vst [vmem:[#allocation2 + $0x638] sm:$0xf] %v3122
      %3178 = vst [vmem:[#allocation2 + $0x640] sm:$0xf] %v3123
      %3179 = vst [vmem:[#allocation2 + $0x648] sm:$0xf] %v3124
      %3180 = vst [vmem:[#allocation2 + $0x650] sm:$0xf] %v3125
      %3181 = vst [vmem:[#allocation2 + $0x658] sm:$0xf] %v3126
      %3182 = vst [vmem:[#allocation2 + $0x660] sm:$0xf] %v3127
      %3183 = vst [vmem:[#allocation2 + $0x668] sm:$0xf] %v3128
      %3184 = vst [vmem:[#allocation2 + $0x670] sm:$0xf] %v3129
      %3185 = vst [vmem:[#allocation2 + $0x678] sm:$0xf] %v3130
      %3186 = vst [vmem:[#allocation2 + $0x680] sm:$0xf] %v3131
      %3187 = vst [vmem:[#allocation2 + $0x688] sm:$0xf] %v3132
      %3188 = vst [vmem:[#allocation2 + $0x690] sm:$0xf] %v3133
      %3189 = vst [vmem:[#allocation2 + $0x698] sm:$0xf] %v3134
      %3190 = vst [vmem:[#allocation2 + $0x6a0] sm:$0xf] %v3135
      %3191 = vst [vmem:[#allocation2 + $0x6a8] sm:$0xf] %v3136
      %3192 = vst [vmem:[#allocation2 + $0x6b0] sm:$0xf] %v3137
      %3193 = vst [vmem:[#allocation2 + $0x6b8] sm:$0xf] %v3138
      %3194 = vst [vmem:[#allocation2 + $0x6c0] sm:$0xf] %v3139
      %3195 = vst [vmem:[#allocation2 + $0x6c8] sm:$0xf] %v3140
      %3196 = vst [vmem:[#allocation2 + $0x6d0] sm:$0xf] %v3141
      %3197 = vst [vmem:[#allocation2 + $0x6d8] sm:$0xf] %v3142
      %3198 = vst [vmem:[#allocation2 + $0x6e0] sm:$0xf] %v3143
      %3199 = vst [vmem:[#allocation2 + $0x6e8] sm:$0xf] %v3144
      %3200 = vst [vmem:[#allocation2 + $0x6f0] sm:$0xf] %v3145
      %3201 = vst.msk [vmem:[#allocation2 + $0x6f8] sm:$0xf] %vm299, %v3118
      %v3202 = vld [vmem:[%s165 + $0x8] sm:$0xff]
      %v3203 = vld [vmem:[%s165 + $0x10] sm:$0xff]
      %v3204 = vld [vmem:[%s165 + $0x18] sm:$0xff]
      %v3205 = vld [vmem:[%s165 + $0x20] sm:$0xff]
      %v3206 = vld [vmem:[%s165 + $0x28] sm:$0xff]
      %v3207 = vld [vmem:[%s165 + $0x30] sm:$0xff]
      %v3208 = vld [vmem:[%s165 + $0x38] sm:$0xff]
      %v3209 = vld [vmem:[%s165 + $0x40] sm:$0xff]
      %v3210 = vld [vmem:[%s165 + $0x48] sm:$0xff]
      %v3211 = vld [vmem:[%s165 + $0x50] sm:$0xff]
      %v3212 = vld [vmem:[%s165 + $0x58] sm:$0xff]
      %v3213 = vld [vmem:[%s165 + $0x60] sm:$0xff]
      %v3214 = vld [vmem:[%s165 + $0x68] sm:$0xff]
      %v3215 = vld [vmem:[%s165 + $0x70] sm:$0xff]
      %s3230 = scalar_lea.vmem [#allocation1], 1
      %3231 = vst [vmem:[%s3230] ss:$2 sm:$0xff] %v3202
      %s3232 = scalar_lea.vmem [#allocation1], 17
      %3233 = vst [vmem:[%s3232] ss:$2 sm:$0xff] %v3203
      %s3234 = scalar_lea.vmem [#allocation1], 33
      %3235 = vst [vmem:[%s3234] ss:$2 sm:$0xff] %v3204
      %s3236 = scalar_lea.vmem [#allocation1], 49
      %3237 = vst [vmem:[%s3236] ss:$2 sm:$0xff] %v3205
      %v3238 = vld.sshfl [vmem:[#allocation1] sm:$0xff pattern:$0x75316420]
      %v3239 = vld.sshfl [vmem:[#allocation1 + $0x8] sm:$0xff pattern:$0x75316420]
      %v3240 = vld.sshfl [vmem:[#allocation1 + $0x10] sm:$0xff pattern:$0x75316420]
      %v3241 = vld.sshfl [vmem:[#allocation1 + $0x18] sm:$0xff pattern:$0x75316420]
      %v3242 = vld.sshfl [vmem:[#allocation1 + $0x20] sm:$0xff pattern:$0x75316420]
      %v3243 = vld.sshfl [vmem:[#allocation1 + $0x28] sm:$0xff pattern:$0x75316420]
      %v3244 = vld.sshfl [vmem:[#allocation1 + $0x30] sm:$0xff pattern:$0x75316420]
      %v3245 = vld.sshfl [vmem:[#allocation1 + $0x38] sm:$0xff pattern:$0x75316420]
      %3246 = vst [vmem:[%s3230] ss:$2 sm:$0xff] %v3206
      %3247 = vst [vmem:[%s3232] ss:$2 sm:$0xff] %v3207
      %3248 = vst [vmem:[%s3234] ss:$2 sm:$0xff] %v3208
      %3249 = vst [vmem:[%s3236] ss:$2 sm:$0xff] %v3209
      %v3250 = vld.sshfl [vmem:[#allocation1] sm:$0xff pattern:$0x75316420]
      %v3251 = vld.sshfl [vmem:[#allocation1 + $0x8] sm:$0xff pattern:$0x75316420]
      %v3252 = vld.sshfl [vmem:[#allocation1 + $0x10] sm:$0xff pattern:$0x75316420]
      %v3253 = vld.sshfl [vmem:[#allocation1 + $0x18] sm:$0xff pattern:$0x75316420]
      %v3254 = vld.sshfl [vmem:[#allocation1 + $0x20] sm:$0xff pattern:$0x75316420]
      %v3255 = vld.sshfl [vmem:[#allocation1 + $0x28] sm:$0xff pattern:$0x75316420]
      %v3256 = vld.sshfl [vmem:[#allocation1 + $0x30] sm:$0xff pattern:$0x75316420]
      %v3257 = vld.sshfl [vmem:[#allocation1 + $0x38] sm:$0xff pattern:$0x75316420]
      %3258 = vst [vmem:[%s3230] ss:$2 sm:$0xff] %v3210
      %3259 = vst [vmem:[%s3232] ss:$2 sm:$0xff] %v3211
      %3260 = vst [vmem:[%s3234] ss:$2 sm:$0xff] %v3212
      %3261 = vst [vmem:[%s3236] ss:$2 sm:$0xff] %v3213
      %v3262 = vld.sshfl [vmem:[#allocation1] sm:$0xff pattern:$0x75316420]
      %v3263 = vld.sshfl [vmem:[#allocation1 + $0x8] sm:$0xff pattern:$0x75316420]
      %v3264 = vld.sshfl [vmem:[#allocation1 + $0x10] sm:$0xff pattern:$0x75316420]
      %v3265 = vld.sshfl [vmem:[#allocation1 + $0x18] sm:$0xff pattern:$0x75316420]
      %v3266 = vld.sshfl [vmem:[#allocation1 + $0x20] sm:$0xff pattern:$0x75316420]
      %v3267 = vld.sshfl [vmem:[#allocation1 + $0x28] sm:$0xff pattern:$0x75316420]
      %v3268 = vld.sshfl [vmem:[#allocation1 + $0x30] sm:$0xff pattern:$0x75316420]
      %v3269 = vld.sshfl [vmem:[#allocation1 + $0x38] sm:$0xff pattern:$0x75316420]
      %3270 = vst [vmem:[%s3230] ss:$2 sm:$0xff] %v3214
      %3271 = vst [vmem:[%s3232] ss:$2 sm:$0xff] %v3215
      %v3272 = vld.sshfl [vmem:[#allocation1] sm:$0xff pattern:$0x75316420]
      %v3273 = vld.sshfl [vmem:[#allocation1 + $0x8] sm:$0xff pattern:$0x75316420]
      %v3274 = vld.sshfl [vmem:[#allocation1 + $0x10] sm:$0xff pattern:$0x75316420]
      %v3275 = vld.sshfl [vmem:[#allocation1 + $0x18] sm:$0xff pattern:$0x75316420]
      %3276 = vrot.lane.b32.xlu0 %v3238, 96
      %v3277 = vpop.permute.xlu0 %3276
      %3278 = vrot.lane.b32.xlu0 %v3239, 96
      %v3279 = vpop.permute.xlu0 %3278
      %3280 = vrot.lane.b32.xlu0 %v3240, 96
      %v3281 = vpop.permute.xlu0 %3280
      %3282 = vrot.lane.b32.xlu0 %v3241, 96
      %v3283 = vpop.permute.xlu0 %3282
      %3284 = vrot.lane.b32.xlu0 %v3242, 96
      %v3285 = vpop.permute.xlu0 %3284
      %3286 = vrot.lane.b32.xlu0 %v3243, 96
      %v3287 = vpop.permute.xlu0 %3286
      %3288 = vrot.lane.b32.xlu0 %v3244, 96
      %v3289 = vpop.permute.xlu0 %3288
      %3290 = vrot.lane.b32.xlu0 %v3245, 96
      %v3291 = vpop.permute.xlu0 %3290
      %3292 = vrot.lane.b32.xlu0 %v3250, 96
      %v3293 = vpop.permute.xlu0 %3292
      %3294 = vrot.lane.b32.xlu0 %v3251, 96
      %v3295 = vpop.permute.xlu0 %3294
      %3296 = vrot.lane.b32.xlu0 %v3252, 96
      %v3297 = vpop.permute.xlu0 %3296
      %3298 = vrot.lane.b32.xlu0 %v3253, 96
      %v3299 = vpop.permute.xlu0 %3298
      %3300 = vrot.lane.b32.xlu0 %v3254, 96
      %v3301 = vpop.permute.xlu0 %3300
      %3302 = vrot.lane.b32.xlu0 %v3255, 96
      %v3303 = vpop.permute.xlu0 %3302
      %3304 = vrot.lane.b32.xlu0 %v3256, 96
      %v3305 = vpop.permute.xlu0 %3304
      %3306 = vrot.lane.b32.xlu0 %v3257, 96
      %v3307 = vpop.permute.xlu0 %3306
      %3308 = vrot.lane.b32.xlu0 %v3262, 96
      %v3309 = vpop.permute.xlu0 %3308
      %3310 = vrot.lane.b32.xlu0 %v3263, 96
      %v3311 = vpop.permute.xlu0 %3310
      %3312 = vrot.lane.b32.xlu0 %v3264, 96
      %v3313 = vpop.permute.xlu0 %3312
      %3314 = vrot.lane.b32.xlu0 %v3265, 96
      %v3315 = vpop.permute.xlu0 %3314
      %3316 = vrot.lane.b32.xlu0 %v3266, 96
      %v3317 = vpop.permute.xlu0 %3316
      %3318 = vrot.lane.b32.xlu0 %v3267, 96
      %v3319 = vpop.permute.xlu0 %3318
      %3320 = vrot.lane.b32.xlu0 %v3268, 96
      %v3321 = vpop.permute.xlu0 %3320
      %3322 = vrot.lane.b32.xlu0 %v3269, 96
      %v3323 = vpop.permute.xlu0 %3322
      %3324 = vrot.lane.b32.xlu0 %v3272, 96
      %v3325 = vpop.permute.xlu0 %3324
      %3326 = vrot.lane.b32.xlu0 %v3273, 96
      %v3327 = vpop.permute.xlu0 %3326
      %3328 = vrot.lane.b32.xlu0 %v3274, 96
      %v3329 = vpop.permute.xlu0 %3328
      %3330 = vrot.lane.b32.xlu0 %v3275, 96
      %v3331 = vpop.permute.xlu0 %3330
      %v3332 = vsel %vm1499, %v3277, %v3279
      %v3333 = vsel %vm1499, %v3279, %v3281
      %v3334 = vsel %vm1499, %v3281, %v3283
      %v3335 = vsel %vm1499, %v3283, %v3285
      %v3336 = vsel %vm1499, %v3285, %v3287
      %v3337 = vsel %vm1499, %v3287, %v3289
      %v3338 = vsel %vm1499, %v3289, %v3291
      %v3339 = vsel %vm1499, %v3291, %v3293
      %v3340 = vsel %vm1499, %v3293, %v3295
      %v3341 = vsel %vm1499, %v3295, %v3297
      %v3342 = vsel %vm1499, %v3297, %v3299
      %v3343 = vsel %vm1499, %v3299, %v3301
      %v3344 = vsel %vm1499, %v3301, %v3303
      %v3345 = vsel %vm1499, %v3303, %v3305
      %v3346 = vsel %vm1499, %v3305, %v3307
      %v3347 = vsel %vm1499, %v3307, %v3309
      %v3348 = vsel %vm1499, %v3309, %v3311
      %v3349 = vsel %vm1499, %v3311, %v3313
      %v3350 = vsel %vm1499, %v3313, %v3315
      %v3351 = vsel %vm1499, %v3315, %v3317
      %v3352 = vsel %vm1499, %v3317, %v3319
      %v3353 = vsel %vm1499, %v3319, %v3321
      %v3354 = vsel %vm1499, %v3321, %v3323
      %v3355 = vsel %vm1499, %v3323, %v3325
      %v3356 = vsel %vm1499, %v3325, %v3327
      %v3357 = vsel %vm1499, %v3327, %v3329
      %v3358 = vsel %vm1499, %v3329, %v3331
      %3387 = vst [vmem:[#allocation2 + $0x620] sm:$0xf0] %v3332
      %3388 = vst [vmem:[#allocation2 + $0x628] sm:$0xf0] %v3333
      %3389 = vst [vmem:[#allocation2 + $0x630] sm:$0xf0] %v3334
      %3390 = vst [vmem:[#allocation2 + $0x638] sm:$0xf0] %v3335
      %3391 = vst [vmem:[#allocation2 + $0x640] sm:$0xf0] %v3336
      %3392 = vst [vmem:[#allocation2 + $0x648] sm:$0xf0] %v3337
      %3393 = vst [vmem:[#allocation2 + $0x650] sm:$0xf0] %v3338
      %3394 = vst [vmem:[#allocation2 + $0x658] sm:$0xf0] %v3339
      %3395 = vst [vmem:[#allocation2 + $0x660] sm:$0xf0] %v3340
      %3396 = vst [vmem:[#allocation2 + $0x668] sm:$0xf0] %v3341
      %3397 = vst [vmem:[#allocation2 + $0x670] sm:$0xf0] %v3342
      %3398 = vst [vmem:[#allocation2 + $0x678] sm:$0xf0] %v3343
      %3399 = vst [vmem:[#allocation2 + $0x680] sm:$0xf0] %v3344
      %3400 = vst [vmem:[#allocation2 + $0x688] sm:$0xf0] %v3345
      %3401 = vst [vmem:[#allocation2 + $0x690] sm:$0xf0] %v3346
      %3402 = vst [vmem:[#allocation2 + $0x698] sm:$0xf0] %v3347
      %3403 = vst [vmem:[#allocation2 + $0x6a0] sm:$0xf0] %v3348
      %3404 = vst [vmem:[#allocation2 + $0x6a8] sm:$0xf0] %v3349
      %3405 = vst [vmem:[#allocation2 + $0x6b0] sm:$0xf0] %v3350
      %3406 = vst [vmem:[#allocation2 + $0x6b8] sm:$0xf0] %v3351
      %3407 = vst [vmem:[#allocation2 + $0x6c0] sm:$0xf0] %v3352
      %3408 = vst [vmem:[#allocation2 + $0x6c8] sm:$0xf0] %v3353
      %3409 = vst [vmem:[#allocation2 + $0x6d0] sm:$0xf0] %v3354
      %3410 = vst [vmem:[#allocation2 + $0x6d8] sm:$0xf0] %v3355
      %3411 = vst [vmem:[#allocation2 + $0x6e0] sm:$0xf0] %v3356
      %3412 = vst [vmem:[#allocation2 + $0x6e8] sm:$0xf0] %v3357
      %3413 = vst [vmem:[#allocation2 + $0x6f0] sm:$0xf0] %v3358
      %3414 = vst.msk [vmem:[#allocation2 + $0x6f8] sm:$0xf0] %vm514, %v3331
      %v3415 = vld [vmem:[%s165 + $0x8] sm:$0xff]
      %v3416 = vld [vmem:[%s165 + $0x10] sm:$0xff]
      %v3417 = vld [vmem:[%s165 + $0x18] sm:$0xff]
      %v3418 = vld [vmem:[%s165 + $0x20] sm:$0xff]
      %v3419 = vld [vmem:[%s165 + $0x28] sm:$0xff]
      %v3420 = vld [vmem:[%s165 + $0x30] sm:$0xff]
      %v3421 = vld [vmem:[%s165 + $0x38] sm:$0xff]
      %v3422 = vld [vmem:[%s165 + $0x40] sm:$0xff]
      %v3423 = vld [vmem:[%s165 + $0x48] sm:$0xff]
      %v3424 = vld [vmem:[%s165 + $0x50] sm:$0xff]
      %v3425 = vld [vmem:[%s165 + $0x58] sm:$0xff]
      %v3426 = vld [vmem:[%s165 + $0x60] sm:$0xff]
      %v3427 = vld [vmem:[%s165 + $0x68] sm:$0xff]
      %v3428 = vld [vmem:[%s165 + $0x70] sm:$0xff]
      %3443 = vst [vmem:[#allocation1] ss:$2 sm:$0xff] %v3415
      %s3444 = scalar_lea.vmem [#allocation1], 16
      %3445 = vst [vmem:[%s3444] ss:$2 sm:$0xff] %v3416
      %s3446 = scalar_lea.vmem [#allocation1], 32
      %3447 = vst [vmem:[%s3446] ss:$2 sm:$0xff] %v3417
      %s3448 = scalar_lea.vmem [#allocation1], 48
      %3449 = vst [vmem:[%s3448] ss:$2 sm:$0xff] %v3418
      %v3450 = vld.sshfl [vmem:[#allocation1] sm:$0xff pattern:$0x75316420]
      %v3451 = vld.sshfl [vmem:[#allocation1 + $0x8] sm:$0xff pattern:$0x75316420]
      %v3452 = vld.sshfl [vmem:[#allocation1 + $0x10] sm:$0xff pattern:$0x75316420]
      %v3453 = vld.sshfl [vmem:[#allocation1 + $0x18] sm:$0xff pattern:$0x75316420]
      %v3454 = vld.sshfl [vmem:[#allocation1 + $0x20] sm:$0xff pattern:$0x75316420]
      %v3455 = vld.sshfl [vmem:[#allocation1 + $0x28] sm:$0xff pattern:$0x75316420]
      %v3456 = vld.sshfl [vmem:[#allocation1 + $0x30] sm:$0xff pattern:$0x75316420]
      %v3457 = vld.sshfl [vmem:[#allocation1 + $0x38] sm:$0xff pattern:$0x75316420]
      %3458 = vst [vmem:[#allocation1] ss:$2 sm:$0xff] %v3419
      %3459 = vst [vmem:[%s3444] ss:$2 sm:$0xff] %v3420
      %3460 = vst [vmem:[%s3446] ss:$2 sm:$0xff] %v3421
      %3461 = vst [vmem:[%s3448] ss:$2 sm:$0xff] %v3422
      %v3462 = vld.sshfl [vmem:[#allocation1] sm:$0xff pattern:$0x75316420]
      %v3463 = vld.sshfl [vmem:[#allocation1 + $0x8] sm:$0xff pattern:$0x75316420]
      %v3464 = vld.sshfl [vmem:[#allocation1 + $0x10] sm:$0xff pattern:$0x75316420]
      %v3465 = vld.sshfl [vmem:[#allocation1 + $0x18] sm:$0xff pattern:$0x75316420]
      %v3466 = vld.sshfl [vmem:[#allocation1 + $0x20] sm:$0xff pattern:$0x75316420]
      %v3467 = vld.sshfl [vmem:[#allocation1 + $0x28] sm:$0xff pattern:$0x75316420]
      %v3468 = vld.sshfl [vmem:[#allocation1 + $0x30] sm:$0xff pattern:$0x75316420]
      %v3469 = vld.sshfl [vmem:[#allocation1 + $0x38] sm:$0xff pattern:$0x75316420]
      %3470 = vst [vmem:[#allocation1] ss:$2 sm:$0xff] %v3423
      %3471 = vst [vmem:[%s3444] ss:$2 sm:$0xff] %v3424
      %3472 = vst [vmem:[%s3446] ss:$2 sm:$0xff] %v3425
      %3473 = vst [vmem:[%s3448] ss:$2 sm:$0xff] %v3426
      %v3474 = vld.sshfl [vmem:[#allocation1] sm:$0xff pattern:$0x75316420]
      %v3475 = vld.sshfl [vmem:[#allocation1 + $0x8] sm:$0xff pattern:$0x75316420]
      %v3476 = vld.sshfl [vmem:[#allocation1 + $0x10] sm:$0xff pattern:$0x75316420]
      %v3477 = vld.sshfl [vmem:[#allocation1 + $0x18] sm:$0xff pattern:$0x75316420]
      %v3478 = vld.sshfl [vmem:[#allocation1 + $0x20] sm:$0xff pattern:$0x75316420]
      %v3479 = vld.sshfl [vmem:[#allocation1 + $0x28] sm:$0xff pattern:$0x75316420]
      %v3480 = vld.sshfl [vmem:[#allocation1 + $0x30] sm:$0xff pattern:$0x75316420]
      %v3481 = vld.sshfl [vmem:[#allocation1 + $0x38] sm:$0xff pattern:$0x75316420]
      %3482 = vst [vmem:[#allocation1] ss:$2 sm:$0xff] %v3427
      %3483 = vst [vmem:[%s3444] ss:$2 sm:$0xff] %v3428
      %v3484 = vld.sshfl [vmem:[#allocation1] sm:$0xff pattern:$0x75316420]
      %v3485 = vld.sshfl [vmem:[#allocation1 + $0x8] sm:$0xff pattern:$0x75316420]
      %v3486 = vld.sshfl [vmem:[#allocation1 + $0x10] sm:$0xff pattern:$0x75316420]
      %v3487 = vld.sshfl [vmem:[#allocation1 + $0x18] sm:$0xff pattern:$0x75316420]
      %3488 = vrot.lane.b32.xlu0 %v3450, 95
      %v3489 = vpop.permute.xlu0 %3488
      %3490 = vrot.lane.b32.xlu0 %v3451, 95
      %v3491 = vpop.permute.xlu0 %3490
      %3492 = vrot.lane.b32.xlu0 %v3452, 95
      %v3493 = vpop.permute.xlu0 %3492
      %3494 = vrot.lane.b32.xlu0 %v3453, 95
      %v3495 = vpop.permute.xlu0 %3494
      %3496 = vrot.lane.b32.xlu0 %v3454, 95
      %v3497 = vpop.permute.xlu0 %3496
      %3498 = vrot.lane.b32.xlu0 %v3455, 95
      %v3499 = vpop.permute.xlu0 %3498
      %3500 = vrot.lane.b32.xlu0 %v3456, 95
      %v3501 = vpop.permute.xlu0 %3500
      %3502 = vrot.lane.b32.xlu0 %v3457, 95
      %v3503 = vpop.permute.xlu0 %3502
      %3504 = vrot.lane.b32.xlu0 %v3462, 95
      %v3505 = vpop.permute.xlu0 %3504
      %3506 = vrot.lane.b32.xlu0 %v3463, 95
      %v3507 = vpop.permute.xlu0 %3506
      %3508 = vrot.lane.b32.xlu0 %v3464, 95
      %v3509 = vpop.permute.xlu0 %3508
      %3510 = vrot.lane.b32.xlu0 %v3465, 95
      %v3511 = vpop.permute.xlu0 %3510
      %3512 = vrot.lane.b32.xlu0 %v3466, 95
      %v3513 = vpop.permute.xlu0 %3512
      %3514 = vrot.lane.b32.xlu0 %v3467, 95
      %v3515 = vpop.permute.xlu0 %3514
      %3516 = vrot.lane.b32.xlu0 %v3468, 95
      %v3517 = vpop.permute.xlu0 %3516
      %3518 = vrot.lane.b32.xlu0 %v3469, 95
      %v3519 = vpop.permute.xlu0 %3518
      %3520 = vrot.lane.b32.xlu0 %v3474, 95
      %v3521 = vpop.permute.xlu0 %3520
      %3522 = vrot.lane.b32.xlu0 %v3475, 95
      %v3523 = vpop.permute.xlu0 %3522
      %3524 = vrot.lane.b32.xlu0 %v3476, 95
      %v3525 = vpop.permute.xlu0 %3524
      %3526 = vrot.lane.b32.xlu0 %v3477, 95
      %v3527 = vpop.permute.xlu0 %3526
      %3528 = vrot.lane.b32.xlu0 %v3478, 95
      %v3529 = vpop.permute.xlu0 %3528
      %3530 = vrot.lane.b32.xlu0 %v3479, 95
      %v3531 = vpop.permute.xlu0 %3530
      %3532 = vrot.lane.b32.xlu0 %v3480, 95
      %v3533 = vpop.permute.xlu0 %3532
      %3534 = vrot.lane.b32.xlu0 %v3481, 95
      %v3535 = vpop.permute.xlu0 %3534
      %3536 = vrot.lane.b32.xlu0 %v3484, 95
      %v3537 = vpop.permute.xlu0 %3536
      %3538 = vrot.lane.b32.xlu0 %v3485, 95
      %v3539 = vpop.permute.xlu0 %3538
      %3540 = vrot.lane.b32.xlu0 %v3486, 95
      %v3541 = vpop.permute.xlu0 %3540
      %3542 = vrot.lane.b32.xlu0 %v3487, 95
      %v3543 = vpop.permute.xlu0 %3542
      %v3544 = vsel %vm1713, %v3489, %v3491
      %v3545 = vsel %vm1713, %v3491, %v3493
      %v3546 = vsel %vm1713, %v3493, %v3495
      %v3547 = vsel %vm1713, %v3495, %v3497
      %v3548 = vsel %vm1713, %v3497, %v3499
      %v3549 = vsel %vm1713, %v3499, %v3501
      %v3550 = vsel %vm1713, %v3501, %v3503
      %v3551 = vsel %vm1713, %v3503, %v3505
      %v3552 = vsel %vm1713, %v3505, %v3507
      %v3553 = vsel %vm1713, %v3507, %v3509
      %v3554 = vsel %vm1713, %v3509, %v3511
      %v3555 = vsel %vm1713, %v3511, %v3513
      %v3556 = vsel %vm1713, %v3513, %v3515
      %v3557 = vsel %vm1713, %v3515, %v3517
      %v3558 = vsel %vm1713, %v3517, %v3519
      %v3559 = vsel %vm1713, %v3519, %v3521
      %v3560 = vsel %vm1713, %v3521, %v3523
      %v3561 = vsel %vm1713, %v3523, %v3525
      %v3562 = vsel %vm1713, %v3525, %v3527
      %v3563 = vsel %vm1713, %v3527, %v3529
      %v3564 = vsel %vm1713, %v3529, %v3531
      %v3565 = vsel %vm1713, %v3531, %v3533
      %v3566 = vsel %vm1713, %v3533, %v3535
      %v3567 = vsel %vm1713, %v3535, %v3537
      %v3568 = vsel %vm1713, %v3537, %v3539
      %v3569 = vsel %vm1713, %v3539, %v3541
      %v3570 = vsel %vm1713, %v3541, %v3543
      %3599 = vst [vmem:[#allocation2 + $0x700] sm:$0xf] %v3544
      %3600 = vst [vmem:[#allocation2 + $0x708] sm:$0xf] %v3545
      %3601 = vst [vmem:[#allocation2 + $0x710] sm:$0xf] %v3546
      %3602 = vst [vmem:[#allocation2 + $0x718] sm:$0xf] %v3547
      %3603 = vst [vmem:[#allocation2 + $0x720] sm:$0xf] %v3548
      %3604 = vst [vmem:[#allocation2 + $0x728] sm:$0xf] %v3549
      %3605 = vst [vmem:[#allocation2 + $0x730] sm:$0xf] %v3550
      %3606 = vst [vmem:[#allocation2 + $0x738] sm:$0xf] %v3551
      %3607 = vst [vmem:[#allocation2 + $0x740] sm:$0xf] %v3552
      %3608 = vst [vmem:[#allocation2 + $0x748] sm:$0xf] %v3553
      %3609 = vst [vmem:[#allocation2 + $0x750] sm:$0xf] %v3554
      %3610 = vst [vmem:[#allocation2 + $0x758] sm:$0xf] %v3555
      %3611 = vst [vmem:[#allocation2 + $0x760] sm:$0xf] %v3556
      %3612 = vst [vmem:[#allocation2 + $0x768] sm:$0xf] %v3557
      %3613 = vst [vmem:[#allocation2 + $0x770] sm:$0xf] %v3558
      %3614 = vst [vmem:[#allocation2 + $0x778] sm:$0xf] %v3559
      %3615 = vst [vmem:[#allocation2 + $0x780] sm:$0xf] %v3560
      %3616 = vst [vmem:[#allocation2 + $0x788] sm:$0xf] %v3561
      %3617 = vst [vmem:[#allocation2 + $0x790] sm:$0xf] %v3562
      %3618 = vst [vmem:[#allocation2 + $0x798] sm:$0xf] %v3563
      %3619 = vst [vmem:[#allocation2 + $0x7a0] sm:$0xf] %v3564
      %3620 = vst [vmem:[#allocation2 + $0x7a8] sm:$0xf] %v3565
      %3621 = vst [vmem:[#allocation2 + $0x7b0] sm:$0xf] %v3566
      %3622 = vst [vmem:[#allocation2 + $0x7b8] sm:$0xf] %v3567
      %3623 = vst [vmem:[#allocation2 + $0x7c0] sm:$0xf] %v3568
      %3624 = vst [vmem:[#allocation2 + $0x7c8] sm:$0xf] %v3569
      %3625 = vst [vmem:[#allocation2 + $0x7d0] sm:$0xf] %v3570
      %3626 = vst.msk [vmem:[#allocation2 + $0x7d8] sm:$0xf] %vm299, %v3543
      %v3627 = vld [vmem:[%s165 + $0x8] sm:$0xff]
      %v3628 = vld [vmem:[%s165 + $0x10] sm:$0xff]
      %v3629 = vld [vmem:[%s165 + $0x18] sm:$0xff]
      %v3630 = vld [vmem:[%s165 + $0x20] sm:$0xff]
      %v3631 = vld [vmem:[%s165 + $0x28] sm:$0xff]
      %v3632 = vld [vmem:[%s165 + $0x30] sm:$0xff]
      %v3633 = vld [vmem:[%s165 + $0x38] sm:$0xff]
      %v3634 = vld [vmem:[%s165 + $0x40] sm:$0xff]
      %v3635 = vld [vmem:[%s165 + $0x48] sm:$0xff]
      %v3636 = vld [vmem:[%s165 + $0x50] sm:$0xff]
      %v3637 = vld [vmem:[%s165 + $0x58] sm:$0xff]
      %v3638 = vld [vmem:[%s165 + $0x60] sm:$0xff]
      %v3639 = vld [vmem:[%s165 + $0x68] sm:$0xff]
      %v3640 = vld [vmem:[%s165 + $0x70] sm:$0xff]
      %s3655 = scalar_lea.vmem [#allocation1], 1
      %3656 = vst [vmem:[%s3655] ss:$2 sm:$0xff] %v3627
      %s3657 = scalar_lea.vmem [#allocation1], 17
      %3658 = vst [vmem:[%s3657] ss:$2 sm:$0xff] %v3628
      %s3659 = scalar_lea.vmem [#allocation1], 33
      %3660 = vst [vmem:[%s3659] ss:$2 sm:$0xff] %v3629
      %s3661 = scalar_lea.vmem [#allocation1], 49
      %3662 = vst [vmem:[%s3661] ss:$2 sm:$0xff] %v3630
      %v3663 = vld.sshfl [vmem:[#allocation1] sm:$0xff pattern:$0x75316420]
      %v3664 = vld.sshfl [vmem:[#allocation1 + $0x8] sm:$0xff pattern:$0x75316420]
      %v3665 = vld.sshfl [vmem:[#allocation1 + $0x10] sm:$0xff pattern:$0x75316420]
      %v3666 = vld.sshfl [vmem:[#allocation1 + $0x18] sm:$0xff pattern:$0x75316420]
      %v3667 = vld.sshfl [vmem:[#allocation1 + $0x20] sm:$0xff pattern:$0x75316420]
      %v3668 = vld.sshfl [vmem:[#allocation1 + $0x28] sm:$0xff pattern:$0x75316420]
      %v3669 = vld.sshfl [vmem:[#allocation1 + $0x30] sm:$0xff pattern:$0x75316420]
      %v3670 = vld.sshfl [vmem:[#allocation1 + $0x38] sm:$0xff pattern:$0x75316420]
      %3671 = vst [vmem:[%s3655] ss:$2 sm:$0xff] %v3631
      %3672 = vst [vmem:[%s3657] ss:$2 sm:$0xff] %v3632
      %3673 = vst [vmem:[%s3659] ss:$2 sm:$0xff] %v3633
      %3674 = vst [vmem:[%s3661] ss:$2 sm:$0xff] %v3634
      %v3675 = vld.sshfl [vmem:[#allocation1] sm:$0xff pattern:$0x75316420]
      %v3676 = vld.sshfl [vmem:[#allocation1 + $0x8] sm:$0xff pattern:$0x75316420]
      %v3677 = vld.sshfl [vmem:[#allocation1 + $0x10] sm:$0xff pattern:$0x75316420]
      %v3678 = vld.sshfl [vmem:[#allocation1 + $0x18] sm:$0xff pattern:$0x75316420]
      %v3679 = vld.sshfl [vmem:[#allocation1 + $0x20] sm:$0xff pattern:$0x75316420]
      %v3680 = vld.sshfl [vmem:[#allocation1 + $0x28] sm:$0xff pattern:$0x75316420]
      %v3681 = vld.sshfl [vmem:[#allocation1 + $0x30] sm:$0xff pattern:$0x75316420]
      %v3682 = vld.sshfl [vmem:[#allocation1 + $0x38] sm:$0xff pattern:$0x75316420]
      %3683 = vst [vmem:[%s3655] ss:$2 sm:$0xff] %v3635
      %3684 = vst [vmem:[%s3657] ss:$2 sm:$0xff] %v3636
      %3685 = vst [vmem:[%s3659] ss:$2 sm:$0xff] %v3637
      %3686 = vst [vmem:[%s3661] ss:$2 sm:$0xff] %v3638
      %v3687 = vld.sshfl [vmem:[#allocation1] sm:$0xff pattern:$0x75316420]
      %v3688 = vld.sshfl [vmem:[#allocation1 + $0x8] sm:$0xff pattern:$0x75316420]
      %v3689 = vld.sshfl [vmem:[#allocation1 + $0x10] sm:$0xff pattern:$0x75316420]
      %v3690 = vld.sshfl [vmem:[#allocation1 + $0x18] sm:$0xff pattern:$0x75316420]
      %v3691 = vld.sshfl [vmem:[#allocation1 + $0x20] sm:$0xff pattern:$0x75316420]
      %v3692 = vld.sshfl [vmem:[#allocation1 + $0x28] sm:$0xff pattern:$0x75316420]
      %v3693 = vld.sshfl [vmem:[#allocation1 + $0x30] sm:$0xff pattern:$0x75316420]
      %v3694 = vld.sshfl [vmem:[#allocation1 + $0x38] sm:$0xff pattern:$0x75316420]
      %3695 = vst [vmem:[%s3655] ss:$2 sm:$0xff] %v3639
      %3696 = vst [vmem:[%s3657] ss:$2 sm:$0xff] %v3640
      %v3697 = vld.sshfl [vmem:[#allocation1] sm:$0xff pattern:$0x75316420]
      %v3698 = vld.sshfl [vmem:[#allocation1 + $0x8] sm:$0xff pattern:$0x75316420]
      %v3699 = vld.sshfl [vmem:[#allocation1 + $0x10] sm:$0xff pattern:$0x75316420]
      %v3700 = vld.sshfl [vmem:[#allocation1 + $0x18] sm:$0xff pattern:$0x75316420]
      %3701 = vrot.lane.b32.xlu0 %v3663, 94
      %v3702 = vpop.permute.xlu0 %3701
      %3703 = vrot.lane.b32.xlu0 %v3664, 94
      %v3704 = vpop.permute.xlu0 %3703
      %3705 = vrot.lane.b32.xlu0 %v3665, 94
      %v3706 = vpop.permute.xlu0 %3705
      %3707 = vrot.lane.b32.xlu0 %v3666, 94
      %v3708 = vpop.permute.xlu0 %3707
      %3709 = vrot.lane.b32.xlu0 %v3667, 94
      %v3710 = vpop.permute.xlu0 %3709
      %3711 = vrot.lane.b32.xlu0 %v3668, 94
      %v3712 = vpop.permute.xlu0 %3711
      %3713 = vrot.lane.b32.xlu0 %v3669, 94
      %v3714 = vpop.permute.xlu0 %3713
      %3715 = vrot.lane.b32.xlu0 %v3670, 94
      %v3716 = vpop.permute.xlu0 %3715
      %3717 = vrot.lane.b32.xlu0 %v3675, 94
      %v3718 = vpop.permute.xlu0 %3717
      %3719 = vrot.lane.b32.xlu0 %v3676, 94
      %v3720 = vpop.permute.xlu0 %3719
      %3721 = vrot.lane.b32.xlu0 %v3677, 94
      %v3722 = vpop.permute.xlu0 %3721
      %3723 = vrot.lane.b32.xlu0 %v3678, 94
      %v3724 = vpop.permute.xlu0 %3723
      %3725 = vrot.lane.b32.xlu0 %v3679, 94
      %v3726 = vpop.permute.xlu0 %3725
      %3727 = vrot.lane.b32.xlu0 %v3680, 94
      %v3728 = vpop.permute.xlu0 %3727
      %3729 = vrot.lane.b32.xlu0 %v3681, 94
      %v3730 = vpop.permute.xlu0 %3729
      %3731 = vrot.lane.b32.xlu0 %v3682, 94
      %v3732 = vpop.permute.xlu0 %3731
      %3733 = vrot.lane.b32.xlu0 %v3687, 94
      %v3734 = vpop.permute.xlu0 %3733
      %3735 = vrot.lane.b32.xlu0 %v3688, 94
      %v3736 = vpop.permute.xlu0 %3735
      %3737 = vrot.lane.b32.xlu0 %v3689, 94
      %v3738 = vpop.permute.xlu0 %3737
      %3739 = vrot.lane.b32.xlu0 %v3690, 94
      %v3740 = vpop.permute.xlu0 %3739
      %3741 = vrot.lane.b32.xlu0 %v3691, 94
      %v3742 = vpop.permute.xlu0 %3741
      %3743 = vrot.lane.b32.xlu0 %v3692, 94
      %v3744 = vpop.permute.xlu0 %3743
      %3745 = vrot.lane.b32.xlu0 %v3693, 94
      %v3746 = vpop.permute.xlu0 %3745
      %3747 = vrot.lane.b32.xlu0 %v3694, 94
      %v3748 = vpop.permute.xlu0 %3747
      %3749 = vrot.lane.b32.xlu0 %v3697, 94
      %v3750 = vpop.permute.xlu0 %3749
      %3751 = vrot.lane.b32.xlu0 %v3698, 94
      %v3752 = vpop.permute.xlu0 %3751
      %3753 = vrot.lane.b32.xlu0 %v3699, 94
      %v3754 = vpop.permute.xlu0 %3753
      %3755 = vrot.lane.b32.xlu0 %v3700, 94
      %v3756 = vpop.permute.xlu0 %3755
      %v3757 = vsel %vm1926, %v3702, %v3704
      %v3758 = vsel %vm1926, %v3704, %v3706
      %v3759 = vsel %vm1926, %v3706, %v3708
      %v3760 = vsel %vm1926, %v3708, %v3710
      %v3761 = vsel %vm1926, %v3710, %v3712
      %v3762 = vsel %vm1926, %v3712, %v3714
      %v3763 = vsel %vm1926, %v3714, %v3716
      %v3764 = vsel %vm1926, %v3716, %v3718
      %v3765 = vsel %vm1926, %v3718, %v3720
      %v3766 = vsel %vm1926, %v3720, %v3722
      %v3767 = vsel %vm1926, %v3722, %v3724
      %v3768 = vsel %vm1926, %v3724, %v3726
      %v3769 = vsel %vm1926, %v3726, %v3728
      %v3770 = vsel %vm1926, %v3728, %v3730
      %v3771 = vsel %vm1926, %v3730, %v3732
      %v3772 = vsel %vm1926, %v3732, %v3734
      %v3773 = vsel %vm1926, %v3734, %v3736
      %v3774 = vsel %vm1926, %v3736, %v3738
      %v3775 = vsel %vm1926, %v3738, %v3740
      %v3776 = vsel %vm1926, %v3740, %v3742
      %v3777 = vsel %vm1926, %v3742, %v3744
      %v3778 = vsel %vm1926, %v3744, %v3746
      %v3779 = vsel %vm1926, %v3746, %v3748
      %v3780 = vsel %vm1926, %v3748, %v3750
      %v3781 = vsel %vm1926, %v3750, %v3752
      %v3782 = vsel %vm1926, %v3752, %v3754
      %v3783 = vsel %vm1926, %v3754, %v3756
      %3812 = vst [vmem:[#allocation2 + $0x700] sm:$0xf0] %v3757
      %3813 = vst [vmem:[#allocation2 + $0x708] sm:$0xf0] %v3758
      %3814 = vst [vmem:[#allocation2 + $0x710] sm:$0xf0] %v3759
      %3815 = vst [vmem:[#allocation2 + $0x718] sm:$0xf0] %v3760
      %3816 = vst [vmem:[#allocation2 + $0x720] sm:$0xf0] %v3761
      %3817 = vst [vmem:[#allocation2 + $0x728] sm:$0xf0] %v3762
      %3818 = vst [vmem:[#allocation2 + $0x730] sm:$0xf0] %v3763
      %3819 = vst [vmem:[#allocation2 + $0x738] sm:$0xf0] %v3764
      %3820 = vst [vmem:[#allocation2 + $0x740] sm:$0xf0] %v3765
      %3821 = vst [vmem:[#allocation2 + $0x748] sm:$0xf0] %v3766
      %3822 = vst [vmem:[#allocation2 + $0x750] sm:$0xf0] %v3767
      %3823 = vst [vmem:[#allocation2 + $0x758] sm:$0xf0] %v3768
      %3824 = vst [vmem:[#allocation2 + $0x760] sm:$0xf0] %v3769
      %3825 = vst [vmem:[#allocation2 + $0x768] sm:$0xf0] %v3770
      %3826 = vst [vmem:[#allocation2 + $0x770] sm:$0xf0] %v3771
      %3827 = vst [vmem:[#allocation2 + $0x778] sm:$0xf0] %v3772
      %3828 = vst [vmem:[#allocation2 + $0x780] sm:$0xf0] %v3773
      %3829 = vst [vmem:[#allocation2 + $0x788] sm:$0xf0] %v3774
      %3830 = vst [vmem:[#allocation2 + $0x790] sm:$0xf0] %v3775
      %3831 = vst [vmem:[#allocation2 + $0x798] sm:$0xf0] %v3776
      %3832 = vst [vmem:[#allocation2 + $0x7a0] sm:$0xf0] %v3777
      %3833 = vst [vmem:[#allocation2 + $0x7a8] sm:$0xf0] %v3778
      %3834 = vst [vmem:[#allocation2 + $0x7b0] sm:$0xf0] %v3779
      %3835 = vst [vmem:[#allocation2 + $0x7b8] sm:$0xf0] %v3780
      %3836 = vst [vmem:[#allocation2 + $0x7c0] sm:$0xf0] %v3781
      %3837 = vst [vmem:[#allocation2 + $0x7c8] sm:$0xf0] %v3782
      %3838 = vst [vmem:[#allocation2 + $0x7d0] sm:$0xf0] %v3783
      %3839 = vst.msk [vmem:[#allocation2 + $0x7d8] sm:$0xf0] %vm514, %v3756
      %v3840 = vld [vmem:[%s165 + $0x10] sm:$0xff]
      %v3841 = vld [vmem:[%s165 + $0x18] sm:$0xff]
      %v3842 = vld [vmem:[%s165 + $0x20] sm:$0xff]
      %v3843 = vld [vmem:[%s165 + $0x28] sm:$0xff]
      %v3844 = vld [vmem:[%s165 + $0x30] sm:$0xff]
      %v3845 = vld [vmem:[%s165 + $0x38] sm:$0xff]
      %v3846 = vld [vmem:[%s165 + $0x40] sm:$0xff]
      %v3847 = vld [vmem:[%s165 + $0x48] sm:$0xff]
      %v3848 = vld [vmem:[%s165 + $0x50] sm:$0xff]
      %v3849 = vld [vmem:[%s165 + $0x58] sm:$0xff]
      %v3850 = vld [vmem:[%s165 + $0x60] sm:$0xff]
      %v3851 = vld [vmem:[%s165 + $0x68] sm:$0xff]
      %v3852 = vld [vmem:[%s165 + $0x70] sm:$0xff]
      %v3853 = vld [vmem:[%s165 + $0x78] sm:$0xff]
      %3868 = vst [vmem:[#allocation1] ss:$2 sm:$0xff] %v3840
      %s3869 = scalar_lea.vmem [#allocation1], 16
      %3870 = vst [vmem:[%s3869] ss:$2 sm:$0xff] %v3841
      %s3871 = scalar_lea.vmem [#allocation1], 32
      %3872 = vst [vmem:[%s3871] ss:$2 sm:$0xff] %v3842
      %s3873 = scalar_lea.vmem [#allocation1], 48
      %3874 = vst [vmem:[%s3873] ss:$2 sm:$0xff] %v3843
      %v3875 = vld.sshfl [vmem:[#allocation1] sm:$0xff pattern:$0x75316420]
      %v3876 = vld.sshfl [vmem:[#allocation1 + $0x8] sm:$0xff pattern:$0x75316420]
      %v3877 = vld.sshfl [vmem:[#allocation1 + $0x10] sm:$0xff pattern:$0x75316420]
      %v3878 = vld.sshfl [vmem:[#allocation1 + $0x18] sm:$0xff pattern:$0x75316420]
      %v3879 = vld.sshfl [vmem:[#allocation1 + $0x20] sm:$0xff pattern:$0x75316420]
      %v3880 = vld.sshfl [vmem:[#allocation1 + $0x28] sm:$0xff pattern:$0x75316420]
      %v3881 = vld.sshfl [vmem:[#allocation1 + $0x30] sm:$0xff pattern:$0x75316420]
      %v3882 = vld.sshfl [vmem:[#allocation1 + $0x38] sm:$0xff pattern:$0x75316420]
      %3883 = vst [vmem:[#allocation1] ss:$2 sm:$0xff] %v3844
      %3884 = vst [vmem:[%s3869] ss:$2 sm:$0xff] %v3845
      %3885 = vst [vmem:[%s3871] ss:$2 sm:$0xff] %v3846
      %3886 = vst [vmem:[%s3873] ss:$2 sm:$0xff] %v3847
      %v3887 = vld.sshfl [vmem:[#allocation1] sm:$0xff pattern:$0x75316420]
      %v3888 = vld.sshfl [vmem:[#allocation1 + $0x8] sm:$0xff pattern:$0x75316420]
      %v3889 = vld.sshfl [vmem:[#allocation1 + $0x10] sm:$0xff pattern:$0x75316420]
      %v3890 = vld.sshfl [vmem:[#allocation1 + $0x18] sm:$0xff pattern:$0x75316420]
      %v3891 = vld.sshfl [vmem:[#allocation1 + $0x20] sm:$0xff pattern:$0x75316420]
      %v3892 = vld.sshfl [vmem:[#allocation1 + $0x28] sm:$0xff pattern:$0x75316420]
      %v3893 = vld.sshfl [vmem:[#allocation1 + $0x30] sm:$0xff pattern:$0x75316420]
      %v3894 = vld.sshfl [vmem:[#allocation1 + $0x38] sm:$0xff pattern:$0x75316420]
      %3895 = vst [vmem:[#allocation1] ss:$2 sm:$0xff] %v3848
      %3896 = vst [vmem:[%s3869] ss:$2 sm:$0xff] %v3849
      %3897 = vst [vmem:[%s3871] ss:$2 sm:$0xff] %v3850
      %3898 = vst [vmem:[%s3873] ss:$2 sm:$0xff] %v3851
      %v3899 = vld.sshfl [vmem:[#allocation1] sm:$0xff pattern:$0x75316420]
      %v3900 = vld.sshfl [vmem:[#allocation1 + $0x8] sm:$0xff pattern:$0x75316420]
      %v3901 = vld.sshfl [vmem:[#allocation1 + $0x10] sm:$0xff pattern:$0x75316420]
      %v3902 = vld.sshfl [vmem:[#allocation1 + $0x18] sm:$0xff pattern:$0x75316420]
      %v3903 = vld.sshfl [vmem:[#allocation1 + $0x20] sm:$0xff pattern:$0x75316420]
      %v3904 = vld.sshfl [vmem:[#allocation1 + $0x28] sm:$0xff pattern:$0x75316420]
      %v3905 = vld.sshfl [vmem:[#allocation1 + $0x30] sm:$0xff pattern:$0x75316420]
      %v3906 = vld.sshfl [vmem:[#allocation1 + $0x38] sm:$0xff pattern:$0x75316420]
      %3907 = vst [vmem:[#allocation1] ss:$2 sm:$0xff] %v3852
      %3908 = vst [vmem:[%s3869] ss:$2 sm:$0xff] %v3853
      %v3909 = vld.sshfl [vmem:[#allocation1] sm:$0xff pattern:$0x75316420]
      %v3910 = vld.sshfl [vmem:[#allocation1 + $0x8] sm:$0xff pattern:$0x75316420]
      %v3911 = vld.sshfl [vmem:[#allocation1 + $0x10] sm:$0xff pattern:$0x75316420]
      %v3912 = vld.sshfl [vmem:[#allocation1 + $0x18] sm:$0xff pattern:$0x75316420]
      %3941 = vst [vmem:[#allocation2 + $0x7e0] sm:$0xf] %v3875
      %3942 = vst [vmem:[#allocation2 + $0x7e8] sm:$0xf] %v3876
      %3943 = vst [vmem:[#allocation2 + $0x7f0] sm:$0xf] %v3877
      %3944 = vst [vmem:[#allocation2 + $0x7f8] sm:$0xf] %v3878
      %3945 = vst [vmem:[#allocation2 + $0x800] sm:$0xf] %v3879
      %3946 = vst [vmem:[#allocation2 + $0x808] sm:$0xf] %v3880
      %3947 = vst [vmem:[#allocation2 + $0x810] sm:$0xf] %v3881
      %3948 = vst [vmem:[#allocation2 + $0x818] sm:$0xf] %v3882
      %3949 = vst [vmem:[#allocation2 + $0x820] sm:$0xf] %v3887
      %3950 = vst [vmem:[#allocation2 + $0x828] sm:$0xf] %v3888
      %3951 = vst [vmem:[#allocation2 + $0x830] sm:$0xf] %v3889
      %3952 = vst [vmem:[#allocation2 + $0x838] sm:$0xf] %v3890
      %3953 = vst [vmem:[#allocation2 + $0x840] sm:$0xf] %v3891
      %3954 = vst [vmem:[#allocation2 + $0x848] sm:$0xf] %v3892
      %3955 = vst [vmem:[#allocation2 + $0x850] sm:$0xf] %v3893
      %3956 = vst [vmem:[#allocation2 + $0x858] sm:$0xf] %v3894
      %3957 = vst [vmem:[#allocation2 + $0x860] sm:$0xf] %v3899
      %3958 = vst [vmem:[#allocation2 + $0x868] sm:$0xf] %v3900
      %3959 = vst [vmem:[#allocation2 + $0x870] sm:$0xf] %v3901
      %3960 = vst [vmem:[#allocation2 + $0x878] sm:$0xf] %v3902
      %3961 = vst [vmem:[#allocation2 + $0x880] sm:$0xf] %v3903
      %3962 = vst [vmem:[#allocation2 + $0x888] sm:$0xf] %v3904
      %3963 = vst [vmem:[#allocation2 + $0x890] sm:$0xf] %v3905
      %3964 = vst [vmem:[#allocation2 + $0x898] sm:$0xf] %v3906
      %3965 = vst [vmem:[#allocation2 + $0x8a0] sm:$0xf] %v3909
      %3966 = vst [vmem:[#allocation2 + $0x8a8] sm:$0xf] %v3910
      %3967 = vst [vmem:[#allocation2 + $0x8b0] sm:$0xf] %v3911
      %3968 = vst.msk [vmem:[#allocation2 + $0x8b8] sm:$0xf] %vm299, %v3912
      %v3969 = vld [vmem:[%s165 + $0x10] sm:$0xff]
      %v3970 = vld [vmem:[%s165 + $0x18] sm:$0xff]
      %v3971 = vld [vmem:[%s165 + $0x20] sm:$0xff]
      %v3972 = vld [vmem:[%s165 + $0x28] sm:$0xff]
      %v3973 = vld [vmem:[%s165 + $0x30] sm:$0xff]
      %v3974 = vld [vmem:[%s165 + $0x38] sm:$0xff]
      %v3975 = vld [vmem:[%s165 + $0x40] sm:$0xff]
      %v3976 = vld [vmem:[%s165 + $0x48] sm:$0xff]
      %v3977 = vld [vmem:[%s165 + $0x50] sm:$0xff]
      %v3978 = vld [vmem:[%s165 + $0x58] sm:$0xff]
      %v3979 = vld [vmem:[%s165 + $0x60] sm:$0xff]
      %v3980 = vld [vmem:[%s165 + $0x68] sm:$0xff]
      %v3981 = vld [vmem:[%s165 + $0x70] sm:$0xff]
      %v3982 = vld [vmem:[%s165 + $0x78] sm:$0xff]
      %s3997 = scalar_lea.vmem [#allocation1], 1
      %3998 = vst [vmem:[%s3997] ss:$2 sm:$0xff] %v3969
      %s3999 = scalar_lea.vmem [#allocation1], 17
      %4000 = vst [vmem:[%s3999] ss:$2 sm:$0xff] %v3970
      %s4001 = scalar_lea.vmem [#allocation1], 33
      %4002 = vst [vmem:[%s4001] ss:$2 sm:$0xff] %v3971
      %s4003 = scalar_lea.vmem [#allocation1], 49
      %4004 = vst [vmem:[%s4003] ss:$2 sm:$0xff] %v3972
      %v4005 = vld.sshfl [vmem:[#allocation1] sm:$0xff pattern:$0x75316420]
      %v4006 = vld.sshfl [vmem:[#allocation1 + $0x8] sm:$0xff pattern:$0x75316420]
      %v4007 = vld.sshfl [vmem:[#allocation1 + $0x10] sm:$0xff pattern:$0x75316420]
      %v4008 = vld.sshfl [vmem:[#allocation1 + $0x18] sm:$0xff pattern:$0x75316420]
      %v4009 = vld.sshfl [vmem:[#allocation1 + $0x20] sm:$0xff pattern:$0x75316420]
      %v4010 = vld.sshfl [vmem:[#allocation1 + $0x28] sm:$0xff pattern:$0x75316420]
      %v4011 = vld.sshfl [vmem:[#allocation1 + $0x30] sm:$0xff pattern:$0x75316420]
      %v4012 = vld.sshfl [vmem:[#allocation1 + $0x38] sm:$0xff pattern:$0x75316420]
      %4013 = vst [vmem:[%s3997] ss:$2 sm:$0xff] %v3973
      %4014 = vst [vmem:[%s3999] ss:$2 sm:$0xff] %v3974
      %4015 = vst [vmem:[%s4001] ss:$2 sm:$0xff] %v3975
      %4016 = vst [vmem:[%s4003] ss:$2 sm:$0xff] %v3976
      %v4017 = vld.sshfl [vmem:[#allocation1] sm:$0xff pattern:$0x75316420]
      %v4018 = vld.sshfl [vmem:[#allocation1 + $0x8] sm:$0xff pattern:$0x75316420]
      %v4019 = vld.sshfl [vmem:[#allocation1 + $0x10] sm:$0xff pattern:$0x75316420]
      %v4020 = vld.sshfl [vmem:[#allocation1 + $0x18] sm:$0xff pattern:$0x75316420]
      %v4021 = vld.sshfl [vmem:[#allocation1 + $0x20] sm:$0xff pattern:$0x75316420]
      %v4022 = vld.sshfl [vmem:[#allocation1 + $0x28] sm:$0xff pattern:$0x75316420]
      %v4023 = vld.sshfl [vmem:[#allocation1 + $0x30] sm:$0xff pattern:$0x75316420]
      %v4024 = vld.sshfl [vmem:[#allocation1 + $0x38] sm:$0xff pattern:$0x75316420]
      %4025 = vst [vmem:[%s3997] ss:$2 sm:$0xff] %v3977
      %4026 = vst [vmem:[%s3999] ss:$2 sm:$0xff] %v3978
      %4027 = vst [vmem:[%s4001] ss:$2 sm:$0xff] %v3979
      %4028 = vst [vmem:[%s4003] ss:$2 sm:$0xff] %v3980
      %v4029 = vld.sshfl [vmem:[#allocation1] sm:$0xff pattern:$0x75316420]
      %v4030 = vld.sshfl [vmem:[#allocation1 + $0x8] sm:$0xff pattern:$0x75316420]
      %v4031 = vld.sshfl [vmem:[#allocation1 + $0x10] sm:$0xff pattern:$0x75316420]
      %v4032 = vld.sshfl [vmem:[#allocation1 + $0x18] sm:$0xff pattern:$0x75316420]
      %v4033 = vld.sshfl [vmem:[#allocation1 + $0x20] sm:$0xff pattern:$0x75316420]
      %v4034 = vld.sshfl [vmem:[#allocation1 + $0x28] sm:$0xff pattern:$0x75316420]
      %v4035 = vld.sshfl [vmem:[#allocation1 + $0x30] sm:$0xff pattern:$0x75316420]
      %v4036 = vld.sshfl [vmem:[#allocation1 + $0x38] sm:$0xff pattern:$0x75316420]
      %4037 = vst [vmem:[%s3997] ss:$2 sm:$0xff] %v3981
      %4038 = vst [vmem:[%s3999] ss:$2 sm:$0xff] %v3982
      %v4039 = vld.sshfl [vmem:[#allocation1] sm:$0xff pattern:$0x75316420]
      %v4040 = vld.sshfl [vmem:[#allocation1 + $0x8] sm:$0xff pattern:$0x75316420]
      %v4041 = vld.sshfl [vmem:[#allocation1 + $0x10] sm:$0xff pattern:$0x75316420]
      %v4042 = vld.sshfl [vmem:[#allocation1 + $0x18] sm:$0xff pattern:$0x75316420]
      %4043 = vrot.lane.b32.xlu0 %v4005, 127
      %v4044 = vpop.permute.xlu0 %4043
      %4045 = vrot.lane.b32.xlu0 %v4006, 127
      %v4046 = vpop.permute.xlu0 %4045
      %4047 = vrot.lane.b32.xlu0 %v4007, 127
      %v4048 = vpop.permute.xlu0 %4047
      %4049 = vrot.lane.b32.xlu0 %v4008, 127
      %v4050 = vpop.permute.xlu0 %4049
      %4051 = vrot.lane.b32.xlu0 %v4009, 127
      %v4052 = vpop.permute.xlu0 %4051
      %4053 = vrot.lane.b32.xlu0 %v4010, 127
      %v4054 = vpop.permute.xlu0 %4053
      %4055 = vrot.lane.b32.xlu0 %v4011, 127
      %v4056 = vpop.permute.xlu0 %4055
      %4057 = vrot.lane.b32.xlu0 %v4012, 127
      %v4058 = vpop.permute.xlu0 %4057
      %4059 = vrot.lane.b32.xlu0 %v4017, 127
      %v4060 = vpop.permute.xlu0 %4059
      %4061 = vrot.lane.b32.xlu0 %v4018, 127
      %v4062 = vpop.permute.xlu0 %4061
      %4063 = vrot.lane.b32.xlu0 %v4019, 127
      %v4064 = vpop.permute.xlu0 %4063
      %4065 = vrot.lane.b32.xlu0 %v4020, 127
      %v4066 = vpop.permute.xlu0 %4065
      %4067 = vrot.lane.b32.xlu0 %v4021, 127
      %v4068 = vpop.permute.xlu0 %4067
      %4069 = vrot.lane.b32.xlu0 %v4022, 127
      %v4070 = vpop.permute.xlu0 %4069
      %4071 = vrot.lane.b32.xlu0 %v4023, 127
      %v4072 = vpop.permute.xlu0 %4071
      %4073 = vrot.lane.b32.xlu0 %v4024, 127
      %v4074 = vpop.permute.xlu0 %4073
      %4075 = vrot.lane.b32.xlu0 %v4029, 127
      %v4076 = vpop.permute.xlu0 %4075
      %4077 = vrot.lane.b32.xlu0 %v4030, 127
      %v4078 = vpop.permute.xlu0 %4077
      %4079 = vrot.lane.b32.xlu0 %v4031, 127
      %v4080 = vpop.permute.xlu0 %4079
      %4081 = vrot.lane.b32.xlu0 %v4032, 127
      %v4082 = vpop.permute.xlu0 %4081
      %4083 = vrot.lane.b32.xlu0 %v4033, 127
      %v4084 = vpop.permute.xlu0 %4083
      %4085 = vrot.lane.b32.xlu0 %v4034, 127
      %v4086 = vpop.permute.xlu0 %4085
      %4087 = vrot.lane.b32.xlu0 %v4035, 127
      %v4088 = vpop.permute.xlu0 %4087
      %4089 = vrot.lane.b32.xlu0 %v4036, 127
      %v4090 = vpop.permute.xlu0 %4089
      %4091 = vrot.lane.b32.xlu0 %v4039, 127
      %v4092 = vpop.permute.xlu0 %4091
      %4093 = vrot.lane.b32.xlu0 %v4040, 127
      %v4094 = vpop.permute.xlu0 %4093
      %4095 = vrot.lane.b32.xlu0 %v4041, 127
      %v4096 = vpop.permute.xlu0 %4095
      %4097 = vrot.lane.b32.xlu0 %v4042, 127
      %v4098 = vpop.permute.xlu0 %4097
      %v4099 = vsel %vm431, %v4044, %v4046
      %v4100 = vsel %vm431, %v4046, %v4048
      %v4101 = vsel %vm431, %v4048, %v4050
      %v4102 = vsel %vm431, %v4050, %v4052
      %v4103 = vsel %vm431, %v4052, %v4054
      %v4104 = vsel %vm431, %v4054, %v4056
      %v4105 = vsel %vm431, %v4056, %v4058
      %v4106 = vsel %vm431, %v4058, %v4060
      %v4107 = vsel %vm431, %v4060, %v4062
      %v4108 = vsel %vm431, %v4062, %v4064
      %v4109 = vsel %vm431, %v4064, %v4066
      %v4110 = vsel %vm431, %v4066, %v4068
      %v4111 = vsel %vm431, %v4068, %v4070
      %v4112 = vsel %vm431, %v4070, %v4072
      %v4113 = vsel %vm431, %v4072, %v4074
      %v4114 = vsel %vm431, %v4074, %v4076
      %v4115 = vsel %vm431, %v4076, %v4078
      %v4116 = vsel %vm431, %v4078, %v4080
      %v4117 = vsel %vm431, %v4080, %v4082
      %v4118 = vsel %vm431, %v4082, %v4084
      %v4119 = vsel %vm431, %v4084, %v4086
      %v4120 = vsel %vm431, %v4086, %v4088
      %v4121 = vsel %vm431, %v4088, %v4090
      %v4122 = vsel %vm431, %v4090, %v4092
      %v4123 = vsel %vm431, %v4092, %v4094
      %v4124 = vsel %vm431, %v4094, %v4096
      %v4125 = vsel %vm431, %v4096, %v4098
      %4154 = vst [vmem:[#allocation2 + $0x7e0] sm:$0xf0] %v4099
      %4155 = vst [vmem:[#allocation2 + $0x7e8] sm:$0xf0] %v4100
      %4156 = vst [vmem:[#allocation2 + $0x7f0] sm:$0xf0] %v4101
      %4157 = vst [vmem:[#allocation2 + $0x7f8] sm:$0xf0] %v4102
      %4158 = vst [vmem:[#allocation2 + $0x800] sm:$0xf0] %v4103
      %4159 = vst [vmem:[#allocation2 + $0x808] sm:$0xf0] %v4104
      %4160 = vst [vmem:[#allocation2 + $0x810] sm:$0xf0] %v4105
      %4161 = vst [vmem:[#allocation2 + $0x818] sm:$0xf0] %v4106
      %4162 = vst [vmem:[#allocation2 + $0x820] sm:$0xf0] %v4107
      %4163 = vst [vmem:[#allocation2 + $0x828] sm:$0xf0] %v4108
      %4164 = vst [vmem:[#allocation2 + $0x830] sm:$0xf0] %v4109
      %4165 = vst [vmem:[#allocation2 + $0x838] sm:$0xf0] %v4110
      %4166 = vst [vmem:[#allocation2 + $0x840] sm:$0xf0] %v4111
      %4167 = vst [vmem:[#allocation2 + $0x848] sm:$0xf0] %v4112
      %4168 = vst [vmem:[#allocation2 + $0x850] sm:$0xf0] %v4113
      %4169 = vst [vmem:[#allocation2 + $0x858] sm:$0xf0] %v4114
      %4170 = vst [vmem:[#allocation2 + $0x860] sm:$0xf0] %v4115
      %4171 = vst [vmem:[#allocation2 + $0x868] sm:$0xf0] %v4116
      %4172 = vst [vmem:[#allocation2 + $0x870] sm:$0xf0] %v4117
      %4173 = vst [vmem:[#allocation2 + $0x878] sm:$0xf0] %v4118
      %4174 = vst [vmem:[#allocation2 + $0x880] sm:$0xf0] %v4119
      %4175 = vst [vmem:[#allocation2 + $0x888] sm:$0xf0] %v4120
      %4176 = vst [vmem:[#allocation2 + $0x890] sm:$0xf0] %v4121
      %4177 = vst [vmem:[#allocation2 + $0x898] sm:$0xf0] %v4122
      %4178 = vst [vmem:[#allocation2 + $0x8a0] sm:$0xf0] %v4123
      %4179 = vst [vmem:[#allocation2 + $0x8a8] sm:$0xf0] %v4124
      %4180 = vst [vmem:[#allocation2 + $0x8b0] sm:$0xf0] %v4125
      %4181 = vst.msk [vmem:[#allocation2 + $0x8b8] sm:$0xf0] %vm514, %v4098
      %v4182 = vld [vmem:[%s165 + $0x10] sm:$0xff]
      %v4183 = vld [vmem:[%s165 + $0x18] sm:$0xff]
      %v4184 = vld [vmem:[%s165 + $0x20] sm:$0xff]
      %v4185 = vld [vmem:[%s165 + $0x28] sm:$0xff]
      %v4186 = vld [vmem:[%s165 + $0x30] sm:$0xff]
      %v4187 = vld [vmem:[%s165 + $0x38] sm:$0xff]
      %v4188 = vld [vmem:[%s165 + $0x40] sm:$0xff]
      %v4189 = vld [vmem:[%s165 + $0x48] sm:$0xff]
      %v4190 = vld [vmem:[%s165 + $0x50] sm:$0xff]
      %v4191 = vld [vmem:[%s165 + $0x58] sm:$0xff]
      %v4192 = vld [vmem:[%s165 + $0x60] sm:$0xff]
      %v4193 = vld [vmem:[%s165 + $0x68] sm:$0xff]
      %v4194 = vld [vmem:[%s165 + $0x70] sm:$0xff]
      %v4195 = vld [vmem:[%s165 + $0x78] sm:$0xff]
      %4210 = vst [vmem:[#allocation1] ss:$2 sm:$0xff] %v4182
      %s4211 = scalar_lea.vmem [#allocation1], 16
      %4212 = vst [vmem:[%s4211] ss:$2 sm:$0xff] %v4183
      %s4213 = scalar_lea.vmem [#allocation1], 32
      %4214 = vst [vmem:[%s4213] ss:$2 sm:$0xff] %v4184
      %s4215 = scalar_lea.vmem [#allocation1], 48
      %4216 = vst [vmem:[%s4215] ss:$2 sm:$0xff] %v4185
      %v4217 = vld.sshfl [vmem:[#allocation1] sm:$0xff pattern:$0x75316420]
      %v4218 = vld.sshfl [vmem:[#allocation1 + $0x8] sm:$0xff pattern:$0x75316420]
      %v4219 = vld.sshfl [vmem:[#allocation1 + $0x10] sm:$0xff pattern:$0x75316420]
      %v4220 = vld.sshfl [vmem:[#allocation1 + $0x18] sm:$0xff pattern:$0x75316420]
      %v4221 = vld.sshfl [vmem:[#allocation1 + $0x20] sm:$0xff pattern:$0x75316420]
      %v4222 = vld.sshfl [vmem:[#allocation1 + $0x28] sm:$0xff pattern:$0x75316420]
      %v4223 = vld.sshfl [vmem:[#allocation1 + $0x30] sm:$0xff pattern:$0x75316420]
      %v4224 = vld.sshfl [vmem:[#allocation1 + $0x38] sm:$0xff pattern:$0x75316420]
      %4225 = vst [vmem:[#allocation1] ss:$2 sm:$0xff] %v4186
      %4226 = vst [vmem:[%s4211] ss:$2 sm:$0xff] %v4187
      %4227 = vst [vmem:[%s4213] ss:$2 sm:$0xff] %v4188
      %4228 = vst [vmem:[%s4215] ss:$2 sm:$0xff] %v4189
      %v4229 = vld.sshfl [vmem:[#allocation1] sm:$0xff pattern:$0x75316420]
      %v4230 = vld.sshfl [vmem:[#allocation1 + $0x8] sm:$0xff pattern:$0x75316420]
      %v4231 = vld.sshfl [vmem:[#allocation1 + $0x10] sm:$0xff pattern:$0x75316420]
      %v4232 = vld.sshfl [vmem:[#allocation1 + $0x18] sm:$0xff pattern:$0x75316420]
      %v4233 = vld.sshfl [vmem:[#allocation1 + $0x20] sm:$0xff pattern:$0x75316420]
      %v4234 = vld.sshfl [vmem:[#allocation1 + $0x28] sm:$0xff pattern:$0x75316420]
      %v4235 = vld.sshfl [vmem:[#allocation1 + $0x30] sm:$0xff pattern:$0x75316420]
      %v4236 = vld.sshfl [vmem:[#allocation1 + $0x38] sm:$0xff pattern:$0x75316420]
      %4237 = vst [vmem:[#allocation1] ss:$2 sm:$0xff] %v4190
      %4238 = vst [vmem:[%s4211] ss:$2 sm:$0xff] %v4191
      %4239 = vst [vmem:[%s4213] ss:$2 sm:$0xff] %v4192
      %4240 = vst [vmem:[%s4215] ss:$2 sm:$0xff] %v4193
      %v4241 = vld.sshfl [vmem:[#allocation1] sm:$0xff pattern:$0x75316420]
      %v4242 = vld.sshfl [vmem:[#allocation1 + $0x8] sm:$0xff pattern:$0x75316420]
      %v4243 = vld.sshfl [vmem:[#allocation1 + $0x10] sm:$0xff pattern:$0x75316420]
      %v4244 = vld.sshfl [vmem:[#allocation1 + $0x18] sm:$0xff pattern:$0x75316420]
      %v4245 = vld.sshfl [vmem:[#allocation1 + $0x20] sm:$0xff pattern:$0x75316420]
      %v4246 = vld.sshfl [vmem:[#allocation1 + $0x28] sm:$0xff pattern:$0x75316420]
      %v4247 = vld.sshfl [vmem:[#allocation1 + $0x30] sm:$0xff pattern:$0x75316420]
      %v4248 = vld.sshfl [vmem:[#allocation1 + $0x38] sm:$0xff pattern:$0x75316420]
      %4249 = vst [vmem:[#allocation1] ss:$2 sm:$0xff] %v4194
      %4250 = vst [vmem:[%s4211] ss:$2 sm:$0xff] %v4195
      %v4251 = vld.sshfl [vmem:[#allocation1] sm:$0xff pattern:$0x75316420]
      %v4252 = vld.sshfl [vmem:[#allocation1 + $0x8] sm:$0xff pattern:$0x75316420]
      %v4253 = vld.sshfl [vmem:[#allocation1 + $0x10] sm:$0xff pattern:$0x75316420]
      %v4254 = vld.sshfl [vmem:[#allocation1 + $0x18] sm:$0xff pattern:$0x75316420]
      %4255 = vrot.lane.b32.xlu0 %v4217, 126
      %v4256 = vpop.permute.xlu0 %4255
      %4257 = vrot.lane.b32.xlu0 %v4218, 126
      %v4258 = vpop.permute.xlu0 %4257
      %4259 = vrot.lane.b32.xlu0 %v4219, 126
      %v4260 = vpop.permute.xlu0 %4259
      %4261 = vrot.lane.b32.xlu0 %v4220, 126
      %v4262 = vpop.permute.xlu0 %4261
      %4263 = vrot.lane.b32.xlu0 %v4221, 126
      %v4264 = vpop.permute.xlu0 %4263
      %4265 = vrot.lane.b32.xlu0 %v4222, 126
      %v4266 = vpop.permute.xlu0 %4265
      %4267 = vrot.lane.b32.xlu0 %v4223, 126
      %v4268 = vpop.permute.xlu0 %4267
      %4269 = vrot.lane.b32.xlu0 %v4224, 126
      %v4270 = vpop.permute.xlu0 %4269
      %4271 = vrot.lane.b32.xlu0 %v4229, 126
      %v4272 = vpop.permute.xlu0 %4271
      %4273 = vrot.lane.b32.xlu0 %v4230, 126
      %v4274 = vpop.permute.xlu0 %4273
      %4275 = vrot.lane.b32.xlu0 %v4231, 126
      %v4276 = vpop.permute.xlu0 %4275
      %4277 = vrot.lane.b32.xlu0 %v4232, 126
      %v4278 = vpop.permute.xlu0 %4277
      %4279 = vrot.lane.b32.xlu0 %v4233, 126
      %v4280 = vpop.permute.xlu0 %4279
      %4281 = vrot.lane.b32.xlu0 %v4234, 126
      %v4282 = vpop.permute.xlu0 %4281
      %4283 = vrot.lane.b32.xlu0 %v4235, 126
      %v4284 = vpop.permute.xlu0 %4283
      %4285 = vrot.lane.b32.xlu0 %v4236, 126
      %v4286 = vpop.permute.xlu0 %4285
      %4287 = vrot.lane.b32.xlu0 %v4241, 126
      %v4288 = vpop.permute.xlu0 %4287
      %4289 = vrot.lane.b32.xlu0 %v4242, 126
      %v4290 = vpop.permute.xlu0 %4289
      %4291 = vrot.lane.b32.xlu0 %v4243, 126
      %v4292 = vpop.permute.xlu0 %4291
      %4293 = vrot.lane.b32.xlu0 %v4244, 126
      %v4294 = vpop.permute.xlu0 %4293
      %4295 = vrot.lane.b32.xlu0 %v4245, 126
      %v4296 = vpop.permute.xlu0 %4295
      %4297 = vrot.lane.b32.xlu0 %v4246, 126
      %v4298 = vpop.permute.xlu0 %4297
      %4299 = vrot.lane.b32.xlu0 %v4247, 126
      %v4300 = vpop.permute.xlu0 %4299
      %4301 = vrot.lane.b32.xlu0 %v4248, 126
      %v4302 = vpop.permute.xlu0 %4301
      %4303 = vrot.lane.b32.xlu0 %v4251, 126
      %v4304 = vpop.permute.xlu0 %4303
      %4305 = vrot.lane.b32.xlu0 %v4252, 126
      %v4306 = vpop.permute.xlu0 %4305
      %4307 = vrot.lane.b32.xlu0 %v4253, 126
      %v4308 = vpop.permute.xlu0 %4307
      %4309 = vrot.lane.b32.xlu0 %v4254, 126
      %v4310 = vpop.permute.xlu0 %4309
      %v4311 = vsel %vm645, %v4256, %v4258
      %v4312 = vsel %vm645, %v4258, %v4260
      %v4313 = vsel %vm645, %v4260, %v4262
      %v4314 = vsel %vm645, %v4262, %v4264
      %v4315 = vsel %vm645, %v4264, %v4266
      %v4316 = vsel %vm645, %v4266, %v4268
      %v4317 = vsel %vm645, %v4268, %v4270
      %v4318 = vsel %vm645, %v4270, %v4272
      %v4319 = vsel %vm645, %v4272, %v4274
      %v4320 = vsel %vm645, %v4274, %v4276
      %v4321 = vsel %vm645, %v4276, %v4278
      %v4322 = vsel %vm645, %v4278, %v4280
      %v4323 = vsel %vm645, %v4280, %v4282
      %v4324 = vsel %vm645, %v4282, %v4284
      %v4325 = vsel %vm645, %v4284, %v4286
      %v4326 = vsel %vm645, %v4286, %v4288
      %v4327 = vsel %vm645, %v4288, %v4290
      %v4328 = vsel %vm645, %v4290, %v4292
      %v4329 = vsel %vm645, %v4292, %v4294
      %v4330 = vsel %vm645, %v4294, %v4296
      %v4331 = vsel %vm645, %v4296, %v4298
      %v4332 = vsel %vm645, %v4298, %v4300
      %v4333 = vsel %vm645, %v4300, %v4302
      %v4334 = vsel %vm645, %v4302, %v4304
      %v4335 = vsel %vm645, %v4304, %v4306
      %v4336 = vsel %vm645, %v4306, %v4308
      %v4337 = vsel %vm645, %v4308, %v4310
      %4366 = vst [vmem:[#allocation2 + $0x8c0] sm:$0xf] %v4311
      %4367 = vst [vmem:[#allocation2 + $0x8c8] sm:$0xf] %v4312
      %4368 = vst [vmem:[#allocation2 + $0x8d0] sm:$0xf] %v4313
      %4369 = vst [vmem:[#allocation2 + $0x8d8] sm:$0xf] %v4314
      %4370 = vst [vmem:[#allocation2 + $0x8e0] sm:$0xf] %v4315
      %4371 = vst [vmem:[#allocation2 + $0x8e8] sm:$0xf] %v4316
      %4372 = vst [vmem:[#allocation2 + $0x8f0] sm:$0xf] %v4317
      %4373 = vst [vmem:[#allocation2 + $0x8f8] sm:$0xf] %v4318
      %4374 = vst [vmem:[#allocation2 + $0x900] sm:$0xf] %v4319
      %4375 = vst [vmem:[#allocation2 + $0x908] sm:$0xf] %v4320
      %4376 = vst [vmem:[#allocation2 + $0x910] sm:$0xf] %v4321
      %4377 = vst [vmem:[#allocation2 + $0x918] sm:$0xf] %v4322
      %4378 = vst [vmem:[#allocation2 + $0x920] sm:$0xf] %v4323
      %4379 = vst [vmem:[#allocation2 + $0x928] sm:$0xf] %v4324
      %4380 = vst [vmem:[#allocation2 + $0x930] sm:$0xf] %v4325
      %4381 = vst [vmem:[#allocation2 + $0x938] sm:$0xf] %v4326
      %4382 = vst [vmem:[#allocation2 + $0x940] sm:$0xf] %v4327
      %4383 = vst [vmem:[#allocation2 + $0x948] sm:$0xf] %v4328
      %4384 = vst [vmem:[#allocation2 + $0x950] sm:$0xf] %v4329
      %4385 = vst [vmem:[#allocation2 + $0x958] sm:$0xf] %v4330
      %4386 = vst [vmem:[#allocation2 + $0x960] sm:$0xf] %v4331
      %4387 = vst [vmem:[#allocation2 + $0x968] sm:$0xf] %v4332
      %4388 = vst [vmem:[#allocation2 + $0x970] sm:$0xf] %v4333
      %4389 = vst [vmem:[#allocation2 + $0x978] sm:$0xf] %v4334
      %4390 = vst [vmem:[#allocation2 + $0x980] sm:$0xf] %v4335
      %4391 = vst [vmem:[#allocation2 + $0x988] sm:$0xf] %v4336
      %4392 = vst [vmem:[#allocation2 + $0x990] sm:$0xf] %v4337
      %4393 = vst.msk [vmem:[#allocation2 + $0x998] sm:$0xf] %vm299, %v4310
      %v4394 = vld [vmem:[%s165 + $0x10] sm:$0xff]
      %v4395 = vld [vmem:[%s165 + $0x18] sm:$0xff]
      %v4396 = vld [vmem:[%s165 + $0x20] sm:$0xff]
      %v4397 = vld [vmem:[%s165 + $0x28] sm:$0xff]
      %v4398 = vld [vmem:[%s165 + $0x30] sm:$0xff]
      %v4399 = vld [vmem:[%s165 + $0x38] sm:$0xff]
      %v4400 = vld [vmem:[%s165 + $0x40] sm:$0xff]
      %v4401 = vld [vmem:[%s165 + $0x48] sm:$0xff]
      %v4402 = vld [vmem:[%s165 + $0x50] sm:$0xff]
      %v4403 = vld [vmem:[%s165 + $0x58] sm:$0xff]
      %v4404 = vld [vmem:[%s165 + $0x60] sm:$0xff]
      %v4405 = vld [vmem:[%s165 + $0x68] sm:$0xff]
      %v4406 = vld [vmem:[%s165 + $0x70] sm:$0xff]
      %v4407 = vld [vmem:[%s165 + $0x78] sm:$0xff]
      %s4422 = scalar_lea.vmem [#allocation1], 1
      %4423 = vst [vmem:[%s4422] ss:$2 sm:$0xff] %v4394
      %s4424 = scalar_lea.vmem [#allocation1], 17
      %4425 = vst [vmem:[%s4424] ss:$2 sm:$0xff] %v4395
      %s4426 = scalar_lea.vmem [#allocation1], 33
      %4427 = vst [vmem:[%s4426] ss:$2 sm:$0xff] %v4396
      %s4428 = scalar_lea.vmem [#allocation1], 49
      %4429 = vst [vmem:[%s4428] ss:$2 sm:$0xff] %v4397
      %v4430 = vld.sshfl [vmem:[#allocation1] sm:$0xff pattern:$0x75316420]
      %v4431 = vld.sshfl [vmem:[#allocation1 + $0x8] sm:$0xff pattern:$0x75316420]
      %v4432 = vld.sshfl [vmem:[#allocation1 + $0x10] sm:$0xff pattern:$0x75316420]
      %v4433 = vld.sshfl [vmem:[#allocation1 + $0x18] sm:$0xff pattern:$0x75316420]
      %v4434 = vld.sshfl [vmem:[#allocation1 + $0x20] sm:$0xff pattern:$0x75316420]
      %v4435 = vld.sshfl [vmem:[#allocation1 + $0x28] sm:$0xff pattern:$0x75316420]
      %v4436 = vld.sshfl [vmem:[#allocation1 + $0x30] sm:$0xff pattern:$0x75316420]
      %v4437 = vld.sshfl [vmem:[#allocation1 + $0x38] sm:$0xff pattern:$0x75316420]
      %4438 = vst [vmem:[%s4422] ss:$2 sm:$0xff] %v4398
      %4439 = vst [vmem:[%s4424] ss:$2 sm:$0xff] %v4399
      %4440 = vst [vmem:[%s4426] ss:$2 sm:$0xff] %v4400
      %4441 = vst [vmem:[%s4428] ss:$2 sm:$0xff] %v4401
      %v4442 = vld.sshfl [vmem:[#allocation1] sm:$0xff pattern:$0x75316420]
      %v4443 = vld.sshfl [vmem:[#allocation1 + $0x8] sm:$0xff pattern:$0x75316420]
      %v4444 = vld.sshfl [vmem:[#allocation1 + $0x10] sm:$0xff pattern:$0x75316420]
      %v4445 = vld.sshfl [vmem:[#allocation1 + $0x18] sm:$0xff pattern:$0x75316420]
      %v4446 = vld.sshfl [vmem:[#allocation1 + $0x20] sm:$0xff pattern:$0x75316420]
      %v4447 = vld.sshfl [vmem:[#allocation1 + $0x28] sm:$0xff pattern:$0x75316420]
      %v4448 = vld.sshfl [vmem:[#allocation1 + $0x30] sm:$0xff pattern:$0x75316420]
      %v4449 = vld.sshfl [vmem:[#allocation1 + $0x38] sm:$0xff pattern:$0x75316420]
      %4450 = vst [vmem:[%s4422] ss:$2 sm:$0xff] %v4402
      %4451 = vst [vmem:[%s4424] ss:$2 sm:$0xff] %v4403
      %4452 = vst [vmem:[%s4426] ss:$2 sm:$0xff] %v4404
      %4453 = vst [vmem:[%s4428] ss:$2 sm:$0xff] %v4405
      %v4454 = vld.sshfl [vmem:[#allocation1] sm:$0xff pattern:$0x75316420]
      %v4455 = vld.sshfl [vmem:[#allocation1 + $0x8] sm:$0xff pattern:$0x75316420]
      %v4456 = vld.sshfl [vmem:[#allocation1 + $0x10] sm:$0xff pattern:$0x75316420]
      %v4457 = vld.sshfl [vmem:[#allocation1 + $0x18] sm:$0xff pattern:$0x75316420]
      %v4458 = vld.sshfl [vmem:[#allocation1 + $0x20] sm:$0xff pattern:$0x75316420]
      %v4459 = vld.sshfl [vmem:[#allocation1 + $0x28] sm:$0xff pattern:$0x75316420]
      %v4460 = vld.sshfl [vmem:[#allocation1 + $0x30] sm:$0xff pattern:$0x75316420]
      %v4461 = vld.sshfl [vmem:[#allocation1 + $0x38] sm:$0xff pattern:$0x75316420]
      %4462 = vst [vmem:[%s4422] ss:$2 sm:$0xff] %v4406
      %4463 = vst [vmem:[%s4424] ss:$2 sm:$0xff] %v4407
      %v4464 = vld.sshfl [vmem:[#allocation1] sm:$0xff pattern:$0x75316420]
      %v4465 = vld.sshfl [vmem:[#allocation1 + $0x8] sm:$0xff pattern:$0x75316420]
      %v4466 = vld.sshfl [vmem:[#allocation1 + $0x10] sm:$0xff pattern:$0x75316420]
      %v4467 = vld.sshfl [vmem:[#allocation1 + $0x18] sm:$0xff pattern:$0x75316420]
      %4468 = vrot.lane.b32.xlu0 %v4430, 112
      %v4469 = vpop.permute.xlu0 %4468
      %4470 = vrot.lane.b32.xlu0 %v4431, 112
      %v4471 = vpop.permute.xlu0 %4470
      %4472 = vrot.lane.b32.xlu0 %v4432, 112
      %v4473 = vpop.permute.xlu0 %4472
      %4474 = vrot.lane.b32.xlu0 %v4433, 112
      %v4475 = vpop.permute.xlu0 %4474
      %4476 = vrot.lane.b32.xlu0 %v4434, 112
      %v4477 = vpop.permute.xlu0 %4476
      %4478 = vrot.lane.b32.xlu0 %v4435, 112
      %v4479 = vpop.permute.xlu0 %4478
      %4480 = vrot.lane.b32.xlu0 %v4436, 112
      %v4481 = vpop.permute.xlu0 %4480
      %4482 = vrot.lane.b32.xlu0 %v4437, 112
      %v4483 = vpop.permute.xlu0 %4482
      %4484 = vrot.lane.b32.xlu0 %v4442, 112
      %v4485 = vpop.permute.xlu0 %4484
      %4486 = vrot.lane.b32.xlu0 %v4443, 112
      %v4487 = vpop.permute.xlu0 %4486
      %4488 = vrot.lane.b32.xlu0 %v4444, 112
      %v4489 = vpop.permute.xlu0 %4488
      %4490 = vrot.lane.b32.xlu0 %v4445, 112
      %v4491 = vpop.permute.xlu0 %4490
      %4492 = vrot.lane.b32.xlu0 %v4446, 112
      %v4493 = vpop.permute.xlu0 %4492
      %4494 = vrot.lane.b32.xlu0 %v4447, 112
      %v4495 = vpop.permute.xlu0 %4494
      %4496 = vrot.lane.b32.xlu0 %v4448, 112
      %v4497 = vpop.permute.xlu0 %4496
      %4498 = vrot.lane.b32.xlu0 %v4449, 112
      %v4499 = vpop.permute.xlu0 %4498
      %4500 = vrot.lane.b32.xlu0 %v4454, 112
      %v4501 = vpop.permute.xlu0 %4500
      %4502 = vrot.lane.b32.xlu0 %v4455, 112
      %v4503 = vpop.permute.xlu0 %4502
      %4504 = vrot.lane.b32.xlu0 %v4456, 112
      %v4505 = vpop.permute.xlu0 %4504
      %4506 = vrot.lane.b32.xlu0 %v4457, 112
      %v4507 = vpop.permute.xlu0 %4506
      %4508 = vrot.lane.b32.xlu0 %v4458, 112
      %v4509 = vpop.permute.xlu0 %4508
      %4510 = vrot.lane.b32.xlu0 %v4459, 112
      %v4511 = vpop.permute.xlu0 %4510
      %4512 = vrot.lane.b32.xlu0 %v4460, 112
      %v4513 = vpop.permute.xlu0 %4512
      %4514 = vrot.lane.b32.xlu0 %v4461, 112
      %v4515 = vpop.permute.xlu0 %4514
      %4516 = vrot.lane.b32.xlu0 %v4464, 112
      %v4517 = vpop.permute.xlu0 %4516
      %4518 = vrot.lane.b32.xlu0 %v4465, 112
      %v4519 = vpop.permute.xlu0 %4518
      %4520 = vrot.lane.b32.xlu0 %v4466, 112
      %v4521 = vpop.permute.xlu0 %4520
      %4522 = vrot.lane.b32.xlu0 %v4467, 112
      %v4523 = vpop.permute.xlu0 %4522
      %v4524 = vsel %vm859, %v4469, %v4471
      %v4525 = vsel %vm859, %v4471, %v4473
      %v4526 = vsel %vm859, %v4473, %v4475
      %v4527 = vsel %vm859, %v4475, %v4477
      %v4528 = vsel %vm859, %v4477, %v4479
      %v4529 = vsel %vm859, %v4479, %v4481
      %v4530 = vsel %vm859, %v4481, %v4483
      %v4531 = vsel %vm859, %v4483, %v4485
      %v4532 = vsel %vm859, %v4485, %v4487
      %v4533 = vsel %vm859, %v4487, %v4489
      %v4534 = vsel %vm859, %v4489, %v4491
      %v4535 = vsel %vm859, %v4491, %v4493
      %v4536 = vsel %vm859, %v4493, %v4495
      %v4537 = vsel %vm859, %v4495, %v4497
      %v4538 = vsel %vm859, %v4497, %v4499
      %v4539 = vsel %vm859, %v4499, %v4501
      %v4540 = vsel %vm859, %v4501, %v4503
      %v4541 = vsel %vm859, %v4503, %v4505
      %v4542 = vsel %vm859, %v4505, %v4507
      %v4543 = vsel %vm859, %v4507, %v4509
      %v4544 = vsel %vm859, %v4509, %v4511
      %v4545 = vsel %vm859, %v4511, %v4513
      %v4546 = vsel %vm859, %v4513, %v4515
      %v4547 = vsel %vm859, %v4515, %v4517
      %v4548 = vsel %vm859, %v4517, %v4519
      %v4549 = vsel %vm859, %v4519, %v4521
      %v4550 = vsel %vm859, %v4521, %v4523
      %4579 = vst [vmem:[#allocation2 + $0x8c0] sm:$0xf0] %v4524
      %4580 = vst [vmem:[#allocation2 + $0x8c8] sm:$0xf0] %v4525
      %4581 = vst [vmem:[#allocation2 + $0x8d0] sm:$0xf0] %v4526
      %4582 = vst [vmem:[#allocation2 + $0x8d8] sm:$0xf0] %v4527
      %4583 = vst [vmem:[#allocation2 + $0x8e0] sm:$0xf0] %v4528
      %4584 = vst [vmem:[#allocation2 + $0x8e8] sm:$0xf0] %v4529
      %4585 = vst [vmem:[#allocation2 + $0x8f0] sm:$0xf0] %v4530
      %4586 = vst [vmem:[#allocation2 + $0x8f8] sm:$0xf0] %v4531
      %4587 = vst [vmem:[#allocation2 + $0x900] sm:$0xf0] %v4532
      %4588 = vst [vmem:[#allocation2 + $0x908] sm:$0xf0] %v4533
      %4589 = vst [vmem:[#allocation2 + $0x910] sm:$0xf0] %v4534
      %4590 = vst [vmem:[#allocation2 + $0x918] sm:$0xf0] %v4535
      %4591 = vst [vmem:[#allocation2 + $0x920] sm:$0xf0] %v4536
      %4592 = vst [vmem:[#allocation2 + $0x928] sm:$0xf0] %v4537
      %4593 = vst [vmem:[#allocation2 + $0x930] sm:$0xf0] %v4538
      %4594 = vst [vmem:[#allocation2 + $0x938] sm:$0xf0] %v4539
      %4595 = vst [vmem:[#allocation2 + $0x940] sm:$0xf0] %v4540
      %4596 = vst [vmem:[#allocation2 + $0x948] sm:$0xf0] %v4541
      %4597 = vst [vmem:[#allocation2 + $0x950] sm:$0xf0] %v4542
      %4598 = vst [vmem:[#allocation2 + $0x958] sm:$0xf0] %v4543
      %4599 = vst [vmem:[#allocation2 + $0x960] sm:$0xf0] %v4544
      %4600 = vst [vmem:[#allocation2 + $0x968] sm:$0xf0] %v4545
      %4601 = vst [vmem:[#allocation2 + $0x970] sm:$0xf0] %v4546
      %4602 = vst [vmem:[#allocation2 + $0x978] sm:$0xf0] %v4547
      %4603 = vst [vmem:[#allocation2 + $0x980] sm:$0xf0] %v4548
      %4604 = vst [vmem:[#allocation2 + $0x988] sm:$0xf0] %v4549
      %4605 = vst [vmem:[#allocation2 + $0x990] sm:$0xf0] %v4550
      %4606 = vst.msk [vmem:[#allocation2 + $0x998] sm:$0xf0] %vm514, %v4523
      %v4607 = vld [vmem:[%s165 + $0x10] sm:$0xff]
      %v4608 = vld [vmem:[%s165 + $0x18] sm:$0xff]
      %v4609 = vld [vmem:[%s165 + $0x20] sm:$0xff]
      %v4610 = vld [vmem:[%s165 + $0x28] sm:$0xff]
      %v4611 = vld [vmem:[%s165 + $0x30] sm:$0xff]
      %v4612 = vld [vmem:[%s165 + $0x38] sm:$0xff]
      %v4613 = vld [vmem:[%s165 + $0x40] sm:$0xff]
      %v4614 = vld [vmem:[%s165 + $0x48] sm:$0xff]
      %v4615 = vld [vmem:[%s165 + $0x50] sm:$0xff]
      %v4616 = vld [vmem:[%s165 + $0x58] sm:$0xff]
      %v4617 = vld [vmem:[%s165 + $0x60] sm:$0xff]
      %v4618 = vld [vmem:[%s165 + $0x68] sm:$0xff]
      %v4619 = vld [vmem:[%s165 + $0x70] sm:$0xff]
      %v4620 = vld [vmem:[%s165 + $0x78] sm:$0xff]
      %4635 = vst [vmem:[#allocation1] ss:$2 sm:$0xff] %v4607
      %s4636 = scalar_lea.vmem [#allocation1], 16
      %4637 = vst [vmem:[%s4636] ss:$2 sm:$0xff] %v4608
      %s4638 = scalar_lea.vmem [#allocation1], 32
      %4639 = vst [vmem:[%s4638] ss:$2 sm:$0xff] %v4609
      %s4640 = scalar_lea.vmem [#allocation1], 48
      %4641 = vst [vmem:[%s4640] ss:$2 sm:$0xff] %v4610
      %v4642 = vld.sshfl [vmem:[#allocation1] sm:$0xff pattern:$0x75316420]
      %v4643 = vld.sshfl [vmem:[#allocation1 + $0x8] sm:$0xff pattern:$0x75316420]
      %v4644 = vld.sshfl [vmem:[#allocation1 + $0x10] sm:$0xff pattern:$0x75316420]
      %v4645 = vld.sshfl [vmem:[#allocation1 + $0x18] sm:$0xff pattern:$0x75316420]
      %v4646 = vld.sshfl [vmem:[#allocation1 + $0x20] sm:$0xff pattern:$0x75316420]
      %v4647 = vld.sshfl [vmem:[#allocation1 + $0x28] sm:$0xff pattern:$0x75316420]
      %v4648 = vld.sshfl [vmem:[#allocation1 + $0x30] sm:$0xff pattern:$0x75316420]
      %v4649 = vld.sshfl [vmem:[#allocation1 + $0x38] sm:$0xff pattern:$0x75316420]
      %4650 = vst [vmem:[#allocation1] ss:$2 sm:$0xff] %v4611
      %4651 = vst [vmem:[%s4636] ss:$2 sm:$0xff] %v4612
      %4652 = vst [vmem:[%s4638] ss:$2 sm:$0xff] %v4613
      %4653 = vst [vmem:[%s4640] ss:$2 sm:$0xff] %v4614
      %v4654 = vld.sshfl [vmem:[#allocation1] sm:$0xff pattern:$0x75316420]
      %v4655 = vld.sshfl [vmem:[#allocation1 + $0x8] sm:$0xff pattern:$0x75316420]
      %v4656 = vld.sshfl [vmem:[#allocation1 + $0x10] sm:$0xff pattern:$0x75316420]
      %v4657 = vld.sshfl [vmem:[#allocation1 + $0x18] sm:$0xff pattern:$0x75316420]
      %v4658 = vld.sshfl [vmem:[#allocation1 + $0x20] sm:$0xff pattern:$0x75316420]
      %v4659 = vld.sshfl [vmem:[#allocation1 + $0x28] sm:$0xff pattern:$0x75316420]
      %v4660 = vld.sshfl [vmem:[#allocation1 + $0x30] sm:$0xff pattern:$0x75316420]
      %v4661 = vld.sshfl [vmem:[#allocation1 + $0x38] sm:$0xff pattern:$0x75316420]
      %4662 = vst [vmem:[#allocation1] ss:$2 sm:$0xff] %v4615
      %4663 = vst [vmem:[%s4636] ss:$2 sm:$0xff] %v4616
      %4664 = vst [vmem:[%s4638] ss:$2 sm:$0xff] %v4617
      %4665 = vst [vmem:[%s4640] ss:$2 sm:$0xff] %v4618
      %v4666 = vld.sshfl [vmem:[#allocation1] sm:$0xff pattern:$0x75316420]
      %v4667 = vld.sshfl [vmem:[#allocation1 + $0x8] sm:$0xff pattern:$0x75316420]
      %v4668 = vld.sshfl [vmem:[#allocation1 + $0x10] sm:$0xff pattern:$0x75316420]
      %v4669 = vld.sshfl [vmem:[#allocation1 + $0x18] sm:$0xff pattern:$0x75316420]
      %v4670 = vld.sshfl [vmem:[#allocation1 + $0x20] sm:$0xff pattern:$0x75316420]
      %v4671 = vld.sshfl [vmem:[#allocation1 + $0x28] sm:$0xff pattern:$0x75316420]
      %v4672 = vld.sshfl [vmem:[#allocation1 + $0x30] sm:$0xff pattern:$0x75316420]
      %v4673 = vld.sshfl [vmem:[#allocation1 + $0x38] sm:$0xff pattern:$0x75316420]
      %4674 = vst [vmem:[#allocation1] ss:$2 sm:$0xff] %v4619
      %4675 = vst [vmem:[%s4636] ss:$2 sm:$0xff] %v4620
      %v4676 = vld.sshfl [vmem:[#allocation1] sm:$0xff pattern:$0x75316420]
      %v4677 = vld.sshfl [vmem:[#allocation1 + $0x8] sm:$0xff pattern:$0x75316420]
      %v4678 = vld.sshfl [vmem:[#allocation1 + $0x10] sm:$0xff pattern:$0x75316420]
      %v4679 = vld.sshfl [vmem:[#allocation1 + $0x18] sm:$0xff pattern:$0x75316420]
      %4680 = vrot.lane.b32.xlu0 %v4642, 111
      %v4681 = vpop.permute.xlu0 %4680
      %4682 = vrot.lane.b32.xlu0 %v4643, 111
      %v4683 = vpop.permute.xlu0 %4682
      %4684 = vrot.lane.b32.xlu0 %v4644, 111
      %v4685 = vpop.permute.xlu0 %4684
      %4686 = vrot.lane.b32.xlu0 %v4645, 111
      %v4687 = vpop.permute.xlu0 %4686
      %4688 = vrot.lane.b32.xlu0 %v4646, 111
      %v4689 = vpop.permute.xlu0 %4688
      %4690 = vrot.lane.b32.xlu0 %v4647, 111
      %v4691 = vpop.permute.xlu0 %4690
      %4692 = vrot.lane.b32.xlu0 %v4648, 111
      %v4693 = vpop.permute.xlu0 %4692
      %4694 = vrot.lane.b32.xlu0 %v4649, 111
      %v4695 = vpop.permute.xlu0 %4694
      %4696 = vrot.lane.b32.xlu0 %v4654, 111
      %v4697 = vpop.permute.xlu0 %4696
      %4698 = vrot.lane.b32.xlu0 %v4655, 111
      %v4699 = vpop.permute.xlu0 %4698
      %4700 = vrot.lane.b32.xlu0 %v4656, 111
      %v4701 = vpop.permute.xlu0 %4700
      %4702 = vrot.lane.b32.xlu0 %v4657, 111
      %v4703 = vpop.permute.xlu0 %4702
      %4704 = vrot.lane.b32.xlu0 %v4658, 111
      %v4705 = vpop.permute.xlu0 %4704
      %4706 = vrot.lane.b32.xlu0 %v4659, 111
      %v4707 = vpop.permute.xlu0 %4706
      %4708 = vrot.lane.b32.xlu0 %v4660, 111
      %v4709 = vpop.permute.xlu0 %4708
      %4710 = vrot.lane.b32.xlu0 %v4661, 111
      %v4711 = vpop.permute.xlu0 %4710
      %4712 = vrot.lane.b32.xlu0 %v4666, 111
      %v4713 = vpop.permute.xlu0 %4712
      %4714 = vrot.lane.b32.xlu0 %v4667, 111
      %v4715 = vpop.permute.xlu0 %4714
      %4716 = vrot.lane.b32.xlu0 %v4668, 111
      %v4717 = vpop.permute.xlu0 %4716
      %4718 = vrot.lane.b32.xlu0 %v4669, 111
      %v4719 = vpop.permute.xlu0 %4718
      %4720 = vrot.lane.b32.xlu0 %v4670, 111
      %v4721 = vpop.permute.xlu0 %4720
      %4722 = vrot.lane.b32.xlu0 %v4671, 111
      %v4723 = vpop.permute.xlu0 %4722
      %4724 = vrot.lane.b32.xlu0 %v4672, 111
      %v4725 = vpop.permute.xlu0 %4724
      %4726 = vrot.lane.b32.xlu0 %v4673, 111
      %v4727 = vpop.permute.xlu0 %4726
      %4728 = vrot.lane.b32.xlu0 %v4676, 111
      %v4729 = vpop.permute.xlu0 %4728
      %4730 = vrot.lane.b32.xlu0 %v4677, 111
      %v4731 = vpop.permute.xlu0 %4730
      %4732 = vrot.lane.b32.xlu0 %v4678, 111
      %v4733 = vpop.permute.xlu0 %4732
      %4734 = vrot.lane.b32.xlu0 %v4679, 111
      %v4735 = vpop.permute.xlu0 %4734
      %v4736 = vsel %vm1072, %v4681, %v4683
      %v4737 = vsel %vm1072, %v4683, %v4685
      %v4738 = vsel %vm1072, %v4685, %v4687
      %v4739 = vsel %vm1072, %v4687, %v4689
      %v4740 = vsel %vm1072, %v4689, %v4691
      %v4741 = vsel %vm1072, %v4691, %v4693
      %v4742 = vsel %vm1072, %v4693, %v4695
      %v4743 = vsel %vm1072, %v4695, %v4697
      %v4744 = vsel %vm1072, %v4697, %v4699
      %v4745 = vsel %vm1072, %v4699, %v4701
      %v4746 = vsel %vm1072, %v4701, %v4703
      %v4747 = vsel %vm1072, %v4703, %v4705
      %v4748 = vsel %vm1072, %v4705, %v4707
      %v4749 = vsel %vm1072, %v4707, %v4709
      %v4750 = vsel %vm1072, %v4709, %v4711
      %v4751 = vsel %vm1072, %v4711, %v4713
      %v4752 = vsel %vm1072, %v4713, %v4715
      %v4753 = vsel %vm1072, %v4715, %v4717
      %v4754 = vsel %vm1072, %v4717, %v4719
      %v4755 = vsel %vm1072, %v4719, %v4721
      %v4756 = vsel %vm1072, %v4721, %v4723
      %v4757 = vsel %vm1072, %v4723, %v4725
      %v4758 = vsel %vm1072, %v4725, %v4727
      %v4759 = vsel %vm1072, %v4727, %v4729
      %v4760 = vsel %vm1072, %v4729, %v4731
      %v4761 = vsel %vm1072, %v4731, %v4733
      %v4762 = vsel %vm1072, %v4733, %v4735
      %4791 = vst [vmem:[#allocation2 + $0x9a0] sm:$0xf] %v4736
      %4792 = vst [vmem:[#allocation2 + $0x9a8] sm:$0xf] %v4737
      %4793 = vst [vmem:[#allocation2 + $0x9b0] sm:$0xf] %v4738
      %4794 = vst [vmem:[#allocation2 + $0x9b8] sm:$0xf] %v4739
      %4795 = vst [vmem:[#allocation2 + $0x9c0] sm:$0xf] %v4740
      %4796 = vst [vmem:[#allocation2 + $0x9c8] sm:$0xf] %v4741
      %4797 = vst [vmem:[#allocation2 + $0x9d0] sm:$0xf] %v4742
      %4798 = vst [vmem:[#allocation2 + $0x9d8] sm:$0xf] %v4743
      %4799 = vst [vmem:[#allocation2 + $0x9e0] sm:$0xf] %v4744
      %4800 = vst [vmem:[#allocation2 + $0x9e8] sm:$0xf] %v4745
      %4801 = vst [vmem:[#allocation2 + $0x9f0] sm:$0xf] %v4746
      %4802 = vst [vmem:[#allocation2 + $0x9f8] sm:$0xf] %v4747
      %4803 = vst [vmem:[#allocation2 + $0xa00] sm:$0xf] %v4748
      %4804 = vst [vmem:[#allocation2 + $0xa08] sm:$0xf] %v4749
      %4805 = vst [vmem:[#allocation2 + $0xa10] sm:$0xf] %v4750
      %4806 = vst [vmem:[#allocation2 + $0xa18] sm:$0xf] %v4751
      %4807 = vst [vmem:[#allocation2 + $0xa20] sm:$0xf] %v4752
      %4808 = vst [vmem:[#allocation2 + $0xa28] sm:$0xf] %v4753
      %4809 = vst [vmem:[#allocation2 + $0xa30] sm:$0xf] %v4754
      %4810 = vst [vmem:[#allocation2 + $0xa38] sm:$0xf] %v4755
      %4811 = vst [vmem:[#allocation2 + $0xa40] sm:$0xf] %v4756
      %4812 = vst [vmem:[#allocation2 + $0xa48] sm:$0xf] %v4757
      %4813 = vst [vmem:[#allocation2 + $0xa50] sm:$0xf] %v4758
      %4814 = vst [vmem:[#allocation2 + $0xa58] sm:$0xf] %v4759
      %4815 = vst [vmem:[#allocation2 + $0xa60] sm:$0xf] %v4760
      %4816 = vst [vmem:[#allocation2 + $0xa68] sm:$0xf] %v4761
      %4817 = vst [vmem:[#allocation2 + $0xa70] sm:$0xf] %v4762
      %4818 = vst.msk [vmem:[#allocation2 + $0xa78] sm:$0xf] %vm299, %v4735
      %v4819 = vld [vmem:[%s165 + $0x10] sm:$0xff]
      %v4820 = vld [vmem:[%s165 + $0x18] sm:$0xff]
      %v4821 = vld [vmem:[%s165 + $0x20] sm:$0xff]
      %v4822 = vld [vmem:[%s165 + $0x28] sm:$0xff]
      %v4823 = vld [vmem:[%s165 + $0x30] sm:$0xff]
      %v4824 = vld [vmem:[%s165 + $0x38] sm:$0xff]
      %v4825 = vld [vmem:[%s165 + $0x40] sm:$0xff]
      %v4826 = vld [vmem:[%s165 + $0x48] sm:$0xff]
      %v4827 = vld [vmem:[%s165 + $0x50] sm:$0xff]
      %v4828 = vld [vmem:[%s165 + $0x58] sm:$0xff]
      %v4829 = vld [vmem:[%s165 + $0x60] sm:$0xff]
      %v4830 = vld [vmem:[%s165 + $0x68] sm:$0xff]
      %v4831 = vld [vmem:[%s165 + $0x70] sm:$0xff]
      %v4832 = vld [vmem:[%s165 + $0x78] sm:$0xff]
      %s4847 = scalar_lea.vmem [#allocation1], 1
      %4848 = vst [vmem:[%s4847] ss:$2 sm:$0xff] %v4819
      %s4849 = scalar_lea.vmem [#allocation1], 17
      %4850 = vst [vmem:[%s4849] ss:$2 sm:$0xff] %v4820
      %s4851 = scalar_lea.vmem [#allocation1], 33
      %4852 = vst [vmem:[%s4851] ss:$2 sm:$0xff] %v4821
      %s4853 = scalar_lea.vmem [#allocation1], 49
      %4854 = vst [vmem:[%s4853] ss:$2 sm:$0xff] %v4822
      %v4855 = vld.sshfl [vmem:[#allocation1] sm:$0xff pattern:$0x75316420]
      %v4856 = vld.sshfl [vmem:[#allocation1 + $0x8] sm:$0xff pattern:$0x75316420]
      %v4857 = vld.sshfl [vmem:[#allocation1 + $0x10] sm:$0xff pattern:$0x75316420]
      %v4858 = vld.sshfl [vmem:[#allocation1 + $0x18] sm:$0xff pattern:$0x75316420]
      %v4859 = vld.sshfl [vmem:[#allocation1 + $0x20] sm:$0xff pattern:$0x75316420]
      %v4860 = vld.sshfl [vmem:[#allocation1 + $0x28] sm:$0xff pattern:$0x75316420]
      %v4861 = vld.sshfl [vmem:[#allocation1 + $0x30] sm:$0xff pattern:$0x75316420]
      %v4862 = vld.sshfl [vmem:[#allocation1 + $0x38] sm:$0xff pattern:$0x75316420]
      %4863 = vst [vmem:[%s4847] ss:$2 sm:$0xff] %v4823
      %4864 = vst [vmem:[%s4849] ss:$2 sm:$0xff] %v4824
      %4865 = vst [vmem:[%s4851] ss:$2 sm:$0xff] %v4825
      %4866 = vst [vmem:[%s4853] ss:$2 sm:$0xff] %v4826
      %v4867 = vld.sshfl [vmem:[#allocation1] sm:$0xff pattern:$0x75316420]
      %v4868 = vld.sshfl [vmem:[#allocation1 + $0x8] sm:$0xff pattern:$0x75316420]
      %v4869 = vld.sshfl [vmem:[#allocation1 + $0x10] sm:$0xff pattern:$0x75316420]
      %v4870 = vld.sshfl [vmem:[#allocation1 + $0x18] sm:$0xff pattern:$0x75316420]
      %v4871 = vld.sshfl [vmem:[#allocation1 + $0x20] sm:$0xff pattern:$0x75316420]
      %v4872 = vld.sshfl [vmem:[#allocation1 + $0x28] sm:$0xff pattern:$0x75316420]
      %v4873 = vld.sshfl [vmem:[#allocation1 + $0x30] sm:$0xff pattern:$0x75316420]
      %v4874 = vld.sshfl [vmem:[#allocation1 + $0x38] sm:$0xff pattern:$0x75316420]
      %4875 = vst [vmem:[%s4847] ss:$2 sm:$0xff] %v4827
      %4876 = vst [vmem:[%s4849] ss:$2 sm:$0xff] %v4828
      %4877 = vst [vmem:[%s4851] ss:$2 sm:$0xff] %v4829
      %4878 = vst [vmem:[%s4853] ss:$2 sm:$0xff] %v4830
      %v4879 = vld.sshfl [vmem:[#allocation1] sm:$0xff pattern:$0x75316420]
      %v4880 = vld.sshfl [vmem:[#allocation1 + $0x8] sm:$0xff pattern:$0x75316420]
      %v4881 = vld.sshfl [vmem:[#allocation1 + $0x10] sm:$0xff pattern:$0x75316420]
      %v4882 = vld.sshfl [vmem:[#allocation1 + $0x18] sm:$0xff pattern:$0x75316420]
      %v4883 = vld.sshfl [vmem:[#allocation1 + $0x20] sm:$0xff pattern:$0x75316420]
      %v4884 = vld.sshfl [vmem:[#allocation1 + $0x28] sm:$0xff pattern:$0x75316420]
      %v4885 = vld.sshfl [vmem:[#allocation1 + $0x30] sm:$0xff pattern:$0x75316420]
      %v4886 = vld.sshfl [vmem:[#allocation1 + $0x38] sm:$0xff pattern:$0x75316420]
      %4887 = vst [vmem:[%s4847] ss:$2 sm:$0xff] %v4831
      %4888 = vst [vmem:[%s4849] ss:$2 sm:$0xff] %v4832
      %v4889 = vld.sshfl [vmem:[#allocation1] sm:$0xff pattern:$0x75316420]
      %v4890 = vld.sshfl [vmem:[#allocation1 + $0x8] sm:$0xff pattern:$0x75316420]
      %v4891 = vld.sshfl [vmem:[#allocation1 + $0x10] sm:$0xff pattern:$0x75316420]
      %v4892 = vld.sshfl [vmem:[#allocation1 + $0x18] sm:$0xff pattern:$0x75316420]
      %4893 = vrot.lane.b32.xlu0 %v4855, 110
      %v4894 = vpop.permute.xlu0 %4893
      %4895 = vrot.lane.b32.xlu0 %v4856, 110
      %v4896 = vpop.permute.xlu0 %4895
      %4897 = vrot.lane.b32.xlu0 %v4857, 110
      %v4898 = vpop.permute.xlu0 %4897
      %4899 = vrot.lane.b32.xlu0 %v4858, 110
      %v4900 = vpop.permute.xlu0 %4899
      %4901 = vrot.lane.b32.xlu0 %v4859, 110
      %v4902 = vpop.permute.xlu0 %4901
      %4903 = vrot.lane.b32.xlu0 %v4860, 110
      %v4904 = vpop.permute.xlu0 %4903
      %4905 = vrot.lane.b32.xlu0 %v4861, 110
      %v4906 = vpop.permute.xlu0 %4905
      %4907 = vrot.lane.b32.xlu0 %v4862, 110
      %v4908 = vpop.permute.xlu0 %4907
      %4909 = vrot.lane.b32.xlu0 %v4867, 110
      %v4910 = vpop.permute.xlu0 %4909
      %4911 = vrot.lane.b32.xlu0 %v4868, 110
      %v4912 = vpop.permute.xlu0 %4911
      %4913 = vrot.lane.b32.xlu0 %v4869, 110
      %v4914 = vpop.permute.xlu0 %4913
      %4915 = vrot.lane.b32.xlu0 %v4870, 110
      %v4916 = vpop.permute.xlu0 %4915
      %4917 = vrot.lane.b32.xlu0 %v4871, 110
      %v4918 = vpop.permute.xlu0 %4917
      %4919 = vrot.lane.b32.xlu0 %v4872, 110
      %v4920 = vpop.permute.xlu0 %4919
      %4921 = vrot.lane.b32.xlu0 %v4873, 110
      %v4922 = vpop.permute.xlu0 %4921
      %4923 = vrot.lane.b32.xlu0 %v4874, 110
      %v4924 = vpop.permute.xlu0 %4923
      %4925 = vrot.lane.b32.xlu0 %v4879, 110
      %v4926 = vpop.permute.xlu0 %4925
      %4927 = vrot.lane.b32.xlu0 %v4880, 110
      %v4928 = vpop.permute.xlu0 %4927
      %4929 = vrot.lane.b32.xlu0 %v4881, 110
      %v4930 = vpop.permute.xlu0 %4929
      %4931 = vrot.lane.b32.xlu0 %v4882, 110
      %v4932 = vpop.permute.xlu0 %4931
      %4933 = vrot.lane.b32.xlu0 %v4883, 110
      %v4934 = vpop.permute.xlu0 %4933
      %4935 = vrot.lane.b32.xlu0 %v4884, 110
      %v4936 = vpop.permute.xlu0 %4935
      %4937 = vrot.lane.b32.xlu0 %v4885, 110
      %v4938 = vpop.permute.xlu0 %4937
      %4939 = vrot.lane.b32.xlu0 %v4886, 110
      %v4940 = vpop.permute.xlu0 %4939
      %4941 = vrot.lane.b32.xlu0 %v4889, 110
      %v4942 = vpop.permute.xlu0 %4941
      %4943 = vrot.lane.b32.xlu0 %v4890, 110
      %v4944 = vpop.permute.xlu0 %4943
      %4945 = vrot.lane.b32.xlu0 %v4891, 110
      %v4946 = vpop.permute.xlu0 %4945
      %4947 = vrot.lane.b32.xlu0 %v4892, 110
      %v4948 = vpop.permute.xlu0 %4947
      %v4949 = vsel %vm1286, %v4894, %v4896
      %v4950 = vsel %vm1286, %v4896, %v4898
      %v4951 = vsel %vm1286, %v4898, %v4900
      %v4952 = vsel %vm1286, %v4900, %v4902
      %v4953 = vsel %vm1286, %v4902, %v4904
      %v4954 = vsel %vm1286, %v4904, %v4906
      %v4955 = vsel %vm1286, %v4906, %v4908
      %v4956 = vsel %vm1286, %v4908, %v4910
      %v4957 = vsel %vm1286, %v4910, %v4912
      %v4958 = vsel %vm1286, %v4912, %v4914
      %v4959 = vsel %vm1286, %v4914, %v4916
      %v4960 = vsel %vm1286, %v4916, %v4918
      %v4961 = vsel %vm1286, %v4918, %v4920
      %v4962 = vsel %vm1286, %v4920, %v4922
      %v4963 = vsel %vm1286, %v4922, %v4924
      %v4964 = vsel %vm1286, %v4924, %v4926
      %v4965 = vsel %vm1286, %v4926, %v4928
      %v4966 = vsel %vm1286, %v4928, %v4930
      %v4967 = vsel %vm1286, %v4930, %v4932
      %v4968 = vsel %vm1286, %v4932, %v4934
      %v4969 = vsel %vm1286, %v4934, %v4936
      %v4970 = vsel %vm1286, %v4936, %v4938
      %v4971 = vsel %vm1286, %v4938, %v4940
      %v4972 = vsel %vm1286, %v4940, %v4942
      %v4973 = vsel %vm1286, %v4942, %v4944
      %v4974 = vsel %vm1286, %v4944, %v4946
      %v4975 = vsel %vm1286, %v4946, %v4948
      %5004 = vst [vmem:[#allocation2 + $0x9a0] sm:$0xf0] %v4949
      %5005 = vst [vmem:[#allocation2 + $0x9a8] sm:$0xf0] %v4950
      %5006 = vst [vmem:[#allocation2 + $0x9b0] sm:$0xf0] %v4951
      %5007 = vst [vmem:[#allocation2 + $0x9b8] sm:$0xf0] %v4952
      %5008 = vst [vmem:[#allocation2 + $0x9c0] sm:$0xf0] %v4953
      %5009 = vst [vmem:[#allocation2 + $0x9c8] sm:$0xf0] %v4954
      %5010 = vst [vmem:[#allocation2 + $0x9d0] sm:$0xf0] %v4955
      %5011 = vst [vmem:[#allocation2 + $0x9d8] sm:$0xf0] %v4956
      %5012 = vst [vmem:[#allocation2 + $0x9e0] sm:$0xf0] %v4957
      %5013 = vst [vmem:[#allocation2 + $0x9e8] sm:$0xf0] %v4958
      %5014 = vst [vmem:[#allocation2 + $0x9f0] sm:$0xf0] %v4959
      %5015 = vst [vmem:[#allocation2 + $0x9f8] sm:$0xf0] %v4960
      %5016 = vst [vmem:[#allocation2 + $0xa00] sm:$0xf0] %v4961
      %5017 = vst [vmem:[#allocation2 + $0xa08] sm:$0xf0] %v4962
      %5018 = vst [vmem:[#allocation2 + $0xa10] sm:$0xf0] %v4963
      %5019 = vst [vmem:[#allocation2 + $0xa18] sm:$0xf0] %v4964
      %5020 = vst [vmem:[#allocation2 + $0xa20] sm:$0xf0] %v4965
      %5021 = vst [vmem:[#allocation2 + $0xa28] sm:$0xf0] %v4966
      %5022 = vst [vmem:[#allocation2 + $0xa30] sm:$0xf0] %v4967
      %5023 = vst [vmem:[#allocation2 + $0xa38] sm:$0xf0] %v4968
      %5024 = vst [vmem:[#allocation2 + $0xa40] sm:$0xf0] %v4969
      %5025 = vst [vmem:[#allocation2 + $0xa48] sm:$0xf0] %v4970
      %5026 = vst [vmem:[#allocation2 + $0xa50] sm:$0xf0] %v4971
      %5027 = vst [vmem:[#allocation2 + $0xa58] sm:$0xf0] %v4972
      %5028 = vst [vmem:[#allocation2 + $0xa60] sm:$0xf0] %v4973
      %5029 = vst [vmem:[#allocation2 + $0xa68] sm:$0xf0] %v4974
      %5030 = vst [vmem:[#allocation2 + $0xa70] sm:$0xf0] %v4975
      %5031 = vst.msk [vmem:[#allocation2 + $0xa78] sm:$0xf0] %vm514, %v4948
      %v5032 = vld [vmem:[%s165 + $0x10] sm:$0xff]
      %v5033 = vld [vmem:[%s165 + $0x18] sm:$0xff]
      %v5034 = vld [vmem:[%s165 + $0x20] sm:$0xff]
      %v5035 = vld [vmem:[%s165 + $0x28] sm:$0xff]
      %v5036 = vld [vmem:[%s165 + $0x30] sm:$0xff]
      %v5037 = vld [vmem:[%s165 + $0x38] sm:$0xff]
      %v5038 = vld [vmem:[%s165 + $0x40] sm:$0xff]
      %v5039 = vld [vmem:[%s165 + $0x48] sm:$0xff]
      %v5040 = vld [vmem:[%s165 + $0x50] sm:$0xff]
      %v5041 = vld [vmem:[%s165 + $0x58] sm:$0xff]
      %v5042 = vld [vmem:[%s165 + $0x60] sm:$0xff]
      %v5043 = vld [vmem:[%s165 + $0x68] sm:$0xff]
      %v5044 = vld [vmem:[%s165 + $0x70] sm:$0xff]
      %v5045 = vld [vmem:[%s165 + $0x78] sm:$0xff]
      %5060 = vst [vmem:[#allocation1] ss:$2 sm:$0xff] %v5032
      %s5061 = scalar_lea.vmem [#allocation1], 16
      %5062 = vst [vmem:[%s5061] ss:$2 sm:$0xff] %v5033
      %s5063 = scalar_lea.vmem [#allocation1], 32
      %5064 = vst [vmem:[%s5063] ss:$2 sm:$0xff] %v5034
      %s5065 = scalar_lea.vmem [#allocation1], 48
      %5066 = vst [vmem:[%s5065] ss:$2 sm:$0xff] %v5035
      %v5067 = vld.sshfl [vmem:[#allocation1] sm:$0xff pattern:$0x75316420]
      %v5068 = vld.sshfl [vmem:[#allocation1 + $0x8] sm:$0xff pattern:$0x75316420]
      %v5069 = vld.sshfl [vmem:[#allocation1 + $0x10] sm:$0xff pattern:$0x75316420]
      %v5070 = vld.sshfl [vmem:[#allocation1 + $0x18] sm:$0xff pattern:$0x75316420]
      %v5071 = vld.sshfl [vmem:[#allocation1 + $0x20] sm:$0xff pattern:$0x75316420]
      %v5072 = vld.sshfl [vmem:[#allocation1 + $0x28] sm:$0xff pattern:$0x75316420]
      %v5073 = vld.sshfl [vmem:[#allocation1 + $0x30] sm:$0xff pattern:$0x75316420]
      %v5074 = vld.sshfl [vmem:[#allocation1 + $0x38] sm:$0xff pattern:$0x75316420]
      %5075 = vst [vmem:[#allocation1] ss:$2 sm:$0xff] %v5036
      %5076 = vst [vmem:[%s5061] ss:$2 sm:$0xff] %v5037
      %5077 = vst [vmem:[%s5063] ss:$2 sm:$0xff] %v5038
      %5078 = vst [vmem:[%s5065] ss:$2 sm:$0xff] %v5039
      %v5079 = vld.sshfl [vmem:[#allocation1] sm:$0xff pattern:$0x75316420]
      %v5080 = vld.sshfl [vmem:[#allocation1 + $0x8] sm:$0xff pattern:$0x75316420]
      %v5081 = vld.sshfl [vmem:[#allocation1 + $0x10] sm:$0xff pattern:$0x75316420]
      %v5082 = vld.sshfl [vmem:[#allocation1 + $0x18] sm:$0xff pattern:$0x75316420]
      %v5083 = vld.sshfl [vmem:[#allocation1 + $0x20] sm:$0xff pattern:$0x75316420]
      %v5084 = vld.sshfl [vmem:[#allocation1 + $0x28] sm:$0xff pattern:$0x75316420]
      %v5085 = vld.sshfl [vmem:[#allocation1 + $0x30] sm:$0xff pattern:$0x75316420]
      %v5086 = vld.sshfl [vmem:[#allocation1 + $0x38] sm:$0xff pattern:$0x75316420]
      %5087 = vst [vmem:[#allocation1] ss:$2 sm:$0xff] %v5040
      %5088 = vst [vmem:[%s5061] ss:$2 sm:$0xff] %v5041
      %5089 = vst [vmem:[%s5063] ss:$2 sm:$0xff] %v5042
      %5090 = vst [vmem:[%s5065] ss:$2 sm:$0xff] %v5043
      %v5091 = vld.sshfl [vmem:[#allocation1] sm:$0xff pattern:$0x75316420]
      %v5092 = vld.sshfl [vmem:[#allocation1 + $0x8] sm:$0xff pattern:$0x75316420]
      %v5093 = vld.sshfl [vmem:[#allocation1 + $0x10] sm:$0xff pattern:$0x75316420]
      %v5094 = vld.sshfl [vmem:[#allocation1 + $0x18] sm:$0xff pattern:$0x75316420]
      %v5095 = vld.sshfl [vmem:[#allocation1 + $0x20] sm:$0xff pattern:$0x75316420]
      %v5096 = vld.sshfl [vmem:[#allocation1 + $0x28] sm:$0xff pattern:$0x75316420]
      %v5097 = vld.sshfl [vmem:[#allocation1 + $0x30] sm:$0xff pattern:$0x75316420]
      %v5098 = vld.sshfl [vmem:[#allocation1 + $0x38] sm:$0xff pattern:$0x75316420]
      %5099 = vst [vmem:[#allocation1] ss:$2 sm:$0xff] %v5044
      %5100 = vst [vmem:[%s5061] ss:$2 sm:$0xff] %v5045
      %v5101 = vld.sshfl [vmem:[#allocation1] sm:$0xff pattern:$0x75316420]
      %v5102 = vld.sshfl [vmem:[#allocation1 + $0x8] sm:$0xff pattern:$0x75316420]
      %v5103 = vld.sshfl [vmem:[#allocation1 + $0x10] sm:$0xff pattern:$0x75316420]
      %v5104 = vld.sshfl [vmem:[#allocation1 + $0x18] sm:$0xff pattern:$0x75316420]
      %5105 = vrot.lane.b32.xlu0 %v5067, 96
      %v5106 = vpop.permute.xlu0 %5105
      %5107 = vrot.lane.b32.xlu0 %v5068, 96
      %v5108 = vpop.permute.xlu0 %5107
      %5109 = vrot.lane.b32.xlu0 %v5069, 96
      %v5110 = vpop.permute.xlu0 %5109
      %5111 = vrot.lane.b32.xlu0 %v5070, 96
      %v5112 = vpop.permute.xlu0 %5111
      %5113 = vrot.lane.b32.xlu0 %v5071, 96
      %v5114 = vpop.permute.xlu0 %5113
      %5115 = vrot.lane.b32.xlu0 %v5072, 96
      %v5116 = vpop.permute.xlu0 %5115
      %5117 = vrot.lane.b32.xlu0 %v5073, 96
      %v5118 = vpop.permute.xlu0 %5117
      %5119 = vrot.lane.b32.xlu0 %v5074, 96
      %v5120 = vpop.permute.xlu0 %5119
      %5121 = vrot.lane.b32.xlu0 %v5079, 96
      %v5122 = vpop.permute.xlu0 %5121
      %5123 = vrot.lane.b32.xlu0 %v5080, 96
      %v5124 = vpop.permute.xlu0 %5123
      %5125 = vrot.lane.b32.xlu0 %v5081, 96
      %v5126 = vpop.permute.xlu0 %5125
      %5127 = vrot.lane.b32.xlu0 %v5082, 96
      %v5128 = vpop.permute.xlu0 %5127
      %5129 = vrot.lane.b32.xlu0 %v5083, 96
      %v5130 = vpop.permute.xlu0 %5129
      %5131 = vrot.lane.b32.xlu0 %v5084, 96
      %v5132 = vpop.permute.xlu0 %5131
      %5133 = vrot.lane.b32.xlu0 %v5085, 96
      %v5134 = vpop.permute.xlu0 %5133
      %5135 = vrot.lane.b32.xlu0 %v5086, 96
      %v5136 = vpop.permute.xlu0 %5135
      %5137 = vrot.lane.b32.xlu0 %v5091, 96
      %v5138 = vpop.permute.xlu0 %5137
      %5139 = vrot.lane.b32.xlu0 %v5092, 96
      %v5140 = vpop.permute.xlu0 %5139
      %5141 = vrot.lane.b32.xlu0 %v5093, 96
      %v5142 = vpop.permute.xlu0 %5141
      %5143 = vrot.lane.b32.xlu0 %v5094, 96
      %v5144 = vpop.permute.xlu0 %5143
      %5145 = vrot.lane.b32.xlu0 %v5095, 96
      %v5146 = vpop.permute.xlu0 %5145
      %5147 = vrot.lane.b32.xlu0 %v5096, 96
      %v5148 = vpop.permute.xlu0 %5147
      %5149 = vrot.lane.b32.xlu0 %v5097, 96
      %v5150 = vpop.permute.xlu0 %5149
      %5151 = vrot.lane.b32.xlu0 %v5098, 96
      %v5152 = vpop.permute.xlu0 %5151
      %5153 = vrot.lane.b32.xlu0 %v5101, 96
      %v5154 = vpop.permute.xlu0 %5153
      %5155 = vrot.lane.b32.xlu0 %v5102, 96
      %v5156 = vpop.permute.xlu0 %5155
      %5157 = vrot.lane.b32.xlu0 %v5103, 96
      %v5158 = vpop.permute.xlu0 %5157
      %5159 = vrot.lane.b32.xlu0 %v5104, 96
      %v5160 = vpop.permute.xlu0 %5159
      %v5161 = vsel %vm1499, %v5106, %v5108
      %v5162 = vsel %vm1499, %v5108, %v5110
      %v5163 = vsel %vm1499, %v5110, %v5112
      %v5164 = vsel %vm1499, %v5112, %v5114
      %v5165 = vsel %vm1499, %v5114, %v5116
      %v5166 = vsel %vm1499, %v5116, %v5118
      %v5167 = vsel %vm1499, %v5118, %v5120
      %v5168 = vsel %vm1499, %v5120, %v5122
      %v5169 = vsel %vm1499, %v5122, %v5124
      %v5170 = vsel %vm1499, %v5124, %v5126
      %v5171 = vsel %vm1499, %v5126, %v5128
      %v5172 = vsel %vm1499, %v5128, %v5130
      %v5173 = vsel %vm1499, %v5130, %v5132
      %v5174 = vsel %vm1499, %v5132, %v5134
      %v5175 = vsel %vm1499, %v5134, %v5136
      %v5176 = vsel %vm1499, %v5136, %v5138
      %v5177 = vsel %vm1499, %v5138, %v5140
      %v5178 = vsel %vm1499, %v5140, %v5142
      %v5179 = vsel %vm1499, %v5142, %v5144
      %v5180 = vsel %vm1499, %v5144, %v5146
      %v5181 = vsel %vm1499, %v5146, %v5148
      %v5182 = vsel %vm1499, %v5148, %v5150
      %v5183 = vsel %vm1499, %v5150, %v5152
      %v5184 = vsel %vm1499, %v5152, %v5154
      %v5185 = vsel %vm1499, %v5154, %v5156
      %v5186 = vsel %vm1499, %v5156, %v5158
      %v5187 = vsel %vm1499, %v5158, %v5160
      %5216 = vst [vmem:[#allocation2 + $0xa80] sm:$0xf] %v5161
      %5217 = vst [vmem:[#allocation2 + $0xa88] sm:$0xf] %v5162
      %5218 = vst [vmem:[#allocation2 + $0xa90] sm:$0xf] %v5163
      %5219 = vst [vmem:[#allocation2 + $0xa98] sm:$0xf] %v5164
      %5220 = vst [vmem:[#allocation2 + $0xaa0] sm:$0xf] %v5165
      %5221 = vst [vmem:[#allocation2 + $0xaa8] sm:$0xf] %v5166
      %5222 = vst [vmem:[#allocation2 + $0xab0] sm:$0xf] %v5167
      %5223 = vst [vmem:[#allocation2 + $0xab8] sm:$0xf] %v5168
      %5224 = vst [vmem:[#allocation2 + $0xac0] sm:$0xf] %v5169
      %5225 = vst [vmem:[#allocation2 + $0xac8] sm:$0xf] %v5170
      %5226 = vst [vmem:[#allocation2 + $0xad0] sm:$0xf] %v5171
      %5227 = vst [vmem:[#allocation2 + $0xad8] sm:$0xf] %v5172
      %5228 = vst [vmem:[#allocation2 + $0xae0] sm:$0xf] %v5173
      %5229 = vst [vmem:[#allocation2 + $0xae8] sm:$0xf] %v5174
      %5230 = vst [vmem:[#allocation2 + $0xaf0] sm:$0xf] %v5175
      %5231 = vst [vmem:[#allocation2 + $0xaf8] sm:$0xf] %v5176
      %5232 = vst [vmem:[#allocation2 + $0xb00] sm:$0xf] %v5177
      %5233 = vst [vmem:[#allocation2 + $0xb08] sm:$0xf] %v5178
      %5234 = vst [vmem:[#allocation2 + $0xb10] sm:$0xf] %v5179
      %5235 = vst [vmem:[#allocation2 + $0xb18] sm:$0xf] %v5180
      %5236 = vst [vmem:[#allocation2 + $0xb20] sm:$0xf] %v5181
      %5237 = vst [vmem:[#allocation2 + $0xb28] sm:$0xf] %v5182
      %5238 = vst [vmem:[#allocation2 + $0xb30] sm:$0xf] %v5183
      %5239 = vst [vmem:[#allocation2 + $0xb38] sm:$0xf] %v5184
      %5240 = vst [vmem:[#allocation2 + $0xb40] sm:$0xf] %v5185
      %5241 = vst [vmem:[#allocation2 + $0xb48] sm:$0xf] %v5186
      %5242 = vst [vmem:[#allocation2 + $0xb50] sm:$0xf] %v5187
      %5243 = vst.msk [vmem:[#allocation2 + $0xb58] sm:$0xf] %vm299, %v5160
      %v5244 = vld [vmem:[%s165 + $0x10] sm:$0xff]
      %v5245 = vld [vmem:[%s165 + $0x18] sm:$0xff]
      %v5246 = vld [vmem:[%s165 + $0x20] sm:$0xff]
      %v5247 = vld [vmem:[%s165 + $0x28] sm:$0xff]
      %v5248 = vld [vmem:[%s165 + $0x30] sm:$0xff]
      %v5249 = vld [vmem:[%s165 + $0x38] sm:$0xff]
      %v5250 = vld [vmem:[%s165 + $0x40] sm:$0xff]
      %v5251 = vld [vmem:[%s165 + $0x48] sm:$0xff]
      %v5252 = vld [vmem:[%s165 + $0x50] sm:$0xff]
      %v5253 = vld [vmem:[%s165 + $0x58] sm:$0xff]
      %v5254 = vld [vmem:[%s165 + $0x60] sm:$0xff]
      %v5255 = vld [vmem:[%s165 + $0x68] sm:$0xff]
      %v5256 = vld [vmem:[%s165 + $0x70] sm:$0xff]
      %v5257 = vld [vmem:[%s165 + $0x78] sm:$0xff]
      %s5272 = scalar_lea.vmem [#allocation1], 1
      %5273 = vst [vmem:[%s5272] ss:$2 sm:$0xff] %v5244
      %s5274 = scalar_lea.vmem [#allocation1], 17
      %5275 = vst [vmem:[%s5274] ss:$2 sm:$0xff] %v5245
      %s5276 = scalar_lea.vmem [#allocation1], 33
      %5277 = vst [vmem:[%s5276] ss:$2 sm:$0xff] %v5246
      %s5278 = scalar_lea.vmem [#allocation1], 49
      %5279 = vst [vmem:[%s5278] ss:$2 sm:$0xff] %v5247
      %v5280 = vld.sshfl [vmem:[#allocation1] sm:$0xff pattern:$0x75316420]
      %v5281 = vld.sshfl [vmem:[#allocation1 + $0x8] sm:$0xff pattern:$0x75316420]
      %v5282 = vld.sshfl [vmem:[#allocation1 + $0x10] sm:$0xff pattern:$0x75316420]
      %v5283 = vld.sshfl [vmem:[#allocation1 + $0x18] sm:$0xff pattern:$0x75316420]
      %v5284 = vld.sshfl [vmem:[#allocation1 + $0x20] sm:$0xff pattern:$0x75316420]
      %v5285 = vld.sshfl [vmem:[#allocation1 + $0x28] sm:$0xff pattern:$0x75316420]
      %v5286 = vld.sshfl [vmem:[#allocation1 + $0x30] sm:$0xff pattern:$0x75316420]
      %v5287 = vld.sshfl [vmem:[#allocation1 + $0x38] sm:$0xff pattern:$0x75316420]
      %5288 = vst [vmem:[%s5272] ss:$2 sm:$0xff] %v5248
      %5289 = vst [vmem:[%s5274] ss:$2 sm:$0xff] %v5249
      %5290 = vst [vmem:[%s5276] ss:$2 sm:$0xff] %v5250
      %5291 = vst [vmem:[%s5278] ss:$2 sm:$0xff] %v5251
      %v5292 = vld.sshfl [vmem:[#allocation1] sm:$0xff pattern:$0x75316420]
      %v5293 = vld.sshfl [vmem:[#allocation1 + $0x8] sm:$0xff pattern:$0x75316420]
      %v5294 = vld.sshfl [vmem:[#allocation1 + $0x10] sm:$0xff pattern:$0x75316420]
      %v5295 = vld.sshfl [vmem:[#allocation1 + $0x18] sm:$0xff pattern:$0x75316420]
      %v5296 = vld.sshfl [vmem:[#allocation1 + $0x20] sm:$0xff pattern:$0x75316420]
      %v5297 = vld.sshfl [vmem:[#allocation1 + $0x28] sm:$0xff pattern:$0x75316420]
      %v5298 = vld.sshfl [vmem:[#allocation1 + $0x30] sm:$0xff pattern:$0x75316420]
      %v5299 = vld.sshfl [vmem:[#allocation1 + $0x38] sm:$0xff pattern:$0x75316420]
      %5300 = vst [vmem:[%s5272] ss:$2 sm:$0xff] %v5252
      %5301 = vst [vmem:[%s5274] ss:$2 sm:$0xff] %v5253
      %5302 = vst [vmem:[%s5276] ss:$2 sm:$0xff] %v5254
      %5303 = vst [vmem:[%s5278] ss:$2 sm:$0xff] %v5255
      %v5304 = vld.sshfl [vmem:[#allocation1] sm:$0xff pattern:$0x75316420]
      %v5305 = vld.sshfl [vmem:[#allocation1 + $0x8] sm:$0xff pattern:$0x75316420]
      %v5306 = vld.sshfl [vmem:[#allocation1 + $0x10] sm:$0xff pattern:$0x75316420]
      %v5307 = vld.sshfl [vmem:[#allocation1 + $0x18] sm:$0xff pattern:$0x75316420]
      %v5308 = vld.sshfl [vmem:[#allocation1 + $0x20] sm:$0xff pattern:$0x75316420]
      %v5309 = vld.sshfl [vmem:[#allocation1 + $0x28] sm:$0xff pattern:$0x75316420]
      %v5310 = vld.sshfl [vmem:[#allocation1 + $0x30] sm:$0xff pattern:$0x75316420]
      %v5311 = vld.sshfl [vmem:[#allocation1 + $0x38] sm:$0xff pattern:$0x75316420]
      %5312 = vst [vmem:[%s5272] ss:$2 sm:$0xff] %v5256
      %5313 = vst [vmem:[%s5274] ss:$2 sm:$0xff] %v5257
      %v5314 = vld.sshfl [vmem:[#allocation1] sm:$0xff pattern:$0x75316420]
      %v5315 = vld.sshfl [vmem:[#allocation1 + $0x8] sm:$0xff pattern:$0x75316420]
      %v5316 = vld.sshfl [vmem:[#allocation1 + $0x10] sm:$0xff pattern:$0x75316420]
      %v5317 = vld.sshfl [vmem:[#allocation1 + $0x18] sm:$0xff pattern:$0x75316420]
      %5318 = vrot.lane.b32.xlu0 %v5280, 95
      %v5319 = vpop.permute.xlu0 %5318
      %5320 = vrot.lane.b32.xlu0 %v5281, 95
      %v5321 = vpop.permute.xlu0 %5320
      %5322 = vrot.lane.b32.xlu0 %v5282, 95
      %v5323 = vpop.permute.xlu0 %5322
      %5324 = vrot.lane.b32.xlu0 %v5283, 95
      %v5325 = vpop.permute.xlu0 %5324
      %5326 = vrot.lane.b32.xlu0 %v5284, 95
      %v5327 = vpop.permute.xlu0 %5326
      %5328 = vrot.lane.b32.xlu0 %v5285, 95
      %v5329 = vpop.permute.xlu0 %5328
      %5330 = vrot.lane.b32.xlu0 %v5286, 95
      %v5331 = vpop.permute.xlu0 %5330
      %5332 = vrot.lane.b32.xlu0 %v5287, 95
      %v5333 = vpop.permute.xlu0 %5332
      %5334 = vrot.lane.b32.xlu0 %v5292, 95
      %v5335 = vpop.permute.xlu0 %5334
      %5336 = vrot.lane.b32.xlu0 %v5293, 95
      %v5337 = vpop.permute.xlu0 %5336
      %5338 = vrot.lane.b32.xlu0 %v5294, 95
      %v5339 = vpop.permute.xlu0 %5338
      %5340 = vrot.lane.b32.xlu0 %v5295, 95
      %v5341 = vpop.permute.xlu0 %5340
      %5342 = vrot.lane.b32.xlu0 %v5296, 95
      %v5343 = vpop.permute.xlu0 %5342
      %5344 = vrot.lane.b32.xlu0 %v5297, 95
      %v5345 = vpop.permute.xlu0 %5344
      %5346 = vrot.lane.b32.xlu0 %v5298, 95
      %v5347 = vpop.permute.xlu0 %5346
      %5348 = vrot.lane.b32.xlu0 %v5299, 95
      %v5349 = vpop.permute.xlu0 %5348
      %5350 = vrot.lane.b32.xlu0 %v5304, 95
      %v5351 = vpop.permute.xlu0 %5350
      %5352 = vrot.lane.b32.xlu0 %v5305, 95
      %v5353 = vpop.permute.xlu0 %5352
      %5354 = vrot.lane.b32.xlu0 %v5306, 95
      %v5355 = vpop.permute.xlu0 %5354
      %5356 = vrot.lane.b32.xlu0 %v5307, 95
      %v5357 = vpop.permute.xlu0 %5356
      %5358 = vrot.lane.b32.xlu0 %v5308, 95
      %v5359 = vpop.permute.xlu0 %5358
      %5360 = vrot.lane.b32.xlu0 %v5309, 95
      %v5361 = vpop.permute.xlu0 %5360
      %5362 = vrot.lane.b32.xlu0 %v5310, 95
      %v5363 = vpop.permute.xlu0 %5362
      %5364 = vrot.lane.b32.xlu0 %v5311, 95
      %v5365 = vpop.permute.xlu0 %5364
      %5366 = vrot.lane.b32.xlu0 %v5314, 95
      %v5367 = vpop.permute.xlu0 %5366
      %5368 = vrot.lane.b32.xlu0 %v5315, 95
      %v5369 = vpop.permute.xlu0 %5368
      %5370 = vrot.lane.b32.xlu0 %v5316, 95
      %v5371 = vpop.permute.xlu0 %5370
      %5372 = vrot.lane.b32.xlu0 %v5317, 95
      %v5373 = vpop.permute.xlu0 %5372
      %v5374 = vsel %vm1713, %v5319, %v5321
      %v5375 = vsel %vm1713, %v5321, %v5323
      %v5376 = vsel %vm1713, %v5323, %v5325
      %v5377 = vsel %vm1713, %v5325, %v5327
      %v5378 = vsel %vm1713, %v5327, %v5329
      %v5379 = vsel %vm1713, %v5329, %v5331
      %v5380 = vsel %vm1713, %v5331, %v5333
      %v5381 = vsel %vm1713, %v5333, %v5335
      %v5382 = vsel %vm1713, %v5335, %v5337
      %v5383 = vsel %vm1713, %v5337, %v5339
      %v5384 = vsel %vm1713, %v5339, %v5341
      %v5385 = vsel %vm1713, %v5341, %v5343
      %v5386 = vsel %vm1713, %v5343, %v5345
      %v5387 = vsel %vm1713, %v5345, %v5347
      %v5388 = vsel %vm1713, %v5347, %v5349
      %v5389 = vsel %vm1713, %v5349, %v5351
      %v5390 = vsel %vm1713, %v5351, %v5353
      %v5391 = vsel %vm1713, %v5353, %v5355
      %v5392 = vsel %vm1713, %v5355, %v5357
      %v5393 = vsel %vm1713, %v5357, %v5359
      %v5394 = vsel %vm1713, %v5359, %v5361
      %v5395 = vsel %vm1713, %v5361, %v5363
      %v5396 = vsel %vm1713, %v5363, %v5365
      %v5397 = vsel %vm1713, %v5365, %v5367
      %v5398 = vsel %vm1713, %v5367, %v5369
      %v5399 = vsel %vm1713, %v5369, %v5371
      %v5400 = vsel %vm1713, %v5371, %v5373
      %5429 = vst [vmem:[#allocation2 + $0xa80] sm:$0xf0] %v5374
      %5430 = vst [vmem:[#allocation2 + $0xa88] sm:$0xf0] %v5375
      %5431 = vst [vmem:[#allocation2 + $0xa90] sm:$0xf0] %v5376
      %5432 = vst [vmem:[#allocation2 + $0xa98] sm:$0xf0] %v5377
      %5433 = vst [vmem:[#allocation2 + $0xaa0] sm:$0xf0] %v5378
      %5434 = vst [vmem:[#allocation2 + $0xaa8] sm:$0xf0] %v5379
      %5435 = vst [vmem:[#allocation2 + $0xab0] sm:$0xf0] %v5380
      %5436 = vst [vmem:[#allocation2 + $0xab8] sm:$0xf0] %v5381
      %5437 = vst [vmem:[#allocation2 + $0xac0] sm:$0xf0] %v5382
      %5438 = vst [vmem:[#allocation2 + $0xac8] sm:$0xf0] %v5383
      %5439 = vst [vmem:[#allocation2 + $0xad0] sm:$0xf0] %v5384
      %5440 = vst [vmem:[#allocation2 + $0xad8] sm:$0xf0] %v5385
      %5441 = vst [vmem:[#allocation2 + $0xae0] sm:$0xf0] %v5386
      %5442 = vst [vmem:[#allocation2 + $0xae8] sm:$0xf0] %v5387
      %5443 = vst [vmem:[#allocation2 + $0xaf0] sm:$0xf0] %v5388
      %5444 = vst [vmem:[#allocation2 + $0xaf8] sm:$0xf0] %v5389
      %5445 = vst [vmem:[#allocation2 + $0xb00] sm:$0xf0] %v5390
      %5446 = vst [vmem:[#allocation2 + $0xb08] sm:$0xf0] %v5391
      %5447 = vst [vmem:[#allocation2 + $0xb10] sm:$0xf0] %v5392
      %5448 = vst [vmem:[#allocation2 + $0xb18] sm:$0xf0] %v5393
      %5449 = vst [vmem:[#allocation2 + $0xb20] sm:$0xf0] %v5394
      %5450 = vst [vmem:[#allocation2 + $0xb28] sm:$0xf0] %v5395
      %5451 = vst [vmem:[#allocation2 + $0xb30] sm:$0xf0] %v5396
      %5452 = vst [vmem:[#allocation2 + $0xb38] sm:$0xf0] %v5397
      %5453 = vst [vmem:[#allocation2 + $0xb40] sm:$0xf0] %v5398
      %5454 = vst [vmem:[#allocation2 + $0xb48] sm:$0xf0] %v5399
      %5455 = vst [vmem:[#allocation2 + $0xb50] sm:$0xf0] %v5400
      %5456 = vst.msk [vmem:[#allocation2 + $0xb58] sm:$0xf0] %vm514, %v5373
      %v5457 = vld [vmem:[%s165 + $0x10] sm:$0xff]
      %v5458 = vld [vmem:[%s165 + $0x18] sm:$0xff]
      %v5459 = vld [vmem:[%s165 + $0x20] sm:$0xff]
      %v5460 = vld [vmem:[%s165 + $0x28] sm:$0xff]
      %v5461 = vld [vmem:[%s165 + $0x30] sm:$0xff]
      %v5462 = vld [vmem:[%s165 + $0x38] sm:$0xff]
      %v5463 = vld [vmem:[%s165 + $0x40] sm:$0xff]
      %v5464 = vld [vmem:[%s165 + $0x48] sm:$0xff]
      %v5465 = vld [vmem:[%s165 + $0x50] sm:$0xff]
      %v5466 = vld [vmem:[%s165 + $0x58] sm:$0xff]
      %v5467 = vld [vmem:[%s165 + $0x60] sm:$0xff]
      %v5468 = vld [vmem:[%s165 + $0x68] sm:$0xff]
      %v5469 = vld [vmem:[%s165 + $0x70] sm:$0xff]
      %v5470 = vld [vmem:[%s165 + $0x78] sm:$0xff]
      %5485 = vst [vmem:[#allocation1] ss:$2 sm:$0xff] %v5457
      %s5486 = scalar_lea.vmem [#allocation1], 16
      %5487 = vst [vmem:[%s5486] ss:$2 sm:$0xff] %v5458
      %s5488 = scalar_lea.vmem [#allocation1], 32
      %5489 = vst [vmem:[%s5488] ss:$2 sm:$0xff] %v5459
      %s5490 = scalar_lea.vmem [#allocation1], 48
      %5491 = vst [vmem:[%s5490] ss:$2 sm:$0xff] %v5460
      %v5492 = vld.sshfl [vmem:[#allocation1] sm:$0xff pattern:$0x75316420]
      %v5493 = vld.sshfl [vmem:[#allocation1 + $0x8] sm:$0xff pattern:$0x75316420]
      %v5494 = vld.sshfl [vmem:[#allocation1 + $0x10] sm:$0xff pattern:$0x75316420]
      %v5495 = vld.sshfl [vmem:[#allocation1 + $0x18] sm:$0xff pattern:$0x75316420]
      %v5496 = vld.sshfl [vmem:[#allocation1 + $0x20] sm:$0xff pattern:$0x75316420]
      %v5497 = vld.sshfl [vmem:[#allocation1 + $0x28] sm:$0xff pattern:$0x75316420]
      %v5498 = vld.sshfl [vmem:[#allocation1 + $0x30] sm:$0xff pattern:$0x75316420]
      %v5499 = vld.sshfl [vmem:[#allocation1 + $0x38] sm:$0xff pattern:$0x75316420]
      %5500 = vst [vmem:[#allocation1] ss:$2 sm:$0xff] %v5461
      %5501 = vst [vmem:[%s5486] ss:$2 sm:$0xff] %v5462
      %5502 = vst [vmem:[%s5488] ss:$2 sm:$0xff] %v5463
      %5503 = vst [vmem:[%s5490] ss:$2 sm:$0xff] %v5464
      %v5504 = vld.sshfl [vmem:[#allocation1] sm:$0xff pattern:$0x75316420]
      %v5505 = vld.sshfl [vmem:[#allocation1 + $0x8] sm:$0xff pattern:$0x75316420]
      %v5506 = vld.sshfl [vmem:[#allocation1 + $0x10] sm:$0xff pattern:$0x75316420]
      %v5507 = vld.sshfl [vmem:[#allocation1 + $0x18] sm:$0xff pattern:$0x75316420]
      %v5508 = vld.sshfl [vmem:[#allocation1 + $0x20] sm:$0xff pattern:$0x75316420]
      %v5509 = vld.sshfl [vmem:[#allocation1 + $0x28] sm:$0xff pattern:$0x75316420]
      %v5510 = vld.sshfl [vmem:[#allocation1 + $0x30] sm:$0xff pattern:$0x75316420]
      %v5511 = vld.sshfl [vmem:[#allocation1 + $0x38] sm:$0xff pattern:$0x75316420]
      %5512 = vst [vmem:[#allocation1] ss:$2 sm:$0xff] %v5465
      %5513 = vst [vmem:[%s5486] ss:$2 sm:$0xff] %v5466
      %5514 = vst [vmem:[%s5488] ss:$2 sm:$0xff] %v5467
      %5515 = vst [vmem:[%s5490] ss:$2 sm:$0xff] %v5468
      %v5516 = vld.sshfl [vmem:[#allocation1] sm:$0xff pattern:$0x75316420]
      %v5517 = vld.sshfl [vmem:[#allocation1 + $0x8] sm:$0xff pattern:$0x75316420]
      %v5518 = vld.sshfl [vmem:[#allocation1 + $0x10] sm:$0xff pattern:$0x75316420]
      %v5519 = vld.sshfl [vmem:[#allocation1 + $0x18] sm:$0xff pattern:$0x75316420]
      %v5520 = vld.sshfl [vmem:[#allocation1 + $0x20] sm:$0xff pattern:$0x75316420]
      %v5521 = vld.sshfl [vmem:[#allocation1 + $0x28] sm:$0xff pattern:$0x75316420]
      %v5522 = vld.sshfl [vmem:[#allocation1 + $0x30] sm:$0xff pattern:$0x75316420]
      %v5523 = vld.sshfl [vmem:[#allocation1 + $0x38] sm:$0xff pattern:$0x75316420]
      %5524 = vst [vmem:[#allocation1] ss:$2 sm:$0xff] %v5469
      %5525 = vst [vmem:[%s5486] ss:$2 sm:$0xff] %v5470
      %v5526 = vld.sshfl [vmem:[#allocation1] sm:$0xff pattern:$0x75316420]
      %v5527 = vld.sshfl [vmem:[#allocation1 + $0x8] sm:$0xff pattern:$0x75316420]
      %v5528 = vld.sshfl [vmem:[#allocation1 + $0x10] sm:$0xff pattern:$0x75316420]
      %v5529 = vld.sshfl [vmem:[#allocation1 + $0x18] sm:$0xff pattern:$0x75316420]
      %5530 = vrot.lane.b32.xlu0 %v5492, 94
      %v5531 = vpop.permute.xlu0 %5530
      %5532 = vrot.lane.b32.xlu0 %v5493, 94
      %v5533 = vpop.permute.xlu0 %5532
      %5534 = vrot.lane.b32.xlu0 %v5494, 94
      %v5535 = vpop.permute.xlu0 %5534
      %5536 = vrot.lane.b32.xlu0 %v5495, 94
      %v5537 = vpop.permute.xlu0 %5536
      %5538 = vrot.lane.b32.xlu0 %v5496, 94
      %v5539 = vpop.permute.xlu0 %5538
      %5540 = vrot.lane.b32.xlu0 %v5497, 94
      %v5541 = vpop.permute.xlu0 %5540
      %5542 = vrot.lane.b32.xlu0 %v5498, 94
      %v5543 = vpop.permute.xlu0 %5542
      %5544 = vrot.lane.b32.xlu0 %v5499, 94
      %v5545 = vpop.permute.xlu0 %5544
      %5546 = vrot.lane.b32.xlu0 %v5504, 94
      %v5547 = vpop.permute.xlu0 %5546
      %5548 = vrot.lane.b32.xlu0 %v5505, 94
      %v5549 = vpop.permute.xlu0 %5548
      %5550 = vrot.lane.b32.xlu0 %v5506, 94
      %v5551 = vpop.permute.xlu0 %5550
      %5552 = vrot.lane.b32.xlu0 %v5507, 94
      %v5553 = vpop.permute.xlu0 %5552
      %5554 = vrot.lane.b32.xlu0 %v5508, 94
      %v5555 = vpop.permute.xlu0 %5554
      %5556 = vrot.lane.b32.xlu0 %v5509, 94
      %v5557 = vpop.permute.xlu0 %5556
      %5558 = vrot.lane.b32.xlu0 %v5510, 94
      %v5559 = vpop.permute.xlu0 %5558
      %5560 = vrot.lane.b32.xlu0 %v5511, 94
      %v5561 = vpop.permute.xlu0 %5560
      %5562 = vrot.lane.b32.xlu0 %v5516, 94
      %v5563 = vpop.permute.xlu0 %5562
      %5564 = vrot.lane.b32.xlu0 %v5517, 94
      %v5565 = vpop.permute.xlu0 %5564
      %5566 = vrot.lane.b32.xlu0 %v5518, 94
      %v5567 = vpop.permute.xlu0 %5566
      %5568 = vrot.lane.b32.xlu0 %v5519, 94
      %v5569 = vpop.permute.xlu0 %5568
      %5570 = vrot.lane.b32.xlu0 %v5520, 94
      %v5571 = vpop.permute.xlu0 %5570
      %5572 = vrot.lane.b32.xlu0 %v5521, 94
      %v5573 = vpop.permute.xlu0 %5572
      %5574 = vrot.lane.b32.xlu0 %v5522, 94
      %v5575 = vpop.permute.xlu0 %5574
      %5576 = vrot.lane.b32.xlu0 %v5523, 94
      %v5577 = vpop.permute.xlu0 %5576
      %5578 = vrot.lane.b32.xlu0 %v5526, 94
      %v5579 = vpop.permute.xlu0 %5578
      %5580 = vrot.lane.b32.xlu0 %v5527, 94
      %v5581 = vpop.permute.xlu0 %5580
      %5582 = vrot.lane.b32.xlu0 %v5528, 94
      %v5583 = vpop.permute.xlu0 %5582
      %5584 = vrot.lane.b32.xlu0 %v5529, 94
      %v5585 = vpop.permute.xlu0 %5584
      %v5586 = vsel %vm1926, %v5531, %v5533
      %v5587 = vsel %vm1926, %v5533, %v5535
      %v5588 = vsel %vm1926, %v5535, %v5537
      %v5589 = vsel %vm1926, %v5537, %v5539
      %v5590 = vsel %vm1926, %v5539, %v5541
      %v5591 = vsel %vm1926, %v5541, %v5543
      %v5592 = vsel %vm1926, %v5543, %v5545
      %v5593 = vsel %vm1926, %v5545, %v5547
      %v5594 = vsel %vm1926, %v5547, %v5549
      %v5595 = vsel %vm1926, %v5549, %v5551
      %v5596 = vsel %vm1926, %v5551, %v5553
      %v5597 = vsel %vm1926, %v5553, %v5555
      %v5598 = vsel %vm1926, %v5555, %v5557
      %v5599 = vsel %vm1926, %v5557, %v5559
      %v5600 = vsel %vm1926, %v5559, %v5561
      %v5601 = vsel %vm1926, %v5561, %v5563
      %v5602 = vsel %vm1926, %v5563, %v5565
      %v5603 = vsel %vm1926, %v5565, %v5567
      %v5604 = vsel %vm1926, %v5567, %v5569
      %v5605 = vsel %vm1926, %v5569, %v5571
      %v5606 = vsel %vm1926, %v5571, %v5573
      %v5607 = vsel %vm1926, %v5573, %v5575
      %v5608 = vsel %vm1926, %v5575, %v5577
      %v5609 = vsel %vm1926, %v5577, %v5579
      %v5610 = vsel %vm1926, %v5579, %v5581
      %v5611 = vsel %vm1926, %v5581, %v5583
      %v5612 = vsel %vm1926, %v5583, %v5585
      %5641 = vst [vmem:[#allocation2 + $0xb60] sm:$0xf] %v5586
      %5642 = vst [vmem:[#allocation2 + $0xb68] sm:$0xf] %v5587
      %5643 = vst [vmem:[#allocation2 + $0xb70] sm:$0xf] %v5588
      %5644 = vst [vmem:[#allocation2 + $0xb78] sm:$0xf] %v5589
      %5645 = vst [vmem:[#allocation2 + $0xb80] sm:$0xf] %v5590
      %5646 = vst [vmem:[#allocation2 + $0xb88] sm:$0xf] %v5591
      %5647 = vst [vmem:[#allocation2 + $0xb90] sm:$0xf] %v5592
      %5648 = vst [vmem:[#allocation2 + $0xb98] sm:$0xf] %v5593
      %5649 = vst [vmem:[#allocation2 + $0xba0] sm:$0xf] %v5594
      %5650 = vst [vmem:[#allocation2 + $0xba8] sm:$0xf] %v5595
      %5651 = vst [vmem:[#allocation2 + $0xbb0] sm:$0xf] %v5596
      %5652 = vst [vmem:[#allocation2 + $0xbb8] sm:$0xf] %v5597
      %5653 = vst [vmem:[#allocation2 + $0xbc0] sm:$0xf] %v5598
      %5654 = vst [vmem:[#allocation2 + $0xbc8] sm:$0xf] %v5599
      %5655 = vst [vmem:[#allocation2 + $0xbd0] sm:$0xf] %v5600
      %5656 = vst [vmem:[#allocation2 + $0xbd8] sm:$0xf] %v5601
      %5657 = vst [vmem:[#allocation2 + $0xbe0] sm:$0xf] %v5602
      %5658 = vst [vmem:[#allocation2 + $0xbe8] sm:$0xf] %v5603
      %5659 = vst [vmem:[#allocation2 + $0xbf0] sm:$0xf] %v5604
      %5660 = vst [vmem:[#allocation2 + $0xbf8] sm:$0xf] %v5605
      %5661 = vst [vmem:[#allocation2 + $0xc00] sm:$0xf] %v5606
      %5662 = vst [vmem:[#allocation2 + $0xc08] sm:$0xf] %v5607
      %5663 = vst [vmem:[#allocation2 + $0xc10] sm:$0xf] %v5608
      %5664 = vst [vmem:[#allocation2 + $0xc18] sm:$0xf] %v5609
      %5665 = vst [vmem:[#allocation2 + $0xc20] sm:$0xf] %v5610
      %5666 = vst [vmem:[#allocation2 + $0xc28] sm:$0xf] %v5611
      %5667 = vst [vmem:[#allocation2 + $0xc30] sm:$0xf] %v5612
      %5668 = vst.msk [vmem:[#allocation2 + $0xc38] sm:$0xf] %vm299, %v5585
      %5669 = vst [vmem:[#allocation2 + $0xb60] sm:$0xf0] 0.0
      %5670 = vst [vmem:[#allocation2 + $0xb68] sm:$0xf0] 0.0
      %5671 = vst [vmem:[#allocation2 + $0xb70] sm:$0xf0] 0.0
      %5672 = vst [vmem:[#allocation2 + $0xb78] sm:$0xf0] 0.0
      %5673 = vst [vmem:[#allocation2 + $0xb80] sm:$0xf0] 0.0
      %5674 = vst [vmem:[#allocation2 + $0xb88] sm:$0xf0] 0.0
      %5675 = vst [vmem:[#allocation2 + $0xb90] sm:$0xf0] 0.0
      %5676 = vst [vmem:[#allocation2 + $0xb98] sm:$0xf0] 0.0
      %5677 = vst [vmem:[#allocation2 + $0xba0] sm:$0xf0] 0.0
      %5678 = vst [vmem:[#allocation2 + $0xba8] sm:$0xf0] 0.0
      %5679 = vst [vmem:[#allocation2 + $0xbb0] sm:$0xf0] 0.0
      %5680 = vst [vmem:[#allocation2 + $0xbb8] sm:$0xf0] 0.0
      %5681 = vst [vmem:[#allocation2 + $0xbc0] sm:$0xf0] 0.0
      %5682 = vst [vmem:[#allocation2 + $0xbc8] sm:$0xf0] 0.0
      %5683 = vst [vmem:[#allocation2 + $0xbd0] sm:$0xf0] 0.0
      %5684 = vst [vmem:[#allocation2 + $0xbd8] sm:$0xf0] 0.0
      %5685 = vst [vmem:[#allocation2 + $0xbe0] sm:$0xf0] 0.0
      %5686 = vst [vmem:[#allocation2 + $0xbe8] sm:$0xf0] 0.0
      %5687 = vst [vmem:[#allocation2 + $0xbf0] sm:$0xf0] 0.0
      %5688 = vst [vmem:[#allocation2 + $0xbf8] sm:$0xf0] 0.0
      %5689 = vst [vmem:[#allocation2 + $0xc00] sm:$0xf0] 0.0
      %5690 = vst [vmem:[#allocation2 + $0xc08] sm:$0xf0] 0.0
      %5691 = vst [vmem:[#allocation2 + $0xc10] sm:$0xf0] 0.0
      %5692 = vst [vmem:[#allocation2 + $0xc18] sm:$0xf0] 0.0
      %5693 = vst [vmem:[#allocation2 + $0xc20] sm:$0xf0] 0.0
      %5694 = vst [vmem:[#allocation2 + $0xc28] sm:$0xf0] 0.0
      %5695 = vst [vmem:[#allocation2 + $0xc30] sm:$0xf0] 0.0
      %5696 = vst.msk [vmem:[#allocation2 + $0xc38] sm:$0xf0] %vm514, 0.0
      %v5697 = vld [vmem:[%s0] sm:$0xff]
      %v5698 = vld [vmem:[#allocation2] sm:$0xff]
      %v5699 = vld [vmem:[#allocation2 + $0x8] sm:$0xff]
      %v5700 = vld [vmem:[#allocation2 + $0x10] sm:$0xff]
      %v5701 = vld [vmem:[#allocation2 + $0x18] sm:$0xff]
      %v5702 = vld [vmem:[#allocation2 + $0x20] sm:$0xff]
      %v5703 = vld [vmem:[#allocation2 + $0x28] sm:$0xff]
      %v5704 = vld [vmem:[#allocation2 + $0x30] sm:$0xff]
      %v5705 = vld [vmem:[#allocation2 + $0x38] sm:$0xff]
      %v5706 = vld [vmem:[#allocation2 + $0x40] sm:$0xff]
      %v5707 = vld [vmem:[#allocation2 + $0x48] sm:$0xff]
      %v5708 = vld [vmem:[#allocation2 + $0x50] sm:$0xff]
      %v5709 = vld [vmem:[#allocation2 + $0x58] sm:$0xff]
      %v5710 = vld [vmem:[#allocation2 + $0x60] sm:$0xff]
      %v5711 = vld [vmem:[#allocation2 + $0x68] sm:$0xff]
      %v5712 = vld [vmem:[#allocation2 + $0x70] sm:$0xff]
      %v5713 = vld [vmem:[#allocation2 + $0x78] sm:$0xff]
      %v5714 = vld [vmem:[#allocation2 + $0x80] sm:$0xff]
      %v5715 = vld [vmem:[#allocation2 + $0x88] sm:$0xff]
      %v5716 = vld [vmem:[#allocation2 + $0x90] sm:$0xff]
      %v5717 = vld [vmem:[#allocation2 + $0x98] sm:$0xff]
      %v5718 = vld [vmem:[#allocation2 + $0xa0] sm:$0xff]
      %v5719 = vld [vmem:[#allocation2 + $0xa8] sm:$0xff]
      %v5720 = vld [vmem:[#allocation2 + $0xb0] sm:$0xff]
      %v5721 = vld [vmem:[#allocation2 + $0xb8] sm:$0xff]
      %v5722 = vld [vmem:[#allocation2 + $0xc0] sm:$0xff]
      %v5723 = vld [vmem:[#allocation2 + $0xc8] sm:$0xff]
      %v5724 = vld [vmem:[#allocation2 + $0xd0] sm:$0xff]
      %v5725 = vld [vmem:[#allocation2 + $0xd8] sm:$0xff]
      %v5726 = vld [vmem:[#allocation2 + $0xe0] sm:$0xff]
      %v5727 = vld [vmem:[#allocation2 + $0xe8] sm:$0xff]
      %v5728 = vld [vmem:[#allocation2 + $0xf0] sm:$0xff]
      %v5729 = vld [vmem:[#allocation2 + $0xf8] sm:$0xff]
      %v5730 = vld [vmem:[#allocation2 + $0x100] sm:$0xff]
      %v5731 = vld [vmem:[#allocation2 + $0x108] sm:$0xff]
      %v5732 = vld [vmem:[#allocation2 + $0x110] sm:$0xff]
      %v5733 = vld [vmem:[#allocation2 + $0x118] sm:$0xff]
      %v5734 = vld [vmem:[#allocation2 + $0x120] sm:$0xff]
      %v5735 = vld [vmem:[#allocation2 + $0x128] sm:$0xff]
      %v5736 = vld [vmem:[#allocation2 + $0x130] sm:$0xff]
      %v5737 = vld [vmem:[#allocation2 + $0x138] sm:$0xff]
      %v5738 = vld [vmem:[#allocation2 + $0x140] sm:$0xff]
      %v5739 = vld [vmem:[#allocation2 + $0x148] sm:$0xff]
      %v5740 = vld [vmem:[#allocation2 + $0x150] sm:$0xff]
      %v5741 = vld [vmem:[#allocation2 + $0x158] sm:$0xff]
      %v5742 = vld [vmem:[#allocation2 + $0x160] sm:$0xff]
      %v5743 = vld [vmem:[#allocation2 + $0x168] sm:$0xff]
      %v5744 = vld [vmem:[#allocation2 + $0x170] sm:$0xff]
      %v5745 = vld [vmem:[#allocation2 + $0x178] sm:$0xff]
      %v5746 = vld [vmem:[#allocation2 + $0x180] sm:$0xff]
      %v5747 = vld [vmem:[#allocation2 + $0x188] sm:$0xff]
      %v5748 = vld [vmem:[#allocation2 + $0x190] sm:$0xff]
      %v5749 = vld [vmem:[#allocation2 + $0x198] sm:$0xff]
      %v5750 = vld [vmem:[#allocation2 + $0x1a0] sm:$0xff]
      %v5751 = vld [vmem:[#allocation2 + $0x1a8] sm:$0xff]
      %v5752 = vld [vmem:[#allocation2 + $0x1b0] sm:$0xff]
      %v5753 = vld [vmem:[#allocation2 + $0x1b8] sm:$0xff]
      %v5754 = vld [vmem:[#allocation2 + $0x1c0] sm:$0xff]
      %v5755 = vld [vmem:[#allocation2 + $0x1c8] sm:$0xff]
      %v5756 = vld [vmem:[#allocation2 + $0x1d0] sm:$0xff]
      %v5757 = vld [vmem:[#allocation2 + $0x1d8] sm:$0xff]
      %v5758 = vld [vmem:[#allocation2 + $0x1e0] sm:$0xff]
      %v5759 = vld [vmem:[#allocation2 + $0x1e8] sm:$0xff]
      %v5760 = vld [vmem:[#allocation2 + $0x1f0] sm:$0xff]
      %v5761 = vld [vmem:[#allocation2 + $0x1f8] sm:$0xff]
      %v5762 = vld [vmem:[#allocation2 + $0x200] sm:$0xff]
      %v5763 = vld [vmem:[#allocation2 + $0x208] sm:$0xff]
      %v5764 = vld [vmem:[#allocation2 + $0x210] sm:$0xff]
      %v5765 = vld [vmem:[#allocation2 + $0x218] sm:$0xff]
      %v5766 = vld [vmem:[#allocation2 + $0x220] sm:$0xff]
      %v5767 = vld [vmem:[#allocation2 + $0x228] sm:$0xff]
      %v5768 = vld [vmem:[#allocation2 + $0x230] sm:$0xff]
      %v5769 = vld [vmem:[#allocation2 + $0x238] sm:$0xff]
      %v5770 = vld [vmem:[#allocation2 + $0x240] sm:$0xff]
      %v5771 = vld [vmem:[#allocation2 + $0x248] sm:$0xff]
      %v5772 = vld [vmem:[#allocation2 + $0x250] sm:$0xff]
      %v5773 = vld [vmem:[#allocation2 + $0x258] sm:$0xff]
      %v5774 = vld [vmem:[#allocation2 + $0x260] sm:$0xff]
      %v5775 = vld [vmem:[#allocation2 + $0x268] sm:$0xff]
      %v5776 = vld [vmem:[#allocation2 + $0x270] sm:$0xff]
      %v5777 = vld [vmem:[#allocation2 + $0x278] sm:$0xff]
      %v5778 = vld [vmem:[#allocation2 + $0x280] sm:$0xff]
      %v5779 = vld [vmem:[#allocation2 + $0x288] sm:$0xff]
      %v5780 = vld [vmem:[#allocation2 + $0x290] sm:$0xff]
      %v5781 = vld [vmem:[#allocation2 + $0x298] sm:$0xff]
      %v5782 = vld [vmem:[#allocation2 + $0x2a0] sm:$0xff]
      %v5783 = vld [vmem:[#allocation2 + $0x2a8] sm:$0xff]
      %v5784 = vld [vmem:[#allocation2 + $0x2b0] sm:$0xff]
      %v5785 = vld [vmem:[#allocation2 + $0x2b8] sm:$0xff]
      %v5786 = vld [vmem:[#allocation2 + $0x2c0] sm:$0xff]
      %v5787 = vld [vmem:[#allocation2 + $0x2c8] sm:$0xff]
      %v5788 = vld [vmem:[#allocation2 + $0x2d0] sm:$0xff]
      %v5789 = vld [vmem:[#allocation2 + $0x2d8] sm:$0xff]
      %v5790 = vld [vmem:[#allocation2 + $0x2e0] sm:$0xff]
      %v5791 = vld [vmem:[#allocation2 + $0x2e8] sm:$0xff]
      %v5792 = vld [vmem:[#allocation2 + $0x2f0] sm:$0xff]
      %v5793 = vld [vmem:[#allocation2 + $0x2f8] sm:$0xff]
      %v5794 = vld [vmem:[#allocation2 + $0x300] sm:$0xff]
      %v5795 = vld [vmem:[#allocation2 + $0x308] sm:$0xff]
      %v5796 = vld [vmem:[#allocation2 + $0x310] sm:$0xff]
      %v5797 = vld [vmem:[#allocation2 + $0x318] sm:$0xff]
      %v5798 = vld [vmem:[#allocation2 + $0x320] sm:$0xff]
      %v5799 = vld [vmem:[#allocation2 + $0x328] sm:$0xff]
      %v5800 = vld [vmem:[#allocation2 + $0x330] sm:$0xff]
      %v5801 = vld [vmem:[#allocation2 + $0x338] sm:$0xff]
      %v5802 = vld [vmem:[#allocation2 + $0x340] sm:$0xff]
      %v5803 = vld [vmem:[#allocation2 + $0x348] sm:$0xff]
      %v5804 = vld [vmem:[#allocation2 + $0x350] sm:$0xff]
      %v5805 = vld [vmem:[#allocation2 + $0x358] sm:$0xff]
      %v5806 = vld [vmem:[#allocation2 + $0x360] sm:$0xff]
      %v5807 = vld [vmem:[#allocation2 + $0x368] sm:$0xff]
      %v5808 = vld [vmem:[#allocation2 + $0x370] sm:$0xff]
      %v5809 = vld [vmem:[#allocation2 + $0x378] sm:$0xff]
      %v5810 = vld [vmem:[#allocation2 + $0x380] sm:$0xff]
      %v5811 = vld [vmem:[#allocation2 + $0x388] sm:$0xff]
      %v5812 = vld [vmem:[#allocation2 + $0x390] sm:$0xff]
      %v5813 = vld [vmem:[#allocation2 + $0x398] sm:$0xff]
      %v5814 = vld [vmem:[#allocation2 + $0x3a0] sm:$0xff]
      %v5815 = vld [vmem:[#allocation2 + $0x3a8] sm:$0xff]
      %v5816 = vld [vmem:[#allocation2 + $0x3b0] sm:$0xff]
      %v5817 = vld [vmem:[#allocation2 + $0x3b8] sm:$0xff]
      %v5818 = vld [vmem:[#allocation2 + $0x3c0] sm:$0xff]
      %v5819 = vld [vmem:[#allocation2 + $0x3c8] sm:$0xff]
      %v5820 = vld [vmem:[#allocation2 + $0x3d0] sm:$0xff]
      %v5821 = vld [vmem:[#allocation2 + $0x3d8] sm:$0xff]
      %v5822 = vld [vmem:[#allocation2 + $0x3e0] sm:$0xff]
      %v5823 = vld [vmem:[#allocation2 + $0x3e8] sm:$0xff]
      %v5824 = vld [vmem:[#allocation2 + $0x3f0] sm:$0xff]
      %v5825 = vld [vmem:[#allocation2 + $0x3f8] sm:$0xff]
      %v5826 = vld [vmem:[#allocation2 + $0x400] sm:$0xff]
      %v5827 = vld [vmem:[#allocation2 + $0x408] sm:$0xff]
      %v5828 = vld [vmem:[#allocation2 + $0x410] sm:$0xff]
      %v5829 = vld [vmem:[#allocation2 + $0x418] sm:$0xff]
      %v5830 = vld [vmem:[#allocation2 + $0x420] sm:$0xff]
      %v5831 = vld [vmem:[#allocation2 + $0x428] sm:$0xff]
      %v5832 = vld [vmem:[#allocation2 + $0x430] sm:$0xff]
      %v5833 = vld [vmem:[#allocation2 + $0x438] sm:$0xff]
      %v5834 = vld [vmem:[#allocation2 + $0x440] sm:$0xff]
      %v5835 = vld [vmem:[#allocation2 + $0x448] sm:$0xff]
      %v5836 = vld [vmem:[#allocation2 + $0x450] sm:$0xff]
      %v5837 = vld [vmem:[#allocation2 + $0x458] sm:$0xff]
      %v5838 = vld [vmem:[#allocation2 + $0x460] sm:$0xff]
      %v5839 = vld [vmem:[#allocation2 + $0x468] sm:$0xff]
      %v5840 = vld [vmem:[#allocation2 + $0x470] sm:$0xff]
      %v5841 = vld [vmem:[#allocation2 + $0x478] sm:$0xff]
      %v5842 = vld [vmem:[#allocation2 + $0x480] sm:$0xff]
      %v5843 = vld [vmem:[#allocation2 + $0x488] sm:$0xff]
      %v5844 = vld [vmem:[#allocation2 + $0x490] sm:$0xff]
      %v5845 = vld [vmem:[#allocation2 + $0x498] sm:$0xff]
      %v5846 = vld [vmem:[#allocation2 + $0x4a0] sm:$0xff]
      %v5847 = vld [vmem:[#allocation2 + $0x4a8] sm:$0xff]
      %v5848 = vld [vmem:[#allocation2 + $0x4b0] sm:$0xff]
      %v5849 = vld [vmem:[#allocation2 + $0x4b8] sm:$0xff]
      %v5850 = vld [vmem:[#allocation2 + $0x4c0] sm:$0xff]
      %v5851 = vld [vmem:[#allocation2 + $0x4c8] sm:$0xff]
      %v5852 = vld [vmem:[#allocation2 + $0x4d0] sm:$0xff]
      %v5853 = vld [vmem:[#allocation2 + $0x4d8] sm:$0xff]
      %v5854 = vld [vmem:[#allocation2 + $0x4e0] sm:$0xff]
      %v5855 = vld [vmem:[#allocation2 + $0x4e8] sm:$0xff]
      %v5856 = vld [vmem:[#allocation2 + $0x4f0] sm:$0xff]
      %v5857 = vld [vmem:[#allocation2 + $0x4f8] sm:$0xff]
      %v5858 = vld [vmem:[#allocation2 + $0x500] sm:$0xff]
      %v5859 = vld [vmem:[#allocation2 + $0x508] sm:$0xff]
      %v5860 = vld [vmem:[#allocation2 + $0x510] sm:$0xff]
      %v5861 = vld [vmem:[#allocation2 + $0x518] sm:$0xff]
      %v5862 = vld [vmem:[#allocation2 + $0x520] sm:$0xff]
      %v5863 = vld [vmem:[#allocation2 + $0x528] sm:$0xff]
      %v5864 = vld [vmem:[#allocation2 + $0x530] sm:$0xff]
      %v5865 = vld [vmem:[#allocation2 + $0x538] sm:$0xff]
      %v5866 = vld [vmem:[#allocation2 + $0x540] sm:$0xff]
      %v5867 = vld [vmem:[#allocation2 + $0x548] sm:$0xff]
      %v5868 = vld [vmem:[#allocation2 + $0x550] sm:$0xff]
      %v5869 = vld [vmem:[#allocation2 + $0x558] sm:$0xff]
      %v5870 = vld [vmem:[#allocation2 + $0x560] sm:$0xff]
      %v5871 = vld [vmem:[#allocation2 + $0x568] sm:$0xff]
      %v5872 = vld [vmem:[#allocation2 + $0x570] sm:$0xff]
      %v5873 = vld [vmem:[#allocation2 + $0x578] sm:$0xff]
      %v5874 = vld [vmem:[#allocation2 + $0x580] sm:$0xff]
      %v5875 = vld [vmem:[#allocation2 + $0x588] sm:$0xff]
      %v5876 = vld [vmem:[#allocation2 + $0x590] sm:$0xff]
      %v5877 = vld [vmem:[#allocation2 + $0x598] sm:$0xff]
      %v5878 = vld [vmem:[#allocation2 + $0x5a0] sm:$0xff]
      %v5879 = vld [vmem:[#allocation2 + $0x5a8] sm:$0xff]
      %v5880 = vld [vmem:[#allocation2 + $0x5b0] sm:$0xff]
      %v5881 = vld [vmem:[#allocation2 + $0x5b8] sm:$0xff]
      %v5882 = vld [vmem:[#allocation2 + $0x5c0] sm:$0xff]
      %v5883 = vld [vmem:[#allocation2 + $0x5c8] sm:$0xff]
      %v5884 = vld [vmem:[#allocation2 + $0x5d0] sm:$0xff]
      %v5885 = vld [vmem:[#allocation2 + $0x5d8] sm:$0xff]
      %v5886 = vld [vmem:[#allocation2 + $0x5e0] sm:$0xff]
      %v5887 = vld [vmem:[#allocation2 + $0x5e8] sm:$0xff]
      %v5888 = vld [vmem:[#allocation2 + $0x5f0] sm:$0xff]
      %v5889 = vld [vmem:[#allocation2 + $0x5f8] sm:$0xff]
      %v5890 = vld [vmem:[#allocation2 + $0x600] sm:$0xff]
      %v5891 = vld [vmem:[#allocation2 + $0x608] sm:$0xff]
      %v5892 = vld [vmem:[#allocation2 + $0x610] sm:$0xff]
      %v5893 = vld [vmem:[#allocation2 + $0x618] sm:$0xff]
      %v5894 = vld [vmem:[#allocation2 + $0x620] sm:$0xff]
      %v5895 = vld [vmem:[#allocation2 + $0x628] sm:$0xff]
      %v5896 = vld [vmem:[#allocation2 + $0x630] sm:$0xff]
      %v5897 = vld [vmem:[#allocation2 + $0x638] sm:$0xff]
      %v5898 = vld [vmem:[#allocation2 + $0x640] sm:$0xff]
      %v5899 = vld [vmem:[#allocation2 + $0x648] sm:$0xff]
      %v5900 = vld [vmem:[#allocation2 + $0x650] sm:$0xff]
      %v5901 = vld [vmem:[#allocation2 + $0x658] sm:$0xff]
      %v5902 = vld [vmem:[#allocation2 + $0x660] sm:$0xff]
      %v5903 = vld [vmem:[#allocation2 + $0x668] sm:$0xff]
      %v5904 = vld [vmem:[#allocation2 + $0x670] sm:$0xff]
      %v5905 = vld [vmem:[#allocation2 + $0x678] sm:$0xff]
      %v5906 = vld [vmem:[#allocation2 + $0x680] sm:$0xff]
      %v5907 = vld [vmem:[#allocation2 + $0x688] sm:$0xff]
      %v5908 = vld [vmem:[#allocation2 + $0x690] sm:$0xff]
      %v5909 = vld [vmem:[#allocation2 + $0x698] sm:$0xff]
      %v5910 = vld [vmem:[#allocation2 + $0x6a0] sm:$0xff]
      %v5911 = vld [vmem:[#allocation2 + $0x6a8] sm:$0xff]
      %v5912 = vld [vmem:[#allocation2 + $0x6b0] sm:$0xff]
      %v5913 = vld [vmem:[#allocation2 + $0x6b8] sm:$0xff]
      %v5914 = vld [vmem:[#allocation2 + $0x6c0] sm:$0xff]
      %v5915 = vld [vmem:[#allocation2 + $0x6c8] sm:$0xff]
      %v5916 = vld [vmem:[#allocation2 + $0x6d0] sm:$0xff]
      %v5917 = vld [vmem:[#allocation2 + $0x6d8] sm:$0xff]
      %v5918 = vld [vmem:[#allocation2 + $0x6e0] sm:$0xff]
      %v5919 = vld [vmem:[#allocation2 + $0x6e8] sm:$0xff]
      %v5920 = vld [vmem:[#allocation2 + $0x6f0] sm:$0xff]
      %v5921 = vld [vmem:[#allocation2 + $0x6f8] sm:$0xff]
      %v5922 = vld [vmem:[#allocation2 + $0x700] sm:$0xff]
      %v5923 = vld [vmem:[#allocation2 + $0x708] sm:$0xff]
      %v5924 = vld [vmem:[#allocation2 + $0x710] sm:$0xff]
      %v5925 = vld [vmem:[#allocation2 + $0x718] sm:$0xff]
      %v5926 = vld [vmem:[#allocation2 + $0x720] sm:$0xff]
      %v5927 = vld [vmem:[#allocation2 + $0x728] sm:$0xff]
      %v5928 = vld [vmem:[#allocation2 + $0x730] sm:$0xff]
      %v5929 = vld [vmem:[#allocation2 + $0x738] sm:$0xff]
      %v5930 = vld [vmem:[#allocation2 + $0x740] sm:$0xff]
      %v5931 = vld [vmem:[#allocation2 + $0x748] sm:$0xff]
      %v5932 = vld [vmem:[#allocation2 + $0x750] sm:$0xff]
      %v5933 = vld [vmem:[#allocation2 + $0x758] sm:$0xff]
      %v5934 = vld [vmem:[#allocation2 + $0x760] sm:$0xff]
      %v5935 = vld [vmem:[#allocation2 + $0x768] sm:$0xff]
      %v5936 = vld [vmem:[#allocation2 + $0x770] sm:$0xff]
      %v5937 = vld [vmem:[#allocation2 + $0x778] sm:$0xff]
      %v5938 = vld [vmem:[#allocation2 + $0x780] sm:$0xff]
      %v5939 = vld [vmem:[#allocation2 + $0x788] sm:$0xff]
      %v5940 = vld [vmem:[#allocation2 + $0x790] sm:$0xff]
      %v5941 = vld [vmem:[#allocation2 + $0x798] sm:$0xff]
      %v5942 = vld [vmem:[#allocation2 + $0x7a0] sm:$0xff]
      %v5943 = vld [vmem:[#allocation2 + $0x7a8] sm:$0xff]
      %v5944 = vld [vmem:[#allocation2 + $0x7b0] sm:$0xff]
      %v5945 = vld [vmem:[#allocation2 + $0x7b8] sm:$0xff]
      %v5946 = vld [vmem:[#allocation2 + $0x7c0] sm:$0xff]
      %v5947 = vld [vmem:[#allocation2 + $0x7c8] sm:$0xff]
      %v5948 = vld [vmem:[#allocation2 + $0x7d0] sm:$0xff]
      %v5949 = vld [vmem:[#allocation2 + $0x7d8] sm:$0xff]
      %v5950 = vld [vmem:[#allocation2 + $0x7e0] sm:$0xff]
      %v5951 = vld [vmem:[#allocation2 + $0x7e8] sm:$0xff]
      %v5952 = vld [vmem:[#allocation2 + $0x7f0] sm:$0xff]
      %v5953 = vld [vmem:[#allocation2 + $0x7f8] sm:$0xff]
      %v5954 = vld [vmem:[#allocation2 + $0x800] sm:$0xff]
      %v5955 = vld [vmem:[#allocation2 + $0x808] sm:$0xff]
      %v5956 = vld [vmem:[#allocation2 + $0x810] sm:$0xff]
      %v5957 = vld [vmem:[#allocation2 + $0x818] sm:$0xff]
      %v5958 = vld [vmem:[#allocation2 + $0x820] sm:$0xff]
      %v5959 = vld [vmem:[#allocation2 + $0x828] sm:$0xff]
      %v5960 = vld [vmem:[#allocation2 + $0x830] sm:$0xff]
      %v5961 = vld [vmem:[#allocation2 + $0x838] sm:$0xff]
      %v5962 = vld [vmem:[#allocation2 + $0x840] sm:$0xff]
      %v5963 = vld [vmem:[#allocation2 + $0x848] sm:$0xff]
      %v5964 = vld [vmem:[#allocation2 + $0x850] sm:$0xff]
      %v5965 = vld [vmem:[#allocation2 + $0x858] sm:$0xff]
      %v5966 = vld [vmem:[#allocation2 + $0x860] sm:$0xff]
      %v5967 = vld [vmem:[#allocation2 + $0x868] sm:$0xff]
      %v5968 = vld [vmem:[#allocation2 + $0x870] sm:$0xff]
      %v5969 = vld [vmem:[#allocation2 + $0x878] sm:$0xff]
      %v5970 = vld [vmem:[#allocation2 + $0x880] sm:$0xff]
      %v5971 = vld [vmem:[#allocation2 + $0x888] sm:$0xff]
      %v5972 = vld [vmem:[#allocation2 + $0x890] sm:$0xff]
      %v5973 = vld [vmem:[#allocation2 + $0x898] sm:$0xff]
      %v5974 = vld [vmem:[#allocation2 + $0x8a0] sm:$0xff]
      %v5975 = vld [vmem:[#allocation2 + $0x8a8] sm:$0xff]
      %v5976 = vld [vmem:[#allocation2 + $0x8b0] sm:$0xff]
      %v5977 = vld [vmem:[#allocation2 + $0x8b8] sm:$0xff]
      %v5978 = vld [vmem:[#allocation2 + $0x8c0] sm:$0xff]
      %v5979 = vld [vmem:[#allocation2 + $0x8c8] sm:$0xff]
      %v5980 = vld [vmem:[#allocation2 + $0x8d0] sm:$0xff]
      %v5981 = vld [vmem:[#allocation2 + $0x8d8] sm:$0xff]
      %v5982 = vld [vmem:[#allocation2 + $0x8e0] sm:$0xff]
      %v5983 = vld [vmem:[#allocation2 + $0x8e8] sm:$0xff]
      %v5984 = vld [vmem:[#allocation2 + $0x8f0] sm:$0xff]
      %v5985 = vld [vmem:[#allocation2 + $0x8f8] sm:$0xff]
      %v5986 = vld [vmem:[#allocation2 + $0x900] sm:$0xff]
      %v5987 = vld [vmem:[#allocation2 + $0x908] sm:$0xff]
      %v5988 = vld [vmem:[#allocation2 + $0x910] sm:$0xff]
      %v5989 = vld [vmem:[#allocation2 + $0x918] sm:$0xff]
      %v5990 = vld [vmem:[#allocation2 + $0x920] sm:$0xff]
      %v5991 = vld [vmem:[#allocation2 + $0x928] sm:$0xff]
      %v5992 = vld [vmem:[#allocation2 + $0x930] sm:$0xff]
      %v5993 = vld [vmem:[#allocation2 + $0x938] sm:$0xff]
      %v5994 = vld [vmem:[#allocation2 + $0x940] sm:$0xff]
      %v5995 = vld [vmem:[#allocation2 + $0x948] sm:$0xff]
      %v5996 = vld [vmem:[#allocation2 + $0x950] sm:$0xff]
      %v5997 = vld [vmem:[#allocation2 + $0x958] sm:$0xff]
      %v5998 = vld [vmem:[#allocation2 + $0x960] sm:$0xff]
      %v5999 = vld [vmem:[#allocation2 + $0x968] sm:$0xff]
      %v6000 = vld [vmem:[#allocation2 + $0x970] sm:$0xff]
      %v6001 = vld [vmem:[#allocation2 + $0x978] sm:$0xff]
      %v6002 = vld [vmem:[#allocation2 + $0x980] sm:$0xff]
      %v6003 = vld [vmem:[#allocation2 + $0x988] sm:$0xff]
      %v6004 = vld [vmem:[#allocation2 + $0x990] sm:$0xff]
      %v6005 = vld [vmem:[#allocation2 + $0x998] sm:$0xff]
      %v6006 = vld [vmem:[#allocation2 + $0x9a0] sm:$0xff]
      %v6007 = vld [vmem:[#allocation2 + $0x9a8] sm:$0xff]
      %v6008 = vld [vmem:[#allocation2 + $0x9b0] sm:$0xff]
      %v6009 = vld [vmem:[#allocation2 + $0x9b8] sm:$0xff]
      %v6010 = vld [vmem:[#allocation2 + $0x9c0] sm:$0xff]
      %v6011 = vld [vmem:[#allocation2 + $0x9c8] sm:$0xff]
      %v6012 = vld [vmem:[#allocation2 + $0x9d0] sm:$0xff]
      %v6013 = vld [vmem:[#allocation2 + $0x9d8] sm:$0xff]
      %v6014 = vld [vmem:[#allocation2 + $0x9e0] sm:$0xff]
      %v6015 = vld [vmem:[#allocation2 + $0x9e8] sm:$0xff]
      %v6016 = vld [vmem:[#allocation2 + $0x9f0] sm:$0xff]
      %v6017 = vld [vmem:[#allocation2 + $0x9f8] sm:$0xff]
      %v6018 = vld [vmem:[#allocation2 + $0xa00] sm:$0xff]
      %v6019 = vld [vmem:[#allocation2 + $0xa08] sm:$0xff]
      %v6020 = vld [vmem:[#allocation2 + $0xa10] sm:$0xff]
      %v6021 = vld [vmem:[#allocation2 + $0xa18] sm:$0xff]
      %v6022 = vld [vmem:[#allocation2 + $0xa20] sm:$0xff]
      %v6023 = vld [vmem:[#allocation2 + $0xa28] sm:$0xff]
      %v6024 = vld [vmem:[#allocation2 + $0xa30] sm:$0xff]
      %v6025 = vld [vmem:[#allocation2 + $0xa38] sm:$0xff]
      %v6026 = vld [vmem:[#allocation2 + $0xa40] sm:$0xff]
      %v6027 = vld [vmem:[#allocation2 + $0xa48] sm:$0xff]
      %v6028 = vld [vmem:[#allocation2 + $0xa50] sm:$0xff]
      %v6029 = vld [vmem:[#allocation2 + $0xa58] sm:$0xff]
      %v6030 = vld [vmem:[#allocation2 + $0xa60] sm:$0xff]
      %v6031 = vld [vmem:[#allocation2 + $0xa68] sm:$0xff]
      %v6032 = vld [vmem:[#allocation2 + $0xa70] sm:$0xff]
      %v6033 = vld [vmem:[#allocation2 + $0xa78] sm:$0xff]
      %v6034 = vld [vmem:[#allocation2 + $0xa80] sm:$0xff]
      %v6035 = vld [vmem:[#allocation2 + $0xa88] sm:$0xff]
      %v6036 = vld [vmem:[#allocation2 + $0xa90] sm:$0xff]
      %v6037 = vld [vmem:[#allocation2 + $0xa98] sm:$0xff]
      %v6038 = vld [vmem:[#allocation2 + $0xaa0] sm:$0xff]
      %v6039 = vld [vmem:[#allocation2 + $0xaa8] sm:$0xff]
      %v6040 = vld [vmem:[#allocation2 + $0xab0] sm:$0xff]
      %v6041 = vld [vmem:[#allocation2 + $0xab8] sm:$0xff]
      %v6042 = vld [vmem:[#allocation2 + $0xac0] sm:$0xff]
      %v6043 = vld [vmem:[#allocation2 + $0xac8] sm:$0xff]
      %v6044 = vld [vmem:[#allocation2 + $0xad0] sm:$0xff]
      %v6045 = vld [vmem:[#allocation2 + $0xad8] sm:$0xff]
      %v6046 = vld [vmem:[#allocation2 + $0xae0] sm:$0xff]
      %v6047 = vld [vmem:[#allocation2 + $0xae8] sm:$0xff]
      %v6048 = vld [vmem:[#allocation2 + $0xaf0] sm:$0xff]
      %v6049 = vld [vmem:[#allocation2 + $0xaf8] sm:$0xff]
      %v6050 = vld [vmem:[#allocation2 + $0xb00] sm:$0xff]
      %v6051 = vld [vmem:[#allocation2 + $0xb08] sm:$0xff]
      %v6052 = vld [vmem:[#allocation2 + $0xb10] sm:$0xff]
      %v6053 = vld [vmem:[#allocation2 + $0xb18] sm:$0xff]
      %v6054 = vld [vmem:[#allocation2 + $0xb20] sm:$0xff]
      %v6055 = vld [vmem:[#allocation2 + $0xb28] sm:$0xff]
      %v6056 = vld [vmem:[#allocation2 + $0xb30] sm:$0xff]
      %v6057 = vld [vmem:[#allocation2 + $0xb38] sm:$0xff]
      %v6058 = vld [vmem:[#allocation2 + $0xb40] sm:$0xff]
      %v6059 = vld [vmem:[#allocation2 + $0xb48] sm:$0xff]
      %v6060 = vld [vmem:[#allocation2 + $0xb50] sm:$0xff]
      %v6061 = vld [vmem:[#allocation2 + $0xb58] sm:$0xff]
      %v6062 = vld [vmem:[#allocation2 + $0xb60] sm:$0xff]
      %v6063 = vld [vmem:[#allocation2 + $0xb68] sm:$0xff]
      %v6064 = vld [vmem:[#allocation2 + $0xb70] sm:$0xff]
      %v6065 = vld [vmem:[#allocation2 + $0xb78] sm:$0xff]
      %v6066 = vld [vmem:[#allocation2 + $0xb80] sm:$0xff]
      %v6067 = vld [vmem:[#allocation2 + $0xb88] sm:$0xff]
      %v6068 = vld [vmem:[#allocation2 + $0xb90] sm:$0xff]
      %v6069 = vld [vmem:[#allocation2 + $0xb98] sm:$0xff]
      %v6070 = vld [vmem:[#allocation2 + $0xba0] sm:$0xff]
      %v6071 = vld [vmem:[#allocation2 + $0xba8] sm:$0xff]
      %v6072 = vld [vmem:[#allocation2 + $0xbb0] sm:$0xff]
      %v6073 = vld [vmem:[#allocation2 + $0xbb8] sm:$0xff]
      %v6074 = vld [vmem:[#allocation2 + $0xbc0] sm:$0xff]
      %v6075 = vld [vmem:[#allocation2 + $0xbc8] sm:$0xff]
      %v6076 = vld [vmem:[#allocation2 + $0xbd0] sm:$0xff]
      %v6077 = vld [vmem:[#allocation2 + $0xbd8] sm:$0xff]
      %v6078 = vld [vmem:[#allocation2 + $0xbe0] sm:$0xff]
      %v6079 = vld [vmem:[#allocation2 + $0xbe8] sm:$0xff]
      %v6080 = vld [vmem:[#allocation2 + $0xbf0] sm:$0xff]
      %v6081 = vld [vmem:[#allocation2 + $0xbf8] sm:$0xff]
      %v6082 = vld [vmem:[#allocation2 + $0xc00] sm:$0xff]
      %v6083 = vld [vmem:[#allocation2 + $0xc08] sm:$0xff]
      %v6084 = vld [vmem:[#allocation2 + $0xc10] sm:$0xff]
      %v6085 = vld [vmem:[#allocation2 + $0xc18] sm:$0xff]
      %v6086 = vld [vmem:[#allocation2 + $0xc20] sm:$0xff]
      %v6087 = vld [vmem:[#allocation2 + $0xc28] sm:$0xff]
      %v6088 = vld [vmem:[#allocation2 + $0xc30] sm:$0xff]
      %v6089 = vld [vmem:[#allocation2 + $0xc38] sm:$0xff]
      %v6090 = vld [vmem:[%s1] sm:$0xff]
      %6092 = vset.pattern.permute.xlu0 0
      %6093 = vperm.xlu0 %6092, %v6090
      %v6094 = vpop.permute.xlu0 %6093
      %v6097 = vsel %vm859, %v5697, 0
      %6099 = vmatpush.msra.mxu0 0.0
      %6100 = vmatpush.msra.mxu0 0.0
      %6101 = vmatpush.msra.mxu0 %v6062
      %6102 = vmatpush.msra.mxu0 %v6034
      %6103 = vmatpush.msra.mxu0 %v6006
      %6104 = vmatpush.msra.mxu0 %v5978
      %6105 = vmatpush.msra.mxu0 %v5950
      %6106 = vmatpush.msra.mxu0 %v5922
      %6107 = vmatpush.msra.mxu0 %v5894
      %6108 = vmatpush.msra.mxu0 %v5866
      %6109 = vmatpush.msra.mxu0 %v5838
      %6110 = vmatpush.msra.mxu0 %v5810
      %6111 = vmatpush.msra.mxu0 %v5782
      %6112 = vmatpush.msra.mxu0 %v5754
      %6113 = vmatpush.msra.mxu0 %v5726
      %6114 = vmatpush.msra.mxu0 %v5698
      %6115 = vmatmul.f32.gmra.mxu0 %v6097
      %v6116 = vpop.f32.mrf.mxu0
      %v6117 = vadd.f32 %v6094, %v6116
      %6118 = vdwg.mxu0
      %6119 = vmatpush.msra.mxu0 0.0
      %6120 = vmatpush.msra.mxu0 0.0
      %6121 = vmatpush.msra.mxu0 %v6063
      %6122 = vmatpush.msra.mxu0 %v6035
      %6123 = vmatpush.msra.mxu0 %v6007
      %6124 = vmatpush.msra.mxu0 %v5979
      %6125 = vmatpush.msra.mxu0 %v5951
      %6126 = vmatpush.msra.mxu0 %v5923
      %6127 = vmatpush.msra.mxu0 %v5895
      %6128 = vmatpush.msra.mxu0 %v5867
      %6129 = vmatpush.msra.mxu0 %v5839
      %6130 = vmatpush.msra.mxu0 %v5811
      %6131 = vmatpush.msra.mxu0 %v5783
      %6132 = vmatpush.msra.mxu0 %v5755
      %6133 = vmatpush.msra.mxu0 %v5727
      %6134 = vmatpush.msra.mxu0 %v5699
      %6135 = vmatmul.f32.gmra.mxu0 %v6097
      %v6136 = vpop.f32.mrf.mxu0
      %v6137 = vadd.f32 %v6094, %v6136
      %6138 = vdwg.mxu0
      %6139 = vmatpush.msra.mxu0 0.0
      %6140 = vmatpush.msra.mxu0 0.0
      %6141 = vmatpush.msra.mxu0 %v6064
      %6142 = vmatpush.msra.mxu0 %v6036
      %6143 = vmatpush.msra.mxu0 %v6008
      %6144 = vmatpush.msra.mxu0 %v5980
      %6145 = vmatpush.msra.mxu0 %v5952
      %6146 = vmatpush.msra.mxu0 %v5924
      %6147 = vmatpush.msra.mxu0 %v5896
      %6148 = vmatpush.msra.mxu0 %v5868
      %6149 = vmatpush.msra.mxu0 %v5840
      %6150 = vmatpush.msra.mxu0 %v5812
      %6151 = vmatpush.msra.mxu0 %v5784
      %6152 = vmatpush.msra.mxu0 %v5756
      %6153 = vmatpush.msra.mxu0 %v5728
      %6154 = vmatpush.msra.mxu0 %v5700
      %6155 = vmatmul.f32.gmra.mxu0 %v6097
      %v6156 = vpop.f32.mrf.mxu0
      %v6157 = vadd.f32 %v6094, %v6156
      %6158 = vdwg.mxu0
      %6159 = vmatpush.msra.mxu0 0.0
      %6160 = vmatpush.msra.mxu0 0.0
      %6161 = vmatpush.msra.mxu0 %v6065
      %6162 = vmatpush.msra.mxu0 %v6037
      %6163 = vmatpush.msra.mxu0 %v6009
      %6164 = vmatpush.msra.mxu0 %v5981
      %6165 = vmatpush.msra.mxu0 %v5953
      %6166 = vmatpush.msra.mxu0 %v5925
      %6167 = vmatpush.msra.mxu0 %v5897
      %6168 = vmatpush.msra.mxu0 %v5869
      %6169 = vmatpush.msra.mxu0 %v5841
      %6170 = vmatpush.msra.mxu0 %v5813
      %6171 = vmatpush.msra.mxu0 %v5785
      %6172 = vmatpush.msra.mxu0 %v5757
      %6173 = vmatpush.msra.mxu0 %v5729
      %6174 = vmatpush.msra.mxu0 %v5701
      %6175 = vmatmul.f32.gmra.mxu0 %v6097
      %v6176 = vpop.f32.mrf.mxu0
      %v6177 = vadd.f32 %v6094, %v6176
      %6178 = vdwg.mxu0
      %6179 = vmatpush.msra.mxu0 0.0
      %6180 = vmatpush.msra.mxu0 0.0
      %6181 = vmatpush.msra.mxu0 %v6066
      %6182 = vmatpush.msra.mxu0 %v6038
      %6183 = vmatpush.msra.mxu0 %v6010
      %6184 = vmatpush.msra.mxu0 %v5982
      %6185 = vmatpush.msra.mxu0 %v5954
      %6186 = vmatpush.msra.mxu0 %v5926
      %6187 = vmatpush.msra.mxu0 %v5898
      %6188 = vmatpush.msra.mxu0 %v5870
      %6189 = vmatpush.msra.mxu0 %v5842
      %6190 = vmatpush.msra.mxu0 %v5814
      %6191 = vmatpush.msra.mxu0 %v5786
      %6192 = vmatpush.msra.mxu0 %v5758
      %6193 = vmatpush.msra.mxu0 %v5730
      %6194 = vmatpush.msra.mxu0 %v5702
      %6195 = vmatmul.f32.gmra.mxu0 %v6097
      %v6196 = vpop.f32.mrf.mxu0
      %v6197 = vadd.f32 %v6094, %v6196
      %6198 = vdwg.mxu0
      %6199 = vmatpush.msra.mxu0 0.0
      %6200 = vmatpush.msra.mxu0 0.0
      %6201 = vmatpush.msra.mxu0 %v6067
      %6202 = vmatpush.msra.mxu0 %v6039
      %6203 = vmatpush.msra.mxu0 %v6011
      %6204 = vmatpush.msra.mxu0 %v5983
      %6205 = vmatpush.msra.mxu0 %v5955
      %6206 = vmatpush.msra.mxu0 %v5927
      %6207 = vmatpush.msra.mxu0 %v5899
      %6208 = vmatpush.msra.mxu0 %v5871
      %6209 = vmatpush.msra.mxu0 %v5843
      %6210 = vmatpush.msra.mxu0 %v5815
      %6211 = vmatpush.msra.mxu0 %v5787
      %6212 = vmatpush.msra.mxu0 %v5759
      %6213 = vmatpush.msra.mxu0 %v5731
      %6214 = vmatpush.msra.mxu0 %v5703
      %6215 = vmatmul.f32.gmra.mxu0 %v6097
      %v6216 = vpop.f32.mrf.mxu0
      %v6217 = vadd.f32 %v6094, %v6216
      %6218 = vdwg.mxu0
      %6219 = vmatpush.msra.mxu0 0.0
      %6220 = vmatpush.msra.mxu0 0.0
      %6221 = vmatpush.msra.mxu0 %v6068
      %6222 = vmatpush.msra.mxu0 %v6040
      %6223 = vmatpush.msra.mxu0 %v6012
      %6224 = vmatpush.msra.mxu0 %v5984
      %6225 = vmatpush.msra.mxu0 %v5956
      %6226 = vmatpush.msra.mxu0 %v5928
      %6227 = vmatpush.msra.mxu0 %v5900
      %6228 = vmatpush.msra.mxu0 %v5872
      %6229 = vmatpush.msra.mxu0 %v5844
      %6230 = vmatpush.msra.mxu0 %v5816
      %6231 = vmatpush.msra.mxu0 %v5788
      %6232 = vmatpush.msra.mxu0 %v5760
      %6233 = vmatpush.msra.mxu0 %v5732
      %6234 = vmatpush.msra.mxu0 %v5704
      %6235 = vmatmul.f32.gmra.mxu0 %v6097
      %v6236 = vpop.f32.mrf.mxu0
      %v6237 = vadd.f32 %v6094, %v6236
      %6238 = vdwg.mxu0
      %6239 = vmatpush.msra.mxu0 0.0
      %6240 = vmatpush.msra.mxu0 0.0
      %6241 = vmatpush.msra.mxu0 %v6069
      %6242 = vmatpush.msra.mxu0 %v6041
      %6243 = vmatpush.msra.mxu0 %v6013
      %6244 = vmatpush.msra.mxu0 %v5985
      %6245 = vmatpush.msra.mxu0 %v5957
      %6246 = vmatpush.msra.mxu0 %v5929
      %6247 = vmatpush.msra.mxu0 %v5901
      %6248 = vmatpush.msra.mxu0 %v5873
      %6249 = vmatpush.msra.mxu0 %v5845
      %6250 = vmatpush.msra.mxu0 %v5817
      %6251 = vmatpush.msra.mxu0 %v5789
      %6252 = vmatpush.msra.mxu0 %v5761
      %6253 = vmatpush.msra.mxu0 %v5733
      %6254 = vmatpush.msra.mxu0 %v5705
      %6255 = vmatmul.f32.gmra.mxu0 %v6097
      %v6256 = vpop.f32.mrf.mxu0
      %v6257 = vadd.f32 %v6094, %v6256
      %6258 = vdwg.mxu0
      %6259 = vmatpush.msra.mxu0 0.0
      %6260 = vmatpush.msra.mxu0 0.0
      %6261 = vmatpush.msra.mxu0 %v6070
      %6262 = vmatpush.msra.mxu0 %v6042
      %6263 = vmatpush.msra.mxu0 %v6014
      %6264 = vmatpush.msra.mxu0 %v5986
      %6265 = vmatpush.msra.mxu0 %v5958
      %6266 = vmatpush.msra.mxu0 %v5930
      %6267 = vmatpush.msra.mxu0 %v5902
      %6268 = vmatpush.msra.mxu0 %v5874
      %6269 = vmatpush.msra.mxu0 %v5846
      %6270 = vmatpush.msra.mxu0 %v5818
      %6271 = vmatpush.msra.mxu0 %v5790
      %6272 = vmatpush.msra.mxu0 %v5762
      %6273 = vmatpush.msra.mxu0 %v5734
      %6274 = vmatpush.msra.mxu0 %v5706
      %6275 = vmatmul.f32.gmra.mxu0 %v6097
      %v6276 = vpop.f32.mrf.mxu0
      %v6277 = vadd.f32 %v6094, %v6276
      %6278 = vdwg.mxu0
      %6279 = vmatpush.msra.mxu0 0.0
      %6280 = vmatpush.msra.mxu0 0.0
      %6281 = vmatpush.msra.mxu0 %v6071
      %6282 = vmatpush.msra.mxu0 %v6043
      %6283 = vmatpush.msra.mxu0 %v6015
      %6284 = vmatpush.msra.mxu0 %v5987
      %6285 = vmatpush.msra.mxu0 %v5959
      %6286 = vmatpush.msra.mxu0 %v5931
      %6287 = vmatpush.msra.mxu0 %v5903
      %6288 = vmatpush.msra.mxu0 %v5875
      %6289 = vmatpush.msra.mxu0 %v5847
      %6290 = vmatpush.msra.mxu0 %v5819
      %6291 = vmatpush.msra.mxu0 %v5791
      %6292 = vmatpush.msra.mxu0 %v5763
      %6293 = vmatpush.msra.mxu0 %v5735
      %6294 = vmatpush.msra.mxu0 %v5707
      %6295 = vmatmul.f32.gmra.mxu0 %v6097
      %v6296 = vpop.f32.mrf.mxu0
      %v6297 = vadd.f32 %v6094, %v6296
      %6298 = vdwg.mxu0
      %6299 = vmatpush.msra.mxu0 0.0
      %6300 = vmatpush.msra.mxu0 0.0
      %6301 = vmatpush.msra.mxu0 %v6072
      %6302 = vmatpush.msra.mxu0 %v6044
      %6303 = vmatpush.msra.mxu0 %v6016
      %6304 = vmatpush.msra.mxu0 %v5988
      %6305 = vmatpush.msra.mxu0 %v5960
      %6306 = vmatpush.msra.mxu0 %v5932
      %6307 = vmatpush.msra.mxu0 %v5904
      %6308 = vmatpush.msra.mxu0 %v5876
      %6309 = vmatpush.msra.mxu0 %v5848
      %6310 = vmatpush.msra.mxu0 %v5820
      %6311 = vmatpush.msra.mxu0 %v5792
      %6312 = vmatpush.msra.mxu0 %v5764
      %6313 = vmatpush.msra.mxu0 %v5736
      %6314 = vmatpush.msra.mxu0 %v5708
      %6315 = vmatmul.f32.gmra.mxu0 %v6097
      %v6316 = vpop.f32.mrf.mxu0
      %v6317 = vadd.f32 %v6094, %v6316
      %6318 = vdwg.mxu0
      %6319 = vmatpush.msra.mxu0 0.0
      %6320 = vmatpush.msra.mxu0 0.0
      %6321 = vmatpush.msra.mxu0 %v6073
      %6322 = vmatpush.msra.mxu0 %v6045
      %6323 = vmatpush.msra.mxu0 %v6017
      %6324 = vmatpush.msra.mxu0 %v5989
      %6325 = vmatpush.msra.mxu0 %v5961
      %6326 = vmatpush.msra.mxu0 %v5933
      %6327 = vmatpush.msra.mxu0 %v5905
      %6328 = vmatpush.msra.mxu0 %v5877
      %6329 = vmatpush.msra.mxu0 %v5849
      %6330 = vmatpush.msra.mxu0 %v5821
      %6331 = vmatpush.msra.mxu0 %v5793
      %6332 = vmatpush.msra.mxu0 %v5765
      %6333 = vmatpush.msra.mxu0 %v5737
      %6334 = vmatpush.msra.mxu0 %v5709
      %6335 = vmatmul.f32.gmra.mxu0 %v6097
      %v6336 = vpop.f32.mrf.mxu0
      %v6337 = vadd.f32 %v6094, %v6336
      %6338 = vdwg.mxu0
      %6339 = vmatpush.msra.mxu0 0.0
      %6340 = vmatpush.msra.mxu0 0.0
      %6341 = vmatpush.msra.mxu0 %v6074
      %6342 = vmatpush.msra.mxu0 %v6046
      %6343 = vmatpush.msra.mxu0 %v6018
      %6344 = vmatpush.msra.mxu0 %v5990
      %6345 = vmatpush.msra.mxu0 %v5962
      %6346 = vmatpush.msra.mxu0 %v5934
      %6347 = vmatpush.msra.mxu0 %v5906
      %6348 = vmatpush.msra.mxu0 %v5878
      %6349 = vmatpush.msra.mxu0 %v5850
      %6350 = vmatpush.msra.mxu0 %v5822
      %6351 = vmatpush.msra.mxu0 %v5794
      %6352 = vmatpush.msra.mxu0 %v5766
      %6353 = vmatpush.msra.mxu0 %v5738
      %6354 = vmatpush.msra.mxu0 %v5710
      %6355 = vmatmul.f32.gmra.mxu0 %v6097
      %v6356 = vpop.f32.mrf.mxu0
      %v6357 = vadd.f32 %v6094, %v6356
      %6358 = vdwg.mxu0
      %6359 = vmatpush.msra.mxu0 0.0
      %6360 = vmatpush.msra.mxu0 0.0
      %6361 = vmatpush.msra.mxu0 %v6075
      %6362 = vmatpush.msra.mxu0 %v6047
      %6363 = vmatpush.msra.mxu0 %v6019
      %6364 = vmatpush.msra.mxu0 %v5991
      %6365 = vmatpush.msra.mxu0 %v5963
      %6366 = vmatpush.msra.mxu0 %v5935
      %6367 = vmatpush.msra.mxu0 %v5907
      %6368 = vmatpush.msra.mxu0 %v5879
      %6369 = vmatpush.msra.mxu0 %v5851
      %6370 = vmatpush.msra.mxu0 %v5823
      %6371 = vmatpush.msra.mxu0 %v5795
      %6372 = vmatpush.msra.mxu0 %v5767
      %6373 = vmatpush.msra.mxu0 %v5739
      %6374 = vmatpush.msra.mxu0 %v5711
      %6375 = vmatmul.f32.gmra.mxu0 %v6097
      %v6376 = vpop.f32.mrf.mxu0
      %v6377 = vadd.f32 %v6094, %v6376
      %6378 = vdwg.mxu0
      %6379 = vmatpush.msra.mxu0 0.0
      %6380 = vmatpush.msra.mxu0 0.0
      %6381 = vmatpush.msra.mxu0 %v6076
      %6382 = vmatpush.msra.mxu0 %v6048
      %6383 = vmatpush.msra.mxu0 %v6020
      %6384 = vmatpush.msra.mxu0 %v5992
      %6385 = vmatpush.msra.mxu0 %v5964
      %6386 = vmatpush.msra.mxu0 %v5936
      %6387 = vmatpush.msra.mxu0 %v5908
      %6388 = vmatpush.msra.mxu0 %v5880
      %6389 = vmatpush.msra.mxu0 %v5852
      %6390 = vmatpush.msra.mxu0 %v5824
      %6391 = vmatpush.msra.mxu0 %v5796
      %6392 = vmatpush.msra.mxu0 %v5768
      %6393 = vmatpush.msra.mxu0 %v5740
      %6394 = vmatpush.msra.mxu0 %v5712
      %6395 = vmatmul.f32.gmra.mxu0 %v6097
      %v6396 = vpop.f32.mrf.mxu0
      %v6397 = vadd.f32 %v6094, %v6396
      %6398 = vdwg.mxu0
      %6399 = vmatpush.msra.mxu0 0.0
      %6400 = vmatpush.msra.mxu0 0.0
      %6401 = vmatpush.msra.mxu0 %v6077
      %6402 = vmatpush.msra.mxu0 %v6049
      %6403 = vmatpush.msra.mxu0 %v6021
      %6404 = vmatpush.msra.mxu0 %v5993
      %6405 = vmatpush.msra.mxu0 %v5965
      %6406 = vmatpush.msra.mxu0 %v5937
      %6407 = vmatpush.msra.mxu0 %v5909
      %6408 = vmatpush.msra.mxu0 %v5881
      %6409 = vmatpush.msra.mxu0 %v5853
      %6410 = vmatpush.msra.mxu0 %v5825
      %6411 = vmatpush.msra.mxu0 %v5797
      %6412 = vmatpush.msra.mxu0 %v5769
      %6413 = vmatpush.msra.mxu0 %v5741
      %6414 = vmatpush.msra.mxu0 %v5713
      %6415 = vmatmul.f32.gmra.mxu0 %v6097
      %v6416 = vpop.f32.mrf.mxu0
      %v6417 = vadd.f32 %v6094, %v6416
      %6418 = vdwg.mxu0
      %6419 = vmatpush.msra.mxu0 0.0
      %6420 = vmatpush.msra.mxu0 0.0
      %6421 = vmatpush.msra.mxu0 %v6078
      %6422 = vmatpush.msra.mxu0 %v6050
      %6423 = vmatpush.msra.mxu0 %v6022
      %6424 = vmatpush.msra.mxu0 %v5994
      %6425 = vmatpush.msra.mxu0 %v5966
      %6426 = vmatpush.msra.mxu0 %v5938
      %6427 = vmatpush.msra.mxu0 %v5910
      %6428 = vmatpush.msra.mxu0 %v5882
      %6429 = vmatpush.msra.mxu0 %v5854
      %6430 = vmatpush.msra.mxu0 %v5826
      %6431 = vmatpush.msra.mxu0 %v5798
      %6432 = vmatpush.msra.mxu0 %v5770
      %6433 = vmatpush.msra.mxu0 %v5742
      %6434 = vmatpush.msra.mxu0 %v5714
      %6435 = vmatmul.f32.gmra.mxu0 %v6097
      %v6436 = vpop.f32.mrf.mxu0
      %v6437 = vadd.f32 %v6094, %v6436
      %6438 = vdwg.mxu0
      %6439 = vmatpush.msra.mxu0 0.0
      %6440 = vmatpush.msra.mxu0 0.0
      %6441 = vmatpush.msra.mxu0 %v6079
      %6442 = vmatpush.msra.mxu0 %v6051
      %6443 = vmatpush.msra.mxu0 %v6023
      %6444 = vmatpush.msra.mxu0 %v5995
      %6445 = vmatpush.msra.mxu0 %v5967
      %6446 = vmatpush.msra.mxu0 %v5939
      %6447 = vmatpush.msra.mxu0 %v5911
      %6448 = vmatpush.msra.mxu0 %v5883
      %6449 = vmatpush.msra.mxu0 %v5855
      %6450 = vmatpush.msra.mxu0 %v5827
      %6451 = vmatpush.msra.mxu0 %v5799
      %6452 = vmatpush.msra.mxu0 %v5771
      %6453 = vmatpush.msra.mxu0 %v5743
      %6454 = vmatpush.msra.mxu0 %v5715
      %6455 = vmatmul.f32.gmra.mxu0 %v6097
      %v6456 = vpop.f32.mrf.mxu0
      %v6457 = vadd.f32 %v6094, %v6456
      %6458 = vdwg.mxu0
      %6459 = vmatpush.msra.mxu0 0.0
      %6460 = vmatpush.msra.mxu0 0.0
      %6461 = vmatpush.msra.mxu0 %v6080
      %6462 = vmatpush.msra.mxu0 %v6052
      %6463 = vmatpush.msra.mxu0 %v6024
      %6464 = vmatpush.msra.mxu0 %v5996
      %6465 = vmatpush.msra.mxu0 %v5968
      %6466 = vmatpush.msra.mxu0 %v5940
      %6467 = vmatpush.msra.mxu0 %v5912
      %6468 = vmatpush.msra.mxu0 %v5884
      %6469 = vmatpush.msra.mxu0 %v5856
      %6470 = vmatpush.msra.mxu0 %v5828
      %6471 = vmatpush.msra.mxu0 %v5800
      %6472 = vmatpush.msra.mxu0 %v5772
      %6473 = vmatpush.msra.mxu0 %v5744
      %6474 = vmatpush.msra.mxu0 %v5716
      %6475 = vmatmul.f32.gmra.mxu0 %v6097
      %v6476 = vpop.f32.mrf.mxu0
      %v6477 = vadd.f32 %v6094, %v6476
      %6478 = vdwg.mxu0
      %6479 = vmatpush.msra.mxu0 0.0
      %6480 = vmatpush.msra.mxu0 0.0
      %6481 = vmatpush.msra.mxu0 %v6081
      %6482 = vmatpush.msra.mxu0 %v6053
      %6483 = vmatpush.msra.mxu0 %v6025
      %6484 = vmatpush.msra.mxu0 %v5997
      %6485 = vmatpush.msra.mxu0 %v5969
      %6486 = vmatpush.msra.mxu0 %v5941
      %6487 = vmatpush.msra.mxu0 %v5913
      %6488 = vmatpush.msra.mxu0 %v5885
      %6489 = vmatpush.msra.mxu0 %v5857
      %6490 = vmatpush.msra.mxu0 %v5829
      %6491 = vmatpush.msra.mxu0 %v5801
      %6492 = vmatpush.msra.mxu0 %v5773
      %6493 = vmatpush.msra.mxu0 %v5745
      %6494 = vmatpush.msra.mxu0 %v5717
      %6495 = vmatmul.f32.gmra.mxu0 %v6097
      %v6496 = vpop.f32.mrf.mxu0
      %v6497 = vadd.f32 %v6094, %v6496
      %6498 = vdwg.mxu0
      %6499 = vmatpush.msra.mxu0 0.0
      %6500 = vmatpush.msra.mxu0 0.0
      %6501 = vmatpush.msra.mxu0 %v6082
      %6502 = vmatpush.msra.mxu0 %v6054
      %6503 = vmatpush.msra.mxu0 %v6026
      %6504 = vmatpush.msra.mxu0 %v5998
      %6505 = vmatpush.msra.mxu0 %v5970
      %6506 = vmatpush.msra.mxu0 %v5942
      %6507 = vmatpush.msra.mxu0 %v5914
      %6508 = vmatpush.msra.mxu0 %v5886
      %6509 = vmatpush.msra.mxu0 %v5858
      %6510 = vmatpush.msra.mxu0 %v5830
      %6511 = vmatpush.msra.mxu0 %v5802
      %6512 = vmatpush.msra.mxu0 %v5774
      %6513 = vmatpush.msra.mxu0 %v5746
      %6514 = vmatpush.msra.mxu0 %v5718
      %6515 = vmatmul.f32.gmra.mxu0 %v6097
      %v6516 = vpop.f32.mrf.mxu0
      %v6517 = vadd.f32 %v6094, %v6516
      %6518 = vdwg.mxu0
      %6519 = vmatpush.msra.mxu0 0.0
      %6520 = vmatpush.msra.mxu0 0.0
      %6521 = vmatpush.msra.mxu0 %v6083
      %6522 = vmatpush.msra.mxu0 %v6055
      %6523 = vmatpush.msra.mxu0 %v6027
      %6524 = vmatpush.msra.mxu0 %v5999
      %6525 = vmatpush.msra.mxu0 %v5971
      %6526 = vmatpush.msra.mxu0 %v5943
      %6527 = vmatpush.msra.mxu0 %v5915
      %6528 = vmatpush.msra.mxu0 %v5887
      %6529 = vmatpush.msra.mxu0 %v5859
      %6530 = vmatpush.msra.mxu0 %v5831
      %6531 = vmatpush.msra.mxu0 %v5803
      %6532 = vmatpush.msra.mxu0 %v5775
      %6533 = vmatpush.msra.mxu0 %v5747
      %6534 = vmatpush.msra.mxu0 %v5719
      %6535 = vmatmul.f32.gmra.mxu0 %v6097
      %v6536 = vpop.f32.mrf.mxu0
      %v6537 = vadd.f32 %v6094, %v6536
      %6538 = vdwg.mxu0
      %6539 = vmatpush.msra.mxu0 0.0
      %6540 = vmatpush.msra.mxu0 0.0
      %6541 = vmatpush.msra.mxu0 %v6084
      %6542 = vmatpush.msra.mxu0 %v6056
      %6543 = vmatpush.msra.mxu0 %v6028
      %6544 = vmatpush.msra.mxu0 %v6000
      %6545 = vmatpush.msra.mxu0 %v5972
      %6546 = vmatpush.msra.mxu0 %v5944
      %6547 = vmatpush.msra.mxu0 %v5916
      %6548 = vmatpush.msra.mxu0 %v5888
      %6549 = vmatpush.msra.mxu0 %v5860
      %6550 = vmatpush.msra.mxu0 %v5832
      %6551 = vmatpush.msra.mxu0 %v5804
      %6552 = vmatpush.msra.mxu0 %v5776
      %6553 = vmatpush.msra.mxu0 %v5748
      %6554 = vmatpush.msra.mxu0 %v5720
      %6555 = vmatmul.f32.gmra.mxu0 %v6097
      %v6556 = vpop.f32.mrf.mxu0
      %v6557 = vadd.f32 %v6094, %v6556
      %6558 = vdwg.mxu0
      %6559 = vmatpush.msra.mxu0 0.0
      %6560 = vmatpush.msra.mxu0 0.0
      %6561 = vmatpush.msra.mxu0 %v6085
      %6562 = vmatpush.msra.mxu0 %v6057
      %6563 = vmatpush.msra.mxu0 %v6029
      %6564 = vmatpush.msra.mxu0 %v6001
      %6565 = vmatpush.msra.mxu0 %v5973
      %6566 = vmatpush.msra.mxu0 %v5945
      %6567 = vmatpush.msra.mxu0 %v5917
      %6568 = vmatpush.msra.mxu0 %v5889
      %6569 = vmatpush.msra.mxu0 %v5861
      %6570 = vmatpush.msra.mxu0 %v5833
      %6571 = vmatpush.msra.mxu0 %v5805
      %6572 = vmatpush.msra.mxu0 %v5777
      %6573 = vmatpush.msra.mxu0 %v5749
      %6574 = vmatpush.msra.mxu0 %v5721
      %6575 = vmatmul.f32.gmra.mxu0 %v6097
      %v6576 = vpop.f32.mrf.mxu0
      %v6577 = vadd.f32 %v6094, %v6576
      %6578 = vdwg.mxu0
      %6579 = vmatpush.msra.mxu0 0.0
      %6580 = vmatpush.msra.mxu0 0.0
      %6581 = vmatpush.msra.mxu0 %v6086
      %6582 = vmatpush.msra.mxu0 %v6058
      %6583 = vmatpush.msra.mxu0 %v6030
      %6584 = vmatpush.msra.mxu0 %v6002
      %6585 = vmatpush.msra.mxu0 %v5974
      %6586 = vmatpush.msra.mxu0 %v5946
      %6587 = vmatpush.msra.mxu0 %v5918
      %6588 = vmatpush.msra.mxu0 %v5890
      %6589 = vmatpush.msra.mxu0 %v5862
      %6590 = vmatpush.msra.mxu0 %v5834
      %6591 = vmatpush.msra.mxu0 %v5806
      %6592 = vmatpush.msra.mxu0 %v5778
      %6593 = vmatpush.msra.mxu0 %v5750
      %6594 = vmatpush.msra.mxu0 %v5722
      %6595 = vmatmul.f32.gmra.mxu0 %v6097
      %v6596 = vpop.f32.mrf.mxu0
      %v6597 = vadd.f32 %v6094, %v6596
      %6598 = vdwg.mxu0
      %6599 = vmatpush.msra.mxu0 0.0
      %6600 = vmatpush.msra.mxu0 0.0
      %6601 = vmatpush.msra.mxu0 %v6087
      %6602 = vmatpush.msra.mxu0 %v6059
      %6603 = vmatpush.msra.mxu0 %v6031
      %6604 = vmatpush.msra.mxu0 %v6003
      %6605 = vmatpush.msra.mxu0 %v5975
      %6606 = vmatpush.msra.mxu0 %v5947
      %6607 = vmatpush.msra.mxu0 %v5919
      %6608 = vmatpush.msra.mxu0 %v5891
      %6609 = vmatpush.msra.mxu0 %v5863
      %6610 = vmatpush.msra.mxu0 %v5835
      %6611 = vmatpush.msra.mxu0 %v5807
      %6612 = vmatpush.msra.mxu0 %v5779
      %6613 = vmatpush.msra.mxu0 %v5751
      %6614 = vmatpush.msra.mxu0 %v5723
      %6615 = vmatmul.f32.gmra.mxu0 %v6097
      %v6616 = vpop.f32.mrf.mxu0
      %v6617 = vadd.f32 %v6094, %v6616
      %6618 = vdwg.mxu0
      %6619 = vmatpush.msra.mxu0 0.0
      %6620 = vmatpush.msra.mxu0 0.0
      %6621 = vmatpush.msra.mxu0 %v6088
      %6622 = vmatpush.msra.mxu0 %v6060
      %6623 = vmatpush.msra.mxu0 %v6032
      %6624 = vmatpush.msra.mxu0 %v6004
      %6625 = vmatpush.msra.mxu0 %v5976
      %6626 = vmatpush.msra.mxu0 %v5948
      %6627 = vmatpush.msra.mxu0 %v5920
      %6628 = vmatpush.msra.mxu0 %v5892
      %6629 = vmatpush.msra.mxu0 %v5864
      %6630 = vmatpush.msra.mxu0 %v5836
      %6631 = vmatpush.msra.mxu0 %v5808
      %6632 = vmatpush.msra.mxu0 %v5780
      %6633 = vmatpush.msra.mxu0 %v5752
      %6634 = vmatpush.msra.mxu0 %v5724
      %6635 = vmatmul.f32.gmra.mxu0 %v6097
      %v6636 = vpop.f32.mrf.mxu0
      %v6637 = vadd.f32 %v6094, %v6636
      %6638 = vdwg.mxu0
      %6639 = vmatpush.msra.mxu0 0.0
      %6640 = vmatpush.msra.mxu0 0.0
      %6641 = vmatpush.msra.mxu0 %v6089
      %6642 = vmatpush.msra.mxu0 %v6061
      %6643 = vmatpush.msra.mxu0 %v6033
      %6644 = vmatpush.msra.mxu0 %v6005
      %6645 = vmatpush.msra.mxu0 %v5977
      %6646 = vmatpush.msra.mxu0 %v5949
      %6647 = vmatpush.msra.mxu0 %v5921
      %6648 = vmatpush.msra.mxu0 %v5893
      %6649 = vmatpush.msra.mxu0 %v5865
      %6650 = vmatpush.msra.mxu0 %v5837
      %6651 = vmatpush.msra.mxu0 %v5809
      %6652 = vmatpush.msra.mxu0 %v5781
      %6653 = vmatpush.msra.mxu0 %v5753
      %6654 = vmatpush.msra.mxu0 %v5725
      %6655 = vmatmul.f32.gmra.mxu0 %v6097
      %v6656 = vpop.f32.mrf.mxu0
      %v6657 = vadd.f32 %v6094, %v6656
      %6658 = vdwg.mxu0
      %6659 = vst [vmem:[%s170] sm:$0xff] %v6117
      %6660 = vst [vmem:[%s170 + $0x8] sm:$0xff] %v6137
      %6661 = vst [vmem:[%s170 + $0x10] sm:$0xff] %v6157
      %6662 = vst [vmem:[%s170 + $0x18] sm:$0xff] %v6177
      %6663 = vst [vmem:[%s170 + $0x20] sm:$0xff] %v6197
      %6664 = vst [vmem:[%s170 + $0x28] sm:$0xff] %v6217
      %6665 = vst [vmem:[%s170 + $0x30] sm:$0xff] %v6237
      %6666 = vst [vmem:[%s170 + $0x38] sm:$0xff] %v6257
      %6667 = vst [vmem:[%s170 + $0x40] sm:$0xff] %v6277
      %6668 = vst [vmem:[%s170 + $0x48] sm:$0xff] %v6297
      %6669 = vst [vmem:[%s170 + $0x50] sm:$0xff] %v6317
      %6670 = vst [vmem:[%s170 + $0x58] sm:$0xff] %v6337
      %6671 = vst [vmem:[%s170 + $0x60] sm:$0xff] %v6357
      %6672 = vst [vmem:[%s170 + $0x68] sm:$0xff] %v6377
      %6673 = vst [vmem:[%s170 + $0x70] sm:$0xff] %v6397
      %6674 = vst [vmem:[%s170 + $0x78] sm:$0xff] %v6417
      %6675 = vst [vmem:[%s170 + $0x80] sm:$0xff] %v6437
      %6676 = vst [vmem:[%s170 + $0x88] sm:$0xff] %v6457
      %6677 = vst [vmem:[%s170 + $0x90] sm:$0xff] %v6477
      %6678 = vst [vmem:[%s170 + $0x98] sm:$0xff] %v6497
      %6679 = vst [vmem:[%s170 + $0xa0] sm:$0xff] %v6517
      %6680 = vst [vmem:[%s170 + $0xa8] sm:$0xff] %v6537
      %6681 = vst [vmem:[%s170 + $0xb0] sm:$0xff] %v6557
      %6682 = vst [vmem:[%s170 + $0xb8] sm:$0xff] %v6577
      %6683 = vst [vmem:[%s170 + $0xc0] sm:$0xff] %v6597
      %6684 = vst [vmem:[%s170 + $0xc8] sm:$0xff] %v6617
      %6685 = vst [vmem:[%s170 + $0xd0] sm:$0xff] %v6637
      %6686 = vst.msk [vmem:[%s170 + $0xd8] sm:$0xff] %vm1926, %v6657
      %vm6687 = vcmask 1048304
      %6688 = vst.msk [vmem:[%s170 + $0xd8] sm:$0xff] %vm6687, 0.0
      %6689 = vst [vmem:[%s170 + $0xe0] sm:$0xff] 0.0
      %6690 = vst [vmem:[%s170 + $0xe8] sm:$0xff] 0.0
      %6691 = vst [vmem:[%s170 + $0xf0] sm:$0xff] 0.0
      %6692 = vst [vmem:[%s170 + $0xf8] sm:$0xff] 0.0
      %p6693 = scmp.lt.s32.totalorder %s14, 1
      %s6694 = scalar_select %p6693, %s14, 1
      %s6695 = smul.addr %s6694, 32
      %s6696 = smul.addr %s6695, 8
      %s6697 = scalar_lea.vmem %s3, %s6696
      // Predicated region
      $region33: #{conv3d_pallas.1} parent=31 // pred_check
        %p6698 = pneg %p100
      $region34: #{conv3d_pallas.1} parent=31 // pred_check_branch
        %6700 = sbr.rel (%p6698) target = $region36
      $region35: #{conv3d_pallas.1} parent=31 // pred_region
        _
      $region36: #{conv3d_pallas.1} parent=31 // pred_fallthru
        _
    $region32: #{conv3d_pallas.1} parent=5 // pred_fallthru
      _
    %p6701 = scmp.le.s32.totalorder 2, %s9
    // Predicated region
    $region37: #{conv3d_pallas.1} parent=5 // pred_check
      %p6702 = pneg %p6701
    $region38: #{conv3d_pallas.1} parent=5 // pred_check_branch
      %6704 = sbr.rel (%p6702) target = $region40
    $region39: #{conv3d_pallas.1} parent=5 // pred_region
      %s6705 = ssub.s32 %s9, 2
      // Predicated region
      $region41: #{conv3d_pallas.1} parent=39 // pred_check
        %p6706 = pneg %p106
      $region42: #{conv3d_pallas.1} parent=39 // pred_check_branch
        %6708 = sbr.rel (%p6706) target = $region44
      $region43: #{conv3d_pallas.1} parent=39 // pred_region
        %p6709 = scmp.lt.s32.totalorder %s15, 1
        %s6710 = scalar_select %p6709, %s15, 1
        %s6711 = smul.addr %s6710, 32
        %s6712 = smul.addr %s6711, 8
        %s6713 = scalar_lea.vmem %s3, %s6712
      $region44: #{conv3d_pallas.1} parent=39 // pred_fallthru
        _
    $region40: #{conv3d_pallas.1} parent=5 // pred_fallthru
      _
  $region6: #{conv3d_pallas.1} parent=0 // loop_footer
    %s13 = sadd.s32 1, %s9
  $region7: #{conv3d_pallas.1} parent=0 // loop_footer_branch
    %8 = sbr.rel target = $region3
  $region8: #{conv3d_pallas.1} parent=0 // loop_exit
    _

</llo_original>
